<compile_context>
chip_gen: v7x
topology: tpu7x:2x2x1
jax: 0.10.0
libtpu: 0.0.40
codegen_flags: <defaults>
</compile_context>

<pallas_src>
import functools

import jax
import jax.numpy as jnp
from jax.experimental import pallas as pl
from jax.experimental.pallas import tpu as pltpu

_F32 = jnp.float32
_BF16 = jnp.bfloat16


# ----------------------------- in-kernel helpers ----------------------------

def _layernorm(x, g, b, eps=1e-5):
    mu = jnp.mean(x, axis=-1, keepdims=True)
    xc = x - mu
    var = jnp.mean(xc * xc, axis=-1, keepdims=True)
    return xc * jax.lax.rsqrt(var + eps) * g + b


def _full_spec(shape):
    n = len(shape)
    return pl.BlockSpec(shape, lambda i, _n=n: (0,) * _n)


# ----------------------------- Pallas kernels ------------------------------

def _linear_kernel(a_ref, w_ref, b_ref, o_ref, *, act):
    y = jnp.dot(a_ref[...], w_ref[...], preferred_element_type=_F32) + b_ref[...]
    if act == "gelu":
        y = jax.nn.gelu(y)
    o_ref[...] = y.astype(o_ref.dtype)


def pallas_linear(a, w, b, act=None):
    M, K = a.shape
    N = w.shape[1]
    return pl.pallas_call(
        functools.partial(_linear_kernel, act=act),
        out_shape=jax.ShapeDtypeStruct((M, N), _BF16),
        grid=(1,),
        in_specs=[_full_spec((M, K)), _full_spec((K, N)), _full_spec((1, N))],
        out_specs=_full_spec((M, N)),
    )(a, w, b)


def _mbconv_kernel(p_ref, scw_ref, scb_ref, ew_ref, eb_ref, dww_ref, dwb_ref,
                   pw_ref, pb_ref, o_ref, *, stride):
    # p_ref: (9, T, Cin) tap-major im2col patches of the block INPUT (bf16),
    #        T = batch * H_out * W_out (batch folded into tokens, grid=(1,)).
    p = p_ref[...]

    # Shortcut branch: center tap (stride 1) or 2x2 avg-pool (stride 2), then 1x1.
    if stride == 2:
        scx = ((p[4].astype(_F32) + p[5].astype(_F32)
                + p[7].astype(_F32) + p[8].astype(_F32)) * 0.25).astype(_BF16)
    else:
        scx = p[4]
    sc = jnp.dot(scx, scw_ref[...], preferred_element_type=_F32) + scb_ref[...]

    # Expand (1x1) + GELU: taps folded into the matmul M dimension -> ONE
    # lane-dense (9T, Cin) x (Cin, Ce) matmul instead of 9 tiny ones.
    T, Cin = p.shape[1], p.shape[2]
    e = jax.nn.gelu(jnp.dot(p.reshape(9 * T, Cin), ew_ref[...],
                            preferred_element_type=_F32) + eb_ref[...])
    e = e.reshape(9, T, -1)

    # Depthwise 3x3 as a per-tap weighted sum (channels on lanes, plain VPU FMAs).
    # NOTE: border taps use pre-expansion zero padding; with exp_b == 0 (conv
    # bias folded into identity BN) this matches the unfused reference exactly.
    # TODO(synk): timm MBConv's BatchNorm (folded to identity) and SE module are omitted.
    acc = jnp.sum(e * dww_ref[...], axis=0)
    y = jax.nn.gelu(acc + dwb_ref[...])

    # Project (1x1) and add the shortcut before the single HBM store (bf16).
    out = jnp.dot(y.astype(_BF16), pw_ref[...],
                  preferred_element_type=_F32) + pb_ref[...]
    o_ref[...] = (sc + out).astype(o_ref.dtype)


def pallas_mbconv(patches, p, stride):
    _, T, Cin = patches.shape
    Ce = p["exp_w"].shape[1]
    Cout = p["proj_w"].shape[1]
    return pl.pallas_call(
        functools.partial(_mbconv_kernel, stride=stride),
        out_shape=jax.ShapeDtypeStruct((T, Cout), _BF16),
        grid=(1,),
        in_specs=[
            _full_spec((9, T, Cin)),
            _full_spec((Cin, Cout)), _full_spec((1, Cout)),
            _full_spec((Cin, Ce)), _full_spec((1, Ce)),
            _full_spec((9, 1, Ce)), _full_spec((1, Ce)),
            _full_spec((Ce, Cout)), _full_spec((1, Cout)),
        ],
        out_specs=_full_spec((T, Cout)),
    )(patches, p["sc_w"], p["sc_b"], p["exp_w"], p["exp_b"],
      p["dw_w"], p["dw_b"], p["proj_w"], p["proj_b"])


def _tstage_kernel(t_ref, ln1g_ref, ln1b_ref, wqkv_ref, bqkv_ref, wo_ref, bo_ref,
                   ln2g_ref, ln2b_ref, w1_ref, b1_ref, w2_ref, b2_ref,
                   hg_ref, hbv_ref, hw_ref, hbias_ref, o_ref,
                   qkv_scr, ocat_scr, *, heads, n_blocks):
    B, N, C = t_ref.shape
    BN = B * N
    dh = C // heads
    scale = dh ** -0.5

    # Residual stream kept in f32 and flattened to (tokens, channels).
    x = t_ref[...].astype(_F32).reshape(BN, C)

    for blk in range(n_blocks):
        # --- attention: LN1 -> ONE lane-dense QKV matmul -> per-head attention
        #     (head split / re-concat done via VMEM scratch lane slices, no
        #     lane-dim reshapes) -> ONE lane-dense output projection -> +resid ---
        h = _layernorm(x, ln1g_ref[blk], ln1b_ref[blk]).astype(_BF16)
        qkv = jnp.dot(h, wqkv_ref[blk], preferred_element_type=_F32) + bqkv_ref[blk]
        qkv_scr[...] = qkv.reshape(B, N, 3 * C)
        for hh in range(heads):
            q = qkv_scr[:, :, hh * dh:(hh + 1) * dh].astype(_BF16)             # (B,N,dh)
            k = qkv_scr[:, :, C + hh * dh:C + (hh + 1) * dh].astype(_BF16)
            v = qkv_scr[:, :, 2 * C + hh * dh:2 * C + (hh + 1) * dh].astype(_BF16)
            s = jnp.einsum("bnd,bmd->bnm", q, k,
                           preferred_element_type=_F32) * scale
            # TODO(synk): timm's relative-position MLP bias ("rmlp") is omitted here.
            s = s - jnp.max(s, axis=-1, keepdims=True)
            e = jnp.exp(s)
            pmat = e * pl.reciprocal(jnp.sum(e, axis=-1, keepdims=True), approx=True)
            ocat_scr[:, :, hh * dh:(hh + 1) * dh] = jnp.einsum(
                "bnm,bmd->bnd", pmat.astype(_BF16), v, preferred_element_type=_F32)
        o_cat = ocat_scr[...].astype(_BF16).reshape(BN, C)
        att = jnp.dot(o_cat, wo_ref[blk], preferred_element_type=_F32) + bo_ref[blk]
        x = x + att

        # --- MLP sub-block: LN2 -> fc1 -> GELU -> fc2 -> +resid ---
        h2 = _layernorm(x, ln2g_ref[blk], ln2b_ref[blk]).astype(_BF16)
        m = jax.nn.gelu(jnp.dot(h2, w1_ref[blk],
                                preferred_element_type=_F32) + b1_ref[blk])
        m = jnp.dot(m.astype(_BF16), w2_ref[blk],
                    preferred_element_type=_F32) + b2_ref[blk]
        x = x + m

    # --- head: LN -> global mean pool over tokens -> FC (classes padded to 512) ---
    hfin = _layernorm(x, hg_ref[...], hbv_ref[...])
    pooled = jnp.mean(hfin.reshape(B, N, C), axis=1)
    o_ref[...] = (jnp.dot(pooled.astype(_BF16), hw_ref[...],
                          preferred_element_type=_F32) + hbias_ref[...]
                  ).astype(o_ref.dtype)


def pallas_transformer_head(t, tp, ln_g, ln_b, hw, hb, heads):
    B, N, C = t.shape
    n_blocks = tp["wqkv"].shape[0]
    hidden = tp["w1"].shape[2]
    ncls_pad = hw.shape[1]
    return pl.pallas_call(
        functools.partial(_tstage_kernel, heads=heads, n_blocks=n_blocks),
        out_shape=jax.ShapeDtypeStruct((B, ncls_pad), _F32),
        grid=(1,),
        in_specs=[
            _full_spec((B, N, C)),
            _full_spec((n_blocks, 1, C)), _full_spec((n_blocks, 1, C)),
            _full_spec((n_blocks, C, 3 * C)), _full_spec((n_blocks, 1, 3 * C)),
            _full_spec((n_blocks, C, C)), _full_spec((n_blocks, 1, C)),
            _full_spec((n_blocks, 1, C)), _full_spec((n_blocks, 1, C)),
            _full_spec((n_blocks, C, hidden)), _full_spec((n_blocks, 1, hidden)),
            _full_spec((n_blocks, hidden, C)), _full_spec((n_blocks, 1, C)),
            _full_spec((1, C)), _full_spec((1, C)),
            _full_spec((C, ncls_pad)), _full_spec((1, ncls_pad)),
        ],
        out_specs=_full_spec((B, ncls_pad)),
        scratch_shapes=[pltpu.VMEM((B, N, 3 * C), _F32),
                        pltpu.VMEM((B, N, C), _F32)],
    )(t, tp["ln1_g"], tp["ln1_b"], tp["wqkv"], tp["bqkv"], tp["wo"], tp["bo"],
      tp["ln2_g"], tp["ln2_b"], tp["w1"], tp["b1"], tp["w2"], tp["b2"],
      ln_g, ln_b, hw, hb)


# ------------------------------ JAX glue ----------------------------------

def im2col(x, k, stride, pad):
    """x: (B, H, W, C) -> (B, k*k, Ho, Wo, C) tap-major patches (NHWC)."""
    x = jnp.pad(x, ((0, 0), (pad, pad), (pad, pad), (0, 0)))
    B, Hp, Wp, C = x.shape
    Ho = (Hp - k) // stride + 1
    Wo = (Wp - k) // stride + 1
    cols = [x[:, di:di + stride * Ho:stride, dj:dj + stride * Wo:stride, :]
            for di in range(k) for dj in range(k)]
    return jnp.stack(cols, axis=1), Ho, Wo


def mbconv(x, p, stride):
    B, H, W, Cin = x.shape
    Cout = p["proj_w"].shape[1]
    patches, Ho, Wo = im2col(x, 3, stride, 1)                 # (B, 9, Ho, Wo, Cin)
    patches = jnp.transpose(patches, (1, 0, 2, 3, 4)).reshape(9, B * Ho * Wo, Cin)
    y = pallas_mbconv(patches.astype(_BF16), p, stride)        # (B*Ho*Wo, Cout) bf16
    return y.reshape(B, Ho, Wo, Cout)


def coatnet_forward(prep, x_nchw, num_classes):
    # NCHW (PyTorch) -> NHWC (kernel layout)
    x = jnp.transpose(x_nchw, (0, 2, 3, 1)).astype(_F32)
    B = x.shape[0]
    Cin = x.shape[-1]

    # stem: 3x3 conv stride 2 + GELU (single fused im2col-matmul kernel)
    patches, Ho, Wo = im2col(x, 3, 2, 1)
    pm = jnp.transpose(patches, (0, 2, 3, 1, 4)).reshape(B * Ho * Wo, 9 * Cin)
    x = pallas_linear(pm.astype(_BF16), prep["stem_w"], prep["stem_b"],
                      act="gelu").reshape(B, Ho, Wo, -1)

    # convolutional stages (one fused kernel per MBConv block, bf16 activations)
    x = mbconv(x, prep["s0"], stride=1)
    x = mbconv(x, prep["s1"], stride=2)

    # transformer stages + head: ONE fused kernel for both blocks + LN/pool/FC
    B, H, W, C = x.shape
    t = x.reshape(B, H * W, C)
    logits = pallas_transformer_head(t, prep["tstage"],
                                     prep["head_ln_g"], prep["head_ln_b"],
                                     prep["head_w"], prep["head_b"], heads=4)
    return logits[:, :num_classes]


# --------------------------- deterministic params --------------------------

def init_params(key, in_ch=4, num_classes=500):
    keys = iter(jax.random.split(key, 64))

    def w(shape, scale=0.02):
        return scale * jax.random.normal(next(keys), shape, jnp.float32)

    zeros = lambda shape: jnp.zeros(shape, jnp.float32)
    ones = lambda shape: jnp.ones(shape, jnp.float32)

    C_stem, C0, C1 = 16, 32, 64
    params = {
        "stem_w": w((9 * in_ch, C_stem)), "stem_b": zeros((C_stem,)),
        "s0": {
            "sc_w": w((C_stem, C0)), "sc_b": zeros((C0,)),
            "exp_w": w((C_stem, C0)), "exp_b": zeros((C0,)),
            "dw_w": w((9, C0)), "dw_b": zeros((C0,)),
            "proj_w": w((C0, C0)), "proj_b": zeros((C0,)),
        },
        "s1": {
            "sc_w": w((C0, C1)), "sc_b": zeros((C1,)),
            "exp_w": w((C0, C1)), "exp_b": zeros((C1,)),
            "dw_w": w((9, C1)), "dw_b": zeros((C1,)),
            "proj_w": w((C1, C1)), "proj_b": zeros((C1,)),
        },
    }

    def tblock():
        return {
            "ln1_g": ones((C1,)), "ln1_b": zeros((C1,)),
            "wqkv": w((C1, 3 * C1)), "bqkv": zeros((3 * C1,)),
            "wo": w((C1, C1)), "bo": zeros((C1,)),
            "ln2_g": ones((C1,)), "ln2_b": zeros((C1,)),
            "mlp_w1": w((C1, 2 * C1)), "mlp_b1": zeros((2 * C1,)),
            "mlp_w2": w((2 * C1, C1)), "mlp_b2": zeros((C1,)),
        }

    params["s2"] = tblock()
    params["s3"] = tblock()
    params["head_ln_g"] = ones((C1,))
    params["head_ln_b"] = zeros((C1,))
    params["head_w"] = w((C1, num_classes))
    params["head_b"] = zeros((num_classes,))
    return params


def prepare_params(params):
    """One-time repack: bf16 weight casts, bias reshapes, per-stage block stacking
    and class padding are hoisted out of the forward pass (no per-call XLA repack)."""

    def mb(d):
        ce = d["exp_w"].shape[1]
        co = d["proj_w"].shape[1]
        return {
            "sc_w": d["sc_w"].astype(_BF16), "sc_b": d["sc_b"].reshape(1, co),
            "exp_w": d["exp_w"].astype(_BF16), "exp_b": d["exp_b"].reshape(1, ce),
            "dw_w": d["dw_w"].reshape(9, 1, ce).astype(_F32),
            "dw_b": d["dw_b"].reshape(1, ce),
            "proj_w": d["proj_w"].astype(_BF16), "proj_b": d["proj_b"].reshape(1, co),
        }

    blocks = [params["s2"], params["s3"]]
    nb = len(blocks)
    C = params["head_ln_g"].shape[0]
    hid = blocks[0]["mlp_w1"].shape[1]
    stack = lambda name: jnp.stack([b[name] for b in blocks], axis=0)
    tstage = {
        "ln1_g": stack("ln1_g").reshape(nb, 1, C),
        "ln1_b": stack("ln1_b").reshape(nb, 1, C),
        "wqkv": stack("wqkv").astype(_BF16),              # (nb, C, 3C) lane-dense
        "bqkv": stack("bqkv").reshape(nb, 1, 3 * C),
        "wo": stack("wo").astype(_BF16),                  # (nb, C, C)  lane-dense
        "bo": stack("bo").reshape(nb, 1, C),
        "ln2_g": stack("ln2_g").reshape(nb, 1, C),
        "ln2_b": stack("ln2_b").reshape(nb, 1, C),
        "w1": stack("mlp_w1").astype(_BF16),
        "b1": stack("mlp_b1").reshape(nb, 1, hid),
        "w2": stack("mlp_w2").astype(_BF16),
        "b2": stack("mlp_b2").reshape(nb, 1, C),
    }

    ncls = params["head_w"].shape[1]
    ncls_pad = ((ncls + 127) // 128) * 128                # 500 -> 512 lane-dense store
    prep = {
        "stem_w": params["stem_w"].astype(_BF16),
        "stem_b": params["stem_b"].reshape(1, -1),
        "s0": mb(params["s0"]),
        "s1": mb(params["s1"]),
        "tstage": tstage,
        "head_ln_g": params["head_ln_g"].reshape(1, C),
        "head_ln_b": params["head_ln_b"].reshape(1, C),
        "head_w": jnp.pad(params["head_w"],
                          ((0, 0), (0, ncls_pad - ncls))).astype(_BF16),
        "head_b": jnp.pad(params["head_b"],
                          ((0, ncls_pad - ncls),)).reshape(1, ncls_pad),
    }
    return prep, ncls


# ---------------------------------- main -----------------------------------

if __name__ == "__main__":
    key = jax.random.PRNGKey(0)
    pkey, xkey = jax.random.split(key)
    params = init_params(pkey, in_ch=4, num_classes=500)
    prep, ncls = prepare_params(params)                       # one-time weight repack
    x = jax.random.normal(xkey, (2, 4, 16, 16), jnp.float32)  # NCHW, like PyTorch

    fwd = jax.jit(lambda p, inp: coatnet_forward(p, inp, ncls))
    logits = jax.block_until_ready(fwd(prep, x))
    assert logits.shape == (2, 500)
    assert bool(jnp.all(jnp.isfinite(logits)))
    print("KERNEL_OK")
</pallas_src>

<mosaic_0001>
module attributes {stable_mosaic.version = 11 : i64} {
  func.func @_linear_kernel(%arg0: i32, %arg1: memref<128x36xbf16, #tpu.memory_space<vmem>>, %arg2: memref<36x16xbf16, #tpu.memory_space<vmem>>, %arg3: memref<1x16xf32, #tpu.memory_space<vmem>>, %arg4: memref<128x16xbf16, #tpu.memory_space<vmem>>) attributes {dimension_semantics = [#tpu.dimension_semantics<arbitrary>], iteration_bounds = array<i64: 1>, scalar_prefetch = 0 : i64, scratch_operands = 0 : i64, tpu.core_type = #tpu.core_type<tc>, window_params = [{pipeline_mode = #tpu.pipeline_mode<synchronous>, transform_indices = @transform_0, window_bounds = array<i64: 128, 36>}, {pipeline_mode = #tpu.pipeline_mode<synchronous>, transform_indices = @transform_1, window_bounds = array<i64: 36, 16>}, {pipeline_mode = #tpu.pipeline_mode<synchronous>, transform_indices = @transform_2, window_bounds = array<i64: 1, 16>}, {pipeline_mode = #tpu.pipeline_mode<synchronous>, transform_indices = @transform_3, window_bounds = array<i64: 128, 16>}]} {
    %c0 = arith.constant 0 : index
    %c0_0 = arith.constant 0 : index
    %0 = vector.load %arg1[%c0, %c0_0] : memref<128x36xbf16, #tpu.memory_space<vmem>>, vector<128x36xbf16>
    %c0_1 = arith.constant 0 : index
    %c0_2 = arith.constant 0 : index
    %1 = vector.load %arg2[%c0_1, %c0_2] : memref<36x16xbf16, #tpu.memory_space<vmem>>, vector<36x16xbf16>
    %cst = arith.constant dense<0.000000e+00> : vector<128x16xf32>
    %2 = tpu.matmul %0, %1, %cst {dimension_numbers = #tpu.dot_dimension_numbers<[1], [0], [0], [1], [0, 0, 1, 1], [], []>} : vector<128x36xbf16>, vector<36x16xbf16>, vector<128x16xf32> -> vector<128x16xf32>
    %c0_3 = arith.constant 0 : index
    %c0_4 = arith.constant 0 : index
    %3 = vector.load %arg3[%c0_3, %c0_4] : memref<1x16xf32, #tpu.memory_space<vmem>>, vector<1x16xf32>
    %4 = vector.broadcast %3 : vector<1x16xf32> to vector<128x16xf32>
    %5 = arith.addf %2, %4 : vector<128x16xf32>
    %6 = arith.mulf %5, %5 : vector<128x16xf32>
    %7 = arith.mulf %5, %6 : vector<128x16xf32>
    %cst_5 = arith.constant 4.471500e-02 : f32
    %8 = vector.broadcast %cst_5 : f32 to vector<128x16xf32>
    %9 = arith.mulf %8, %7 : vector<128x16xf32>
    %10 = arith.addf %5, %9 : vector<128x16xf32>
    %cst_6 = arith.constant 0.797884583 : f32
    %11 = vector.broadcast %cst_6 : f32 to vector<128x16xf32>
    %12 = arith.mulf %11, %10 : vector<128x16xf32>
    %13 = math.tanh %12 : vector<128x16xf32>
    %cst_7 = arith.constant 1.000000e+00 : f32
    %14 = vector.broadcast %cst_7 : f32 to vector<128x16xf32>
    %15 = arith.addf %14, %13 : vector<128x16xf32>
    %cst_8 = arith.constant 5.000000e-01 : f32
    %16 = vector.broadcast %cst_8 : f32 to vector<128x16xf32>
    %17 = arith.mulf %16, %15 : vector<128x16xf32>
    %18 = arith.mulf %5, %17 : vector<128x16xf32>
    %19 = arith.truncf %18 : vector<128x16xf32> to vector<128x16xbf16>
    %c0_9 = arith.constant 0 : index
    %c0_10 = arith.constant 0 : index
    %20 = vector.load %arg4[%c0_9, %c0_10] : memref<128x16xbf16, #tpu.memory_space<vmem>>, vector<128x16xbf16>
    tpu.vector_store %arg4[%c0_9, %c0_10], %19 {strides = array<i32>} : memref<128x16xbf16, #tpu.memory_space<vmem>>, vector<128x16xbf16>,
    return
  }
  func.func @transform_0(%arg0: i32) -> (i32, i32) {
    %c0_i32 = arith.constant 0 : i32
    %c0_i32_0 = arith.constant 0 : i32
    %c0_i32_1 = arith.constant 0 : i32
    return %c0_i32, %c0_i32_0 : i32, i32
  }
  func.func @transform_1(%arg0: i32) -> (i32, i32) {
    %c0_i32 = arith.constant 0 : i32
    %c0_i32_0 = arith.constant 0 : i32
    %c0_i32_1 = arith.constant 0 : i32
    return %c0_i32, %c0_i32_0 : i32, i32
  }
  func.func @transform_2(%arg0: i32) -> (i32, i32) {
    %c0_i32 = arith.constant 0 : i32
    %c0_i32_0 = arith.constant 0 : i32
    %c0_i32_1 = arith.constant 0 : i32
    return %c0_i32, %c0_i32_0 : i32, i32
  }
  func.func @transform_3(%arg0: i32) -> (i32, i32) {
    %c0_i32 = arith.constant 0 : i32
    %c0_i32_0 = arith.constant 0 : i32
    %c0_i32_1 = arith.constant 0 : i32
    return %c0_i32, %c0_i32_0 : i32, i32
  }
}

module attributes {stable_mosaic.version = 11 : i64} {
  func.func @_mbconv_kernel(%arg0: i32, %arg1: memref<9x128x16xbf16, #tpu.memory_space<vmem>>, %arg2: memref<16x32xbf16, #tpu.memory_space<vmem>>, %arg3: memref<1x32xf32, #tpu.memory_space<vmem>>, %arg4: memref<16x32xbf16, #tpu.memory_space<vmem>>, %arg5: memref<1x32xf32, #tpu.memory_space<vmem>>, %arg6: memref<9x1x32xf32, #tpu.memory_space<vmem>>, %arg7: memref<1x32xf32, #tpu.memory_space<vmem>>, %arg8: memref<32x32xbf16, #tpu.memory_space<vmem>>, %arg9: memref<1x32xf32, #tpu.memory_space<vmem>>, %arg10: memref<128x32xbf16, #tpu.memory_space<vmem>>) attributes {dimension_semantics = [#tpu.dimension_semantics<arbitrary>], iteration_bounds = array<i64: 1>, scalar_prefetch = 0 : i64, scratch_operands = 0 : i64, tpu.core_type = #tpu.core_type<tc>, window_params = [{pipeline_mode = #tpu.pipeline_mode<synchronous>, transform_indices = @transform_0, window_bounds = array<i64: 9, 128, 16>}, {pipeline_mode = #tpu.pipeline_mode<synchronous>, transform_indices = @transform_1, window_bounds = array<i64: 16, 32>}, {pipeline_mode = #tpu.pipeline_mode<synchronous>, transform_indices = @transform_2, window_bounds = array<i64: 1, 32>}, {pipeline_mode = #tpu.pipeline_mode<synchronous>, transform_indices = @transform_3, window_bounds = array<i64: 16, 32>}, {pipeline_mode = #tpu.pipeline_mode<synchronous>, transform_indices = @transform_4, window_bounds = array<i64: 1, 32>}, {pipeline_mode = #tpu.pipeline_mode<synchronous>, transform_indices = @transform_5, window_bounds = array<i64: 9, 1, 32>}, {pipeline_mode = #tpu.pipeline_mode<synchronous>, transform_indices = @transform_6, window_bounds = array<i64: 1, 32>}, {pipeline_mode = #tpu.pipeline_mode<synchronous>, transform_indices = @transform_7, window_bounds = array<i64: 32, 32>}, {pipeline_mode = #tpu.pipeline_mode<synchronous>, transform_indices = @transform_8, window_bounds = array<i64: 1, 32>}, {pipeline_mode = #tpu.pipeline_mode<synchronous>, transform_indices = @transform_9, window_bounds = array<i64: 128, 32>}]} {
    %c0 = arith.constant 0 : index
    %c0_0 = arith.constant 0 : index
    %c0_1 = arith.constant 0 : index
    %0 = vector.load %arg1[%c0, %c0_0, %c0_1] : memref<9x128x16xbf16, #tpu.memory_space<vmem>>, vector<9x128x16xbf16>
    %1 = vector.extract_strided_slice %0 {offsets = [4, 0, 0], sizes = [1, 128, 16], strides = [1, 1, 1]} : vector<9x128x16xbf16> to vector<1x128x16xbf16>
    %2 = vector.shape_cast %1 : vector<1x128x16xbf16> to vector<128x16xbf16>
    %c0_2 = arith.constant 0 : index
    %c0_3 = arith.constant 0 : index
    %3 = vector.load %arg2[%c0_2, %c0_3] : memref<16x32xbf16, #tpu.memory_space<vmem>>, vector<16x32xbf16>
    %cst = arith.constant dense<0.000000e+00> : vector<128x32xf32>
    %4 = tpu.matmul %2, %3, %cst {dimension_numbers = #tpu.dot_dimension_numbers<[1], [0], [0], [1], [0, 0, 1, 1], [], []>} : vector<128x16xbf16>, vector<16x32xbf16>, vector<128x32xf32> -> vector<128x32xf32>
    %c0_4 = arith.constant 0 : index
    %c0_5 = arith.constant 0 : index
    %5 = vector.load %arg3[%c0_4, %c0_5] : memref<1x32xf32, #tpu.memory_space<vmem>>, vector<1x32xf32>
    %6 = vector.broadcast %5 : vector<1x32xf32> to vector<128x32xf32>
    %7 = arith.addf %4, %6 : vector<128x32xf32>
    %8 = vector.shape_cast %0 : vector<9x128x16xbf16> to vector<1152x16xbf16>
    %c0_6 = arith.constant 0 : index
    %c0_7 = arith.constant 0 : index
    %9 = vector.load %arg4[%c0_6, %c0_7] : memref<16x32xbf16, #tpu.memory_space<vmem>>, vector<16x32xbf16>
    %cst_8 = arith.constant dense<0.000000e+00> : vector<1152x32xf32>
    %10 = tpu.matmul %8, %9, %cst_8 {dimension_numbers = #tpu.dot_dimension_numbers<[1], [0], [0], [1], [0, 0, 1, 1], [], []>} : vector<1152x16xbf16>, vector<16x32xbf16>, vector<1152x32xf32> -> vector<1152x32xf32>
    %c0_9 = arith.constant 0 : index
    %c0_10 = arith.constant 0 : index
    %11 = vector.load %arg5[%c0_9, %c0_10] : memref<1x32xf32, #tpu.memory_space<vmem>>, vector<1x32xf32>
    %12 = vector.broadcast %11 : vector<1x32xf32> to vector<1152x32xf32>
    %13 = arith.addf %10, %12 : vector<1152x32xf32>
    %14 = arith.mulf %13, %13 : vector<1152x32xf32>
    %15 = arith.mulf %13, %14 : vector<1152x32xf32>
    %cst_11 = arith.constant 4.471500e-02 : f32
    %16 = vector.broadcast %cst_11 : f32 to vector<1152x32xf32>
    %17 = arith.mulf %16, %15 : vector<1152x32xf32>
    %18 = arith.addf %13, %17 : vector<1152x32xf32>
    %cst_12 = arith.constant 0.797884583 : f32
    %19 = vector.broadcast %cst_12 : f32 to vector<1152x32xf32>
    %20 = arith.mulf %19, %18 : vector<1152x32xf32>
    %21 = math.tanh %20 : vector<1152x32xf32>
    %cst_13 = arith.constant 1.000000e+00 : f32
    %22 = vector.broadcast %cst_13 : f32 to vector<1152x32xf32>
    %23 = arith.addf %22, %21 : vector<1152x32xf32>
    %cst_14 = arith.constant 5.000000e-01 : f32
    %24 = vector.broadcast %cst_14 : f32 to vector<1152x32xf32>
    %25 = arith.mulf %24, %23 : vector<1152x32xf32>
    %26 = arith.mulf %13, %25 : vector<1152x32xf32>
    %27 = vector.shape_cast %26 : vector<1152x32xf32> to vector<9x128x32xf32>
    %c0_15 = arith.constant 0 : index
    %c0_16 = arith.constant 0 : index
    %c0_17 = arith.constant 0 : index
    %28 = vector.load %arg6[%c0_15, %c0_16, %c0_17] : memref<9x1x32xf32, #tpu.memory_space<vmem>>, vector<9x1x32xf32>
    %29 = vector.broadcast %28 : vector<9x1x32xf32> to vector<9x128x32xf32>
    %30 = arith.mulf %27, %29 : vector<9x128x32xf32>
    %cst_18 = arith.constant dense<0.000000e+00> : vector<128x32xf32>
    %31 = vector.multi_reduction <add>, %30, %cst_18 [0] : vector<9x128x32xf32> to vector<128x32xf32>
    %c0_19 = arith.constant 0 : index
    %c0_20 = arith.constant 0 : index
    %32 = vector.load %arg7[%c0_19, %c0_20] : memref<1x32xf32, #tpu.memory_space<vmem>>, vector<1x32xf32>
    %33 = vector.broadcast %32 : vector<1x32xf32> to vector<128x32xf32>
    %34 = arith.addf %31, %33 : vector<128x32xf32>
    %35 = arith.mulf %34, %34 : vector<128x32xf32>
    %36 = arith.mulf %34, %35 : vector<128x32xf32>
    %cst_21 = arith.constant 4.471500e-02 : f32
    %37 = vector.broadcast %cst_21 : f32 to vector<128x32xf32>
    %38 = arith.mulf %37, %36 : vector<128x32xf32>
    %39 = arith.addf %34, %38 : vector<128x32xf32>
    %cst_22 = arith.constant 0.797884583 : f32
    %40 = vector.broadcast %cst_22 : f32 to vector<128x32xf32>
    %41 = arith.mulf %40, %39 : vector<128x32xf32>
    %42 = math.tanh %41 : vector<128x32xf32>
    %cst_23 = arith.constant 1.000000e+00 : f32
    %43 = vector.broadcast %cst_23 : f32 to vector<128x32xf32>
    %44 = arith.addf %43, %42 : vector<128x32xf32>
    %cst_24 = arith.constant 5.000000e-01 : f32
    %45 = vector.broadcast %cst_24 : f32 to vector<128x32xf32>
    %46 = arith.mulf %45, %44 : vector<128x32xf32>
    %47 = arith.mulf %34, %46 : vector<128x32xf32>
    %48 = arith.truncf %47 : vector<128x32xf32> to vector<128x32xbf16>
    %c0_25 = arith.constant 0 : index
    %c0_26 = arith.constant 0 : index
    %49 = vector.load %arg8[%c0_25, %c0_26] : memref<32x32xbf16, #tpu.memory_space<vmem>>, vector<32x32xbf16>
    %cst_27 = arith.constant dense<0.000000e+00> : vector<128x32xf32>
    %50 = tpu.matmul %48, %49, %cst_27 {dimension_numbers = #tpu.dot_dimension_numbers<[1], [0], [0], [1], [0, 0, 1, 1], [], []>} : vector<128x32xbf16>, vector<32x32xbf16>, vector<128x32xf32> -> vector<128x32xf32>
    %c0_28 = arith.constant 0 : index
    %c0_29 = arith.constant 0 : index
    %51 = vector.load %arg9[%c0_28, %c0_29] : memref<1x32xf32, #tpu.memory_space<vmem>>, vector<1x32xf32>
    %52 = vector.broadcast %51 : vector<1x32xf32> to vector<128x32xf32>
    %53 = arith.addf %50, %52 : vector<128x32xf32>
    %54 = arith.addf %7, %53 : vector<128x32xf32>
    %55 = arith.truncf %54 : vector<128x32xf32> to vector<128x32xbf16>
    %c0_30 = arith.constant 0 : index
    %c0_31 = arith.constant 0 : index
    %56 = vector.load %arg10[%c0_30, %c0_31] : memref<128x32xbf16, #tpu.memory_space<vmem>>, vector<128x32xbf16>
    tpu.vector_store %arg10[%c0_30, %c0_31], %55 {strides = array<i32>} : memref<128x32xbf16, #tpu.memory_space<vmem>>, vector<128x32xbf16>,
    return
  }
  func.func @transform_0(%arg0: i32) -> (i32, i32, i32) {
    %c0_i32 = arith.constant 0 : i32
    %c0_i32_0 = arith.constant 0 : i32
    %c0_i32_1 = arith.constant 0 : i32
    %c0_i32_2 = arith.constant 0 : i32
    return %c0_i32, %c0_i32_0, %c0_i32_1 : i32, i32, i32
  }
  func.func @transform_1(%arg0: i32) -> (i32, i32) {
    %c0_i32 = arith.constant 0 : i32
    %c0_i32_0 = arith.constant 0 : i32
    %c0_i32_1 = arith.constant 0 : i32
    return %c0_i32, %c0_i32_0 : i32, i32
  }
  func.func @transform_2(%arg0: i32) -> (i32, i32) {
    %c0_i32 = arith.constant 0 : i32
    %c0_i32_0 = arith.constant 0 : i32
    %c0_i32_1 = arith.constant 0 : i32
    return %c0_i32, %c0_i32_0 : i32, i32
  }
  func.func @transform_3(%arg0: i32) -> (i32, i32) {
    %c0_i32 = arith.constant 0 : i32
    %c0_i32_0 = arith.constant 0 : i32
    %c0_i32_1 = arith.constant 0 : i32
    return %c0_i32, %c0_i32_0 : i32, i32
  }
  func.func @transform_4(%arg0: i32) -> (i32, i32) {
    %c0_i32 = arith.constant 0 : i32
    %c0_i32_0 = arith.constant 0 : i32
    %c0_i32_1 = arith.constant 0 : i32
    return %c0_i32, %c0_i32_0 : i32, i32
  }
  func.func @transform_5(%arg0: i32) -> (i32, i32, i32) {
    %c0_i32 = arith.constant 0 : i32
    %c0_i32_0 = arith.constant 0 : i32
    %c0_i32_1 = arith.constant 0 : i32
    %c0_i32_2 = arith.constant 0 : i32
    return %c0_i32, %c0_i32_0, %c0_i32_1 : i32, i32, i32
  }
  func.func @transform_6(%arg0: i32) -> (i32, i32) {
    %c0_i32 = arith.constant 0 : i32
    %c0_i32_0 = arith.constant 0 : i32
    %c0_i32_1 = arith.constant 0 : i32
    return %c0_i32, %c0_i32_0 : i32, i32
  }
  func.func @transform_7(%arg0: i32) -> (i32, i32) {
    %c0_i32 = arith.constant 0 : i32
    %c0_i32_0 = arith.constant 0 : i32
    %c0_i32_1 = arith.constant 0 : i32
    return %c0_i32, %c0_i32_0 : i32, i32
  }
  func.func @transform_8(%arg0: i32) -> (i32, i32) {
    %c0_i32 = arith.constant 0 : i32
    %c0_i32_0 = arith.constant 0 : i32
    %c0_i32_1 = arith.constant 0 : i32
    return %c0_i32, %c0_i32_0 : i32, i32
  }
  func.func @transform_9(%arg0: i32) -> (i32, i32) {
    %c0_i32 = arith.constant 0 : i32
    %c0_i32_0 = arith.constant 0 : i32
    %c0_i32_1 = arith.constant 0 : i32
    return %c0_i32, %c0_i32_0 : i32, i32
  }
}

module attributes {stable_mosaic.version = 11 : i64} {
  func.func @_mbconv_kernel(%arg0: i32, %arg1: memref<9x32x32xbf16, #tpu.memory_space<vmem>>, %arg2: memref<32x64xbf16, #tpu.memory_space<vmem>>, %arg3: memref<1x64xf32, #tpu.memory_space<vmem>>, %arg4: memref<32x64xbf16, #tpu.memory_space<vmem>>, %arg5: memref<1x64xf32, #tpu.memory_space<vmem>>, %arg6: memref<9x1x64xf32, #tpu.memory_space<vmem>>, %arg7: memref<1x64xf32, #tpu.memory_space<vmem>>, %arg8: memref<64x64xbf16, #tpu.memory_space<vmem>>, %arg9: memref<1x64xf32, #tpu.memory_space<vmem>>, %arg10: memref<32x64xbf16, #tpu.memory_space<vmem>>) attributes {dimension_semantics = [#tpu.dimension_semantics<arbitrary>], iteration_bounds = array<i64: 1>, scalar_prefetch = 0 : i64, scratch_operands = 0 : i64, tpu.core_type = #tpu.core_type<tc>, window_params = [{pipeline_mode = #tpu.pipeline_mode<synchronous>, transform_indices = @transform_0, window_bounds = array<i64: 9, 32, 32>}, {pipeline_mode = #tpu.pipeline_mode<synchronous>, transform_indices = @transform_1, window_bounds = array<i64: 32, 64>}, {pipeline_mode = #tpu.pipeline_mode<synchronous>, transform_indices = @transform_2, window_bounds = array<i64: 1, 64>}, {pipeline_mode = #tpu.pipeline_mode<synchronous>, transform_indices = @transform_3, window_bounds = array<i64: 32, 64>}, {pipeline_mode = #tpu.pipeline_mode<synchronous>, transform_indices = @transform_4, window_bounds = array<i64: 1, 64>}, {pipeline_mode = #tpu.pipeline_mode<synchronous>, transform_indices = @transform_5, window_bounds = array<i64: 9, 1, 64>}, {pipeline_mode = #tpu.pipeline_mode<synchronous>, transform_indices = @transform_6, window_bounds = array<i64: 1, 64>}, {pipeline_mode = #tpu.pipeline_mode<synchronous>, transform_indices = @transform_7, window_bounds = array<i64: 64, 64>}, {pipeline_mode = #tpu.pipeline_mode<synchronous>, transform_indices = @transform_8, window_bounds = array<i64: 1, 64>}, {pipeline_mode = #tpu.pipeline_mode<synchronous>, transform_indices = @transform_9, window_bounds = array<i64: 32, 64>}]} {
    %c0 = arith.constant 0 : index
    %c0_0 = arith.constant 0 : index
    %c0_1 = arith.constant 0 : index
    %0 = vector.load %arg1[%c0, %c0_0, %c0_1] : memref<9x32x32xbf16, #tpu.memory_space<vmem>>, vector<9x32x32xbf16>
    %1 = vector.extract_strided_slice %0 {offsets = [4, 0, 0], sizes = [1, 32, 32], strides = [1, 1, 1]} : vector<9x32x32xbf16> to vector<1x32x32xbf16>
    %2 = vector.shape_cast %1 : vector<1x32x32xbf16> to vector<32x32xbf16>
    %3 = arith.extf %2 : vector<32x32xbf16> to vector<32x32xf32>
    %4 = vector.extract_strided_slice %0 {offsets = [5, 0, 0], sizes = [1, 32, 32], strides = [1, 1, 1]} : vector<9x32x32xbf16> to vector<1x32x32xbf16>
    %5 = vector.shape_cast %4 : vector<1x32x32xbf16> to vector<32x32xbf16>
    %6 = arith.extf %5 : vector<32x32xbf16> to vector<32x32xf32>
    %7 = arith.addf %3, %6 : vector<32x32xf32>
    %8 = vector.extract_strided_slice %0 {offsets = [7, 0, 0], sizes = [1, 32, 32], strides = [1, 1, 1]} : vector<9x32x32xbf16> to vector<1x32x32xbf16>
    %9 = vector.shape_cast %8 : vector<1x32x32xbf16> to vector<32x32xbf16>
    %10 = arith.extf %9 : vector<32x32xbf16> to vector<32x32xf32>
    %11 = arith.addf %7, %10 : vector<32x32xf32>
    %12 = vector.extract_strided_slice %0 {offsets = [8, 0, 0], sizes = [1, 32, 32], strides = [1, 1, 1]} : vector<9x32x32xbf16> to vector<1x32x32xbf16>
    %13 = vector.shape_cast %12 : vector<1x32x32xbf16> to vector<32x32xbf16>
    %14 = arith.extf %13 : vector<32x32xbf16> to vector<32x32xf32>
    %15 = arith.addf %11, %14 : vector<32x32xf32>
    %cst = arith.constant 2.500000e-01 : f32
    %16 = vector.broadcast %cst : f32 to vector<32x32xf32>
    %17 = arith.mulf %15, %16 : vector<32x32xf32>
    %18 = arith.truncf %17 : vector<32x32xf32> to vector<32x32xbf16>
    %c0_2 = arith.constant 0 : index
    %c0_3 = arith.constant 0 : index
    %19 = vector.load %arg2[%c0_2, %c0_3] : memref<32x64xbf16, #tpu.memory_space<vmem>>, vector<32x64xbf16>
    %cst_4 = arith.constant dense<0.000000e+00> : vector<32x64xf32>
    %20 = tpu.matmul %18, %19, %cst_4 {dimension_numbers = #tpu.dot_dimension_numbers<[1], [0], [0], [1], [0, 0, 1, 1], [], []>} : vector<32x32xbf16>, vector<32x64xbf16>, vector<32x64xf32> -> vector<32x64xf32>
    %c0_5 = arith.constant 0 : index
    %c0_6 = arith.constant 0 : index
    %21 = vector.load %arg3[%c0_5, %c0_6] : memref<1x64xf32, #tpu.memory_space<vmem>>, vector<1x64xf32>
    %22 = vector.broadcast %21 : vector<1x64xf32> to vector<32x64xf32>
    %23 = arith.addf %20, %22 : vector<32x64xf32>
    %24 = vector.shape_cast %0 : vector<9x32x32xbf16> to vector<288x32xbf16>
    %c0_7 = arith.constant 0 : index
    %c0_8 = arith.constant 0 : index
    %25 = vector.load %arg4[%c0_7, %c0_8] : memref<32x64xbf16, #tpu.memory_space<vmem>>, vector<32x64xbf16>
    %cst_9 = arith.constant dense<0.000000e+00> : vector<288x64xf32>
    %26 = tpu.matmul %24, %25, %cst_9 {dimension_numbers = #tpu.dot_dimension_numbers<[1], [0], [0], [1], [0, 0, 1, 1], [], []>} : vector<288x32xbf16>, vector<32x64xbf16>, vector<288x64xf32> -> vector<288x64xf32>
    %c0_10 = arith.constant 0 : index
    %c0_11 = arith.constant 0 : index
    %27 = vector.load %arg5[%c0_10, %c0_11] : memref<1x64xf32, #tpu.memory_space<vmem>>, vector<1x64xf32>
    %28 = vector.broadcast %27 : vector<1x64xf32> to vector<288x64xf32>
    %29 = arith.addf %26, %28 : vector<288x64xf32>
    %30 = arith.mulf %29, %29 : vector<288x64xf32>
    %31 = arith.mulf %29, %30 : vector<288x64xf32>
    %cst_12 = arith.constant 4.471500e-02 : f32
    %32 = vector.broadcast %cst_12 : f32 to vector<288x64xf32>
    %33 = arith.mulf %32, %31 : vector<288x64xf32>
    %34 = arith.addf %29, %33 : vector<288x64xf32>
    %cst_13 = arith.constant 0.797884583 : f32
    %35 = vector.broadcast %cst_13 : f32 to vector<288x64xf32>
    %36 = arith.mulf %35, %34 : vector<288x64xf32>
    %37 = math.tanh %36 : vector<288x64xf32>
    %cst_14 = arith.constant 1.000000e+00 : f32
    %38 = vector.broadcast %cst_14 : f32 to vector<288x64xf32>
    %39 = arith.addf %38, %37 : vector<288x64xf32>
    %cst_15 = arith.constant 5.000000e-01 : f32
    %40 = vector.broadcast %cst_15 : f32 to vector<288x64xf32>
    %41 = arith.mulf %40, %39 : vector<288x64xf32>
    %42 = arith.mulf %29, %41 : vector<288x64xf32>
    %43 = vector.shape_cast %42 : vector<288x64xf32> to vector<9x32x64xf32>
    %c0_16 = arith.constant 0 : index
    %c0_17 = arith.constant 0 : index
    %c0_18 = arith.constant 0 : index
    %44 = vector.load %arg6[%c0_16, %c0_17, %c0_18] : memref<9x1x64xf32, #tpu.memory_space<vmem>>, vector<9x1x64xf32>
    %45 = vector.broadcast %44 : vector<9x1x64xf32> to vector<9x32x64xf32>
    %46 = arith.mulf %43, %45 : vector<9x32x64xf32>
    %cst_19 = arith.constant dense<0.000000e+00> : vector<32x64xf32>
    %47 = vector.multi_reduction <add>, %46, %cst_19 [0] : vector<9x32x64xf32> to vector<32x64xf32>
    %c0_20 = arith.constant 0 : index
    %c0_21 = arith.constant 0 : index
    %48 = vector.load %arg7[%c0_20, %c0_21] : memref<1x64xf32, #tpu.memory_space<vmem>>, vector<1x64xf32>
    %49 = vector.broadcast %48 : vector<1x64xf32> to vector<32x64xf32>
    %50 = arith.addf %47, %49 : vector<32x64xf32>
    %51 = arith.mulf %50, %50 : vector<32x64xf32>
    %52 = arith.mulf %50, %51 : vector<32x64xf32>
    %cst_22 = arith.constant 4.471500e-02 : f32
    %53 = vector.broadcast %cst_22 : f32 to vector<32x64xf32>
    %54 = arith.mulf %53, %52 : vector<32x64xf32>
    %55 = arith.addf %50, %54 : vector<32x64xf32>
    %cst_23 = arith.constant 0.797884583 : f32
    %56 = vector.broadcast %cst_23 : f32 to vector<32x64xf32>
    %57 = arith.mulf %56, %55 : vector<32x64xf32>
    %58 = math.tanh %57 : vector<32x64xf32>
    %cst_24 = arith.constant 1.000000e+00 : f32
    %59 = vector.broadcast %cst_24 : f32 to vector<32x64xf32>
    %60 = arith.addf %59, %58 : vector<32x64xf32>
    %cst_25 = arith.constant 5.000000e-01 : f32
    %61 = vector.broadcast %cst_25 : f32 to vector<32x64xf32>
    %62 = arith.mulf %61, %60 : vector<32x64xf32>
    %63 = arith.mulf %50, %62 : vector<32x64xf32>
    %64 = arith.truncf %63 : vector<32x64xf32> to vector<32x64xbf16>
    %c0_26 = arith.constant 0 : index
    %c0_27 = arith.constant 0 : index
    %65 = vector.load %arg8[%c0_26, %c0_27] : memref<64x64xbf16, #tpu.memory_space<vmem>>, vector<64x64xbf16>
    %cst_28 = arith.constant dense<0.000000e+00> : vector<32x64xf32>
    %66 = tpu.matmul %64, %65, %cst_28 {dimension_numbers = #tpu.dot_dimension_numbers<[1], [0], [0], [1], [0, 0, 1, 1], [], []>} : vector<32x64xbf16>, vector<64x64xbf16>, vector<32x64xf32> -> vector<32x64xf32>
    %c0_29 = arith.constant 0 : index
    %c0_30 = arith.constant 0 : index
    %67 = vector.load %arg9[%c0_29, %c0_30] : memref<1x64xf32, #tpu.memory_space<vmem>>, vector<1x64xf32>
    %68 = vector.broadcast %67 : vector<1x64xf32> to vector<32x64xf32>
    %69 = arith.addf %66, %68 : vector<32x64xf32>
    %70 = arith.addf %23, %69 : vector<32x64xf32>
    %71 = arith.truncf %70 : vector<32x64xf32> to vector<32x64xbf16>
    %c0_31 = arith.constant 0 : index
    %c0_32 = arith.constant 0 : index
    %72 = vector.load %arg10[%c0_31, %c0_32] : memref<32x64xbf16, #tpu.memory_space<vmem>>, vector<32x64xbf16>
    tpu.vector_store %arg10[%c0_31, %c0_32], %71 {strides = array<i32>} : memref<32x64xbf16, #tpu.memory_space<vmem>>, vector<32x64xbf16>,
    return
  }
  func.func @transform_0(%arg0: i32) -> (i32, i32, i32) {
    %c0_i32 = arith.constant 0 : i32
    %c0_i32_0 = arith.constant 0 : i32
    %c0_i32_1 = arith.constant 0 : i32
    %c0_i32_2 = arith.constant 0 : i32
    return %c0_i32, %c0_i32_0, %c0_i32_1 : i32, i32, i32
  }
  func.func @transform_1(%arg0: i32) -> (i32, i32) {
    %c0_i32 = arith.constant 0 : i32
    %c0_i32_0 = arith.constant 0 : i32
    %c0_i32_1 = arith.constant 0 : i32
    return %c0_i32, %c0_i32_0 : i32, i32
  }
  func.func @transform_2(%arg0: i32) -> (i32, i32) {
    %c0_i32 = arith.constant 0 : i32
    %c0_i32_0 = arith.constant 0 : i32
    %c0_i32_1 = arith.constant 0 : i32
    return %c0_i32, %c0_i32_0 : i32, i32
  }
  func.func @transform_3(%arg0: i32) -> (i32, i32) {
    %c0_i32 = arith.constant 0 : i32
    %c0_i32_0 = arith.constant 0 : i32
    %c0_i32_1 = arith.constant 0 : i32
    return %c0_i32, %c0_i32_0 : i32, i32
  }
  func.func @transform_4(%arg0: i32) -> (i32, i32) {
    %c0_i32 = arith.constant 0 : i32
    %c0_i32_0 = arith.constant 0 : i32
    %c0_i32_1 = arith.constant 0 : i32
    return %c0_i32, %c0_i32_0 : i32, i32
  }
  func.func @transform_5(%arg0: i32) -> (i32, i32, i32) {
    %c0_i32 = arith.constant 0 : i32
    %c0_i32_0 = arith.constant 0 : i32
    %c0_i32_1 = arith.constant 0 : i32
    %c0_i32_2 = arith.constant 0 : i32
    return %c0_i32, %c0_i32_0, %c0_i32_1 : i32, i32, i32
  }
  func.func @transform_6(%arg0: i32) -> (i32, i32) {
    %c0_i32 = arith.constant 0 : i32
    %c0_i32_0 = arith.constant 0 : i32
    %c0_i32_1 = arith.constant 0 : i32
    return %c0_i32, %c0_i32_0 : i32, i32
  }
  func.func @transform_7(%arg0: i32) -> (i32, i32) {
    %c0_i32 = arith.constant 0 : i32
    %c0_i32_0 = arith.constant 0 : i32
    %c0_i32_1 = arith.constant 0 : i32
    return %c0_i32, %c0_i32_0 : i32, i32
  }
  func.func @transform_8(%arg0: i32) -> (i32, i32) {
    %c0_i32 = arith.constant 0 : i32
    %c0_i32_0 = arith.constant 0 : i32
    %c0_i32_1 = arith.constant 0 : i32
    return %c0_i32, %c0_i32_0 : i32, i32
  }
  func.func @transform_9(%arg0: i32) -> (i32, i32) {
    %c0_i32 = arith.constant 0 : i32
    %c0_i32_0 = arith.constant 0 : i32
    %c0_i32_1 = arith.constant 0 : i32
    return %c0_i32, %c0_i32_0 : i32, i32
  }
}

module attributes {stable_mosaic.version = 11 : i64} {
  func.func @_tstage_kernel(%arg0: i32, %arg1: memref<2x16x64xbf16, #tpu.memory_space<vmem>>, %arg2: memref<2x1x64xf32, #tpu.memory_space<vmem>>, %arg3: memref<2x1x64xf32, #tpu.memory_space<vmem>>, %arg4: memref<2x64x192xbf16, #tpu.memory_space<vmem>>, %arg5: memref<2x1x192xf32, #tpu.memory_space<vmem>>, %arg6: memref<2x64x64xbf16, #tpu.memory_space<vmem>>, %arg7: memref<2x1x64xf32, #tpu.memory_space<vmem>>, %arg8: memref<2x1x64xf32, #tpu.memory_space<vmem>>, %arg9: memref<2x1x64xf32, #tpu.memory_space<vmem>>, %arg10: memref<2x64x128xbf16, #tpu.memory_space<vmem>>, %arg11: memref<2x1x128xf32, #tpu.memory_space<vmem>>, %arg12: memref<2x128x64xbf16, #tpu.memory_space<vmem>>, %arg13: memref<2x1x64xf32, #tpu.memory_space<vmem>>, %arg14: memref<1x64xf32, #tpu.memory_space<vmem>>, %arg15: memref<1x64xf32, #tpu.memory_space<vmem>>, %arg16: memref<64x512xbf16, #tpu.memory_space<vmem>>, %arg17: memref<1x512xf32, #tpu.memory_space<vmem>>, %arg18: memref<2x512xf32, #tpu.memory_space<vmem>>, %arg19: memref<2x16x192xf32, #tpu.memory_space<vmem>>, %arg20: memref<2x16x64xf32, #tpu.memory_space<vmem>>) attributes {dimension_semantics = [#tpu.dimension_semantics<arbitrary>], iteration_bounds = array<i64: 1>, scalar_prefetch = 0 : i64, scratch_operands = 2 : i64, tpu.core_type = #tpu.core_type<tc>, window_params = [{pipeline_mode = #tpu.pipeline_mode<synchronous>, transform_indices = @transform_0, window_bounds = array<i64: 2, 16, 64>}, {pipeline_mode = #tpu.pipeline_mode<synchronous>, transform_indices = @transform_1, window_bounds = array<i64: 2, 1, 64>}, {pipeline_mode = #tpu.pipeline_mode<synchronous>, transform_indices = @transform_2, window_bounds = array<i64: 2, 1, 64>}, {pipeline_mode = #tpu.pipeline_mode<synchronous>, transform_indices = @transform_3, window_bounds = array<i64: 2, 64, 192>}, {pipeline_mode = #tpu.pipeline_mode<synchronous>, transform_indices = @transform_4, window_bounds = array<i64: 2, 1, 192>}, {pipeline_mode = #tpu.pipeline_mode<synchronous>, transform_indices = @transform_5, window_bounds = array<i64: 2, 64, 64>}, {pipeline_mode = #tpu.pipeline_mode<synchronous>, transform_indices = @transform_6, window_bounds = array<i64: 2, 1, 64>}, {pipeline_mode = #tpu.pipeline_mode<synchronous>, transform_indices = @transform_7, window_bounds = array<i64: 2, 1, 64>}, {pipeline_mode = #tpu.pipeline_mode<synchronous>, transform_indices = @transform_8, window_bounds = array<i64: 2, 1, 64>}, {pipeline_mode = #tpu.pipeline_mode<synchronous>, transform_indices = @transform_9, window_bounds = array<i64: 2, 64, 128>}, {pipeline_mode = #tpu.pipeline_mode<synchronous>, transform_indices = @transform_10, window_bounds = array<i64: 2, 1, 128>}, {pipeline_mode = #tpu.pipeline_mode<synchronous>, transform_indices = @transform_11, window_bounds = array<i64: 2, 128, 64>}, {pipeline_mode = #tpu.pipeline_mode<synchronous>, transform_indices = @transform_12, window_bounds = array<i64: 2, 1, 64>}, {pipeline_mode = #tpu.pipeline_mode<synchronous>, transform_indices = @transform_13, window_bounds = array<i64: 1, 64>}, {pipeline_mode = #tpu.pipeline_mode<synchronous>, transform_indices = @transform_14, window_bounds = array<i64: 1, 64>}, {pipeline_mode = #tpu.pipeline_mode<synchronous>, transform_indices = @transform_15, window_bounds = array<i64: 64, 512>}, {pipeline_mode = #tpu.pipeline_mode<synchronous>, transform_indices = @transform_16, window_bounds = array<i64: 1, 512>}, {pipeline_mode = #tpu.pipeline_mode<synchronous>, transform_indices = @transform_17, window_bounds = array<i64: 2, 512>}]} {
    %c0 = arith.constant 0 : index
    %c0_0 = arith.constant 0 : index
    %c0_1 = arith.constant 0 : index
    %0 = vector.load %arg1[%c0, %c0_0, %c0_1] : memref<2x16x64xbf16, #tpu.memory_space<vmem>>, vector<2x16x64xbf16>
    %1 = arith.extf %0 : vector<2x16x64xbf16> to vector<2x16x64xf32>
    %2 = vector.shape_cast %1 : vector<2x16x64xf32> to vector<32x64xf32>
    %c0_2 = arith.constant 0 : index
    %c0_3 = arith.constant 0 : index
    %c0_4 = arith.constant 0 : index
    %3 = vector.load %arg2[%c0_2, %c0_3, %c0_4] : memref<2x1x64xf32, #tpu.memory_space<vmem>>, vector<1x1x64xf32>
    %4 = vector.shape_cast %3 : vector<1x1x64xf32> to vector<1x64xf32>
    %c0_5 = arith.constant 0 : index
    %c0_6 = arith.constant 0 : index
    %c0_7 = arith.constant 0 : index
    %5 = vector.load %arg3[%c0_5, %c0_6, %c0_7] : memref<2x1x64xf32, #tpu.memory_space<vmem>>, vector<1x1x64xf32>
    %6 = vector.shape_cast %5 : vector<1x1x64xf32> to vector<1x64xf32>
    %cst = arith.constant dense<0.000000e+00> : vector<32xf32>
    %7 = vector.multi_reduction <add>, %2, %cst [1] : vector<32x64xf32> to vector<32xf32>
    %8 = vector.shape_cast %7 : vector<32xf32> to vector<32x1xf32>
    %cst_8 = arith.constant 6.400000e+01 : f32
    %9 = vector.broadcast %cst_8 : f32 to vector<32x1xf32>
    %10 = arith.divf %8, %9 : vector<32x1xf32>
    %11 = vector.broadcast %10 : vector<32x1xf32> to vector<32x64xf32>
    %12 = arith.subf %2, %11 : vector<32x64xf32>
    %13 = arith.mulf %12, %12 : vector<32x64xf32>
    %cst_9 = arith.constant dense<0.000000e+00> : vector<32xf32>
    %14 = vector.multi_reduction <add>, %13, %cst_9 [1] : vector<32x64xf32> to vector<32xf32>
    %15 = vector.shape_cast %14 : vector<32xf32> to vector<32x1xf32>
    %cst_10 = arith.constant 6.400000e+01 : f32
    %16 = vector.broadcast %cst_10 : f32 to vector<32x1xf32>
    %17 = arith.divf %15, %16 : vector<32x1xf32>
    %cst_11 = arith.constant 9.99999974E-6 : f32
    %18 = vector.broadcast %cst_11 : f32 to vector<32x1xf32>
    %19 = arith.addf %17, %18 : vector<32x1xf32>
    %20 = math.rsqrt %19 : vector<32x1xf32>
    %21 = vector.broadcast %20 : vector<32x1xf32> to vector<32x64xf32>
    %22 = arith.mulf %12, %21 : vector<32x64xf32>
    %23 = vector.broadcast %4 : vector<1x64xf32> to vector<32x64xf32>
    %24 = arith.mulf %22, %23 : vector<32x64xf32>
    %25 = vector.broadcast %6 : vector<1x64xf32> to vector<32x64xf32>
    %26 = arith.addf %24, %25 : vector<32x64xf32>
    %27 = arith.truncf %26 : vector<32x64xf32> to vector<32x64xbf16>
    %c0_12 = arith.constant 0 : index
    %c0_13 = arith.constant 0 : index
    %c0_14 = arith.constant 0 : index
    %28 = vector.load %arg4[%c0_12, %c0_13, %c0_14] : memref<2x64x192xbf16, #tpu.memory_space<vmem>>, vector<1x64x192xbf16>
    %29 = vector.shape_cast %28 : vector<1x64x192xbf16> to vector<64x192xbf16>
    %cst_15 = arith.constant dense<0.000000e+00> : vector<32x192xf32>
    %30 = tpu.matmul %27, %29, %cst_15 {dimension_numbers = #tpu.dot_dimension_numbers<[1], [0], [0], [1], [0, 0, 1, 1], [], []>} : vector<32x64xbf16>, vector<64x192xbf16>, vector<32x192xf32> -> vector<32x192xf32>
    %c0_16 = arith.constant 0 : index
    %c0_17 = arith.constant 0 : index
    %c0_18 = arith.constant 0 : index
    %31 = vector.load %arg5[%c0_16, %c0_17, %c0_18] : memref<2x1x192xf32, #tpu.memory_space<vmem>>, vector<1x1x192xf32>
    %32 = vector.shape_cast %31 : vector<1x1x192xf32> to vector<1x192xf32>
    %33 = vector.broadcast %32 : vector<1x192xf32> to vector<32x192xf32>
    %34 = arith.addf %30, %33 : vector<32x192xf32>
    %35 = vector.shape_cast %34 : vector<32x192xf32> to vector<2x16x192xf32>
    %c0_19 = arith.constant 0 : index
    %c0_20 = arith.constant 0 : index
    %c0_21 = arith.constant 0 : index
    %36 = vector.load %arg19[%c0_19, %c0_20, %c0_21] : memref<2x16x192xf32, #tpu.memory_space<vmem>>, vector<2x16x192xf32>
    tpu.vector_store %arg19[%c0_19, %c0_20, %c0_21], %35 {strides = array<i32>} : memref<2x16x192xf32, #tpu.memory_space<vmem>>, vector<2x16x192xf32>,
    %c0_22 = arith.constant 0 : index
    %c0_23 = arith.constant 0 : index
    %c0_24 = arith.constant 0 : index
    %37 = vector.load %arg19[%c0_22, %c0_23, %c0_24] : memref<2x16x192xf32, #tpu.memory_space<vmem>>, vector<2x16x16xf32>
    %38 = arith.truncf %37 : vector<2x16x16xf32> to vector<2x16x16xbf16>
    %c0_25 = arith.constant 0 : index
    %c0_26 = arith.constant 0 : index
    %c64 = arith.constant 64 : index
    %39 = vector.load %arg19[%c0_25, %c0_26, %c64] : memref<2x16x192xf32, #tpu.memory_space<vmem>>, vector<2x16x16xf32>
    %40 = arith.truncf %39 : vector<2x16x16xf32> to vector<2x16x16xbf16>
    %c0_27 = arith.constant 0 : index
    %c0_28 = arith.constant 0 : index
    %c128 = arith.constant 128 : index
    %41 = vector.load %arg19[%c0_27, %c0_28, %c128] : memref<2x16x192xf32, #tpu.memory_space<vmem>>, vector<2x16x16xf32>
    %42 = arith.truncf %41 : vector<2x16x16xf32> to vector<2x16x16xbf16>
    "tpu.trace_start"() <{level = 10 : i32, message = "bnd,bmd->bnm"}> : () -> ()
    %cst_29 = arith.constant dense<0.000000e+00> : vector<2x16x16xf32>
    %43 = tpu.matmul %38, %40, %cst_29 {dimension_numbers = #tpu.dot_dimension_numbers<[2], [2], [1], [1], [0, 0, 0, 1, 1, 1], [0], [0]>} : vector<2x16x16xbf16>, vector<2x16x16xbf16>, vector<2x16x16xf32> -> vector<2x16x16xf32>
    "tpu.trace_stop"() : () -> ()
    %cst_30 = arith.constant 2.500000e-01 : f32
    %44 = vector.broadcast %cst_30 : f32 to vector<2x16x16xf32>
    %45 = arith.mulf %43, %44 : vector<2x16x16xf32>
    %cst_31 = arith.constant dense<0xFF800000> : vector<2x16xf32>
    %46 = vector.multi_reduction <maximumf>, %45, %cst_31 [2] : vector<2x16x16xf32> to vector<2x16xf32>
    %47 = vector.shape_cast %46 : vector<2x16xf32> to vector<2x16x1xf32>
    %48 = vector.broadcast %47 : vector<2x16x1xf32> to vector<2x16x16xf32>
    %49 = arith.subf %45, %48 : vector<2x16x16xf32>
    %50 = math.exp %49 : vector<2x16x16xf32>
    %cst_32 = arith.constant dense<0.000000e+00> : vector<2x16xf32>
    %51 = vector.multi_reduction <add>, %50, %cst_32 [2] : vector<2x16x16xf32> to vector<2x16xf32>
    %52 = vector.shape_cast %51 : vector<2x16xf32> to vector<2x16x1xf32>
    %53 = tpu.reciprocal %52 {approx = true} : vector<2x16x1xf32> -> vector<2x16x1xf32>
    %54 = vector.broadcast %53 : vector<2x16x1xf32> to vector<2x16x16xf32>
    %55 = arith.mulf %50, %54 : vector<2x16x16xf32>
    %56 = arith.truncf %55 : vector<2x16x16xf32> to vector<2x16x16xbf16>
    "tpu.trace_start"() <{level = 10 : i32, message = "bnm,bmd->bnd"}> : () -> ()
    %cst_33 = arith.constant dense<0.000000e+00> : vector<2x16x16xf32>
    %57 = tpu.matmul %56, %42, %cst_33 {dimension_numbers = #tpu.dot_dimension_numbers<[2], [1], [1], [2], [0, 0, 0, 1, 1, 2], [0], [0]>} : vector<2x16x16xbf16>, vector<2x16x16xbf16>, vector<2x16x16xf32> -> vector<2x16x16xf32>
    "tpu.trace_stop"() : () -> ()
    %c0_34 = arith.constant 0 : index
    %c0_35 = arith.constant 0 : index
    %c0_36 = arith.constant 0 : index
    %58 = vector.load %arg20[%c0_34, %c0_35, %c0_36] : memref<2x16x64xf32, #tpu.memory_space<vmem>>, vector<2x16x16xf32>
    tpu.vector_store %arg20[%c0_34, %c0_35, %c0_36], %57 {strides = array<i32>} : memref<2x16x64xf32, #tpu.memory_space<vmem>>, vector<2x16x16xf32>,
    %c0_37 = arith.constant 0 : index
    %c0_38 = arith.constant 0 : index
    %c16 = arith.constant 16 : index
    %59 = vector.load %arg19[%c0_37, %c0_38, %c16] : memref<2x16x192xf32, #tpu.memory_space<vmem>>, vector<2x16x16xf32>
    %60 = arith.truncf %59 : vector<2x16x16xf32> to vector<2x16x16xbf16>
    %c0_39 = arith.constant 0 : index
    %c0_40 = arith.constant 0 : index
    %c80 = arith.constant 80 : index
    %61 = vector.load %arg19[%c0_39, %c0_40, %c80] : memref<2x16x192xf32, #tpu.memory_space<vmem>>, vector<2x16x16xf32>
    %62 = arith.truncf %61 : vector<2x16x16xf32> to vector<2x16x16xbf16>
    %c0_41 = arith.constant 0 : index
    %c0_42 = arith.constant 0 : index
    %c144 = arith.constant 144 : index
    %63 = vector.load %arg19[%c0_41, %c0_42, %c144] : memref<2x16x192xf32, #tpu.memory_space<vmem>>, vector<2x16x16xf32>
    %64 = arith.truncf %63 : vector<2x16x16xf32> to vector<2x16x16xbf16>
    "tpu.trace_start"() <{level = 10 : i32, message = "bnd,bmd->bnm"}> : () -> ()
    %cst_43 = arith.constant dense<0.000000e+00> : vector<2x16x16xf32>
    %65 = tpu.matmul %60, %62, %cst_43 {dimension_numbers = #tpu.dot_dimension_numbers<[2], [2], [1], [1], [0, 0, 0, 1, 1, 1], [0], [0]>} : vector<2x16x16xbf16>, vector<2x16x16xbf16>, vector<2x16x16xf32> -> vector<2x16x16xf32>
    "tpu.trace_stop"() : () -> ()
    %cst_44 = arith.constant 2.500000e-01 : f32
    %66 = vector.broadcast %cst_44 : f32 to vector<2x16x16xf32>
    %67 = arith.mulf %65, %66 : vector<2x16x16xf32>
    %cst_45 = arith.constant dense<0xFF800000> : vector<2x16xf32>
    %68 = vector.multi_reduction <maximumf>, %67, %cst_45 [2] : vector<2x16x16xf32> to vector<2x16xf32>
    %69 = vector.shape_cast %68 : vector<2x16xf32> to vector<2x16x1xf32>
    %70 = vector.broadcast %69 : vector<2x16x1xf32> to vector<2x16x16xf32>
    %71 = arith.subf %67, %70 : vector<2x16x16xf32>
    %72 = math.exp %71 : vector<2x16x16xf32>
    %cst_46 = arith.constant dense<0.000000e+00> : vector<2x16xf32>
    %73 = vector.multi_reduction <add>, %72, %cst_46 [2] : vector<2x16x16xf32> to vector<2x16xf32>
    %74 = vector.shape_cast %73 : vector<2x16xf32> to vector<2x16x1xf32>
    %75 = tpu.reciprocal %74 {approx = true} : vector<2x16x1xf32> -> vector<2x16x1xf32>
    %76 = vector.broadcast %75 : vector<2x16x1xf32> to vector<2x16x16xf32>
    %77 = arith.mulf %72, %76 : vector<2x16x16xf32>
    %78 = arith.truncf %77 : vector<2x16x16xf32> to vector<2x16x16xbf16>
    "tpu.trace_start"() <{level = 10 : i32, message = "bnm,bmd->bnd"}> : () -> ()
    %cst_47 = arith.constant dense<0.000000e+00> : vector<2x16x16xf32>
    %79 = tpu.matmul %78, %64, %cst_47 {dimension_numbers = #tpu.dot_dimension_numbers<[2], [1], [1], [2], [0, 0, 0, 1, 1, 2], [0], [0]>} : vector<2x16x16xbf16>, vector<2x16x16xbf16>, vector<2x16x16xf32> -> vector<2x16x16xf32>
    "tpu.trace_stop"() : () -> ()
    %c0_48 = arith.constant 0 : index
    %c0_49 = arith.constant 0 : index
    %c16_50 = arith.constant 16 : index
    %80 = vector.load %arg20[%c0_48, %c0_49, %c16_50] : memref<2x16x64xf32, #tpu.memory_space<vmem>>, vector<2x16x16xf32>
    tpu.vector_store %arg20[%c0_48, %c0_49, %c16_50], %79 {strides = array<i32>} : memref<2x16x64xf32, #tpu.memory_space<vmem>>, vector<2x16x16xf32>,
    %c0_51 = arith.constant 0 : index
    %c0_52 = arith.constant 0 : index
    %c32 = arith.constant 32 : index
    %81 = vector.load %arg19[%c0_51, %c0_52, %c32] : memref<2x16x192xf32, #tpu.memory_space<vmem>>, vector<2x16x16xf32>
    %82 = arith.truncf %81 : vector<2x16x16xf32> to vector<2x16x16xbf16>
    %c0_53 = arith.constant 0 : index
    %c0_54 = arith.constant 0 : index
    %c96 = arith.constant 96 : index
    %83 = vector.load %arg19[%c0_53, %c0_54, %c96] : memref<2x16x192xf32, #tpu.memory_space<vmem>>, vector<2x16x16xf32>
    %84 = arith.truncf %83 : vector<2x16x16xf32> to vector<2x16x16xbf16>
    %c0_55 = arith.constant 0 : index
    %c0_56 = arith.constant 0 : index
    %c160 = arith.constant 160 : index
    %85 = vector.load %arg19[%c0_55, %c0_56, %c160] : memref<2x16x192xf32, #tpu.memory_space<vmem>>, vector<2x16x16xf32>
    %86 = arith.truncf %85 : vector<2x16x16xf32> to vector<2x16x16xbf16>
    "tpu.trace_start"() <{level = 10 : i32, message = "bnd,bmd->bnm"}> : () -> ()
    %cst_57 = arith.constant dense<0.000000e+00> : vector<2x16x16xf32>
    %87 = tpu.matmul %82, %84, %cst_57 {dimension_numbers = #tpu.dot_dimension_numbers<[2], [2], [1], [1], [0, 0, 0, 1, 1, 1], [0], [0]>} : vector<2x16x16xbf16>, vector<2x16x16xbf16>, vector<2x16x16xf32> -> vector<2x16x16xf32>
    "tpu.trace_stop"() : () -> ()
    %cst_58 = arith.constant 2.500000e-01 : f32
    %88 = vector.broadcast %cst_58 : f32 to vector<2x16x16xf32>
    %89 = arith.mulf %87, %88 : vector<2x16x16xf32>
    %cst_59 = arith.constant dense<0xFF800000> : vector<2x16xf32>
    %90 = vector.multi_reduction <maximumf>, %89, %cst_59 [2] : vector<2x16x16xf32> to vector<2x16xf32>
    %91 = vector.shape_cast %90 : vector<2x16xf32> to vector<2x16x1xf32>
    %92 = vector.broadcast %91 : vector<2x16x1xf32> to vector<2x16x16xf32>
    %93 = arith.subf %89, %92 : vector<2x16x16xf32>
    %94 = math.exp %93 : vector<2x16x16xf32>
    %cst_60 = arith.constant dense<0.000000e+00> : vector<2x16xf32>
    %95 = vector.multi_reduction <add>, %94, %cst_60 [2] : vector<2x16x16xf32> to vector<2x16xf32>
    %96 = vector.shape_cast %95 : vector<2x16xf32> to vector<2x16x1xf32>
    %97 = tpu.reciprocal %96 {approx = true} : vector<2x16x1xf32> -> vector<2x16x1xf32>
    %98 = vector.broadcast %97 : vector<2x16x1xf32> to vector<2x16x16xf32>
    %99 = arith.mulf %94, %98 : vector<2x16x16xf32>
    %100 = arith.truncf %99 : vector<2x16x16xf32> to vector<2x16x16xbf16>
    "tpu.trace_start"() <{level = 10 : i32, message = "bnm,bmd->bnd"}> : () -> ()
    %cst_61 = arith.constant dense<0.000000e+00> : vector<2x16x16xf32>
    %101 = tpu.matmul %100, %86, %cst_61 {dimension_numbers = #tpu.dot_dimension_numbers<[2], [1], [1], [2], [0, 0, 0, 1, 1, 2], [0], [0]>} : vector<2x16x16xbf16>, vector<2x16x16xbf16>, vector<2x16x16xf32> -> vector<2x16x16xf32>
    "tpu.trace_stop"() : () -> ()
    %c0_62 = arith.constant 0 : index
    %c0_63 = arith.constant 0 : index
    %c32_64 = arith.constant 32 : index
    %102 = vector.load %arg20[%c0_62, %c0_63, %c32_64] : memref<2x16x64xf32, #tpu.memory_space<vmem>>, vector<2x16x16xf32>
    tpu.vector_store %arg20[%c0_62, %c0_63, %c32_64], %101 {strides = array<i32>} : memref<2x16x64xf32, #tpu.memory_space<vmem>>, vector<2x16x16xf32>,
    %c0_65 = arith.constant 0 : index
    %c0_66 = arith.constant 0 : index
    %c48 = arith.constant 48 : index
    %103 = vector.load %arg19[%c0_65, %c0_66, %c48] : memref<2x16x192xf32, #tpu.memory_space<vmem>>, vector<2x16x16xf32>
    %104 = arith.truncf %103 : vector<2x16x16xf32> to vector<2x16x16xbf16>
    %c0_67 = arith.constant 0 : index
    %c0_68 = arith.constant 0 : index
    %c112 = arith.constant 112 : index
    %105 = vector.load %arg19[%c0_67, %c0_68, %c112] : memref<2x16x192xf32, #tpu.memory_space<vmem>>, vector<2x16x16xf32>
    %106 = arith.truncf %105 : vector<2x16x16xf32> to vector<2x16x16xbf16>
    %c0_69 = arith.constant 0 : index
    %c0_70 = arith.constant 0 : index
    %c176 = arith.constant 176 : index
    %107 = vector.load %arg19[%c0_69, %c0_70, %c176] : memref<2x16x192xf32, #tpu.memory_space<vmem>>, vector<2x16x16xf32>
    %108 = arith.truncf %107 : vector<2x16x16xf32> to vector<2x16x16xbf16>
    "tpu.trace_start"() <{level = 10 : i32, message = "bnd,bmd->bnm"}> : () -> ()
    %cst_71 = arith.constant dense<0.000000e+00> : vector<2x16x16xf32>
    %109 = tpu.matmul %104, %106, %cst_71 {dimension_numbers = #tpu.dot_dimension_numbers<[2], [2], [1], [1], [0, 0, 0, 1, 1, 1], [0], [0]>} : vector<2x16x16xbf16>, vector<2x16x16xbf16>, vector<2x16x16xf32> -> vector<2x16x16xf32>
    "tpu.trace_stop"() : () -> ()
    %cst_72 = arith.constant 2.500000e-01 : f32
    %110 = vector.broadcast %cst_72 : f32 to vector<2x16x16xf32>
    %111 = arith.mulf %109, %110 : vector<2x16x16xf32>
    %cst_73 = arith.constant dense<0xFF800000> : vector<2x16xf32>
    %112 = vector.multi_reduction <maximumf>, %111, %cst_73 [2] : vector<2x16x16xf32> to vector<2x16xf32>
    %113 = vector.shape_cast %112 : vector<2x16xf32> to vector<2x16x1xf32>
    %114 = vector.broadcast %113 : vector<2x16x1xf32> to vector<2x16x16xf32>
    %115 = arith.subf %111, %114 : vector<2x16x16xf32>
    %116 = math.exp %115 : vector<2x16x16xf32>
    %cst_74 = arith.constant dense<0.000000e+00> : vector<2x16xf32>
    %117 = vector.multi_reduction <add>, %116, %cst_74 [2] : vector<2x16x16xf32> to vector<2x16xf32>
    %118 = vector.shape_cast %117 : vector<2x16xf32> to vector<2x16x1xf32>
    %119 = tpu.reciprocal %118 {approx = true} : vector<2x16x1xf32> -> vector<2x16x1xf32>
    %120 = vector.broadcast %119 : vector<2x16x1xf32> to vector<2x16x16xf32>
    %121 = arith.mulf %116, %120 : vector<2x16x16xf32>
    %122 = arith.truncf %121 : vector<2x16x16xf32> to vector<2x16x16xbf16>
    "tpu.trace_start"() <{level = 10 : i32, message = "bnm,bmd->bnd"}> : () -> ()
    %cst_75 = arith.constant dense<0.000000e+00> : vector<2x16x16xf32>
    %123 = tpu.matmul %122, %108, %cst_75 {dimension_numbers = #tpu.dot_dimension_numbers<[2], [1], [1], [2], [0, 0, 0, 1, 1, 2], [0], [0]>} : vector<2x16x16xbf16>, vector<2x16x16xbf16>, vector<2x16x16xf32> -> vector<2x16x16xf32>
    "tpu.trace_stop"() : () -> ()
    %c0_76 = arith.constant 0 : index
    %c0_77 = arith.constant 0 : index
    %c48_78 = arith.constant 48 : index
    %124 = vector.load %arg20[%c0_76, %c0_77, %c48_78] : memref<2x16x64xf32, #tpu.memory_space<vmem>>, vector<2x16x16xf32>
    tpu.vector_store %arg20[%c0_76, %c0_77, %c48_78], %123 {strides = array<i32>} : memref<2x16x64xf32, #tpu.memory_space<vmem>>, vector<2x16x16xf32>,
    %c0_79 = arith.constant 0 : index
    %c0_80 = arith.constant 0 : index
    %c0_81 = arith.constant 0 : index
    %125 = vector.load %arg20[%c0_79, %c0_80, %c0_81] : memref<2x16x64xf32, #tpu.memory_space<vmem>>, vector<2x16x64xf32>
    %126 = arith.truncf %125 : vector<2x16x64xf32> to vector<2x16x64xbf16>
    %127 = vector.shape_cast %126 : vector<2x16x64xbf16> to vector<32x64xbf16>
    %c0_82 = arith.constant 0 : index
    %c0_83 = arith.constant 0 : index
    %c0_84 = arith.constant 0 : index
    %128 = vector.load %arg6[%c0_82, %c0_83, %c0_84] : memref<2x64x64xbf16, #tpu.memory_space<vmem>>, vector<1x64x64xbf16>
    %129 = vector.shape_cast %128 : vector<1x64x64xbf16> to vector<64x64xbf16>
    %cst_85 = arith.constant dense<0.000000e+00> : vector<32x64xf32>
    %130 = tpu.matmul %127, %129, %cst_85 {dimension_numbers = #tpu.dot_dimension_numbers<[1], [0], [0], [1], [0, 0, 1, 1], [], []>} : vector<32x64xbf16>, vector<64x64xbf16>, vector<32x64xf32> -> vector<32x64xf32>
    %c0_86 = arith.constant 0 : index
    %c0_87 = arith.constant 0 : index
    %c0_88 = arith.constant 0 : index
    %131 = vector.load %arg7[%c0_86, %c0_87, %c0_88] : memref<2x1x64xf32, #tpu.memory_space<vmem>>, vector<1x1x64xf32>
    %132 = vector.shape_cast %131 : vector<1x1x64xf32> to vector<1x64xf32>
    %133 = vector.broadcast %132 : vector<1x64xf32> to vector<32x64xf32>
    %134 = arith.addf %130, %133 : vector<32x64xf32>
    %135 = arith.addf %2, %134 : vector<32x64xf32>
    %c0_89 = arith.constant 0 : index
    %c0_90 = arith.constant 0 : index
    %c0_91 = arith.constant 0 : index
    %136 = vector.load %arg8[%c0_89, %c0_90, %c0_91] : memref<2x1x64xf32, #tpu.memory_space<vmem>>, vector<1x1x64xf32>
    %137 = vector.shape_cast %136 : vector<1x1x64xf32> to vector<1x64xf32>
    %c0_92 = arith.constant 0 : index
    %c0_93 = arith.constant 0 : index
    %c0_94 = arith.constant 0 : index
    %138 = vector.load %arg9[%c0_92, %c0_93, %c0_94] : memref<2x1x64xf32, #tpu.memory_space<vmem>>, vector<1x1x64xf32>
    %139 = vector.shape_cast %138 : vector<1x1x64xf32> to vector<1x64xf32>
    %cst_95 = arith.constant dense<0.000000e+00> : vector<32xf32>
    %140 = vector.multi_reduction <add>, %135, %cst_95 [1] : vector<32x64xf32> to vector<32xf32>
    %141 = vector.shape_cast %140 : vector<32xf32> to vector<32x1xf32>
    %cst_96 = arith.constant 6.400000e+01 : f32
    %142 = vector.broadcast %cst_96 : f32 to vector<32x1xf32>
    %143 = arith.divf %141, %142 : vector<32x1xf32>
    %144 = vector.broadcast %143 : vector<32x1xf32> to vector<32x64xf32>
    %145 = arith.subf %135, %144 : vector<32x64xf32>
    %146 = arith.mulf %145, %145 : vector<32x64xf32>
    %cst_97 = arith.constant dense<0.000000e+00> : vector<32xf32>
    %147 = vector.multi_reduction <add>, %146, %cst_97 [1] : vector<32x64xf32> to vector<32xf32>
    %148 = vector.shape_cast %147 : vector<32xf32> to vector<32x1xf32>
    %cst_98 = arith.constant 6.400000e+01 : f32
    %149 = vector.broadcast %cst_98 : f32 to vector<32x1xf32>
    %150 = arith.divf %148, %149 : vector<32x1xf32>
    %cst_99 = arith.constant 9.99999974E-6 : f32
    %151 = vector.broadcast %cst_99 : f32 to vector<32x1xf32>
    %152 = arith.addf %150, %151 : vector<32x1xf32>
    %153 = math.rsqrt %152 : vector<32x1xf32>
    %154 = vector.broadcast %153 : vector<32x1xf32> to vector<32x64xf32>
    %155 = arith.mulf %145, %154 : vector<32x64xf32>
    %156 = vector.broadcast %137 : vector<1x64xf32> to vector<32x64xf32>
    %157 = arith.mulf %155, %156 : vector<32x64xf32>
    %158 = vector.broadcast %139 : vector<1x64xf32> to vector<32x64xf32>
    %159 = arith.addf %157, %158 : vector<32x64xf32>
    %160 = arith.truncf %159 : vector<32x64xf32> to vector<32x64xbf16>
    %c0_100 = arith.constant 0 : index
    %c0_101 = arith.constant 0 : index
    %c0_102 = arith.constant 0 : index
    %161 = vector.load %arg10[%c0_100, %c0_101, %c0_102] : memref<2x64x128xbf16, #tpu.memory_space<vmem>>, vector<1x64x128xbf16>
    %162 = vector.shape_cast %161 : vector<1x64x128xbf16> to vector<64x128xbf16>
    %cst_103 = arith.constant dense<0.000000e+00> : vector<32x128xf32>
    %163 = tpu.matmul %160, %162, %cst_103 {dimension_numbers = #tpu.dot_dimension_numbers<[1], [0], [0], [1], [0, 0, 1, 1], [], []>} : vector<32x64xbf16>, vector<64x128xbf16>, vector<32x128xf32> -> vector<32x128xf32>
    %c0_104 = arith.constant 0 : index
    %c0_105 = arith.constant 0 : index
    %c0_106 = arith.constant 0 : index
    %164 = vector.load %arg11[%c0_104, %c0_105, %c0_106] : memref<2x1x128xf32, #tpu.memory_space<vmem>>, vector<1x1x128xf32>
    %165 = vector.shape_cast %164 : vector<1x1x128xf32> to vector<1x128xf32>
    %166 = vector.broadcast %165 : vector<1x128xf32> to vector<32x128xf32>
    %167 = arith.addf %163, %166 : vector<32x128xf32>
    %168 = arith.mulf %167, %167 : vector<32x128xf32>
    %169 = arith.mulf %167, %168 : vector<32x128xf32>
    %cst_107 = arith.constant 4.471500e-02 : f32
    %170 = vector.broadcast %cst_107 : f32 to vector<32x128xf32>
    %171 = arith.mulf %170, %169 : vector<32x128xf32>
    %172 = arith.addf %167, %171 : vector<32x128xf32>
    %cst_108 = arith.constant 0.797884583 : f32
    %173 = vector.broadcast %cst_108 : f32 to vector<32x128xf32>
    %174 = arith.mulf %173, %172 : vector<32x128xf32>
    %175 = math.tanh %174 : vector<32x128xf32>
    %cst_109 = arith.constant 1.000000e+00 : f32
    %176 = vector.broadcast %cst_109 : f32 to vector<32x128xf32>
    %177 = arith.addf %176, %175 : vector<32x128xf32>
    %cst_110 = arith.constant 5.000000e-01 : f32
    %178 = vector.broadcast %cst_110 : f32 to vector<32x128xf32>
    %179 = arith.mulf %178, %177 : vector<32x128xf32>
    %180 = arith.mulf %167, %179 : vector<32x128xf32>
    %181 = arith.truncf %180 : vector<32x128xf32> to vector<32x128xbf16>
    %c0_111 = arith.constant 0 : index
    %c0_112 = arith.constant 0 : index
    %c0_113 = arith.constant 0 : index
    %182 = vector.load %arg12[%c0_111, %c0_112, %c0_113] : memref<2x128x64xbf16, #tpu.memory_space<vmem>>, vector<1x128x64xbf16>
    %183 = vector.shape_cast %182 : vector<1x128x64xbf16> to vector<128x64xbf16>
    %cst_114 = arith.constant dense<0.000000e+00> : vector<32x64xf32>
    %184 = tpu.matmul %181, %183, %cst_114 {dimension_numbers = #tpu.dot_dimension_numbers<[1], [0], [0], [1], [0, 0, 1, 1], [], []>} : vector<32x128xbf16>, vector<128x64xbf16>, vector<32x64xf32> -> vector<32x64xf32>
    %c0_115 = arith.constant 0 : index
    %c0_116 = arith.constant 0 : index
    %c0_117 = arith.constant 0 : index
    %185 = vector.load %arg13[%c0_115, %c0_116, %c0_117] : memref<2x1x64xf32, #tpu.memory_space<vmem>>, vector<1x1x64xf32>
    %186 = vector.shape_cast %185 : vector<1x1x64xf32> to vector<1x64xf32>
    %187 = vector.broadcast %186 : vector<1x64xf32> to vector<32x64xf32>
    %188 = arith.addf %184, %187 : vector<32x64xf32>
    %189 = arith.addf %135, %188 : vector<32x64xf32>
    %c1 = arith.constant 1 : index
    %c0_118 = arith.constant 0 : index
    %c0_119 = arith.constant 0 : index
    %190 = vector.load %arg2[%c1, %c0_118, %c0_119] : memref<2x1x64xf32, #tpu.memory_space<vmem>>, vector<1x1x64xf32>
    %191 = vector.shape_cast %190 : vector<1x1x64xf32> to vector<1x64xf32>
    %c1_120 = arith.constant 1 : index
    %c0_121 = arith.constant 0 : index
    %c0_122 = arith.constant 0 : index
    %192 = vector.load %arg3[%c1_120, %c0_121, %c0_122] : memref<2x1x64xf32, #tpu.memory_space<vmem>>, vector<1x1x64xf32>
    %193 = vector.shape_cast %192 : vector<1x1x64xf32> to vector<1x64xf32>
    %cst_123 = arith.constant dense<0.000000e+00> : vector<32xf32>
    %194 = vector.multi_reduction <add>, %189, %cst_123 [1] : vector<32x64xf32> to vector<32xf32>
    %195 = vector.shape_cast %194 : vector<32xf32> to vector<32x1xf32>
    %cst_124 = arith.constant 6.400000e+01 : f32
    %196 = vector.broadcast %cst_124 : f32 to vector<32x1xf32>
    %197 = arith.divf %195, %196 : vector<32x1xf32>
    %198 = vector.broadcast %197 : vector<32x1xf32> to vector<32x64xf32>
    %199 = arith.subf %189, %198 : vector<32x64xf32>
    %200 = arith.mulf %199, %199 : vector<32x64xf32>
    %cst_125 = arith.constant dense<0.000000e+00> : vector<32xf32>
    %201 = vector.multi_reduction <add>, %200, %cst_125 [1] : vector<32x64xf32> to vector<32xf32>
    %202 = vector.shape_cast %201 : vector<32xf32> to vector<32x1xf32>
    %cst_126 = arith.constant 6.400000e+01 : f32
    %203 = vector.broadcast %cst_126 : f32 to vector<32x1xf32>
    %204 = arith.divf %202, %203 : vector<32x1xf32>
    %cst_127 = arith.constant 9.99999974E-6 : f32
    %205 = vector.broadcast %cst_127 : f32 to vector<32x1xf32>
    %206 = arith.addf %204, %205 : vector<32x1xf32>
    %207 = math.rsqrt %206 : vector<32x1xf32>
    %208 = vector.broadcast %207 : vector<32x1xf32> to vector<32x64xf32>
    %209 = arith.mulf %199, %208 : vector<32x64xf32>
    %210 = vector.broadcast %191 : vector<1x64xf32> to vector<32x64xf32>
    %211 = arith.mulf %209, %210 : vector<32x64xf32>
    %212 = vector.broadcast %193 : vector<1x64xf32> to vector<32x64xf32>
    %213 = arith.addf %211, %212 : vector<32x64xf32>
    %214 = arith.truncf %213 : vector<32x64xf32> to vector<32x64xbf16>
    %c1_128 = arith.constant 1 : index
    %c0_129 = arith.constant 0 : index
    %c0_130 = arith.constant 0 : index
    %215 = vector.load %arg4[%c1_128, %c0_129, %c0_130] : memref<2x64x192xbf16, #tpu.memory_space<vmem>>, vector<1x64x192xbf16>
    %216 = vector.shape_cast %215 : vector<1x64x192xbf16> to vector<64x192xbf16>
    %cst_131 = arith.constant dense<0.000000e+00> : vector<32x192xf32>
    %217 = tpu.matmul %214, %216, %cst_131 {dimension_numbers = #tpu.dot_dimension_numbers<[1], [0], [0], [1], [0, 0, 1, 1], [], []>} : vector<32x64xbf16>, vector<64x192xbf16>, vector<32x192xf32> -> vector<32x192xf32>
    %c1_132 = arith.constant 1 : index
    %c0_133 = arith.constant 0 : index
    %c0_134 = arith.constant 0 : index
    %218 = vector.load %arg5[%c1_132, %c0_133, %c0_134] : memref<2x1x192xf32, #tpu.memory_space<vmem>>, vector<1x1x192xf32>
    %219 = vector.shape_cast %218 : vector<1x1x192xf32> to vector<1x192xf32>
    %220 = vector.broadcast %219 : vector<1x192xf32> to vector<32x192xf32>
    %221 = arith.addf %217, %220 : vector<32x192xf32>
    %222 = vector.shape_cast %221 : vector<32x192xf32> to vector<2x16x192xf32>
    %c0_135 = arith.constant 0 : index
    %c0_136 = arith.constant 0 : index
    %c0_137 = arith.constant 0 : index
    %223 = vector.load %arg19[%c0_135, %c0_136, %c0_137] : memref<2x16x192xf32, #tpu.memory_space<vmem>>, vector<2x16x192xf32>
    tpu.vector_store %arg19[%c0_135, %c0_136, %c0_137], %222 {strides = array<i32>} : memref<2x16x192xf32, #tpu.memory_space<vmem>>, vector<2x16x192xf32>,
    %c0_138 = arith.constant 0 : index
    %c0_139 = arith.constant 0 : index
    %c0_140 = arith.constant 0 : index
    %224 = vector.load %arg19[%c0_138, %c0_139, %c0_140] : memref<2x16x192xf32, #tpu.memory_space<vmem>>, vector<2x16x16xf32>
    %225 = arith.truncf %224 : vector<2x16x16xf32> to vector<2x16x16xbf16>
    %c0_141 = arith.constant 0 : index
    %c0_142 = arith.constant 0 : index
    %c64_143 = arith.constant 64 : index
    %226 = vector.load %arg19[%c0_141, %c0_142, %c64_143] : memref<2x16x192xf32, #tpu.memory_space<vmem>>, vector<2x16x16xf32>
    %227 = arith.truncf %226 : vector<2x16x16xf32> to vector<2x16x16xbf16>
    %c0_144 = arith.constant 0 : index
    %c0_145 = arith.constant 0 : index
    %c128_146 = arith.constant 128 : index
    %228 = vector.load %arg19[%c0_144, %c0_145, %c128_146] : memref<2x16x192xf32, #tpu.memory_space<vmem>>, vector<2x16x16xf32>
    %229 = arith.truncf %228 : vector<2x16x16xf32> to vector<2x16x16xbf16>
    "tpu.trace_start"() <{level = 10 : i32, message = "bnd,bmd->bnm"}> : () -> ()
    %cst_147 = arith.constant dense<0.000000e+00> : vector<2x16x16xf32>
    %230 = tpu.matmul %225, %227, %cst_147 {dimension_numbers = #tpu.dot_dimension_numbers<[2], [2], [1], [1], [0, 0, 0, 1, 1, 1], [0], [0]>} : vector<2x16x16xbf16>, vector<2x16x16xbf16>, vector<2x16x16xf32> -> vector<2x16x16xf32>
    "tpu.trace_stop"() : () -> ()
    %cst_148 = arith.constant 2.500000e-01 : f32
    %231 = vector.broadcast %cst_148 : f32 to vector<2x16x16xf32>
    %232 = arith.mulf %230, %231 : vector<2x16x16xf32>
    %cst_149 = arith.constant dense<0xFF800000> : vector<2x16xf32>
    %233 = vector.multi_reduction <maximumf>, %232, %cst_149 [2] : vector<2x16x16xf32> to vector<2x16xf32>
    %234 = vector.shape_cast %233 : vector<2x16xf32> to vector<2x16x1xf32>
    %235 = vector.broadcast %234 : vector<2x16x1xf32> to vector<2x16x16xf32>
    %236 = arith.subf %232, %235 : vector<2x16x16xf32>
    %237 = math.exp %236 : vector<2x16x16xf32>
    %cst_150 = arith.constant dense<0.000000e+00> : vector<2x16xf32>
    %238 = vector.multi_reduction <add>, %237, %cst_150 [2] : vector<2x16x16xf32> to vector<2x16xf32>
    %239 = vector.shape_cast %238 : vector<2x16xf32> to vector<2x16x1xf32>
    %240 = tpu.reciprocal %239 {approx = true} : vector<2x16x1xf32> -> vector<2x16x1xf32>
    %241 = vector.broadcast %240 : vector<2x16x1xf32> to vector<2x16x16xf32>
    %242 = arith.mulf %237, %241 : vector<2x16x16xf32>
    %243 = arith.truncf %242 : vector<2x16x16xf32> to vector<2x16x16xbf16>
    "tpu.trace_start"() <{level = 10 : i32, message = "bnm,bmd->bnd"}> : () -> ()
    %cst_151 = arith.constant dense<0.000000e+00> : vector<2x16x16xf32>
    %244 = tpu.matmul %243, %229, %cst_151 {dimension_numbers = #tpu.dot_dimension_numbers<[2], [1], [1], [2], [0, 0, 0, 1, 1, 2], [0], [0]>} : vector<2x16x16xbf16>, vector<2x16x16xbf16>, vector<2x16x16xf32> -> vector<2x16x16xf32>
    "tpu.trace_stop"() : () -> ()
    %c0_152 = arith.constant 0 : index
    %c0_153 = arith.constant 0 : index
    %c0_154 = arith.constant 0 : index
    %245 = vector.load %arg20[%c0_152, %c0_153, %c0_154] : memref<2x16x64xf32, #tpu.memory_space<vmem>>, vector<2x16x16xf32>
    tpu.vector_store %arg20[%c0_152, %c0_153, %c0_154], %244 {strides = array<i32>} : memref<2x16x64xf32, #tpu.memory_space<vmem>>, vector<2x16x16xf32>,
    %c0_155 = arith.constant 0 : index
    %c0_156 = arith.constant 0 : index
    %c16_157 = arith.constant 16 : index
    %246 = vector.load %arg19[%c0_155, %c0_156, %c16_157] : memref<2x16x192xf32, #tpu.memory_space<vmem>>, vector<2x16x16xf32>
    %247 = arith.truncf %246 : vector<2x16x16xf32> to vector<2x16x16xbf16>
    %c0_158 = arith.constant 0 : index
    %c0_159 = arith.constant 0 : index
    %c80_160 = arith.constant 80 : index
    %248 = vector.load %arg19[%c0_158, %c0_159, %c80_160] : memref<2x16x192xf32, #tpu.memory_space<vmem>>, vector<2x16x16xf32>
    %249 = arith.truncf %248 : vector<2x16x16xf32> to vector<2x16x16xbf16>
    %c0_161 = arith.constant 0 : index
    %c0_162 = arith.constant 0 : index
    %c144_163 = arith.constant 144 : index
    %250 = vector.load %arg19[%c0_161, %c0_162, %c144_163] : memref<2x16x192xf32, #tpu.memory_space<vmem>>, vector<2x16x16xf32>
    %251 = arith.truncf %250 : vector<2x16x16xf32> to vector<2x16x16xbf16>
    "tpu.trace_start"() <{level = 10 : i32, message = "bnd,bmd->bnm"}> : () -> ()
    %cst_164 = arith.constant dense<0.000000e+00> : vector<2x16x16xf32>
    %252 = tpu.matmul %247, %249, %cst_164 {dimension_numbers = #tpu.dot_dimension_numbers<[2], [2], [1], [1], [0, 0, 0, 1, 1, 1], [0], [0]>} : vector<2x16x16xbf16>, vector<2x16x16xbf16>, vector<2x16x16xf32> -> vector<2x16x16xf32>
    "tpu.trace_stop"() : () -> ()
    %cst_165 = arith.constant 2.500000e-01 : f32
    %253 = vector.broadcast %cst_165 : f32 to vector<2x16x16xf32>
    %254 = arith.mulf %252, %253 : vector<2x16x16xf32>
    %cst_166 = arith.constant dense<0xFF800000> : vector<2x16xf32>
    %255 = vector.multi_reduction <maximumf>, %254, %cst_166 [2] : vector<2x16x16xf32> to vector<2x16xf32>
    %256 = vector.shape_cast %255 : vector<2x16xf32> to vector<2x16x1xf32>
    %257 = vector.broadcast %256 : vector<2x16x1xf32> to vector<2x16x16xf32>
    %258 = arith.subf %254, %257 : vector<2x16x16xf32>
    %259 = math.exp %258 : vector<2x16x16xf32>
    %cst_167 = arith.constant dense<0.000000e+00> : vector<2x16xf32>
    %260 = vector.multi_reduction <add>, %259, %cst_167 [2] : vector<2x16x16xf32> to vector<2x16xf32>
    %261 = vector.shape_cast %260 : vector<2x16xf32> to vector<2x16x1xf32>
    %262 = tpu.reciprocal %261 {approx = true} : vector<2x16x1xf32> -> vector<2x16x1xf32>
    %263 = vector.broadcast %262 : vector<2x16x1xf32> to vector<2x16x16xf32>
    %264 = arith.mulf %259, %263 : vector<2x16x16xf32>
    %265 = arith.truncf %264 : vector<2x16x16xf32> to vector<2x16x16xbf16>
    "tpu.trace_start"() <{level = 10 : i32, message = "bnm,bmd->bnd"}> : () -> ()
    %cst_168 = arith.constant dense<0.000000e+00> : vector<2x16x16xf32>
    %266 = tpu.matmul %265, %251, %cst_168 {dimension_numbers = #tpu.dot_dimension_numbers<[2], [1], [1], [2], [0, 0, 0, 1, 1, 2], [0], [0]>} : vector<2x16x16xbf16>, vector<2x16x16xbf16>, vector<2x16x16xf32> -> vector<2x16x16xf32>
    "tpu.trace_stop"() : () -> ()
    %c0_169 = arith.constant 0 : index
    %c0_170 = arith.constant 0 : index
    %c16_171 = arith.constant 16 : index
    %267 = vector.load %arg20[%c0_169, %c0_170, %c16_171] : memref<2x16x64xf32, #tpu.memory_space<vmem>>, vector<2x16x16xf32>
    tpu.vector_store %arg20[%c0_169, %c0_170, %c16_171], %266 {strides = array<i32>} : memref<2x16x64xf32, #tpu.memory_space<vmem>>, vector<2x16x16xf32>,
    %c0_172 = arith.constant 0 : index
    %c0_173 = arith.constant 0 : index
    %c32_174 = arith.constant 32 : index
    %268 = vector.load %arg19[%c0_172, %c0_173, %c32_174] : memref<2x16x192xf32, #tpu.memory_space<vmem>>, vector<2x16x16xf32>
    %269 = arith.truncf %268 : vector<2x16x16xf32> to vector<2x16x16xbf16>
    %c0_175 = arith.constant 0 : index
    %c0_176 = arith.constant 0 : index
    %c96_177 = arith.constant 96 : index
    %270 = vector.load %arg19[%c0_175, %c0_176, %c96_177] : memref<2x16x192xf32, #tpu.memory_space<vmem>>, vector<2x16x16xf32>
    %271 = arith.truncf %270 : vector<2x16x16xf32> to vector<2x16x16xbf16>
    %c0_178 = arith.constant 0 : index
    %c0_179 = arith.constant 0 : index
    %c160_180 = arith.constant 160 : index
    %272 = vector.load %arg19[%c0_178, %c0_179, %c160_180] : memref<2x16x192xf32, #tpu.memory_space<vmem>>, vector<2x16x16xf32>
    %273 = arith.truncf %272 : vector<2x16x16xf32> to vector<2x16x16xbf16>
    "tpu.trace_start"() <{level = 10 : i32, message = "bnd,bmd->bnm"}> : () -> ()
    %cst_181 = arith.constant dense<0.000000e+00> : vector<2x16x16xf32>
    %274 = tpu.matmul %269, %271, %cst_181 {dimension_numbers = #tpu.dot_dimension_numbers<[2], [2], [1], [1], [0, 0, 0, 1, 1, 1], [0], [0]>} : vector<2x16x16xbf16>, vector<2x16x16xbf16>, vector<2x16x16xf32> -> vector<2x16x16xf32>
    "tpu.trace_stop"() : () -> ()
    %cst_182 = arith.constant 2.500000e-01 : f32
    %275 = vector.broadcast %cst_182 : f32 to vector<2x16x16xf32>
    %276 = arith.mulf %274, %275 : vector<2x16x16xf32>
    %cst_183 = arith.constant dense<0xFF800000> : vector<2x16xf32>
    %277 = vector.multi_reduction <maximumf>, %276, %cst_183 [2] : vector<2x16x16xf32> to vector<2x16xf32>
    %278 = vector.shape_cast %277 : vector<2x16xf32> to vector<2x16x1xf32>
    %279 = vector.broadcast %278 : vector<2x16x1xf32> to vector<2x16x16xf32>
    %280 = arith.subf %276, %279 : vector<2x16x16xf32>
    %281 = math.exp %280 : vector<2x16x16xf32>
    %cst_184 = arith.constant dense<0.000000e+00> : vector<2x16xf32>
    %282 = vector.multi_reduction <add>, %281, %cst_184 [2] : vector<2x16x16xf32> to vector<2x16xf32>
    %283 = vector.shape_cast %282 : vector<2x16xf32> to vector<2x16x1xf32>
    %284 = tpu.reciprocal %283 {approx = true} : vector<2x16x1xf32> -> vector<2x16x1xf32>
    %285 = vector.broadcast %284 : vector<2x16x1xf32> to vector<2x16x16xf32>
    %286 = arith.mulf %281, %285 : vector<2x16x16xf32>
    %287 = arith.truncf %286 : vector<2x16x16xf32> to vector<2x16x16xbf16>
    "tpu.trace_start"() <{level = 10 : i32, message = "bnm,bmd->bnd"}> : () -> ()
    %cst_185 = arith.constant dense<0.000000e+00> : vector<2x16x16xf32>
    %288 = tpu.matmul %287, %273, %cst_185 {dimension_numbers = #tpu.dot_dimension_numbers<[2], [1], [1], [2], [0, 0, 0, 1, 1, 2], [0], [0]>} : vector<2x16x16xbf16>, vector<2x16x16xbf16>, vector<2x16x16xf32> -> vector<2x16x16xf32>
    "tpu.trace_stop"() : () -> ()
    %c0_186 = arith.constant 0 : index
    %c0_187 = arith.constant 0 : index
    %c32_188 = arith.constant 32 : index
    %289 = vector.load %arg20[%c0_186, %c0_187, %c32_188] : memref<2x16x64xf32, #tpu.memory_space<vmem>>, vector<2x16x16xf32>
    tpu.vector_store %arg20[%c0_186, %c0_187, %c32_188], %288 {strides = array<i32>} : memref<2x16x64xf32, #tpu.memory_space<vmem>>, vector<2x16x16xf32>,
    %c0_189 = arith.constant 0 : index
    %c0_190 = arith.constant 0 : index
    %c48_191 = arith.constant 48 : index
    %290 = vector.load %arg19[%c0_189, %c0_190, %c48_191] : memref<2x16x192xf32, #tpu.memory_space<vmem>>, vector<2x16x16xf32>
    %291 = arith.truncf %290 : vector<2x16x16xf32> to vector<2x16x16xbf16>
    %c0_192 = arith.constant 0 : index
    %c0_193 = arith.constant 0 : index
    %c112_194 = arith.constant 112 : index
    %292 = vector.load %arg19[%c0_192, %c0_193, %c112_194] : memref<2x16x192xf32, #tpu.memory_space<vmem>>, vector<2x16x16xf32>
    %293 = arith.truncf %292 : vector<2x16x16xf32> to vector<2x16x16xbf16>
    %c0_195 = arith.constant 0 : index
    %c0_196 = arith.constant 0 : index
    %c176_197 = arith.constant 176 : index
    %294 = vector.load %arg19[%c0_195, %c0_196, %c176_197] : memref<2x16x192xf32, #tpu.memory_space<vmem>>, vector<2x16x16xf32>
    %295 = arith.truncf %294 : vector<2x16x16xf32> to vector<2x16x16xbf16>
    "tpu.trace_start"() <{level = 10 : i32, message = "bnd,bmd->bnm"}> : () -> ()
    %cst_198 = arith.constant dense<0.000000e+00> : vector<2x16x16xf32>
    %296 = tpu.matmul %291, %293, %cst_198 {dimension_numbers = #tpu.dot_dimension_numbers<[2], [2], [1], [1], [0, 0, 0, 1, 1, 1], [0], [0]>} : vector<2x16x16xbf16>, vector<2x16x16xbf16>, vector<2x16x16xf32> -> vector<2x16x16xf32>
    "tpu.trace_stop"() : () -> ()
    %cst_199 = arith.constant 2.500000e-01 : f32
    %297 = vector.broadcast %cst_199 : f32 to vector<2x16x16xf32>
    %298 = arith.mulf %296, %297 : vector<2x16x16xf32>
    %cst_200 = arith.constant dense<0xFF800000> : vector<2x16xf32>
    %299 = vector.multi_reduction <maximumf>, %298, %cst_200 [2] : vector<2x16x16xf32> to vector<2x16xf32>
    %300 = vector.shape_cast %299 : vector<2x16xf32> to vector<2x16x1xf32>
    %301 = vector.broadcast %300 : vector<2x16x1xf32> to vector<2x16x16xf32>
    %302 = arith.subf %298, %301 : vector<2x16x16xf32>
    %303 = math.exp %302 : vector<2x16x16xf32>
    %cst_201 = arith.constant dense<0.000000e+00> : vector<2x16xf32>
    %304 = vector.multi_reduction <add>, %303, %cst_201 [2] : vector<2x16x16xf32> to vector<2x16xf32>
    %305 = vector.shape_cast %304 : vector<2x16xf32> to vector<2x16x1xf32>
    %306 = tpu.reciprocal %305 {approx = true} : vector<2x16x1xf32> -> vector<2x16x1xf32>
    %307 = vector.broadcast %306 : vector<2x16x1xf32> to vector<2x16x16xf32>
    %308 = arith.mulf %303, %307 : vector<2x16x16xf32>
    %309 = arith.truncf %308 : vector<2x16x16xf32> to vector<2x16x16xbf16>
    "tpu.trace_start"() <{level = 10 : i32, message = "bnm,bmd->bnd"}> : () -> ()
    %cst_202 = arith.constant dense<0.000000e+00> : vector<2x16x16xf32>
    %310 = tpu.matmul %309, %295, %cst_202 {dimension_numbers = #tpu.dot_dimension_numbers<[2], [1], [1], [2], [0, 0, 0, 1, 1, 2], [0], [0]>} : vector<2x16x16xbf16>, vector<2x16x16xbf16>, vector<2x16x16xf32> -> vector<2x16x16xf32>
    "tpu.trace_stop"() : () -> ()
    %c0_203 = arith.constant 0 : index
    %c0_204 = arith.constant 0 : index
    %c48_205 = arith.constant 48 : index
    %311 = vector.load %arg20[%c0_203, %c0_204, %c48_205] : memref<2x16x64xf32, #tpu.memory_space<vmem>>, vector<2x16x16xf32>
    tpu.vector_store %arg20[%c0_203, %c0_204, %c48_205], %310 {strides = array<i32>} : memref<2x16x64xf32, #tpu.memory_space<vmem>>, vector<2x16x16xf32>,
    %c0_206 = arith.constant 0 : index
    %c0_207 = arith.constant 0 : index
    %c0_208 = arith.constant 0 : index
    %312 = vector.load %arg20[%c0_206, %c0_207, %c0_208] : memref<2x16x64xf32, #tpu.memory_space<vmem>>, vector<2x16x64xf32>
    %313 = arith.truncf %312 : vector<2x16x64xf32> to vector<2x16x64xbf16>
    %314 = vector.shape_cast %313 : vector<2x16x64xbf16> to vector<32x64xbf16>
    %c1_209 = arith.constant 1 : index
    %c0_210 = arith.constant 0 : index
    %c0_211 = arith.constant 0 : index
    %315 = vector.load %arg6[%c1_209, %c0_210, %c0_211] : memref<2x64x64xbf16, #tpu.memory_space<vmem>>, vector<1x64x64xbf16>
    %316 = vector.shape_cast %315 : vector<1x64x64xbf16> to vector<64x64xbf16>
    %cst_212 = arith.constant dense<0.000000e+00> : vector<32x64xf32>
    %317 = tpu.matmul %314, %316, %cst_212 {dimension_numbers = #tpu.dot_dimension_numbers<[1], [0], [0], [1], [0, 0, 1, 1], [], []>} : vector<32x64xbf16>, vector<64x64xbf16>, vector<32x64xf32> -> vector<32x64xf32>
    %c1_213 = arith.constant 1 : index
    %c0_214 = arith.constant 0 : index
    %c0_215 = arith.constant 0 : index
    %318 = vector.load %arg7[%c1_213, %c0_214, %c0_215] : memref<2x1x64xf32, #tpu.memory_space<vmem>>, vector<1x1x64xf32>
    %319 = vector.shape_cast %318 : vector<1x1x64xf32> to vector<1x64xf32>
    %320 = vector.broadcast %319 : vector<1x64xf32> to vector<32x64xf32>
    %321 = arith.addf %317, %320 : vector<32x64xf32>
    %322 = arith.addf %189, %321 : vector<32x64xf32>
    %c1_216 = arith.constant 1 : index
    %c0_217 = arith.constant 0 : index
    %c0_218 = arith.constant 0 : index
    %323 = vector.load %arg8[%c1_216, %c0_217, %c0_218] : memref<2x1x64xf32, #tpu.memory_space<vmem>>, vector<1x1x64xf32>
    %324 = vector.shape_cast %323 : vector<1x1x64xf32> to vector<1x64xf32>
    %c1_219 = arith.constant 1 : index
    %c0_220 = arith.constant 0 : index
    %c0_221 = arith.constant 0 : index
    %325 = vector.load %arg9[%c1_219, %c0_220, %c0_221] : memref<2x1x64xf32, #tpu.memory_space<vmem>>, vector<1x1x64xf32>
    %326 = vector.shape_cast %325 : vector<1x1x64xf32> to vector<1x64xf32>
    %cst_222 = arith.constant dense<0.000000e+00> : vector<32xf32>
    %327 = vector.multi_reduction <add>, %322, %cst_222 [1] : vector<32x64xf32> to vector<32xf32>
    %328 = vector.shape_cast %327 : vector<32xf32> to vector<32x1xf32>
    %cst_223 = arith.constant 6.400000e+01 : f32
    %329 = vector.broadcast %cst_223 : f32 to vector<32x1xf32>
    %330 = arith.divf %328, %329 : vector<32x1xf32>
    %331 = vector.broadcast %330 : vector<32x1xf32> to vector<32x64xf32>
    %332 = arith.subf %322, %331 : vector<32x64xf32>
    %333 = arith.mulf %332, %332 : vector<32x64xf32>
    %cst_224 = arith.constant dense<0.000000e+00> : vector<32xf32>
    %334 = vector.multi_reduction <add>, %333, %cst_224 [1] : vector<32x64xf32> to vector<32xf32>
    %335 = vector.shape_cast %334 : vector<32xf32> to vector<32x1xf32>
    %cst_225 = arith.constant 6.400000e+01 : f32
    %336 = vector.broadcast %cst_225 : f32 to vector<32x1xf32>
    %337 = arith.divf %335, %336 : vector<32x1xf32>
    %cst_226 = arith.constant 9.99999974E-6 : f32
    %338 = vector.broadcast %cst_226 : f32 to vector<32x1xf32>
    %339 = arith.addf %337, %338 : vector<32x1xf32>
    %340 = math.rsqrt %339 : vector<32x1xf32>
    %341 = vector.broadcast %340 : vector<32x1xf32> to vector<32x64xf32>
    %342 = arith.mulf %332, %341 : vector<32x64xf32>
    %343 = vector.broadcast %324 : vector<1x64xf32> to vector<32x64xf32>
    %344 = arith.mulf %342, %343 : vector<32x64xf32>
    %345 = vector.broadcast %326 : vector<1x64xf32> to vector<32x64xf32>
    %346 = arith.addf %344, %345 : vector<32x64xf32>
    %347 = arith.truncf %346 : vector<32x64xf32> to vector<32x64xbf16>
    %c1_227 = arith.constant 1 : index
    %c0_228 = arith.constant 0 : index
    %c0_229 = arith.constant 0 : index
    %348 = vector.load %arg10[%c1_227, %c0_228, %c0_229] : memref<2x64x128xbf16, #tpu.memory_space<vmem>>, vector<1x64x128xbf16>
    %349 = vector.shape_cast %348 : vector<1x64x128xbf16> to vector<64x128xbf16>
    %cst_230 = arith.constant dense<0.000000e+00> : vector<32x128xf32>
    %350 = tpu.matmul %347, %349, %cst_230 {dimension_numbers = #tpu.dot_dimension_numbers<[1], [0], [0], [1], [0, 0, 1, 1], [], []>} : vector<32x64xbf16>, vector<64x128xbf16>, vector<32x128xf32> -> vector<32x128xf32>
    %c1_231 = arith.constant 1 : index
    %c0_232 = arith.constant 0 : index
    %c0_233 = arith.constant 0 : index
    %351 = vector.load %arg11[%c1_231, %c0_232, %c0_233] : memref<2x1x128xf32, #tpu.memory_space<vmem>>, vector<1x1x128xf32>
    %352 = vector.shape_cast %351 : vector<1x1x128xf32> to vector<1x128xf32>
    %353 = vector.broadcast %352 : vector<1x128xf32> to vector<32x128xf32>
    %354 = arith.addf %350, %353 : vector<32x128xf32>
    %355 = arith.mulf %354, %354 : vector<32x128xf32>
    %356 = arith.mulf %354, %355 : vector<32x128xf32>
    %cst_234 = arith.constant 4.471500e-02 : f32
    %357 = vector.broadcast %cst_234 : f32 to vector<32x128xf32>
    %358 = arith.mulf %357, %356 : vector<32x128xf32>
    %359 = arith.addf %354, %358 : vector<32x128xf32>
    %cst_235 = arith.constant 0.797884583 : f32
    %360 = vector.broadcast %cst_235 : f32 to vector<32x128xf32>
    %361 = arith.mulf %360, %359 : vector<32x128xf32>
    %362 = math.tanh %361 : vector<32x128xf32>
    %cst_236 = arith.constant 1.000000e+00 : f32
    %363 = vector.broadcast %cst_236 : f32 to vector<32x128xf32>
    %364 = arith.addf %363, %362 : vector<32x128xf32>
    %cst_237 = arith.constant 5.000000e-01 : f32
    %365 = vector.broadcast %cst_237 : f32 to vector<32x128xf32>
    %366 = arith.mulf %365, %364 : vector<32x128xf32>
    %367 = arith.mulf %354, %366 : vector<32x128xf32>
    %368 = arith.truncf %367 : vector<32x128xf32> to vector<32x128xbf16>
    %c1_238 = arith.constant 1 : index
    %c0_239 = arith.constant 0 : index
    %c0_240 = arith.constant 0 : index
    %369 = vector.load %arg12[%c1_238, %c0_239, %c0_240] : memref<2x128x64xbf16, #tpu.memory_space<vmem>>, vector<1x128x64xbf16>
    %370 = vector.shape_cast %369 : vector<1x128x64xbf16> to vector<128x64xbf16>
    %cst_241 = arith.constant dense<0.000000e+00> : vector<32x64xf32>
    %371 = tpu.matmul %368, %370, %cst_241 {dimension_numbers = #tpu.dot_dimension_numbers<[1], [0], [0], [1], [0, 0, 1, 1], [], []>} : vector<32x128xbf16>, vector<128x64xbf16>, vector<32x64xf32> -> vector<32x64xf32>
    %c1_242 = arith.constant 1 : index
    %c0_243 = arith.constant 0 : index
    %c0_244 = arith.constant 0 : index
    %372 = vector.load %arg13[%c1_242, %c0_243, %c0_244] : memref<2x1x64xf32, #tpu.memory_space<vmem>>, vector<1x1x64xf32>
    %373 = vector.shape_cast %372 : vector<1x1x64xf32> to vector<1x64xf32>
    %374 = vector.broadcast %373 : vector<1x64xf32> to vector<32x64xf32>
    %375 = arith.addf %371, %374 : vector<32x64xf32>
    %376 = arith.addf %322, %375 : vector<32x64xf32>
    %c0_245 = arith.constant 0 : index
    %c0_246 = arith.constant 0 : index
    %377 = vector.load %arg14[%c0_245, %c0_246] : memref<1x64xf32, #tpu.memory_space<vmem>>, vector<1x64xf32>
    %c0_247 = arith.constant 0 : index
    %c0_248 = arith.constant 0 : index
    %378 = vector.load %arg15[%c0_247, %c0_248] : memref<1x64xf32, #tpu.memory_space<vmem>>, vector<1x64xf32>
    %cst_249 = arith.constant dense<0.000000e+00> : vector<32xf32>
    %379 = vector.multi_reduction <add>, %376, %cst_249 [1] : vector<32x64xf32> to vector<32xf32>
    %380 = vector.shape_cast %379 : vector<32xf32> to vector<32x1xf32>
    %cst_250 = arith.constant 6.400000e+01 : f32
    %381 = vector.broadcast %cst_250 : f32 to vector<32x1xf32>
    %382 = arith.divf %380, %381 : vector<32x1xf32>
    %383 = vector.broadcast %382 : vector<32x1xf32> to vector<32x64xf32>
    %384 = arith.subf %376, %383 : vector<32x64xf32>
    %385 = arith.mulf %384, %384 : vector<32x64xf32>
    %cst_251 = arith.constant dense<0.000000e+00> : vector<32xf32>
    %386 = vector.multi_reduction <add>, %385, %cst_251 [1] : vector<32x64xf32> to vector<32xf32>
    %387 = vector.shape_cast %386 : vector<32xf32> to vector<32x1xf32>
    %cst_252 = arith.constant 6.400000e+01 : f32
    %388 = vector.broadcast %cst_252 : f32 to vector<32x1xf32>
    %389 = arith.divf %387, %388 : vector<32x1xf32>
    %cst_253 = arith.constant 9.99999974E-6 : f32
    %390 = vector.broadcast %cst_253 : f32 to vector<32x1xf32>
    %391 = arith.addf %389, %390 : vector<32x1xf32>
    %392 = math.rsqrt %391 : vector<32x1xf32>
    %393 = vector.broadcast %392 : vector<32x1xf32> to vector<32x64xf32>
    %394 = arith.mulf %384, %393 : vector<32x64xf32>
    %395 = vector.broadcast %377 : vector<1x64xf32> to vector<32x64xf32>
    %396 = arith.mulf %394, %395 : vector<32x64xf32>
    %397 = vector.broadcast %378 : vector<1x64xf32> to vector<32x64xf32>
    %398 = arith.addf %396, %397 : vector<32x64xf32>
    %399 = vector.shape_cast %398 : vector<32x64xf32> to vector<2x16x64xf32>
    %cst_254 = arith.constant dense<0.000000e+00> : vector<2x64xf32>
    %400 = vector.multi_reduction <add>, %399, %cst_254 [1] : vector<2x16x64xf32> to vector<2x64xf32>
    %cst_255 = arith.constant 1.600000e+01 : f32
    %401 = vector.broadcast %cst_255 : f32 to vector<2x64xf32>
    %402 = arith.divf %400, %401 : vector<2x64xf32>
    %403 = arith.truncf %402 : vector<2x64xf32> to vector<2x64xbf16>
    %c0_256 = arith.constant 0 : index
    %c0_257 = arith.constant 0 : index
    %404 = vector.load %arg16[%c0_256, %c0_257] : memref<64x512xbf16, #tpu.memory_space<vmem>>, vector<64x512xbf16>
    %cst_258 = arith.constant dense<0.000000e+00> : vector<2x512xf32>
    %405 = tpu.matmul %403, %404, %cst_258 {dimension_numbers = #tpu.dot_dimension_numbers<[1], [0], [0], [1], [0, 0, 1, 1], [], []>} : vector<2x64xbf16>, vector<64x512xbf16>, vector<2x512xf32> -> vector<2x512xf32>
    %c0_259 = arith.constant 0 : index
    %c0_260 = arith.constant 0 : index
    %406 = vector.load %arg17[%c0_259, %c0_260] : memref<1x512xf32, #tpu.memory_space<vmem>>, vector<1x512xf32>
    %407 = vector.broadcast %406 : vector<1x512xf32> to vector<2x512xf32>
    %408 = arith.addf %405, %407 : vector<2x512xf32>
    %c0_261 = arith.constant 0 : index
    %c0_262 = arith.constant 0 : index
    %409 = vector.load %arg18[%c0_261, %c0_262] : memref<2x512xf32, #tpu.memory_space<vmem>>, vector<2x512xf32>
    tpu.vector_store %arg18[%c0_261, %c0_262], %408 {strides = array<i32>} : memref<2x512xf32, #tpu.memory_space<vmem>>, vector<2x512xf32>,
    return
  }
  func.func @transform_0(%arg0: i32) -> (i32, i32, i32) {
    %c0_i32 = arith.constant 0 : i32
    %c0_i32_0 = arith.constant 0 : i32
    %c0_i32_1 = arith.constant 0 : i32
    %c0_i32_2 = arith.constant 0 : i32
    return %c0_i32, %c0_i32_0, %c0_i32_1 : i32, i32, i32
  }
  func.func @transform_1(%arg0: i32) -> (i32, i32, i32) {
    %c0_i32 = arith.constant 0 : i32
    %c0_i32_0 = arith.constant 0 : i32
    %c0_i32_1 = arith.constant 0 : i32
    %c0_i32_2 = arith.constant 0 : i32
    return %c0_i32, %c0_i32_0, %c0_i32_1 : i32, i32, i32
  }
  func.func @transform_2(%arg0: i32) -> (i32, i32, i32) {
    %c0_i32 = arith.constant 0 : i32
    %c0_i32_0 = arith.constant 0 : i32
    %c0_i32_1 = arith.constant 0 : i32
    %c0_i32_2 = arith.constant 0 : i32
    return %c0_i32, %c0_i32_0, %c0_i32_1 : i32, i32, i32
  }
  func.func @transform_3(%arg0: i32) -> (i32, i32, i32) {
    %c0_i32 = arith.constant 0 : i32
    %c0_i32_0 = arith.constant 0 : i32
    %c0_i32_1 = arith.constant 0 : i32
    %c0_i32_2 = arith.constant 0 : i32
    return %c0_i32, %c0_i32_0, %c0_i32_1 : i32, i32, i32
  }
  func.func @transform_4(%arg0: i32) -> (i32, i32, i32) {
    %c0_i32 = arith.constant 0 : i32
    %c0_i32_0 = arith.constant 0 : i32
    %c0_i32_1 = arith.constant 0 : i32
    %c0_i32_2 = arith.constant 0 : i32
    return %c0_i32, %c0_i32_0, %c0_i32_1 : i32, i32, i32
  }
  func.func @transform_5(%arg0: i32) -> (i32, i32, i32) {
    %c0_i32 = arith.constant 0 : i32
    %c0_i32_0 = arith.constant 0 : i32
    %c0_i32_1 = arith.constant 0 : i32
    %c0_i32_2 = arith.constant 0 : i32
    return %c0_i32, %c0_i32_0, %c0_i32_1 : i32, i32, i32
  }
  func.func @transform_6(%arg0: i32) -> (i32, i32, i32) {
    %c0_i32 = arith.constant 0 : i32
    %c0_i32_0 = arith.constant 0 : i32
    %c0_i32_1 = arith.constant 0 : i32
    %c0_i32_2 = arith.constant 0 : i32
    return %c0_i32, %c0_i32_0, %c0_i32_1 : i32, i32, i32
  }
  func.func @transform_7(%arg0: i32) -> (i32, i32, i32) {
    %c0_i32 = arith.constant 0 : i32
    %c0_i32_0 = arith.constant 0 : i32
    %c0_i32_1 = arith.constant 0 : i32
    %c0_i32_2 = arith.constant 0 : i32
    return %c0_i32, %c0_i32_0, %c0_i32_1 : i32, i32, i32
  }
  func.func @transform_8(%arg0: i32) -> (i32, i32, i32) {
    %c0_i32 = arith.constant 0 : i32
    %c0_i32_0 = arith.constant 0 : i32
    %c0_i32_1 = arith.constant 0 : i32
    %c0_i32_2 = arith.constant 0 : i32
    return %c0_i32, %c0_i32_0, %c0_i32_1 : i32, i32, i32
  }
  func.func @transform_9(%arg0: i32) -> (i32, i32, i32) {
    %c0_i32 = arith.constant 0 : i32
    %c0_i32_0 = arith.constant 0 : i32
    %c0_i32_1 = arith.constant 0 : i32
    %c0_i32_2 = arith.constant 0 : i32
    return %c0_i32, %c0_i32_0, %c0_i32_1 : i32, i32, i32
  }
  func.func @transform_10(%arg0: i32) -> (i32, i32, i32) {
    %c0_i32 = arith.constant 0 : i32
    %c0_i32_0 = arith.constant 0 : i32
    %c0_i32_1 = arith.constant 0 : i32
    %c0_i32_2 = arith.constant 0 : i32
    return %c0_i32, %c0_i32_0, %c0_i32_1 : i32, i32, i32
  }
  func.func @transform_11(%arg0: i32) -> (i32, i32, i32) {
    %c0_i32 = arith.constant 0 : i32
    %c0_i32_0 = arith.constant 0 : i32
    %c0_i32_1 = arith.constant 0 : i32
    %c0_i32_2 = arith.constant 0 : i32
    return %c0_i32, %c0_i32_0, %c0_i32_1 : i32, i32, i32
  }
  func.func @transform_12(%arg0: i32) -> (i32, i32, i32) {
    %c0_i32 = arith.constant 0 : i32
    %c0_i32_0 = arith.constant 0 : i32
    %c0_i32_1 = arith.constant 0 : i32
    %c0_i32_2 = arith.constant 0 : i32
    return %c0_i32, %c0_i32_0, %c0_i32_1 : i32, i32, i32
  }
  func.func @transform_13(%arg0: i32) -> (i32, i32) {
    %c0_i32 = arith.constant 0 : i32
    %c0_i32_0 = arith.constant 0 : i32
    %c0_i32_1 = arith.constant 0 : i32
    return %c0_i32, %c0_i32_0 : i32, i32
  }
  func.func @transform_14(%arg0: i32) -> (i32, i32) {
    %c0_i32 = arith.constant 0 : i32
    %c0_i32_0 = arith.constant 0 : i32
    %c0_i32_1 = arith.constant 0 : i32
    return %c0_i32, %c0_i32_0 : i32, i32
  }
  func.func @transform_15(%arg0: i32) -> (i32, i32) {
    %c0_i32 = arith.constant 0 : i32
    %c0_i32_0 = arith.constant 0 : i32
    %c0_i32_1 = arith.constant 0 : i32
    return %c0_i32, %c0_i32_0 : i32, i32
  }
  func.func @transform_16(%arg0: i32) -> (i32, i32) {
    %c0_i32 = arith.constant 0 : i32
    %c0_i32_0 = arith.constant 0 : i32
    %c0_i32_1 = arith.constant 0 : i32
    return %c0_i32, %c0_i32_0 : i32, i32
  }
  func.func @transform_17(%arg0: i32) -> (i32, i32) {
    %c0_i32 = arith.constant 0 : i32
    %c0_i32_0 = arith.constant 0 : i32
    %c0_i32_1 = arith.constant 0 : i32
    return %c0_i32, %c0_i32_0 : i32, i32
  }
}

</mosaic_0001>

<llo_original>
// kernel: _lambda_.4
$region0: #{_lambda_.4}
  #allocation0 [shape = 'u32[]', space=smem, size = 0x4, offset = 0x4, fixed_abs, tag = 'smem constant byte address 0x4 - core index']
  #allocation1 [shape = 'u32[144,128]{1,0:T(1,128)}', space=vmem, size = 0x12000, scoped, tag = 'internal scratch']
  %s0 = inlined_call_operand.vmem [shape: bf16[128,36], index: 0, kind: input, shape index: {}]
  %s1 = inlined_call_operand.vmem [shape: bf16[36,16], index: 1, kind: input, shape index: {}]
  %s2 = inlined_call_operand.vmem [shape: f32[1,16], index: 2, kind: input, shape index: {}]
  %s3 = inlined_call_operand.vmem [shape: bf16[128,16], index: 3, kind: output, shape index: {}]
  %s4 = sld [smem:[#allocation0]]
  $region22: #{_lambda_.4} parent=0
    _
  %s6 = ssub.s32 1, %s4
  %s7 = scalar_select 0, %s6, %s4
  // Predicated region
  $region2: #{_lambda_.4} parent=0 // pred_check
    _
  $region3: #{_lambda_.4} parent=0 // pred_check_branch
    %9 = sbr.rel (0) target = $region5
  $region4: #{_lambda_.4} parent=0 // pred_region
    _
  $region5: #{_lambda_.4} parent=0 // pred_fallthru
    _
  // Predicated region
  $region6: #{_lambda_.4} parent=0 // pred_check
    _
  $region7: #{_lambda_.4} parent=0 // pred_check_branch
    %11 = sbr.rel (0) target = $region9
  $region8: #{_lambda_.4} parent=0 // pred_region
    _
  $region9: #{_lambda_.4} parent=0 // pred_fallthru
    _
  // Predicated region
  $region10: #{_lambda_.4} parent=0 // pred_check
    _
  $region11: #{_lambda_.4} parent=0 // pred_check_branch
    %13 = sbr.rel (0) target = $region13
  $region12: #{_lambda_.4} parent=0 // pred_region
    _
  $region13: #{_lambda_.4} parent=0 // pred_fallthru
    _
  %v15 = vld [vmem:[%s0] sm:$0xf]
  %v16 = vld [vmem:[%s0 + $0x4] sm:$0xf]
  %v17 = vld [vmem:[%s0 + $0x8] sm:$0xf]
  %v18 = vld [vmem:[%s0 + $0xc] sm:$0xf]
  %v19 = vld [vmem:[%s0 + $0x10] sm:$0xf]
  %v20 = vld [vmem:[%s0 + $0x14] sm:$0xf]
  %v21 = vld [vmem:[%s0 + $0x18] sm:$0xf]
  %v22 = vld [vmem:[%s0 + $0x1c] sm:$0xf]
  %v23 = vld [vmem:[%s0 + $0x20] sm:$0xf]
  %v24 = vld [vmem:[%s0 + $0x24] sm:$0xf]
  %v25 = vld [vmem:[%s0 + $0x28] sm:$0xf]
  %v26 = vld [vmem:[%s0 + $0x2c] sm:$0xf]
  %v27 = vld [vmem:[%s0 + $0x30] sm:$0xf]
  %v28 = vld [vmem:[%s0 + $0x34] sm:$0xf]
  %v29 = vld [vmem:[%s0 + $0x38] sm:$0xf]
  %v30 = vld [vmem:[%s0 + $0x3c] sm:$0xf]
  %v31 = vld [vmem:[%s1] sm:$0xf]
  %v32 = vld [vmem:[%s1 + $0x4] sm:$0xf]
  %v33 = vld [vmem:[%s1 + $0x8] sm:$0xf]
  %v34 = vld [vmem:[%s1 + $0xc] sm:$0xf]
  %v35 = vld [vmem:[%s1 + $0x10] sm:$0x3]
  %v36 = vld [vmem:[%s2] sm:$0x1]
  %v38 = vlaneseq
  %v39 = vshrl.u32 %v38, 7
  %v40 = vsub.s32 0, %v39
  %v41 = vrot.slane %v36, %v40
  %v59 = vunpack.c.l.b16 %v15
  %v60 = vunpack.c.l.b16 %v16
  %v61 = vunpack.c.l.b16 %v17
  %v62 = vunpack.c.l.b16 %v18
  %v63 = vunpack.c.l.b16 %v19
  %v64 = vunpack.c.l.b16 %v20
  %v65 = vunpack.c.l.b16 %v21
  %v66 = vunpack.c.l.b16 %v22
  %v67 = vunpack.c.l.b16 %v23
  %v68 = vunpack.c.l.b16 %v24
  %v69 = vunpack.c.l.b16 %v25
  %v70 = vunpack.c.l.b16 %v26
  %v71 = vunpack.c.l.b16 %v27
  %v72 = vunpack.c.l.b16 %v28
  %v73 = vunpack.c.l.b16 %v29
  %v74 = vunpack.c.l.b16 %v30
  %v75 = vpack.c.b16 %v60, %v59
  %v76 = vpack.c.b16 %v62, %v61
  %v77 = vpack.c.b16 %v64, %v63
  %v78 = vpack.c.b16 %v66, %v65
  %v79 = vpack.c.b16 %v68, %v67
  %v80 = vpack.c.b16 %v70, %v69
  %v81 = vpack.c.b16 %v72, %v71
  %v82 = vpack.c.b16 %v74, %v73
  %v88 = vunpack.c.l.b16 %v31
  %v89 = vunpack.c.l.b16 %v32
  %v90 = vunpack.c.l.b16 %v33
  %v91 = vunpack.c.l.b16 %v34
  %v92 = vunpack.c.l.b16 %v35
  %v93 = vpack.c.b16 %v89, %v88
  %v94 = vpack.c.b16 %v91, %v90
  %v95 = vpack.c.b16 %v92, %v92
  %vm98 = vcmask 293888
  %v100 = vsel %vm98, %v75, 0
  %v103 = vsel %vm98, %v76, 0
  %v106 = vsel %vm98, %v77, 0
  %v109 = vsel %vm98, %v78, 0
  %v112 = vsel %vm98, %v79, 0
  %v115 = vsel %vm98, %v80, 0
  %v118 = vsel %vm98, %v81, 0
  %v121 = vsel %vm98, %v82, 0
  %vm123 = vcmask 1041408
  %v125 = vsel %vm123, %v95, 0
  %127 = vmatprep.subr.bf16.mxu0 0
  %128 = vmatpush1.bf16.msra.mxu0 %v93
  %129 = vmatprep.subr.bf16.mxu0 0
  %130 = vmatpush1.bf16.msra.mxu0 %v94
  %131 = vmatprep.subr.bf16.mxu0 0
  %132 = vmatpush1.bf16.msra.mxu0 %v125
  %133 = vmatprep.subr.bf16.mxu0 0
  %134 = vmatpush1.bf16.msra.mxu0 0
  %135 = vmatprep.subr.bf16.mxu0 0
  %136 = vmatpush1.bf16.msra.mxu0 0
  %137 = vmatprep.subr.bf16.mxu0 0
  %138 = vmatpush1.bf16.msra.mxu0 0
  %139 = vmatprep.subr.bf16.mxu0 0
  %140 = vmatpush1.bf16.msra.mxu0 0
  %141 = vmatprep.subr.bf16.mxu0 0
  %142 = vmatpush1.bf16.msra.mxu0 0
  %143 = vmatprep.subr.bf16.mxu0 0
  %144 = vmatpush1.bf16.msra.mxu0 0
  %145 = vmatprep.subr.bf16.mxu0 0
  %146 = vmatpush1.bf16.msra.mxu0 0
  %147 = vmatprep.subr.bf16.mxu0 0
  %148 = vmatpush1.bf16.msra.mxu0 0
  %149 = vmatprep.subr.bf16.mxu0 0
  %150 = vmatpush1.bf16.msra.mxu0 0
  %151 = vmatprep.subr.bf16.mxu0 0
  %152 = vmatpush1.bf16.msra.mxu0 0
  %153 = vmatprep.subr.bf16.mxu0 0
  %154 = vmatpush1.bf16.msra.mxu0 0
  %155 = vmatprep.subr.bf16.mxu0 0
  %156 = vmatpush1.bf16.msra.mxu0 0
  %157 = vmatprep.subr.bf16.mxu0 0
  %158 = vmatpush1.bf16.msra.mxu0 0
  %159 = vmatprep.mubr.bf16.mxu0 0
  %160 = vmatmul.mubr.bf16.gmra.mrb[0].mxu0 %v100
  %v161 = vpop.f32.mrb[0].mxu0
  %v162 = vadd.f32 %v41, %v161
  %v163 = vpop.f32.mrb[0].mxu0
  %v164 = vpop.f32.mrb[0].mxu0
  %v165 = vadd.f32 %v41, %v164
  %v166 = vpop.f32.mrb[0].mxu0
  %167 = vmatprep.mubr.bf16.mxu0 0
  %168 = vmatmul.mubr.bf16.gmra.mrb[0].mxu0 %v103
  %v169 = vpop.f32.mrb[0].mxu0
  %v170 = vadd.f32 %v41, %v169
  %v171 = vpop.f32.mrb[0].mxu0
  %v172 = vpop.f32.mrb[0].mxu0
  %v173 = vadd.f32 %v41, %v172
  %v174 = vpop.f32.mrb[0].mxu0
  %175 = vmatprep.mubr.bf16.mxu0 0
  %176 = vmatmul.mubr.bf16.gmra.mrb[0].mxu0 %v106
  %v177 = vpop.f32.mrb[0].mxu0
  %v178 = vadd.f32 %v41, %v177
  %v179 = vpop.f32.mrb[0].mxu0
  %v180 = vpop.f32.mrb[0].mxu0
  %v181 = vadd.f32 %v41, %v180
  %v182 = vpop.f32.mrb[0].mxu0
  %183 = vmatprep.mubr.bf16.mxu0 0
  %184 = vmatmul.mubr.bf16.gmra.mrb[0].mxu0 %v109
  %v185 = vpop.f32.mrb[0].mxu0
  %v186 = vadd.f32 %v41, %v185
  %v187 = vpop.f32.mrb[0].mxu0
  %v188 = vpop.f32.mrb[0].mxu0
  %v189 = vadd.f32 %v41, %v188
  %v190 = vpop.f32.mrb[0].mxu0
  %191 = vmatprep.mubr.bf16.mxu0 0
  %192 = vmatmul.mubr.bf16.gmra.mrb[0].mxu0 %v112
  %v193 = vpop.f32.mrb[0].mxu0
  %v194 = vadd.f32 %v41, %v193
  %v195 = vpop.f32.mrb[0].mxu0
  %v196 = vpop.f32.mrb[0].mxu0
  %v197 = vadd.f32 %v41, %v196
  %v198 = vpop.f32.mrb[0].mxu0
  %199 = vmatprep.mubr.bf16.mxu0 0
  %200 = vmatmul.mubr.bf16.gmra.mrb[0].mxu0 %v115
  %v201 = vpop.f32.mrb[0].mxu0
  %v202 = vadd.f32 %v41, %v201
  %v203 = vpop.f32.mrb[0].mxu0
  %v204 = vpop.f32.mrb[0].mxu0
  %v205 = vadd.f32 %v41, %v204
  %v206 = vpop.f32.mrb[0].mxu0
  %207 = vmatprep.mubr.bf16.mxu0 0
  %208 = vmatmul.mubr.bf16.gmra.mrb[0].mxu0 %v118
  %v209 = vpop.f32.mrb[0].mxu0
  %v210 = vadd.f32 %v41, %v209
  %v211 = vpop.f32.mrb[0].mxu0
  %v212 = vpop.f32.mrb[0].mxu0
  %v213 = vadd.f32 %v41, %v212
  %v214 = vpop.f32.mrb[0].mxu0
  %215 = vmatprep.mubr.bf16.mxu0 0
  %216 = vmatmul.mubr.bf16.gmra.mrb[0].mxu0 %v121
  %v217 = vpop.f32.mrb[0].mxu0
  %v218 = vadd.f32 %v41, %v217
  %v219 = vpop.f32.mrb[0].mxu0
  %v220 = vpop.f32.mrb[0].mxu0
  %v221 = vadd.f32 %v41, %v220
  %v222 = vpop.f32.mrb[0].mxu0
  %223 = vdwg.mxu0
  %v224 = vmul.f32 %v162, %v162
  %v225 = vmul.f32 %v165, %v165
  %v226 = vmul.f32 %v170, %v170
  %v227 = vmul.f32 %v173, %v173
  %v228 = vmul.f32 %v178, %v178
  %v229 = vmul.f32 %v181, %v181
  %v230 = vmul.f32 %v186, %v186
  %v231 = vmul.f32 %v189, %v189
  %v232 = vmul.f32 %v194, %v194
  %v233 = vmul.f32 %v197, %v197
  %v234 = vmul.f32 %v202, %v202
  %v235 = vmul.f32 %v205, %v205
  %v236 = vmul.f32 %v210, %v210
  %v237 = vmul.f32 %v213, %v213
  %v238 = vmul.f32 %v218, %v218
  %v239 = vmul.f32 %v221, %v221
  %v240 = vmul.f32 %v162, %v224
  %v241 = vmul.f32 %v165, %v225
  %v242 = vmul.f32 %v170, %v226
  %v243 = vmul.f32 %v173, %v227
  %v244 = vmul.f32 %v178, %v228
  %v245 = vmul.f32 %v181, %v229
  %v246 = vmul.f32 %v186, %v230
  %v247 = vmul.f32 %v189, %v231
  %v248 = vmul.f32 %v194, %v232
  %v249 = vmul.f32 %v197, %v233
  %v250 = vmul.f32 %v202, %v234
  %v251 = vmul.f32 %v205, %v235
  %v252 = vmul.f32 %v210, %v236
  %v253 = vmul.f32 %v213, %v237
  %v254 = vmul.f32 %v218, %v238
  %v255 = vmul.f32 %v221, %v239
  %v256 = vmul.f32 %v240, 0.044715
  %v257 = vmul.f32 %v241, 0.044715
  %v258 = vmul.f32 %v242, 0.044715
  %v259 = vmul.f32 %v243, 0.044715
  %v260 = vmul.f32 %v244, 0.044715
  %v261 = vmul.f32 %v245, 0.044715
  %v262 = vmul.f32 %v246, 0.044715
  %v263 = vmul.f32 %v247, 0.044715
  %v264 = vmul.f32 %v248, 0.044715
  %v265 = vmul.f32 %v249, 0.044715
  %v266 = vmul.f32 %v250, 0.044715
  %v267 = vmul.f32 %v251, 0.044715
  %v268 = vmul.f32 %v252, 0.044715
  %v269 = vmul.f32 %v253, 0.044715
  %v270 = vmul.f32 %v254, 0.044715
  %v271 = vmul.f32 %v255, 0.044715
  %v272 = vadd.f32 %v162, %v256
  %v273 = vadd.f32 %v165, %v257
  %v274 = vadd.f32 %v170, %v258
  %v275 = vadd.f32 %v173, %v259
  %v276 = vadd.f32 %v178, %v260
  %v277 = vadd.f32 %v181, %v261
  %v278 = vadd.f32 %v186, %v262
  %v279 = vadd.f32 %v189, %v263
  %v280 = vadd.f32 %v194, %v264
  %v281 = vadd.f32 %v197, %v265
  %v282 = vadd.f32 %v202, %v266
  %v283 = vadd.f32 %v205, %v267
  %v284 = vadd.f32 %v210, %v268
  %v285 = vadd.f32 %v213, %v269
  %v286 = vadd.f32 %v218, %v270
  %v287 = vadd.f32 %v221, %v271
  %v288 = vmul.f32 %v272, 0.7978846
  %v289 = vmul.f32 %v273, 0.7978846
  %v290 = vmul.f32 %v274, 0.7978846
  %v291 = vmul.f32 %v275, 0.7978846
  %v292 = vmul.f32 %v276, 0.7978846
  %v293 = vmul.f32 %v277, 0.7978846
  %v294 = vmul.f32 %v278, 0.7978846
  %v295 = vmul.f32 %v279, 0.7978846
  %v296 = vmul.f32 %v280, 0.7978846
  %v297 = vmul.f32 %v281, 0.7978846
  %v298 = vmul.f32 %v282, 0.7978846
  %v299 = vmul.f32 %v283, 0.7978846
  %v300 = vmul.f32 %v284, 0.7978846
  %v301 = vmul.f32 %v285, 0.7978846
  %v302 = vmul.f32 %v286, 0.7978846
  %v303 = vmul.f32 %v287, 0.7978846
  %v304 = vtanh.pop %v288
  %v305 = vtanh.pop %v289
  %v306 = vtanh.pop %v290
  %v307 = vtanh.pop %v291
  %v308 = vtanh.pop %v292
  %v309 = vtanh.pop %v293
  %v310 = vtanh.pop %v294
  %v311 = vtanh.pop %v295
  %v312 = vtanh.pop %v296
  %v313 = vtanh.pop %v297
  %v314 = vtanh.pop %v298
  %v315 = vtanh.pop %v299
  %v316 = vtanh.pop %v300
  %v317 = vtanh.pop %v301
  %v318 = vtanh.pop %v302
  %v319 = vtanh.pop %v303
  %v320 = vadd.f32 %v304, 1.0
  %v321 = vadd.f32 %v305, 1.0
  %v322 = vadd.f32 %v306, 1.0
  %v323 = vadd.f32 %v307, 1.0
  %v324 = vadd.f32 %v308, 1.0
  %v325 = vadd.f32 %v309, 1.0
  %v326 = vadd.f32 %v310, 1.0
  %v327 = vadd.f32 %v311, 1.0
  %v328 = vadd.f32 %v312, 1.0
  %v329 = vadd.f32 %v313, 1.0
  %v330 = vadd.f32 %v314, 1.0
  %v331 = vadd.f32 %v315, 1.0
  %v332 = vadd.f32 %v316, 1.0
  %v333 = vadd.f32 %v317, 1.0
  %v334 = vadd.f32 %v318, 1.0
  %v335 = vadd.f32 %v319, 1.0
  %v336 = vmul.f32 %v320, 0.5
  %v337 = vmul.f32 %v321, 0.5
  %v338 = vmul.f32 %v322, 0.5
  %v339 = vmul.f32 %v323, 0.5
  %v340 = vmul.f32 %v324, 0.5
  %v341 = vmul.f32 %v325, 0.5
  %v342 = vmul.f32 %v326, 0.5
  %v343 = vmul.f32 %v327, 0.5
  %v344 = vmul.f32 %v328, 0.5
  %v345 = vmul.f32 %v329, 0.5
  %v346 = vmul.f32 %v330, 0.5
  %v347 = vmul.f32 %v331, 0.5
  %v348 = vmul.f32 %v332, 0.5
  %v349 = vmul.f32 %v333, 0.5
  %v350 = vmul.f32 %v334, 0.5
  %v351 = vmul.f32 %v335, 0.5
  %v352 = vmul.f32 %v162, %v336
  %v353 = vmul.f32 %v165, %v337
  %v354 = vmul.f32 %v170, %v338
  %v355 = vmul.f32 %v173, %v339
  %v356 = vmul.f32 %v178, %v340
  %v357 = vmul.f32 %v181, %v341
  %v358 = vmul.f32 %v186, %v342
  %v359 = vmul.f32 %v189, %v343
  %v360 = vmul.f32 %v194, %v344
  %v361 = vmul.f32 %v197, %v345
  %v362 = vmul.f32 %v202, %v346
  %v363 = vmul.f32 %v205, %v347
  %v364 = vmul.f32 %v210, %v348
  %v365 = vmul.f32 %v213, %v349
  %v366 = vmul.f32 %v218, %v350
  %v367 = vmul.f32 %v221, %v351
  %v368 = vpack.c.bf16 %v353, %v352
  %v369 = vpack.c.bf16 %v355, %v354
  %v370 = vpack.c.bf16 %v357, %v356
  %v371 = vpack.c.bf16 %v359, %v358
  %v372 = vpack.c.bf16 %v361, %v360
  %v373 = vpack.c.bf16 %v363, %v362
  %v374 = vpack.c.bf16 %v365, %v364
  %v375 = vpack.c.bf16 %v367, %v366
  %v384 = vunpack.c.l.b16 %v368
  %v385 = vunpack.c.h.b16 %v368
  %v386 = vunpack.c.l.b16 %v369
  %v387 = vunpack.c.h.b16 %v369
  %v388 = vunpack.c.l.b16 %v370
  %v389 = vunpack.c.h.b16 %v370
  %v390 = vunpack.c.l.b16 %v371
  %v391 = vunpack.c.h.b16 %v371
  %v392 = vunpack.c.l.b16 %v372
  %v393 = vunpack.c.h.b16 %v372
  %v394 = vunpack.c.l.b16 %v373
  %v395 = vunpack.c.h.b16 %v373
  %v396 = vunpack.c.l.b16 %v374
  %v397 = vunpack.c.h.b16 %v374
  %v398 = vunpack.c.l.b16 %v375
  %v399 = vunpack.c.h.b16 %v375
  %v400 = vpack.c.b16 %v384, %v384
  %v401 = vpack.c.b16 %v385, %v385
  %v402 = vpack.c.b16 %v386, %v386
  %v403 = vpack.c.b16 %v387, %v387
  %v404 = vpack.c.b16 %v388, %v388
  %v405 = vpack.c.b16 %v389, %v389
  %v406 = vpack.c.b16 %v390, %v390
  %v407 = vpack.c.b16 %v391, %v391
  %v408 = vpack.c.b16 %v392, %v392
  %v409 = vpack.c.b16 %v393, %v393
  %v410 = vpack.c.b16 %v394, %v394
  %v411 = vpack.c.b16 %v395, %v395
  %v412 = vpack.c.b16 %v396, %v396
  %v413 = vpack.c.b16 %v397, %v397
  %v414 = vpack.c.b16 %v398, %v398
  %v415 = vpack.c.b16 %v399, %v399
  %vm432 = vcmask 125952
  %433 = vst.msk [vmem:[%s3] sm:$0xf] %vm432, %v400
  %434 = vst.msk [vmem:[%s3 + $0x4] sm:$0xf] %vm432, %v401
  %435 = vst.msk [vmem:[%s3 + $0x8] sm:$0xf] %vm432, %v402
  %436 = vst.msk [vmem:[%s3 + $0xc] sm:$0xf] %vm432, %v403
  %437 = vst.msk [vmem:[%s3 + $0x10] sm:$0xf] %vm432, %v404
  %438 = vst.msk [vmem:[%s3 + $0x14] sm:$0xf] %vm432, %v405
  %439 = vst.msk [vmem:[%s3 + $0x18] sm:$0xf] %vm432, %v406
  %440 = vst.msk [vmem:[%s3 + $0x1c] sm:$0xf] %vm432, %v407
  %441 = vst.msk [vmem:[%s3 + $0x20] sm:$0xf] %vm432, %v408
  %442 = vst.msk [vmem:[%s3 + $0x24] sm:$0xf] %vm432, %v409
  %443 = vst.msk [vmem:[%s3 + $0x28] sm:$0xf] %vm432, %v410
  %444 = vst.msk [vmem:[%s3 + $0x2c] sm:$0xf] %vm432, %v411
  %445 = vst.msk [vmem:[%s3 + $0x30] sm:$0xf] %vm432, %v412
  %446 = vst.msk [vmem:[%s3 + $0x34] sm:$0xf] %vm432, %v413
  %447 = vst.msk [vmem:[%s3 + $0x38] sm:$0xf] %vm432, %v414
  %448 = vst.msk [vmem:[%s3 + $0x3c] sm:$0xf] %vm432, %v415
  // Predicated region
  $region14: #{_lambda_.4} parent=0 // pred_check
    _
  $region15: #{_lambda_.4} parent=0 // pred_check_branch
    %450 = sbr.rel (0) target = $region17
  $region16: #{_lambda_.4} parent=0 // pred_region
    _
  $region17: #{_lambda_.4} parent=0 // pred_fallthru
    _
  // Predicated region
  $region18: #{_lambda_.4} parent=0 // pred_check
    _
  $region19: #{_lambda_.4} parent=0 // pred_check_branch
    %452 = sbr.rel (0) target = $region21
  $region20: #{_lambda_.4} parent=0 // pred_region
    _
  $region21: #{_lambda_.4} parent=0 // pred_fallthru
    _

// kernel: _lambda_.6
$region0: #{_lambda_.6}
  #allocation0 [shape = 'u32[]', space=smem, size = 0x4, offset = 0x4, fixed_abs, tag = 'smem constant byte address 0x4 - core index']
  #allocation1 [shape = 'u32[144,128]{1,0:T(1,128)}', space=vmem, size = 0x12000, scoped, tag = 'internal scratch']
  %s0 = inlined_call_operand.vmem [shape: bf16[9,32,32], index: 0, kind: input, shape index: {}]
  %s1 = inlined_call_operand.vmem [shape: bf16[32,64], index: 1, kind: input, shape index: {}]
  %s2 = inlined_call_operand.vmem [shape: f32[1,64], index: 2, kind: input, shape index: {}]
  %s3 = inlined_call_operand.vmem [shape: bf16[32,64], index: 3, kind: input, shape index: {}]
  %s4 = inlined_call_operand.vmem [shape: f32[1,64], index: 4, kind: input, shape index: {}]
  %s5 = inlined_call_operand.vmem [shape: f32[9,1,64], index: 5, kind: input, shape index: {}]
  %s6 = inlined_call_operand.vmem [shape: f32[1,64], index: 6, kind: input, shape index: {}]
  %s7 = inlined_call_operand.vmem [shape: bf16[64,64], index: 7, kind: input, shape index: {}]
  %s8 = inlined_call_operand.vmem [shape: f32[1,64], index: 8, kind: input, shape index: {}]
  %s9 = inlined_call_operand.vmem [shape: bf16[32,64], index: 9, kind: output, shape index: {}]
  %s10 = sld [smem:[#allocation0]]
  $region46: #{_lambda_.6} parent=0
    _
  %s12 = ssub.s32 1, %s10
  %s13 = scalar_select 0, %s12, %s10
  // Predicated region
  $region2: #{_lambda_.6} parent=0 // pred_check
    _
  $region3: #{_lambda_.6} parent=0 // pred_check_branch
    %15 = sbr.rel (0) target = $region5
  $region4: #{_lambda_.6} parent=0 // pred_region
    _
  $region5: #{_lambda_.6} parent=0 // pred_fallthru
    _
  // Predicated region
  $region6: #{_lambda_.6} parent=0 // pred_check
    _
  $region7: #{_lambda_.6} parent=0 // pred_check_branch
    %17 = sbr.rel (0) target = $region9
  $region8: #{_lambda_.6} parent=0 // pred_region
    _
  $region9: #{_lambda_.6} parent=0 // pred_fallthru
    _
  // Predicated region
  $region10: #{_lambda_.6} parent=0 // pred_check
    _
  $region11: #{_lambda_.6} parent=0 // pred_check_branch
    %19 = sbr.rel (0) target = $region13
  $region12: #{_lambda_.6} parent=0 // pred_region
    _
  $region13: #{_lambda_.6} parent=0 // pred_fallthru
    _
  // Predicated region
  $region14: #{_lambda_.6} parent=0 // pred_check
    _
  $region15: #{_lambda_.6} parent=0 // pred_check_branch
    %21 = sbr.rel (0) target = $region17
  $region16: #{_lambda_.6} parent=0 // pred_region
    _
  $region17: #{_lambda_.6} parent=0 // pred_fallthru
    _
  // Predicated region
  $region18: #{_lambda_.6} parent=0 // pred_check
    _
  $region19: #{_lambda_.6} parent=0 // pred_check_branch
    %23 = sbr.rel (0) target = $region21
  $region20: #{_lambda_.6} parent=0 // pred_region
    _
  $region21: #{_lambda_.6} parent=0 // pred_fallthru
    _
  // Predicated region
  $region22: #{_lambda_.6} parent=0 // pred_check
    _
  $region23: #{_lambda_.6} parent=0 // pred_check_branch
    %25 = sbr.rel (0) target = $region25
  $region24: #{_lambda_.6} parent=0 // pred_region
    _
  $region25: #{_lambda_.6} parent=0 // pred_fallthru
    _
  // Predicated region
  $region26: #{_lambda_.6} parent=0 // pred_check
    _
  $region27: #{_lambda_.6} parent=0 // pred_check_branch
    %27 = sbr.rel (0) target = $region29
  $region28: #{_lambda_.6} parent=0 // pred_region
    _
  $region29: #{_lambda_.6} parent=0 // pred_fallthru
    _
  // Predicated region
  $region30: #{_lambda_.6} parent=0 // pred_check
    _
  $region31: #{_lambda_.6} parent=0 // pred_check_branch
    %29 = sbr.rel (0) target = $region33
  $region32: #{_lambda_.6} parent=0 // pred_region
    _
  $region33: #{_lambda_.6} parent=0 // pred_fallthru
    _
  // Predicated region
  $region34: #{_lambda_.6} parent=0 // pred_check
    _
  $region35: #{_lambda_.6} parent=0 // pred_check_branch
    %31 = sbr.rel (0) target = $region37
  $region36: #{_lambda_.6} parent=0 // pred_region
    _
  $region37: #{_lambda_.6} parent=0 // pred_fallthru
    _
  %v33 = vld [vmem:[%s0] sm:$0xf]
  %v34 = vld [vmem:[%s0 + $0x4] sm:$0xf]
  %v35 = vld [vmem:[%s0 + $0x8] sm:$0xf]
  %v36 = vld [vmem:[%s0 + $0xc] sm:$0xf]
  %v37 = vld [vmem:[%s0 + $0x10] sm:$0xf]
  %v38 = vld [vmem:[%s0 + $0x14] sm:$0xf]
  %v39 = vld [vmem:[%s0 + $0x18] sm:$0xf]
  %v40 = vld [vmem:[%s0 + $0x1c] sm:$0xf]
  %v41 = vld [vmem:[%s0 + $0x20] sm:$0xf]
  %v42 = vld [vmem:[%s0 + $0x24] sm:$0xf]
  %v43 = vld [vmem:[%s0 + $0x28] sm:$0xf]
  %v44 = vld [vmem:[%s0 + $0x2c] sm:$0xf]
  %v45 = vld [vmem:[%s0 + $0x30] sm:$0xf]
  %v46 = vld [vmem:[%s0 + $0x34] sm:$0xf]
  %v47 = vld [vmem:[%s0 + $0x38] sm:$0xf]
  %v48 = vld [vmem:[%s0 + $0x3c] sm:$0xf]
  %v49 = vld [vmem:[%s0 + $0x40] sm:$0xf]
  %v50 = vld [vmem:[%s0 + $0x44] sm:$0xf]
  %v51 = vld [vmem:[%s0 + $0x48] sm:$0xf]
  %v52 = vld [vmem:[%s0 + $0x4c] sm:$0xf]
  %v53 = vld [vmem:[%s0 + $0x50] sm:$0xf]
  %v54 = vld [vmem:[%s0 + $0x54] sm:$0xf]
  %v55 = vld [vmem:[%s0 + $0x58] sm:$0xf]
  %v56 = vld [vmem:[%s0 + $0x5c] sm:$0xf]
  %v57 = vld [vmem:[%s0 + $0x60] sm:$0xf]
  %v58 = vld [vmem:[%s0 + $0x64] sm:$0xf]
  %v59 = vld [vmem:[%s0 + $0x68] sm:$0xf]
  %v60 = vld [vmem:[%s0 + $0x6c] sm:$0xf]
  %v61 = vld [vmem:[%s0 + $0x70] sm:$0xf]
  %v62 = vld [vmem:[%s0 + $0x74] sm:$0xf]
  %v63 = vld [vmem:[%s0 + $0x78] sm:$0xf]
  %v64 = vld [vmem:[%s0 + $0x7c] sm:$0xf]
  %v65 = vld [vmem:[%s0 + $0x80] sm:$0xf]
  %v66 = vld [vmem:[%s0 + $0x84] sm:$0xf]
  %v67 = vld [vmem:[%s0 + $0x88] sm:$0xf]
  %v68 = vld [vmem:[%s0 + $0x8c] sm:$0xf]
  %v69 = vunpack.c.l.bf16 %v49
  %v70 = vunpack.c.l.bf16 %v50
  %v71 = vunpack.c.l.bf16 %v51
  %v72 = vunpack.c.l.bf16 %v52
  %v73 = vunpack.c.l.bf16 %v53
  %v74 = vunpack.c.l.bf16 %v54
  %v75 = vunpack.c.l.bf16 %v55
  %v76 = vunpack.c.l.bf16 %v56
  %v77 = vadd.f32 %v69, %v73
  %v78 = vadd.f32 %v70, %v74
  %v79 = vadd.f32 %v71, %v75
  %v80 = vadd.f32 %v72, %v76
  %v81 = vunpack.c.l.bf16 %v61
  %v82 = vunpack.c.l.bf16 %v62
  %v83 = vunpack.c.l.bf16 %v63
  %v84 = vunpack.c.l.bf16 %v64
  %v85 = vadd.f32 %v77, %v81
  %v86 = vadd.f32 %v78, %v82
  %v87 = vadd.f32 %v79, %v83
  %v88 = vadd.f32 %v80, %v84
  %v89 = vunpack.c.l.bf16 %v65
  %v90 = vunpack.c.l.bf16 %v66
  %v91 = vunpack.c.l.bf16 %v67
  %v92 = vunpack.c.l.bf16 %v68
  %v93 = vadd.f32 %v85, %v89
  %v94 = vadd.f32 %v86, %v90
  %v95 = vadd.f32 %v87, %v91
  %v96 = vadd.f32 %v88, %v92
  %v97 = vmul.f32 %v93, 0.25
  %v98 = vmul.f32 %v94, 0.25
  %v99 = vmul.f32 %v95, 0.25
  %v100 = vmul.f32 %v96, 0.25
  %v101 = vpack.c.bf16 %v98, %v97
  %v102 = vpack.c.bf16 %v100, %v99
  %v103 = vld [vmem:[%s1] sm:$0xf]
  %v104 = vld [vmem:[%s1 + $0x4] sm:$0xf]
  %v105 = vld [vmem:[%s1 + $0x8] sm:$0xf]
  %v106 = vld [vmem:[%s1 + $0xc] sm:$0xf]
  %v107 = vld [vmem:[%s2] sm:$0x1]
  %v109 = vlaneseq
  %v110 = vshrl.u32 %v109, 7
  %v111 = vsub.s32 0, %v110
  %v112 = vrot.slane %v107, %v111
  %v118 = vunpack.c.l.b16 %v103
  %v119 = vunpack.c.l.b16 %v104
  %v120 = vunpack.c.l.b16 %v105
  %v121 = vunpack.c.l.b16 %v106
  %v122 = vpack.c.b16 %v119, %v118
  %v123 = vpack.c.b16 %v121, %v120
  %vm126 = vcmask 261120
  %v128 = vsel %vm126, %v101, 0
  %v131 = vsel %vm126, %v102, 0
  %133 = vmatprep.subr.bf16.mxu0 0
  %134 = vmatpush1.bf16.msra.mxu0 %v122
  %135 = vmatprep.subr.bf16.mxu0 0
  %136 = vmatpush1.bf16.msra.mxu0 %v123
  %137 = vmatprep.subr.bf16.mxu0 0
  %138 = vmatpush1.bf16.msra.mxu0 0
  %139 = vmatprep.subr.bf16.mxu0 0
  %140 = vmatpush1.bf16.msra.mxu0 0
  %141 = vmatprep.subr.bf16.mxu0 0
  %142 = vmatpush1.bf16.msra.mxu0 0
  %143 = vmatprep.subr.bf16.mxu0 0
  %144 = vmatpush1.bf16.msra.mxu0 0
  %145 = vmatprep.subr.bf16.mxu0 0
  %146 = vmatpush1.bf16.msra.mxu0 0
  %147 = vmatprep.subr.bf16.mxu0 0
  %148 = vmatpush1.bf16.msra.mxu0 0
  %149 = vmatprep.subr.bf16.mxu0 0
  %150 = vmatpush1.bf16.msra.mxu0 0
  %151 = vmatprep.subr.bf16.mxu0 0
  %152 = vmatpush1.bf16.msra.mxu0 0
  %153 = vmatprep.subr.bf16.mxu0 0
  %154 = vmatpush1.bf16.msra.mxu0 0
  %155 = vmatprep.subr.bf16.mxu0 0
  %156 = vmatpush1.bf16.msra.mxu0 0
  %157 = vmatprep.subr.bf16.mxu0 0
  %158 = vmatpush1.bf16.msra.mxu0 0
  %159 = vmatprep.subr.bf16.mxu0 0
  %160 = vmatpush1.bf16.msra.mxu0 0
  %161 = vmatprep.subr.bf16.mxu0 0
  %162 = vmatpush1.bf16.msra.mxu0 0
  %163 = vmatprep.subr.bf16.mxu0 0
  %164 = vmatpush1.bf16.msra.mxu0 0
  %165 = vmatprep.mubr.bf16.mxu0 0
  %166 = vmatmul.mubr.bf16.gmra.mrb[0].mxu0 %v128
  %v167 = vpop.f32.mrb[0].mxu0
  %v168 = vadd.f32 %v112, %v167
  %v169 = vpop.f32.mrb[0].mxu0
  %v170 = vpop.f32.mrb[0].mxu0
  %v171 = vadd.f32 %v112, %v170
  %v172 = vpop.f32.mrb[0].mxu0
  %173 = vmatprep.mubr.bf16.mxu0 0
  %174 = vmatmul.mubr.bf16.gmra.mrb[0].mxu0 %v131
  %v175 = vpop.f32.mrb[0].mxu0
  %v176 = vadd.f32 %v112, %v175
  %v177 = vpop.f32.mrb[0].mxu0
  %v178 = vpop.f32.mrb[0].mxu0
  %v179 = vadd.f32 %v112, %v178
  %v180 = vpop.f32.mrb[0].mxu0
  %181 = vdwg.mxu0
  %v182 = vld [vmem:[%s3] sm:$0xf]
  %v183 = vld [vmem:[%s3 + $0x4] sm:$0xf]
  %v184 = vld [vmem:[%s3 + $0x8] sm:$0xf]
  %v185 = vld [vmem:[%s3 + $0xc] sm:$0xf]
  %v186 = vld [vmem:[%s4] sm:$0x1]
  %v188 = vlaneseq
  %v189 = vshrl.u32 %v188, 7
  %v190 = vsub.s32 0, %v189
  %v191 = vrot.slane %v186, %v190
  %v229 = vunpack.c.l.b16 %v33
  %v230 = vunpack.c.l.b16 %v34
  %v231 = vunpack.c.l.b16 %v35
  %v232 = vunpack.c.l.b16 %v36
  %v233 = vunpack.c.l.b16 %v37
  %v234 = vunpack.c.l.b16 %v38
  %v235 = vunpack.c.l.b16 %v39
  %v236 = vunpack.c.l.b16 %v40
  %v237 = vunpack.c.l.b16 %v41
  %v238 = vunpack.c.l.b16 %v42
  %v239 = vunpack.c.l.b16 %v43
  %v240 = vunpack.c.l.b16 %v44
  %v241 = vunpack.c.l.b16 %v45
  %v242 = vunpack.c.l.b16 %v46
  %v243 = vunpack.c.l.b16 %v47
  %v244 = vunpack.c.l.b16 %v48
  %v245 = vunpack.c.l.b16 %v49
  %v246 = vunpack.c.l.b16 %v50
  %v247 = vunpack.c.l.b16 %v51
  %v248 = vunpack.c.l.b16 %v52
  %v249 = vunpack.c.l.b16 %v53
  %v250 = vunpack.c.l.b16 %v54
  %v251 = vunpack.c.l.b16 %v55
  %v252 = vunpack.c.l.b16 %v56
  %v253 = vunpack.c.l.b16 %v57
  %v254 = vunpack.c.l.b16 %v58
  %v255 = vunpack.c.l.b16 %v59
  %v256 = vunpack.c.l.b16 %v60
  %v257 = vunpack.c.l.b16 %v61
  %v258 = vunpack.c.l.b16 %v62
  %v259 = vunpack.c.l.b16 %v63
  %v260 = vunpack.c.l.b16 %v64
  %v261 = vunpack.c.l.b16 %v65
  %v262 = vunpack.c.l.b16 %v66
  %v263 = vunpack.c.l.b16 %v67
  %v264 = vunpack.c.l.b16 %v68
  %v265 = vpack.c.b16 %v230, %v229
  %v266 = vpack.c.b16 %v232, %v231
  %v267 = vpack.c.b16 %v234, %v233
  %v268 = vpack.c.b16 %v236, %v235
  %v269 = vpack.c.b16 %v238, %v237
  %v270 = vpack.c.b16 %v240, %v239
  %v271 = vpack.c.b16 %v242, %v241
  %v272 = vpack.c.b16 %v244, %v243
  %v273 = vpack.c.b16 %v246, %v245
  %v274 = vpack.c.b16 %v248, %v247
  %v275 = vpack.c.b16 %v250, %v249
  %v276 = vpack.c.b16 %v252, %v251
  %v277 = vpack.c.b16 %v254, %v253
  %v278 = vpack.c.b16 %v256, %v255
  %v279 = vpack.c.b16 %v258, %v257
  %v280 = vpack.c.b16 %v260, %v259
  %v281 = vpack.c.b16 %v262, %v261
  %v282 = vpack.c.b16 %v264, %v263
  %v287 = vunpack.c.l.b16 %v182
  %v288 = vunpack.c.l.b16 %v183
  %v289 = vunpack.c.l.b16 %v184
  %v290 = vunpack.c.l.b16 %v185
  %v291 = vpack.c.b16 %v288, %v287
  %v292 = vpack.c.b16 %v290, %v289
  %v296 = vsel %vm126, %v265, 0
  %v299 = vsel %vm126, %v266, 0
  %v302 = vsel %vm126, %v267, 0
  %v305 = vsel %vm126, %v268, 0
  %v308 = vsel %vm126, %v269, 0
  %v311 = vsel %vm126, %v270, 0
  %v314 = vsel %vm126, %v271, 0
  %v317 = vsel %vm126, %v272, 0
  %v320 = vsel %vm126, %v273, 0
  %v323 = vsel %vm126, %v274, 0
  %v326 = vsel %vm126, %v275, 0
  %v329 = vsel %vm126, %v276, 0
  %v332 = vsel %vm126, %v277, 0
  %v335 = vsel %vm126, %v278, 0
  %v338 = vsel %vm126, %v279, 0
  %v341 = vsel %vm126, %v280, 0
  %v344 = vsel %vm126, %v281, 0
  %v347 = vsel %vm126, %v282, 0
  %349 = vmatprep.subr.bf16.mxu0 0
  %350 = vmatpush1.bf16.msra.mxu0 %v291
  %351 = vmatprep.subr.bf16.mxu0 0
  %352 = vmatpush1.bf16.msra.mxu0 %v292
  %353 = vmatprep.subr.bf16.mxu0 0
  %354 = vmatpush1.bf16.msra.mxu0 0
  %355 = vmatprep.subr.bf16.mxu0 0
  %356 = vmatpush1.bf16.msra.mxu0 0
  %357 = vmatprep.subr.bf16.mxu0 0
  %358 = vmatpush1.bf16.msra.mxu0 0
  %359 = vmatprep.subr.bf16.mxu0 0
  %360 = vmatpush1.bf16.msra.mxu0 0
  %361 = vmatprep.subr.bf16.mxu0 0
  %362 = vmatpush1.bf16.msra.mxu0 0
  %363 = vmatprep.subr.bf16.mxu0 0
  %364 = vmatpush1.bf16.msra.mxu0 0
  %365 = vmatprep.subr.bf16.mxu0 0
  %366 = vmatpush1.bf16.msra.mxu0 0
  %367 = vmatprep.subr.bf16.mxu0 0
  %368 = vmatpush1.bf16.msra.mxu0 0
  %369 = vmatprep.subr.bf16.mxu0 0
  %370 = vmatpush1.bf16.msra.mxu0 0
  %371 = vmatprep.subr.bf16.mxu0 0
  %372 = vmatpush1.bf16.msra.mxu0 0
  %373 = vmatprep.subr.bf16.mxu0 0
  %374 = vmatpush1.bf16.msra.mxu0 0
  %375 = vmatprep.subr.bf16.mxu0 0
  %376 = vmatpush1.bf16.msra.mxu0 0
  %377 = vmatprep.subr.bf16.mxu0 0
  %378 = vmatpush1.bf16.msra.mxu0 0
  %379 = vmatprep.subr.bf16.mxu0 0
  %380 = vmatpush1.bf16.msra.mxu0 0
  %381 = vmatprep.mubr.bf16.mxu0 0
  %382 = vmatmul.mubr.bf16.gmra.mrb[0].mxu0 %v296
  %v383 = vpop.f32.mrb[0].mxu0
  %v384 = vadd.f32 %v191, %v383
  %v385 = vpop.f32.mrb[0].mxu0
  %v386 = vpop.f32.mrb[0].mxu0
  %v387 = vadd.f32 %v191, %v386
  %v388 = vpop.f32.mrb[0].mxu0
  %389 = vmatprep.mubr.bf16.mxu0 0
  %390 = vmatmul.mubr.bf16.gmra.mrb[0].mxu0 %v299
  %v391 = vpop.f32.mrb[0].mxu0
  %v392 = vadd.f32 %v191, %v391
  %v393 = vpop.f32.mrb[0].mxu0
  %v394 = vpop.f32.mrb[0].mxu0
  %v395 = vadd.f32 %v191, %v394
  %v396 = vpop.f32.mrb[0].mxu0
  %397 = vmatprep.mubr.bf16.mxu0 0
  %398 = vmatmul.mubr.bf16.gmra.mrb[0].mxu0 %v302
  %v399 = vpop.f32.mrb[0].mxu0
  %v400 = vadd.f32 %v191, %v399
  %v401 = vpop.f32.mrb[0].mxu0
  %v402 = vpop.f32.mrb[0].mxu0
  %v403 = vadd.f32 %v191, %v402
  %v404 = vpop.f32.mrb[0].mxu0
  %405 = vmatprep.mubr.bf16.mxu0 0
  %406 = vmatmul.mubr.bf16.gmra.mrb[0].mxu0 %v305
  %v407 = vpop.f32.mrb[0].mxu0
  %v408 = vadd.f32 %v191, %v407
  %v409 = vpop.f32.mrb[0].mxu0
  %v410 = vpop.f32.mrb[0].mxu0
  %v411 = vadd.f32 %v191, %v410
  %v412 = vpop.f32.mrb[0].mxu0
  %413 = vmatprep.mubr.bf16.mxu0 0
  %414 = vmatmul.mubr.bf16.gmra.mrb[0].mxu0 %v308
  %v415 = vpop.f32.mrb[0].mxu0
  %v416 = vadd.f32 %v191, %v415
  %v417 = vpop.f32.mrb[0].mxu0
  %v418 = vpop.f32.mrb[0].mxu0
  %v419 = vadd.f32 %v191, %v418
  %v420 = vpop.f32.mrb[0].mxu0
  %421 = vmatprep.mubr.bf16.mxu0 0
  %422 = vmatmul.mubr.bf16.gmra.mrb[0].mxu0 %v311
  %v423 = vpop.f32.mrb[0].mxu0
  %v424 = vadd.f32 %v191, %v423
  %v425 = vpop.f32.mrb[0].mxu0
  %v426 = vpop.f32.mrb[0].mxu0
  %v427 = vadd.f32 %v191, %v426
  %v428 = vpop.f32.mrb[0].mxu0
  %429 = vmatprep.mubr.bf16.mxu0 0
  %430 = vmatmul.mubr.bf16.gmra.mrb[0].mxu0 %v314
  %v431 = vpop.f32.mrb[0].mxu0
  %v432 = vadd.f32 %v191, %v431
  %v433 = vpop.f32.mrb[0].mxu0
  %v434 = vpop.f32.mrb[0].mxu0
  %v435 = vadd.f32 %v191, %v434
  %v436 = vpop.f32.mrb[0].mxu0
  %437 = vmatprep.mubr.bf16.mxu0 0
  %438 = vmatmul.mubr.bf16.gmra.mrb[0].mxu0 %v317
  %v439 = vpop.f32.mrb[0].mxu0
  %v440 = vadd.f32 %v191, %v439
  %v441 = vpop.f32.mrb[0].mxu0
  %v442 = vpop.f32.mrb[0].mxu0
  %v443 = vadd.f32 %v191, %v442
  %v444 = vpop.f32.mrb[0].mxu0
  %445 = vmatprep.mubr.bf16.mxu0 0
  %446 = vmatmul.mubr.bf16.gmra.mrb[0].mxu0 %v320
  %v447 = vpop.f32.mrb[0].mxu0
  %v448 = vadd.f32 %v191, %v447
  %v449 = vpop.f32.mrb[0].mxu0
  %v450 = vpop.f32.mrb[0].mxu0
  %v451 = vadd.f32 %v191, %v450
  %v452 = vpop.f32.mrb[0].mxu0
  %453 = vmatprep.mubr.bf16.mxu0 0
  %454 = vmatmul.mubr.bf16.gmra.mrb[0].mxu0 %v323
  %v455 = vpop.f32.mrb[0].mxu0
  %v456 = vadd.f32 %v191, %v455
  %v457 = vpop.f32.mrb[0].mxu0
  %v458 = vpop.f32.mrb[0].mxu0
  %v459 = vadd.f32 %v191, %v458
  %v460 = vpop.f32.mrb[0].mxu0
  %461 = vmatprep.mubr.bf16.mxu0 0
  %462 = vmatmul.mubr.bf16.gmra.mrb[0].mxu0 %v326
  %v463 = vpop.f32.mrb[0].mxu0
  %v464 = vadd.f32 %v191, %v463
  %v465 = vpop.f32.mrb[0].mxu0
  %v466 = vpop.f32.mrb[0].mxu0
  %v467 = vadd.f32 %v191, %v466
  %v468 = vpop.f32.mrb[0].mxu0
  %469 = vmatprep.mubr.bf16.mxu0 0
  %470 = vmatmul.mubr.bf16.gmra.mrb[0].mxu0 %v329
  %v471 = vpop.f32.mrb[0].mxu0
  %v472 = vadd.f32 %v191, %v471
  %v473 = vpop.f32.mrb[0].mxu0
  %v474 = vpop.f32.mrb[0].mxu0
  %v475 = vadd.f32 %v191, %v474
  %v476 = vpop.f32.mrb[0].mxu0
  %477 = vmatprep.mubr.bf16.mxu0 0
  %478 = vmatmul.mubr.bf16.gmra.mrb[0].mxu0 %v332
  %v479 = vpop.f32.mrb[0].mxu0
  %v480 = vadd.f32 %v191, %v479
  %v481 = vpop.f32.mrb[0].mxu0
  %v482 = vpop.f32.mrb[0].mxu0
  %v483 = vadd.f32 %v191, %v482
  %v484 = vpop.f32.mrb[0].mxu0
  %485 = vmatprep.mubr.bf16.mxu0 0
  %486 = vmatmul.mubr.bf16.gmra.mrb[0].mxu0 %v335
  %v487 = vpop.f32.mrb[0].mxu0
  %v488 = vadd.f32 %v191, %v487
  %v489 = vpop.f32.mrb[0].mxu0
  %v490 = vpop.f32.mrb[0].mxu0
  %v491 = vadd.f32 %v191, %v490
  %v492 = vpop.f32.mrb[0].mxu0
  %493 = vmatprep.mubr.bf16.mxu0 0
  %494 = vmatmul.mubr.bf16.gmra.mrb[0].mxu0 %v338
  %v495 = vpop.f32.mrb[0].mxu0
  %v496 = vadd.f32 %v191, %v495
  %v497 = vpop.f32.mrb[0].mxu0
  %v498 = vpop.f32.mrb[0].mxu0
  %v499 = vadd.f32 %v191, %v498
  %v500 = vpop.f32.mrb[0].mxu0
  %501 = vmatprep.mubr.bf16.mxu0 0
  %502 = vmatmul.mubr.bf16.gmra.mrb[0].mxu0 %v341
  %v503 = vpop.f32.mrb[0].mxu0
  %v504 = vadd.f32 %v191, %v503
  %v505 = vpop.f32.mrb[0].mxu0
  %v506 = vpop.f32.mrb[0].mxu0
  %v507 = vadd.f32 %v191, %v506
  %v508 = vpop.f32.mrb[0].mxu0
  %509 = vmatprep.mubr.bf16.mxu0 0
  %510 = vmatmul.mubr.bf16.gmra.mrb[0].mxu0 %v344
  %v511 = vpop.f32.mrb[0].mxu0
  %v512 = vadd.f32 %v191, %v511
  %v513 = vpop.f32.mrb[0].mxu0
  %v514 = vpop.f32.mrb[0].mxu0
  %v515 = vadd.f32 %v191, %v514
  %v516 = vpop.f32.mrb[0].mxu0
  %517 = vmatprep.mubr.bf16.mxu0 0
  %518 = vmatmul.mubr.bf16.gmra.mrb[0].mxu0 %v347
  %v519 = vpop.f32.mrb[0].mxu0
  %v520 = vadd.f32 %v191, %v519
  %v521 = vpop.f32.mrb[0].mxu0
  %v522 = vpop.f32.mrb[0].mxu0
  %v523 = vadd.f32 %v191, %v522
  %v524 = vpop.f32.mrb[0].mxu0
  %525 = vdwg.mxu0
  %v526 = vmul.f32 %v384, %v384
  %v527 = vmul.f32 %v387, %v387
  %v528 = vmul.f32 %v392, %v392
  %v529 = vmul.f32 %v395, %v395
  %v530 = vmul.f32 %v400, %v400
  %v531 = vmul.f32 %v403, %v403
  %v532 = vmul.f32 %v408, %v408
  %v533 = vmul.f32 %v411, %v411
  %v534 = vmul.f32 %v416, %v416
  %v535 = vmul.f32 %v419, %v419
  %v536 = vmul.f32 %v424, %v424
  %v537 = vmul.f32 %v427, %v427
  %v538 = vmul.f32 %v432, %v432
  %v539 = vmul.f32 %v435, %v435
  %v540 = vmul.f32 %v440, %v440
  %v541 = vmul.f32 %v443, %v443
  %v542 = vmul.f32 %v448, %v448
  %v543 = vmul.f32 %v451, %v451
  %v544 = vmul.f32 %v456, %v456
  %v545 = vmul.f32 %v459, %v459
  %v546 = vmul.f32 %v464, %v464
  %v547 = vmul.f32 %v467, %v467
  %v548 = vmul.f32 %v472, %v472
  %v549 = vmul.f32 %v475, %v475
  %v550 = vmul.f32 %v480, %v480
  %v551 = vmul.f32 %v483, %v483
  %v552 = vmul.f32 %v488, %v488
  %v553 = vmul.f32 %v491, %v491
  %v554 = vmul.f32 %v496, %v496
  %v555 = vmul.f32 %v499, %v499
  %v556 = vmul.f32 %v504, %v504
  %v557 = vmul.f32 %v507, %v507
  %v558 = vmul.f32 %v512, %v512
  %v559 = vmul.f32 %v515, %v515
  %v560 = vmul.f32 %v520, %v520
  %v561 = vmul.f32 %v523, %v523
  %v562 = vmul.f32 %v384, %v526
  %v563 = vmul.f32 %v387, %v527
  %v564 = vmul.f32 %v392, %v528
  %v565 = vmul.f32 %v395, %v529
  %v566 = vmul.f32 %v400, %v530
  %v567 = vmul.f32 %v403, %v531
  %v568 = vmul.f32 %v408, %v532
  %v569 = vmul.f32 %v411, %v533
  %v570 = vmul.f32 %v416, %v534
  %v571 = vmul.f32 %v419, %v535
  %v572 = vmul.f32 %v424, %v536
  %v573 = vmul.f32 %v427, %v537
  %v574 = vmul.f32 %v432, %v538
  %v575 = vmul.f32 %v435, %v539
  %v576 = vmul.f32 %v440, %v540
  %v577 = vmul.f32 %v443, %v541
  %v578 = vmul.f32 %v448, %v542
  %v579 = vmul.f32 %v451, %v543
  %v580 = vmul.f32 %v456, %v544
  %v581 = vmul.f32 %v459, %v545
  %v582 = vmul.f32 %v464, %v546
  %v583 = vmul.f32 %v467, %v547
  %v584 = vmul.f32 %v472, %v548
  %v585 = vmul.f32 %v475, %v549
  %v586 = vmul.f32 %v480, %v550
  %v587 = vmul.f32 %v483, %v551
  %v588 = vmul.f32 %v488, %v552
  %v589 = vmul.f32 %v491, %v553
  %v590 = vmul.f32 %v496, %v554
  %v591 = vmul.f32 %v499, %v555
  %v592 = vmul.f32 %v504, %v556
  %v593 = vmul.f32 %v507, %v557
  %v594 = vmul.f32 %v512, %v558
  %v595 = vmul.f32 %v515, %v559
  %v596 = vmul.f32 %v520, %v560
  %v597 = vmul.f32 %v523, %v561
  %v598 = vmul.f32 %v562, 0.044715
  %v599 = vmul.f32 %v563, 0.044715
  %v600 = vmul.f32 %v564, 0.044715
  %v601 = vmul.f32 %v565, 0.044715
  %v602 = vmul.f32 %v566, 0.044715
  %v603 = vmul.f32 %v567, 0.044715
  %v604 = vmul.f32 %v568, 0.044715
  %v605 = vmul.f32 %v569, 0.044715
  %v606 = vmul.f32 %v570, 0.044715
  %v607 = vmul.f32 %v571, 0.044715
  %v608 = vmul.f32 %v572, 0.044715
  %v609 = vmul.f32 %v573, 0.044715
  %v610 = vmul.f32 %v574, 0.044715
  %v611 = vmul.f32 %v575, 0.044715
  %v612 = vmul.f32 %v576, 0.044715
  %v613 = vmul.f32 %v577, 0.044715
  %v614 = vmul.f32 %v578, 0.044715
  %v615 = vmul.f32 %v579, 0.044715
  %v616 = vmul.f32 %v580, 0.044715
  %v617 = vmul.f32 %v581, 0.044715
  %v618 = vmul.f32 %v582, 0.044715
  %v619 = vmul.f32 %v583, 0.044715
  %v620 = vmul.f32 %v584, 0.044715
  %v621 = vmul.f32 %v585, 0.044715
  %v622 = vmul.f32 %v586, 0.044715
  %v623 = vmul.f32 %v587, 0.044715
  %v624 = vmul.f32 %v588, 0.044715
  %v625 = vmul.f32 %v589, 0.044715
  %v626 = vmul.f32 %v590, 0.044715
  %v627 = vmul.f32 %v591, 0.044715
  %v628 = vmul.f32 %v592, 0.044715
  %v629 = vmul.f32 %v593, 0.044715
  %v630 = vmul.f32 %v594, 0.044715
  %v631 = vmul.f32 %v595, 0.044715
  %v632 = vmul.f32 %v596, 0.044715
  %v633 = vmul.f32 %v597, 0.044715
  %v634 = vadd.f32 %v384, %v598
  %v635 = vadd.f32 %v387, %v599
  %v636 = vadd.f32 %v392, %v600
  %v637 = vadd.f32 %v395, %v601
  %v638 = vadd.f32 %v400, %v602
  %v639 = vadd.f32 %v403, %v603
  %v640 = vadd.f32 %v408, %v604
  %v641 = vadd.f32 %v411, %v605
  %v642 = vadd.f32 %v416, %v606
  %v643 = vadd.f32 %v419, %v607
  %v644 = vadd.f32 %v424, %v608
  %v645 = vadd.f32 %v427, %v609
  %v646 = vadd.f32 %v432, %v610
  %v647 = vadd.f32 %v435, %v611
  %v648 = vadd.f32 %v440, %v612
  %v649 = vadd.f32 %v443, %v613
  %v650 = vadd.f32 %v448, %v614
  %v651 = vadd.f32 %v451, %v615
  %v652 = vadd.f32 %v456, %v616
  %v653 = vadd.f32 %v459, %v617
  %v654 = vadd.f32 %v464, %v618
  %v655 = vadd.f32 %v467, %v619
  %v656 = vadd.f32 %v472, %v620
  %v657 = vadd.f32 %v475, %v621
  %v658 = vadd.f32 %v480, %v622
  %v659 = vadd.f32 %v483, %v623
  %v660 = vadd.f32 %v488, %v624
  %v661 = vadd.f32 %v491, %v625
  %v662 = vadd.f32 %v496, %v626
  %v663 = vadd.f32 %v499, %v627
  %v664 = vadd.f32 %v504, %v628
  %v665 = vadd.f32 %v507, %v629
  %v666 = vadd.f32 %v512, %v630
  %v667 = vadd.f32 %v515, %v631
  %v668 = vadd.f32 %v520, %v632
  %v669 = vadd.f32 %v523, %v633
  %v670 = vmul.f32 %v634, 0.7978846
  %v671 = vmul.f32 %v635, 0.7978846
  %v672 = vmul.f32 %v636, 0.7978846
  %v673 = vmul.f32 %v637, 0.7978846
  %v674 = vmul.f32 %v638, 0.7978846
  %v675 = vmul.f32 %v639, 0.7978846
  %v676 = vmul.f32 %v640, 0.7978846
  %v677 = vmul.f32 %v641, 0.7978846
  %v678 = vmul.f32 %v642, 0.7978846
  %v679 = vmul.f32 %v643, 0.7978846
  %v680 = vmul.f32 %v644, 0.7978846
  %v681 = vmul.f32 %v645, 0.7978846
  %v682 = vmul.f32 %v646, 0.7978846
  %v683 = vmul.f32 %v647, 0.7978846
  %v684 = vmul.f32 %v648, 0.7978846
  %v685 = vmul.f32 %v649, 0.7978846
  %v686 = vmul.f32 %v650, 0.7978846
  %v687 = vmul.f32 %v651, 0.7978846
  %v688 = vmul.f32 %v652, 0.7978846
  %v689 = vmul.f32 %v653, 0.7978846
  %v690 = vmul.f32 %v654, 0.7978846
  %v691 = vmul.f32 %v655, 0.7978846
  %v692 = vmul.f32 %v656, 0.7978846
  %v693 = vmul.f32 %v657, 0.7978846
  %v694 = vmul.f32 %v658, 0.7978846
  %v695 = vmul.f32 %v659, 0.7978846
  %v696 = vmul.f32 %v660, 0.7978846
  %v697 = vmul.f32 %v661, 0.7978846
  %v698 = vmul.f32 %v662, 0.7978846
  %v699 = vmul.f32 %v663, 0.7978846
  %v700 = vmul.f32 %v664, 0.7978846
  %v701 = vmul.f32 %v665, 0.7978846
  %v702 = vmul.f32 %v666, 0.7978846
  %v703 = vmul.f32 %v667, 0.7978846
  %v704 = vmul.f32 %v668, 0.7978846
  %v705 = vmul.f32 %v669, 0.7978846
  %v706 = vtanh.pop %v670
  %v707 = vtanh.pop %v671
  %v708 = vtanh.pop %v672
  %v709 = vtanh.pop %v673
  %v710 = vtanh.pop %v674
  %v711 = vtanh.pop %v675
  %v712 = vtanh.pop %v676
  %v713 = vtanh.pop %v677
  %v714 = vtanh.pop %v678
  %v715 = vtanh.pop %v679
  %v716 = vtanh.pop %v680
  %v717 = vtanh.pop %v681
  %v718 = vtanh.pop %v682
  %v719 = vtanh.pop %v683
  %v720 = vtanh.pop %v684
  %v721 = vtanh.pop %v685
  %v722 = vtanh.pop %v686
  %v723 = vtanh.pop %v687
  %v724 = vtanh.pop %v688
  %v725 = vtanh.pop %v689
  %v726 = vtanh.pop %v690
  %v727 = vtanh.pop %v691
  %v728 = vtanh.pop %v692
  %v729 = vtanh.pop %v693
  %v730 = vtanh.pop %v694
  %v731 = vtanh.pop %v695
  %v732 = vtanh.pop %v696
  %v733 = vtanh.pop %v697
  %v734 = vtanh.pop %v698
  %v735 = vtanh.pop %v699
  %v736 = vtanh.pop %v700
  %v737 = vtanh.pop %v701
  %v738 = vtanh.pop %v702
  %v739 = vtanh.pop %v703
  %v740 = vtanh.pop %v704
  %v741 = vtanh.pop %v705
  %v742 = vadd.f32 %v706, 1.0
  %v743 = vadd.f32 %v707, 1.0
  %v744 = vadd.f32 %v708, 1.0
  %v745 = vadd.f32 %v709, 1.0
  %v746 = vadd.f32 %v710, 1.0
  %v747 = vadd.f32 %v711, 1.0
  %v748 = vadd.f32 %v712, 1.0
  %v749 = vadd.f32 %v713, 1.0
  %v750 = vadd.f32 %v714, 1.0
  %v751 = vadd.f32 %v715, 1.0
  %v752 = vadd.f32 %v716, 1.0
  %v753 = vadd.f32 %v717, 1.0
  %v754 = vadd.f32 %v718, 1.0
  %v755 = vadd.f32 %v719, 1.0
  %v756 = vadd.f32 %v720, 1.0
  %v757 = vadd.f32 %v721, 1.0
  %v758 = vadd.f32 %v722, 1.0
  %v759 = vadd.f32 %v723, 1.0
  %v760 = vadd.f32 %v724, 1.0
  %v761 = vadd.f32 %v725, 1.0
  %v762 = vadd.f32 %v726, 1.0
  %v763 = vadd.f32 %v727, 1.0
  %v764 = vadd.f32 %v728, 1.0
  %v765 = vadd.f32 %v729, 1.0
  %v766 = vadd.f32 %v730, 1.0
  %v767 = vadd.f32 %v731, 1.0
  %v768 = vadd.f32 %v732, 1.0
  %v769 = vadd.f32 %v733, 1.0
  %v770 = vadd.f32 %v734, 1.0
  %v771 = vadd.f32 %v735, 1.0
  %v772 = vadd.f32 %v736, 1.0
  %v773 = vadd.f32 %v737, 1.0
  %v774 = vadd.f32 %v738, 1.0
  %v775 = vadd.f32 %v739, 1.0
  %v776 = vadd.f32 %v740, 1.0
  %v777 = vadd.f32 %v741, 1.0
  %v778 = vmul.f32 %v742, 0.5
  %v779 = vmul.f32 %v743, 0.5
  %v780 = vmul.f32 %v744, 0.5
  %v781 = vmul.f32 %v745, 0.5
  %v782 = vmul.f32 %v746, 0.5
  %v783 = vmul.f32 %v747, 0.5
  %v784 = vmul.f32 %v748, 0.5
  %v785 = vmul.f32 %v749, 0.5
  %v786 = vmul.f32 %v750, 0.5
  %v787 = vmul.f32 %v751, 0.5
  %v788 = vmul.f32 %v752, 0.5
  %v789 = vmul.f32 %v753, 0.5
  %v790 = vmul.f32 %v754, 0.5
  %v791 = vmul.f32 %v755, 0.5
  %v792 = vmul.f32 %v756, 0.5
  %v793 = vmul.f32 %v757, 0.5
  %v794 = vmul.f32 %v758, 0.5
  %v795 = vmul.f32 %v759, 0.5
  %v796 = vmul.f32 %v760, 0.5
  %v797 = vmul.f32 %v761, 0.5
  %v798 = vmul.f32 %v762, 0.5
  %v799 = vmul.f32 %v763, 0.5
  %v800 = vmul.f32 %v764, 0.5
  %v801 = vmul.f32 %v765, 0.5
  %v802 = vmul.f32 %v766, 0.5
  %v803 = vmul.f32 %v767, 0.5
  %v804 = vmul.f32 %v768, 0.5
  %v805 = vmul.f32 %v769, 0.5
  %v806 = vmul.f32 %v770, 0.5
  %v807 = vmul.f32 %v771, 0.5
  %v808 = vmul.f32 %v772, 0.5
  %v809 = vmul.f32 %v773, 0.5
  %v810 = vmul.f32 %v774, 0.5
  %v811 = vmul.f32 %v775, 0.5
  %v812 = vmul.f32 %v776, 0.5
  %v813 = vmul.f32 %v777, 0.5
  %v814 = vmul.f32 %v384, %v778
  %v815 = vmul.f32 %v387, %v779
  %v816 = vmul.f32 %v392, %v780
  %v817 = vmul.f32 %v395, %v781
  %v818 = vmul.f32 %v400, %v782
  %v819 = vmul.f32 %v403, %v783
  %v820 = vmul.f32 %v408, %v784
  %v821 = vmul.f32 %v411, %v785
  %v822 = vmul.f32 %v416, %v786
  %v823 = vmul.f32 %v419, %v787
  %v824 = vmul.f32 %v424, %v788
  %v825 = vmul.f32 %v427, %v789
  %v826 = vmul.f32 %v432, %v790
  %v827 = vmul.f32 %v435, %v791
  %v828 = vmul.f32 %v440, %v792
  %v829 = vmul.f32 %v443, %v793
  %v830 = vmul.f32 %v448, %v794
  %v831 = vmul.f32 %v451, %v795
  %v832 = vmul.f32 %v456, %v796
  %v833 = vmul.f32 %v459, %v797
  %v834 = vmul.f32 %v464, %v798
  %v835 = vmul.f32 %v467, %v799
  %v836 = vmul.f32 %v472, %v800
  %v837 = vmul.f32 %v475, %v801
  %v838 = vmul.f32 %v480, %v802
  %v839 = vmul.f32 %v483, %v803
  %v840 = vmul.f32 %v488, %v804
  %v841 = vmul.f32 %v491, %v805
  %v842 = vmul.f32 %v496, %v806
  %v843 = vmul.f32 %v499, %v807
  %v844 = vmul.f32 %v504, %v808
  %v845 = vmul.f32 %v507, %v809
  %v846 = vmul.f32 %v512, %v810
  %v847 = vmul.f32 %v515, %v811
  %v848 = vmul.f32 %v520, %v812
  %v849 = vmul.f32 %v523, %v813
  %v850 = vld [vmem:[%s5] sm:$0x1]
  %v851 = vld [vmem:[%s5 + $0x1] sm:$0x1]
  %v852 = vld [vmem:[%s5 + $0x2] sm:$0x1]
  %v853 = vld [vmem:[%s5 + $0x3] sm:$0x1]
  %v854 = vld [vmem:[%s5 + $0x4] sm:$0x1]
  %v855 = vld [vmem:[%s5 + $0x5] sm:$0x1]
  %v856 = vld [vmem:[%s5 + $0x6] sm:$0x1]
  %v857 = vld [vmem:[%s5 + $0x7] sm:$0x1]
  %v858 = vld [vmem:[%s5 + $0x8] sm:$0x1]
  %v868 = vlaneseq
  %v869 = vshrl.u32 %v868, 7
  %v870 = vsub.s32 0, %v869
  %v871 = vrot.slane %v850, %v870
  %v872 = vlaneseq
  %v873 = vshrl.u32 %v872, 7
  %v874 = vsub.s32 0, %v873
  %v875 = vrot.slane %v851, %v874
  %v876 = vlaneseq
  %v877 = vshrl.u32 %v876, 7
  %v878 = vsub.s32 0, %v877
  %v879 = vrot.slane %v852, %v878
  %v880 = vlaneseq
  %v881 = vshrl.u32 %v880, 7
  %v882 = vsub.s32 0, %v881
  %v883 = vrot.slane %v853, %v882
  %v884 = vlaneseq
  %v885 = vshrl.u32 %v884, 7
  %v886 = vsub.s32 0, %v885
  %v887 = vrot.slane %v854, %v886
  %v888 = vlaneseq
  %v889 = vshrl.u32 %v888, 7
  %v890 = vsub.s32 0, %v889
  %v891 = vrot.slane %v855, %v890
  %v892 = vlaneseq
  %v893 = vshrl.u32 %v892, 7
  %v894 = vsub.s32 0, %v893
  %v895 = vrot.slane %v856, %v894
  %v896 = vlaneseq
  %v897 = vshrl.u32 %v896, 7
  %v898 = vsub.s32 0, %v897
  %v899 = vrot.slane %v857, %v898
  %v900 = vlaneseq
  %v901 = vshrl.u32 %v900, 7
  %v902 = vsub.s32 0, %v901
  %v903 = vrot.slane %v858, %v902
  %v913 = vmul.f32 %v814, %v871
  %v914 = vmul.f32 %v815, %v871
  %v915 = vmul.f32 %v816, %v871
  %v916 = vmul.f32 %v817, %v871
  %v917 = vmul.f32 %v818, %v875
  %v918 = vmul.f32 %v819, %v875
  %v919 = vmul.f32 %v820, %v875
  %v920 = vmul.f32 %v821, %v875
  %v921 = vmul.f32 %v822, %v879
  %v922 = vmul.f32 %v823, %v879
  %v923 = vmul.f32 %v824, %v879
  %v924 = vmul.f32 %v825, %v879
  %v925 = vmul.f32 %v826, %v883
  %v926 = vmul.f32 %v827, %v883
  %v927 = vmul.f32 %v828, %v883
  %v928 = vmul.f32 %v829, %v883
  %v929 = vmul.f32 %v830, %v887
  %v930 = vmul.f32 %v831, %v887
  %v931 = vmul.f32 %v832, %v887
  %v932 = vmul.f32 %v833, %v887
  %v933 = vmul.f32 %v834, %v891
  %v934 = vmul.f32 %v835, %v891
  %v935 = vmul.f32 %v836, %v891
  %v936 = vmul.f32 %v837, %v891
  %v937 = vmul.f32 %v838, %v895
  %v938 = vmul.f32 %v839, %v895
  %v939 = vmul.f32 %v840, %v895
  %v940 = vmul.f32 %v841, %v895
  %v941 = vmul.f32 %v842, %v899
  %v942 = vmul.f32 %v843, %v899
  %v943 = vmul.f32 %v844, %v899
  %v944 = vmul.f32 %v845, %v899
  %v945 = vmul.f32 %v846, %v903
  %v946 = vmul.f32 %v847, %v903
  %v947 = vmul.f32 %v848, %v903
  %v948 = vmul.f32 %v849, %v903
  %vm949 = vcmask 523264
  %v950 = vsel %vm949, %v913, 0.0
  %v951 = vsel %vm949, %v917, 0.0
  %v952 = vadd.f32 %v950, %v951
  %v953 = vsel %vm949, %v921, 0.0
  %v954 = vadd.f32 %v952, %v953
  %v955 = vsel %vm949, %v925, 0.0
  %v956 = vadd.f32 %v954, %v955
  %v957 = vsel %vm949, %v929, 0.0
  %v958 = vadd.f32 %v956, %v957
  %v959 = vsel %vm949, %v933, 0.0
  %v960 = vadd.f32 %v958, %v959
  %v961 = vsel %vm949, %v937, 0.0
  %v962 = vadd.f32 %v960, %v961
  %v963 = vsel %vm949, %v941, 0.0
  %v964 = vadd.f32 %v962, %v963
  %v965 = vsel %vm949, %v945, 0.0
  %v966 = vadd.f32 %v964, %v965
  %v967 = vsel %vm949, %v914, 0.0
  %v968 = vsel %vm949, %v918, 0.0
  %v969 = vadd.f32 %v967, %v968
  %v970 = vsel %vm949, %v922, 0.0
  %v971 = vadd.f32 %v969, %v970
  %v972 = vsel %vm949, %v926, 0.0
  %v973 = vadd.f32 %v971, %v972
  %v974 = vsel %vm949, %v930, 0.0
  %v975 = vadd.f32 %v973, %v974
  %v976 = vsel %vm949, %v934, 0.0
  %v977 = vadd.f32 %v975, %v976
  %v978 = vsel %vm949, %v938, 0.0
  %v979 = vadd.f32 %v977, %v978
  %v980 = vsel %vm949, %v942, 0.0
  %v981 = vadd.f32 %v979, %v980
  %v982 = vsel %vm949, %v946, 0.0
  %v983 = vadd.f32 %v981, %v982
  %v984 = vsel %vm949, %v915, 0.0
  %v985 = vsel %vm949, %v919, 0.0
  %v986 = vadd.f32 %v984, %v985
  %v987 = vsel %vm949, %v923, 0.0
  %v988 = vadd.f32 %v986, %v987
  %v989 = vsel %vm949, %v927, 0.0
  %v990 = vadd.f32 %v988, %v989
  %v991 = vsel %vm949, %v931, 0.0
  %v992 = vadd.f32 %v990, %v991
  %v993 = vsel %vm949, %v935, 0.0
  %v994 = vadd.f32 %v992, %v993
  %v995 = vsel %vm949, %v939, 0.0
  %v996 = vadd.f32 %v994, %v995
  %v997 = vsel %vm949, %v943, 0.0
  %v998 = vadd.f32 %v996, %v997
  %v999 = vsel %vm949, %v947, 0.0
  %v1000 = vadd.f32 %v998, %v999
  %v1001 = vsel %vm949, %v916, 0.0
  %v1002 = vsel %vm949, %v920, 0.0
  %v1003 = vadd.f32 %v1001, %v1002
  %v1004 = vsel %vm949, %v924, 0.0
  %v1005 = vadd.f32 %v1003, %v1004
  %v1006 = vsel %vm949, %v928, 0.0
  %v1007 = vadd.f32 %v1005, %v1006
  %v1008 = vsel %vm949, %v932, 0.0
  %v1009 = vadd.f32 %v1007, %v1008
  %v1010 = vsel %vm949, %v936, 0.0
  %v1011 = vadd.f32 %v1009, %v1010
  %v1012 = vsel %vm949, %v940, 0.0
  %v1013 = vadd.f32 %v1011, %v1012
  %v1014 = vsel %vm949, %v944, 0.0
  %v1015 = vadd.f32 %v1013, %v1014
  %v1016 = vsel %vm949, %v948, 0.0
  %v1017 = vadd.f32 %v1015, %v1016
  %v1018 = vld [vmem:[%s6] sm:$0x1]
  %v1020 = vlaneseq
  %v1021 = vshrl.u32 %v1020, 7
  %v1022 = vsub.s32 0, %v1021
  %v1023 = vrot.slane %v1018, %v1022
  %v1025 = vadd.f32 %v966, %v1023
  %v1026 = vadd.f32 %v983, %v1023
  %v1027 = vadd.f32 %v1000, %v1023
  %v1028 = vadd.f32 %v1017, %v1023
  %v1029 = vmul.f32 %v1025, %v1025
  %v1030 = vmul.f32 %v1026, %v1026
  %v1031 = vmul.f32 %v1027, %v1027
  %v1032 = vmul.f32 %v1028, %v1028
  %v1033 = vmul.f32 %v1025, %v1029
  %v1034 = vmul.f32 %v1026, %v1030
  %v1035 = vmul.f32 %v1027, %v1031
  %v1036 = vmul.f32 %v1028, %v1032
  %v1037 = vmul.f32 %v1033, 0.044715
  %v1038 = vmul.f32 %v1034, 0.044715
  %v1039 = vmul.f32 %v1035, 0.044715
  %v1040 = vmul.f32 %v1036, 0.044715
  %v1041 = vadd.f32 %v1025, %v1037
  %v1042 = vadd.f32 %v1026, %v1038
  %v1043 = vadd.f32 %v1027, %v1039
  %v1044 = vadd.f32 %v1028, %v1040
  %v1045 = vmul.f32 %v1041, 0.7978846
  %v1046 = vmul.f32 %v1042, 0.7978846
  %v1047 = vmul.f32 %v1043, 0.7978846
  %v1048 = vmul.f32 %v1044, 0.7978846
  %v1049 = vtanh.pop %v1045
  %v1050 = vtanh.pop %v1046
  %v1051 = vtanh.pop %v1047
  %v1052 = vtanh.pop %v1048
  %v1053 = vadd.f32 %v1049, 1.0
  %v1054 = vadd.f32 %v1050, 1.0
  %v1055 = vadd.f32 %v1051, 1.0
  %v1056 = vadd.f32 %v1052, 1.0
  %v1057 = vmul.f32 %v1053, 0.5
  %v1058 = vmul.f32 %v1054, 0.5
  %v1059 = vmul.f32 %v1055, 0.5
  %v1060 = vmul.f32 %v1056, 0.5
  %v1061 = vmul.f32 %v1025, %v1057
  %v1062 = vmul.f32 %v1026, %v1058
  %v1063 = vmul.f32 %v1027, %v1059
  %v1064 = vmul.f32 %v1028, %v1060
  %v1065 = vpack.c.bf16 %v1062, %v1061
  %v1066 = vpack.c.bf16 %v1064, %v1063
  %v1067 = vld [vmem:[%s7] sm:$0xf]
  %v1068 = vld [vmem:[%s7 + $0x4] sm:$0xf]
  %v1069 = vld [vmem:[%s7 + $0x8] sm:$0xf]
  %v1070 = vld [vmem:[%s7 + $0xc] sm:$0xf]
  %v1071 = vld [vmem:[%s7 + $0x10] sm:$0xf]
  %v1072 = vld [vmem:[%s7 + $0x14] sm:$0xf]
  %v1073 = vld [vmem:[%s7 + $0x18] sm:$0xf]
  %v1074 = vld [vmem:[%s7 + $0x1c] sm:$0xf]
  %v1075 = vld [vmem:[%s8] sm:$0x1]
  %v1077 = vlaneseq
  %v1078 = vshrl.u32 %v1077, 7
  %v1079 = vsub.s32 0, %v1078
  %v1080 = vrot.slane %v1075, %v1079
  %v1090 = vunpack.c.l.b16 %v1067
  %v1091 = vunpack.c.l.b16 %v1068
  %v1092 = vunpack.c.l.b16 %v1069
  %v1093 = vunpack.c.l.b16 %v1070
  %v1094 = vunpack.c.l.b16 %v1071
  %v1095 = vunpack.c.l.b16 %v1072
  %v1096 = vunpack.c.l.b16 %v1073
  %v1097 = vunpack.c.l.b16 %v1074
  %v1098 = vpack.c.b16 %v1091, %v1090
  %v1099 = vpack.c.b16 %v1093, %v1092
  %v1100 = vpack.c.b16 %v1095, %v1094
  %v1101 = vpack.c.b16 %v1097, %v1096
  %v1107 = vsel %vm949, %v1065, 0
  %v1110 = vsel %vm949, %v1066, 0
  %1112 = vmatprep.subr.bf16.mxu0 0
  %1113 = vmatpush1.bf16.msra.mxu0 %v1098
  %1114 = vmatprep.subr.bf16.mxu0 0
  %1115 = vmatpush1.bf16.msra.mxu0 %v1099
  %1116 = vmatprep.subr.bf16.mxu0 0
  %1117 = vmatpush1.bf16.msra.mxu0 %v1100
  %1118 = vmatprep.subr.bf16.mxu0 0
  %1119 = vmatpush1.bf16.msra.mxu0 %v1101
  %1120 = vmatprep.subr.bf16.mxu0 0
  %1121 = vmatpush1.bf16.msra.mxu0 0
  %1122 = vmatprep.subr.bf16.mxu0 0
  %1123 = vmatpush1.bf16.msra.mxu0 0
  %1124 = vmatprep.subr.bf16.mxu0 0
  %1125 = vmatpush1.bf16.msra.mxu0 0
  %1126 = vmatprep.subr.bf16.mxu0 0
  %1127 = vmatpush1.bf16.msra.mxu0 0
  %1128 = vmatprep.subr.bf16.mxu0 0
  %1129 = vmatpush1.bf16.msra.mxu0 0
  %1130 = vmatprep.subr.bf16.mxu0 0
  %1131 = vmatpush1.bf16.msra.mxu0 0
  %1132 = vmatprep.subr.bf16.mxu0 0
  %1133 = vmatpush1.bf16.msra.mxu0 0
  %1134 = vmatprep.subr.bf16.mxu0 0
  %1135 = vmatpush1.bf16.msra.mxu0 0
  %1136 = vmatprep.subr.bf16.mxu0 0
  %1137 = vmatpush1.bf16.msra.mxu0 0
  %1138 = vmatprep.subr.bf16.mxu0 0
  %1139 = vmatpush1.bf16.msra.mxu0 0
  %1140 = vmatprep.subr.bf16.mxu0 0
  %1141 = vmatpush1.bf16.msra.mxu0 0
  %1142 = vmatprep.subr.bf16.mxu0 0
  %1143 = vmatpush1.bf16.msra.mxu0 0
  %1144 = vmatprep.mubr.bf16.mxu0 0
  %1145 = vmatmul.mubr.bf16.gmra.mrb[0].mxu0 %v1107
  %v1146 = vpop.f32.mrb[0].mxu0
  %v1147 = vadd.f32 %v1080, %v1146
  %v1148 = vpop.f32.mrb[0].mxu0
  %v1149 = vpop.f32.mrb[0].mxu0
  %v1150 = vadd.f32 %v1080, %v1149
  %v1151 = vpop.f32.mrb[0].mxu0
  %1152 = vmatprep.mubr.bf16.mxu0 0
  %1153 = vmatmul.mubr.bf16.gmra.mrb[0].mxu0 %v1110
  %v1154 = vpop.f32.mrb[0].mxu0
  %v1155 = vadd.f32 %v1080, %v1154
  %v1156 = vpop.f32.mrb[0].mxu0
  %v1157 = vpop.f32.mrb[0].mxu0
  %v1158 = vadd.f32 %v1080, %v1157
  %v1159 = vpop.f32.mrb[0].mxu0
  %1160 = vdwg.mxu0
  %v1161 = vadd.f32 %v168, %v1147
  %v1162 = vadd.f32 %v171, %v1150
  %v1163 = vadd.f32 %v176, %v1155
  %v1164 = vadd.f32 %v179, %v1158
  %v1165 = vpack.c.bf16 %v1162, %v1161
  %v1166 = vpack.c.bf16 %v1164, %v1163
  %v1169 = vunpack.c.l.b16 %v1165
  %v1170 = vunpack.c.h.b16 %v1165
  %v1171 = vunpack.c.l.b16 %v1166
  %v1172 = vunpack.c.h.b16 %v1166
  %v1173 = vpack.c.b16 %v1169, %v1169
  %v1174 = vpack.c.b16 %v1170, %v1170
  %v1175 = vpack.c.b16 %v1171, %v1171
  %v1176 = vpack.c.b16 %v1172, %v1172
  %vm1181 = vcmask 519168
  %1182 = vst.msk [vmem:[%s9] sm:$0xf] %vm1181, %v1173
  %1183 = vst.msk [vmem:[%s9 + $0x4] sm:$0xf] %vm1181, %v1174
  %1184 = vst.msk [vmem:[%s9 + $0x8] sm:$0xf] %vm1181, %v1175
  %1185 = vst.msk [vmem:[%s9 + $0xc] sm:$0xf] %vm1181, %v1176
  // Predicated region
  $region38: #{_lambda_.6} parent=0 // pred_check
    _
  $region39: #{_lambda_.6} parent=0 // pred_check_branch
    %1187 = sbr.rel (0) target = $region41
  $region40: #{_lambda_.6} parent=0 // pred_region
    _
  $region41: #{_lambda_.6} parent=0 // pred_fallthru
    _
  // Predicated region
  $region42: #{_lambda_.6} parent=0 // pred_check
    _
  $region43: #{_lambda_.6} parent=0 // pred_check_branch
    %1189 = sbr.rel (0) target = $region45
  $region44: #{_lambda_.6} parent=0 // pred_region
    _
  $region45: #{_lambda_.6} parent=0 // pred_fallthru
    _

// kernel: _lambda_.5
$region0: #{_lambda_.5}
  #allocation0 [shape = 'u32[]', space=smem, size = 0x4, offset = 0x4, fixed_abs, tag = 'smem constant byte address 0x4 - core index']
  #allocation1 [shape = 'u32[144,128]{1,0:T(1,128)}', space=vmem, size = 0x12000, scoped, tag = 'internal scratch']
  %s0 = inlined_call_operand.vmem [shape: bf16[9,128,16], index: 0, kind: input, shape index: {}]
  %s1 = inlined_call_operand.vmem [shape: bf16[16,32], index: 1, kind: input, shape index: {}]
  %s2 = inlined_call_operand.vmem [shape: f32[1,32], index: 2, kind: input, shape index: {}]
  %s3 = inlined_call_operand.vmem [shape: bf16[16,32], index: 3, kind: input, shape index: {}]
  %s4 = inlined_call_operand.vmem [shape: f32[1,32], index: 4, kind: input, shape index: {}]
  %s5 = inlined_call_operand.vmem [shape: f32[9,1,32], index: 5, kind: input, shape index: {}]
  %s6 = inlined_call_operand.vmem [shape: f32[1,32], index: 6, kind: input, shape index: {}]
  %s7 = inlined_call_operand.vmem [shape: bf16[32,32], index: 7, kind: input, shape index: {}]
  %s8 = inlined_call_operand.vmem [shape: f32[1,32], index: 8, kind: input, shape index: {}]
  %s9 = inlined_call_operand.vmem [shape: bf16[128,32], index: 9, kind: output, shape index: {}]
  %s10 = sld [smem:[#allocation0]]
  $region46: #{_lambda_.5} parent=0
    _
  %s12 = ssub.s32 1, %s10
  %s13 = scalar_select 0, %s12, %s10
  // Predicated region
  $region2: #{_lambda_.5} parent=0 // pred_check
    _
  $region3: #{_lambda_.5} parent=0 // pred_check_branch
    %15 = sbr.rel (0) target = $region5
  $region4: #{_lambda_.5} parent=0 // pred_region
    _
  $region5: #{_lambda_.5} parent=0 // pred_fallthru
    _
  // Predicated region
  $region6: #{_lambda_.5} parent=0 // pred_check
    _
  $region7: #{_lambda_.5} parent=0 // pred_check_branch
    %17 = sbr.rel (0) target = $region9
  $region8: #{_lambda_.5} parent=0 // pred_region
    _
  $region9: #{_lambda_.5} parent=0 // pred_fallthru
    _
  // Predicated region
  $region10: #{_lambda_.5} parent=0 // pred_check
    _
  $region11: #{_lambda_.5} parent=0 // pred_check_branch
    %19 = sbr.rel (0) target = $region13
  $region12: #{_lambda_.5} parent=0 // pred_region
    _
  $region13: #{_lambda_.5} parent=0 // pred_fallthru
    _
  // Predicated region
  $region14: #{_lambda_.5} parent=0 // pred_check
    _
  $region15: #{_lambda_.5} parent=0 // pred_check_branch
    %21 = sbr.rel (0) target = $region17
  $region16: #{_lambda_.5} parent=0 // pred_region
    _
  $region17: #{_lambda_.5} parent=0 // pred_fallthru
    _
  // Predicated region
  $region18: #{_lambda_.5} parent=0 // pred_check
    _
  $region19: #{_lambda_.5} parent=0 // pred_check_branch
    %23 = sbr.rel (0) target = $region21
  $region20: #{_lambda_.5} parent=0 // pred_region
    _
  $region21: #{_lambda_.5} parent=0 // pred_fallthru
    _
  // Predicated region
  $region22: #{_lambda_.5} parent=0 // pred_check
    _
  $region23: #{_lambda_.5} parent=0 // pred_check_branch
    %25 = sbr.rel (0) target = $region25
  $region24: #{_lambda_.5} parent=0 // pred_region
    _
  $region25: #{_lambda_.5} parent=0 // pred_fallthru
    _
  // Predicated region
  $region26: #{_lambda_.5} parent=0 // pred_check
    _
  $region27: #{_lambda_.5} parent=0 // pred_check_branch
    %27 = sbr.rel (0) target = $region29
  $region28: #{_lambda_.5} parent=0 // pred_region
    _
  $region29: #{_lambda_.5} parent=0 // pred_fallthru
    _
  // Predicated region
  $region30: #{_lambda_.5} parent=0 // pred_check
    _
  $region31: #{_lambda_.5} parent=0 // pred_check_branch
    %29 = sbr.rel (0) target = $region33
  $region32: #{_lambda_.5} parent=0 // pred_region
    _
  $region33: #{_lambda_.5} parent=0 // pred_fallthru
    _
  // Predicated region
  $region34: #{_lambda_.5} parent=0 // pred_check
    _
  $region35: #{_lambda_.5} parent=0 // pred_check_branch
    %31 = sbr.rel (0) target = $region37
  $region36: #{_lambda_.5} parent=0 // pred_region
    _
  $region37: #{_lambda_.5} parent=0 // pred_fallthru
    _
  %v33 = vld [vmem:[%s0] sm:$0xf]
  %v34 = vld [vmem:[%s0 + $0x4] sm:$0xf]
  %v35 = vld [vmem:[%s0 + $0x8] sm:$0xf]
  %v36 = vld [vmem:[%s0 + $0xc] sm:$0xf]
  %v37 = vld [vmem:[%s0 + $0x10] sm:$0xf]
  %v38 = vld [vmem:[%s0 + $0x14] sm:$0xf]
  %v39 = vld [vmem:[%s0 + $0x18] sm:$0xf]
  %v40 = vld [vmem:[%s0 + $0x1c] sm:$0xf]
  %v41 = vld [vmem:[%s0 + $0x20] sm:$0xf]
  %v42 = vld [vmem:[%s0 + $0x24] sm:$0xf]
  %v43 = vld [vmem:[%s0 + $0x28] sm:$0xf]
  %v44 = vld [vmem:[%s0 + $0x2c] sm:$0xf]
  %v45 = vld [vmem:[%s0 + $0x30] sm:$0xf]
  %v46 = vld [vmem:[%s0 + $0x34] sm:$0xf]
  %v47 = vld [vmem:[%s0 + $0x38] sm:$0xf]
  %v48 = vld [vmem:[%s0 + $0x3c] sm:$0xf]
  %v49 = vld [vmem:[%s0 + $0x40] sm:$0xf]
  %v50 = vld [vmem:[%s0 + $0x44] sm:$0xf]
  %v51 = vld [vmem:[%s0 + $0x48] sm:$0xf]
  %v52 = vld [vmem:[%s0 + $0x4c] sm:$0xf]
  %v53 = vld [vmem:[%s0 + $0x50] sm:$0xf]
  %v54 = vld [vmem:[%s0 + $0x54] sm:$0xf]
  %v55 = vld [vmem:[%s0 + $0x58] sm:$0xf]
  %v56 = vld [vmem:[%s0 + $0x5c] sm:$0xf]
  %v57 = vld [vmem:[%s0 + $0x60] sm:$0xf]
  %v58 = vld [vmem:[%s0 + $0x64] sm:$0xf]
  %v59 = vld [vmem:[%s0 + $0x68] sm:$0xf]
  %v60 = vld [vmem:[%s0 + $0x6c] sm:$0xf]
  %v61 = vld [vmem:[%s0 + $0x70] sm:$0xf]
  %v62 = vld [vmem:[%s0 + $0x74] sm:$0xf]
  %v63 = vld [vmem:[%s0 + $0x78] sm:$0xf]
  %v64 = vld [vmem:[%s0 + $0x7c] sm:$0xf]
  %v65 = vld [vmem:[%s0 + $0x80] sm:$0xf]
  %v66 = vld [vmem:[%s0 + $0x84] sm:$0xf]
  %v67 = vld [vmem:[%s0 + $0x88] sm:$0xf]
  %v68 = vld [vmem:[%s0 + $0x8c] sm:$0xf]
  %v69 = vld [vmem:[%s0 + $0x90] sm:$0xf]
  %v70 = vld [vmem:[%s0 + $0x94] sm:$0xf]
  %v71 = vld [vmem:[%s0 + $0x98] sm:$0xf]
  %v72 = vld [vmem:[%s0 + $0x9c] sm:$0xf]
  %v73 = vld [vmem:[%s0 + $0xa0] sm:$0xf]
  %v74 = vld [vmem:[%s0 + $0xa4] sm:$0xf]
  %v75 = vld [vmem:[%s0 + $0xa8] sm:$0xf]
  %v76 = vld [vmem:[%s0 + $0xac] sm:$0xf]
  %v77 = vld [vmem:[%s0 + $0xb0] sm:$0xf]
  %v78 = vld [vmem:[%s0 + $0xb4] sm:$0xf]
  %v79 = vld [vmem:[%s0 + $0xb8] sm:$0xf]
  %v80 = vld [vmem:[%s0 + $0xbc] sm:$0xf]
  %v81 = vld [vmem:[%s0 + $0xc0] sm:$0xf]
  %v82 = vld [vmem:[%s0 + $0xc4] sm:$0xf]
  %v83 = vld [vmem:[%s0 + $0xc8] sm:$0xf]
  %v84 = vld [vmem:[%s0 + $0xcc] sm:$0xf]
  %v85 = vld [vmem:[%s0 + $0xd0] sm:$0xf]
  %v86 = vld [vmem:[%s0 + $0xd4] sm:$0xf]
  %v87 = vld [vmem:[%s0 + $0xd8] sm:$0xf]
  %v88 = vld [vmem:[%s0 + $0xdc] sm:$0xf]
  %v89 = vld [vmem:[%s0 + $0xe0] sm:$0xf]
  %v90 = vld [vmem:[%s0 + $0xe4] sm:$0xf]
  %v91 = vld [vmem:[%s0 + $0xe8] sm:$0xf]
  %v92 = vld [vmem:[%s0 + $0xec] sm:$0xf]
  %v93 = vld [vmem:[%s0 + $0xf0] sm:$0xf]
  %v94 = vld [vmem:[%s0 + $0xf4] sm:$0xf]
  %v95 = vld [vmem:[%s0 + $0xf8] sm:$0xf]
  %v96 = vld [vmem:[%s0 + $0xfc] sm:$0xf]
  %v97 = vld [vmem:[%s0 + $0x100] sm:$0xf]
  %v98 = vld [vmem:[%s0 + $0x104] sm:$0xf]
  %v99 = vld [vmem:[%s0 + $0x108] sm:$0xf]
  %v100 = vld [vmem:[%s0 + $0x10c] sm:$0xf]
  %v101 = vld [vmem:[%s0 + $0x110] sm:$0xf]
  %v102 = vld [vmem:[%s0 + $0x114] sm:$0xf]
  %v103 = vld [vmem:[%s0 + $0x118] sm:$0xf]
  %v104 = vld [vmem:[%s0 + $0x11c] sm:$0xf]
  %v105 = vld [vmem:[%s0 + $0x120] sm:$0xf]
  %v106 = vld [vmem:[%s0 + $0x124] sm:$0xf]
  %v107 = vld [vmem:[%s0 + $0x128] sm:$0xf]
  %v108 = vld [vmem:[%s0 + $0x12c] sm:$0xf]
  %v109 = vld [vmem:[%s0 + $0x130] sm:$0xf]
  %v110 = vld [vmem:[%s0 + $0x134] sm:$0xf]
  %v111 = vld [vmem:[%s0 + $0x138] sm:$0xf]
  %v112 = vld [vmem:[%s0 + $0x13c] sm:$0xf]
  %v113 = vld [vmem:[%s0 + $0x140] sm:$0xf]
  %v114 = vld [vmem:[%s0 + $0x144] sm:$0xf]
  %v115 = vld [vmem:[%s0 + $0x148] sm:$0xf]
  %v116 = vld [vmem:[%s0 + $0x14c] sm:$0xf]
  %v117 = vld [vmem:[%s0 + $0x150] sm:$0xf]
  %v118 = vld [vmem:[%s0 + $0x154] sm:$0xf]
  %v119 = vld [vmem:[%s0 + $0x158] sm:$0xf]
  %v120 = vld [vmem:[%s0 + $0x15c] sm:$0xf]
  %v121 = vld [vmem:[%s0 + $0x160] sm:$0xf]
  %v122 = vld [vmem:[%s0 + $0x164] sm:$0xf]
  %v123 = vld [vmem:[%s0 + $0x168] sm:$0xf]
  %v124 = vld [vmem:[%s0 + $0x16c] sm:$0xf]
  %v125 = vld [vmem:[%s0 + $0x170] sm:$0xf]
  %v126 = vld [vmem:[%s0 + $0x174] sm:$0xf]
  %v127 = vld [vmem:[%s0 + $0x178] sm:$0xf]
  %v128 = vld [vmem:[%s0 + $0x17c] sm:$0xf]
  %v129 = vld [vmem:[%s0 + $0x180] sm:$0xf]
  %v130 = vld [vmem:[%s0 + $0x184] sm:$0xf]
  %v131 = vld [vmem:[%s0 + $0x188] sm:$0xf]
  %v132 = vld [vmem:[%s0 + $0x18c] sm:$0xf]
  %v133 = vld [vmem:[%s0 + $0x190] sm:$0xf]
  %v134 = vld [vmem:[%s0 + $0x194] sm:$0xf]
  %v135 = vld [vmem:[%s0 + $0x198] sm:$0xf]
  %v136 = vld [vmem:[%s0 + $0x19c] sm:$0xf]
  %v137 = vld [vmem:[%s0 + $0x1a0] sm:$0xf]
  %v138 = vld [vmem:[%s0 + $0x1a4] sm:$0xf]
  %v139 = vld [vmem:[%s0 + $0x1a8] sm:$0xf]
  %v140 = vld [vmem:[%s0 + $0x1ac] sm:$0xf]
  %v141 = vld [vmem:[%s0 + $0x1b0] sm:$0xf]
  %v142 = vld [vmem:[%s0 + $0x1b4] sm:$0xf]
  %v143 = vld [vmem:[%s0 + $0x1b8] sm:$0xf]
  %v144 = vld [vmem:[%s0 + $0x1bc] sm:$0xf]
  %v145 = vld [vmem:[%s0 + $0x1c0] sm:$0xf]
  %v146 = vld [vmem:[%s0 + $0x1c4] sm:$0xf]
  %v147 = vld [vmem:[%s0 + $0x1c8] sm:$0xf]
  %v148 = vld [vmem:[%s0 + $0x1cc] sm:$0xf]
  %v149 = vld [vmem:[%s0 + $0x1d0] sm:$0xf]
  %v150 = vld [vmem:[%s0 + $0x1d4] sm:$0xf]
  %v151 = vld [vmem:[%s0 + $0x1d8] sm:$0xf]
  %v152 = vld [vmem:[%s0 + $0x1dc] sm:$0xf]
  %v153 = vld [vmem:[%s0 + $0x1e0] sm:$0xf]
  %v154 = vld [vmem:[%s0 + $0x1e4] sm:$0xf]
  %v155 = vld [vmem:[%s0 + $0x1e8] sm:$0xf]
  %v156 = vld [vmem:[%s0 + $0x1ec] sm:$0xf]
  %v157 = vld [vmem:[%s0 + $0x1f0] sm:$0xf]
  %v158 = vld [vmem:[%s0 + $0x1f4] sm:$0xf]
  %v159 = vld [vmem:[%s0 + $0x1f8] sm:$0xf]
  %v160 = vld [vmem:[%s0 + $0x1fc] sm:$0xf]
  %v161 = vld [vmem:[%s0 + $0x200] sm:$0xf]
  %v162 = vld [vmem:[%s0 + $0x204] sm:$0xf]
  %v163 = vld [vmem:[%s0 + $0x208] sm:$0xf]
  %v164 = vld [vmem:[%s0 + $0x20c] sm:$0xf]
  %v165 = vld [vmem:[%s0 + $0x210] sm:$0xf]
  %v166 = vld [vmem:[%s0 + $0x214] sm:$0xf]
  %v167 = vld [vmem:[%s0 + $0x218] sm:$0xf]
  %v168 = vld [vmem:[%s0 + $0x21c] sm:$0xf]
  %v169 = vld [vmem:[%s0 + $0x220] sm:$0xf]
  %v170 = vld [vmem:[%s0 + $0x224] sm:$0xf]
  %v171 = vld [vmem:[%s0 + $0x228] sm:$0xf]
  %v172 = vld [vmem:[%s0 + $0x22c] sm:$0xf]
  %v173 = vld [vmem:[%s0 + $0x230] sm:$0xf]
  %v174 = vld [vmem:[%s0 + $0x234] sm:$0xf]
  %v175 = vld [vmem:[%s0 + $0x238] sm:$0xf]
  %v176 = vld [vmem:[%s0 + $0x23c] sm:$0xf]
  %v177 = vld [vmem:[%s1] sm:$0xf]
  %v178 = vld [vmem:[%s1 + $0x4] sm:$0xf]
  %v179 = vld [vmem:[%s2] sm:$0x1]
  %v181 = vlaneseq
  %v182 = vshrl.u32 %v181, 7
  %v183 = vsub.s32 0, %v182
  %v184 = vrot.slane %v179, %v183
  %v202 = vunpack.c.l.b16 %v97
  %v203 = vunpack.c.l.b16 %v98
  %v204 = vunpack.c.l.b16 %v99
  %v205 = vunpack.c.l.b16 %v100
  %v206 = vunpack.c.l.b16 %v101
  %v207 = vunpack.c.l.b16 %v102
  %v208 = vunpack.c.l.b16 %v103
  %v209 = vunpack.c.l.b16 %v104
  %v210 = vunpack.c.l.b16 %v105
  %v211 = vunpack.c.l.b16 %v106
  %v212 = vunpack.c.l.b16 %v107
  %v213 = vunpack.c.l.b16 %v108
  %v214 = vunpack.c.l.b16 %v109
  %v215 = vunpack.c.l.b16 %v110
  %v216 = vunpack.c.l.b16 %v111
  %v217 = vunpack.c.l.b16 %v112
  %v218 = vpack.c.b16 %v203, %v202
  %v219 = vpack.c.b16 %v205, %v204
  %v220 = vpack.c.b16 %v207, %v206
  %v221 = vpack.c.b16 %v209, %v208
  %v222 = vpack.c.b16 %v211, %v210
  %v223 = vpack.c.b16 %v213, %v212
  %v224 = vpack.c.b16 %v215, %v214
  %v225 = vpack.c.b16 %v217, %v216
  %v228 = vunpack.c.l.b16 %v177
  %v229 = vunpack.c.l.b16 %v178
  %v230 = vpack.c.b16 %v229, %v228
  %vm232 = vcmask 130048
  %v234 = vsel %vm232, %v218, 0
  %v237 = vsel %vm232, %v219, 0
  %v240 = vsel %vm232, %v220, 0
  %v243 = vsel %vm232, %v221, 0
  %v246 = vsel %vm232, %v222, 0
  %v249 = vsel %vm232, %v223, 0
  %v252 = vsel %vm232, %v224, 0
  %v255 = vsel %vm232, %v225, 0
  %257 = vmatprep.subr.bf16.mxu0 0
  %258 = vmatpush1.bf16.msra.mxu0 %v230
  %259 = vmatprep.subr.bf16.mxu0 0
  %260 = vmatpush1.bf16.msra.mxu0 0
  %261 = vmatprep.subr.bf16.mxu0 0
  %262 = vmatpush1.bf16.msra.mxu0 0
  %263 = vmatprep.subr.bf16.mxu0 0
  %264 = vmatpush1.bf16.msra.mxu0 0
  %265 = vmatprep.subr.bf16.mxu0 0
  %266 = vmatpush1.bf16.msra.mxu0 0
  %267 = vmatprep.subr.bf16.mxu0 0
  %268 = vmatpush1.bf16.msra.mxu0 0
  %269 = vmatprep.subr.bf16.mxu0 0
  %270 = vmatpush1.bf16.msra.mxu0 0
  %271 = vmatprep.subr.bf16.mxu0 0
  %272 = vmatpush1.bf16.msra.mxu0 0
  %273 = vmatprep.subr.bf16.mxu0 0
  %274 = vmatpush1.bf16.msra.mxu0 0
  %275 = vmatprep.subr.bf16.mxu0 0
  %276 = vmatpush1.bf16.msra.mxu0 0
  %277 = vmatprep.subr.bf16.mxu0 0
  %278 = vmatpush1.bf16.msra.mxu0 0
  %279 = vmatprep.subr.bf16.mxu0 0
  %280 = vmatpush1.bf16.msra.mxu0 0
  %281 = vmatprep.subr.bf16.mxu0 0
  %282 = vmatpush1.bf16.msra.mxu0 0
  %283 = vmatprep.subr.bf16.mxu0 0
  %284 = vmatpush1.bf16.msra.mxu0 0
  %285 = vmatprep.subr.bf16.mxu0 0
  %286 = vmatpush1.bf16.msra.mxu0 0
  %287 = vmatprep.subr.bf16.mxu0 0
  %288 = vmatpush1.bf16.msra.mxu0 0
  %289 = vmatprep.mubr.bf16.mxu0 0
  %290 = vmatmul.mubr.bf16.gmra.mrb[0].mxu0 %v234
  %v291 = vpop.f32.mrb[0].mxu0
  %v292 = vadd.f32 %v184, %v291
  %v293 = vpop.f32.mrb[0].mxu0
  %v294 = vpop.f32.mrb[0].mxu0
  %v295 = vadd.f32 %v184, %v294
  %v296 = vpop.f32.mrb[0].mxu0
  %297 = vmatprep.mubr.bf16.mxu0 0
  %298 = vmatmul.mubr.bf16.gmra.mrb[0].mxu0 %v237
  %v299 = vpop.f32.mrb[0].mxu0
  %v300 = vadd.f32 %v184, %v299
  %v301 = vpop.f32.mrb[0].mxu0
  %v302 = vpop.f32.mrb[0].mxu0
  %v303 = vadd.f32 %v184, %v302
  %v304 = vpop.f32.mrb[0].mxu0
  %305 = vmatprep.mubr.bf16.mxu0 0
  %306 = vmatmul.mubr.bf16.gmra.mrb[0].mxu0 %v240
  %v307 = vpop.f32.mrb[0].mxu0
  %v308 = vadd.f32 %v184, %v307
  %v309 = vpop.f32.mrb[0].mxu0
  %v310 = vpop.f32.mrb[0].mxu0
  %v311 = vadd.f32 %v184, %v310
  %v312 = vpop.f32.mrb[0].mxu0
  %313 = vmatprep.mubr.bf16.mxu0 0
  %314 = vmatmul.mubr.bf16.gmra.mrb[0].mxu0 %v243
  %v315 = vpop.f32.mrb[0].mxu0
  %v316 = vadd.f32 %v184, %v315
  %v317 = vpop.f32.mrb[0].mxu0
  %v318 = vpop.f32.mrb[0].mxu0
  %v319 = vadd.f32 %v184, %v318
  %v320 = vpop.f32.mrb[0].mxu0
  %321 = vmatprep.mubr.bf16.mxu0 0
  %322 = vmatmul.mubr.bf16.gmra.mrb[0].mxu0 %v246
  %v323 = vpop.f32.mrb[0].mxu0
  %v324 = vadd.f32 %v184, %v323
  %v325 = vpop.f32.mrb[0].mxu0
  %v326 = vpop.f32.mrb[0].mxu0
  %v327 = vadd.f32 %v184, %v326
  %v328 = vpop.f32.mrb[0].mxu0
  %329 = vmatprep.mubr.bf16.mxu0 0
  %330 = vmatmul.mubr.bf16.gmra.mrb[0].mxu0 %v249
  %v331 = vpop.f32.mrb[0].mxu0
  %v332 = vadd.f32 %v184, %v331
  %v333 = vpop.f32.mrb[0].mxu0
  %v334 = vpop.f32.mrb[0].mxu0
  %v335 = vadd.f32 %v184, %v334
  %v336 = vpop.f32.mrb[0].mxu0
  %337 = vmatprep.mubr.bf16.mxu0 0
  %338 = vmatmul.mubr.bf16.gmra.mrb[0].mxu0 %v252
  %v339 = vpop.f32.mrb[0].mxu0
  %v340 = vadd.f32 %v184, %v339
  %v341 = vpop.f32.mrb[0].mxu0
  %v342 = vpop.f32.mrb[0].mxu0
  %v343 = vadd.f32 %v184, %v342
  %v344 = vpop.f32.mrb[0].mxu0
  %345 = vmatprep.mubr.bf16.mxu0 0
  %346 = vmatmul.mubr.bf16.gmra.mrb[0].mxu0 %v255
  %v347 = vpop.f32.mrb[0].mxu0
  %v348 = vadd.f32 %v184, %v347
  %v349 = vpop.f32.mrb[0].mxu0
  %v350 = vpop.f32.mrb[0].mxu0
  %v351 = vadd.f32 %v184, %v350
  %v352 = vpop.f32.mrb[0].mxu0
  %353 = vdwg.mxu0
  %v354 = vld [vmem:[%s3] sm:$0xf]
  %v355 = vld [vmem:[%s3 + $0x4] sm:$0xf]
  %v356 = vld [vmem:[%s4] sm:$0x1]
  %v358 = vlaneseq
  %v359 = vshrl.u32 %v358, 7
  %v360 = vsub.s32 0, %v359
  %v361 = vrot.slane %v356, %v360
  %v491 = vunpack.c.l.b16 %v33
  %v492 = vunpack.c.l.b16 %v34
  %v493 = vunpack.c.l.b16 %v35
  %v494 = vunpack.c.l.b16 %v36
  %v495 = vunpack.c.l.b16 %v37
  %v496 = vunpack.c.l.b16 %v38
  %v497 = vunpack.c.l.b16 %v39
  %v498 = vunpack.c.l.b16 %v40
  %v499 = vunpack.c.l.b16 %v41
  %v500 = vunpack.c.l.b16 %v42
  %v501 = vunpack.c.l.b16 %v43
  %v502 = vunpack.c.l.b16 %v44
  %v503 = vunpack.c.l.b16 %v45
  %v504 = vunpack.c.l.b16 %v46
  %v505 = vunpack.c.l.b16 %v47
  %v506 = vunpack.c.l.b16 %v48
  %v507 = vunpack.c.l.b16 %v49
  %v508 = vunpack.c.l.b16 %v50
  %v509 = vunpack.c.l.b16 %v51
  %v510 = vunpack.c.l.b16 %v52
  %v511 = vunpack.c.l.b16 %v53
  %v512 = vunpack.c.l.b16 %v54
  %v513 = vunpack.c.l.b16 %v55
  %v514 = vunpack.c.l.b16 %v56
  %v515 = vunpack.c.l.b16 %v57
  %v516 = vunpack.c.l.b16 %v58
  %v517 = vunpack.c.l.b16 %v59
  %v518 = vunpack.c.l.b16 %v60
  %v519 = vunpack.c.l.b16 %v61
  %v520 = vunpack.c.l.b16 %v62
  %v521 = vunpack.c.l.b16 %v63
  %v522 = vunpack.c.l.b16 %v64
  %v523 = vunpack.c.l.b16 %v65
  %v524 = vunpack.c.l.b16 %v66
  %v525 = vunpack.c.l.b16 %v67
  %v526 = vunpack.c.l.b16 %v68
  %v527 = vunpack.c.l.b16 %v69
  %v528 = vunpack.c.l.b16 %v70
  %v529 = vunpack.c.l.b16 %v71
  %v530 = vunpack.c.l.b16 %v72
  %v531 = vunpack.c.l.b16 %v73
  %v532 = vunpack.c.l.b16 %v74
  %v533 = vunpack.c.l.b16 %v75
  %v534 = vunpack.c.l.b16 %v76
  %v535 = vunpack.c.l.b16 %v77
  %v536 = vunpack.c.l.b16 %v78
  %v537 = vunpack.c.l.b16 %v79
  %v538 = vunpack.c.l.b16 %v80
  %v539 = vunpack.c.l.b16 %v81
  %v540 = vunpack.c.l.b16 %v82
  %v541 = vunpack.c.l.b16 %v83
  %v542 = vunpack.c.l.b16 %v84
  %v543 = vunpack.c.l.b16 %v85
  %v544 = vunpack.c.l.b16 %v86
  %v545 = vunpack.c.l.b16 %v87
  %v546 = vunpack.c.l.b16 %v88
  %v547 = vunpack.c.l.b16 %v89
  %v548 = vunpack.c.l.b16 %v90
  %v549 = vunpack.c.l.b16 %v91
  %v550 = vunpack.c.l.b16 %v92
  %v551 = vunpack.c.l.b16 %v93
  %v552 = vunpack.c.l.b16 %v94
  %v553 = vunpack.c.l.b16 %v95
  %v554 = vunpack.c.l.b16 %v96
  %v555 = vunpack.c.l.b16 %v113
  %v556 = vunpack.c.l.b16 %v114
  %v557 = vunpack.c.l.b16 %v115
  %v558 = vunpack.c.l.b16 %v116
  %v559 = vunpack.c.l.b16 %v117
  %v560 = vunpack.c.l.b16 %v118
  %v561 = vunpack.c.l.b16 %v119
  %v562 = vunpack.c.l.b16 %v120
  %v563 = vunpack.c.l.b16 %v121
  %v564 = vunpack.c.l.b16 %v122
  %v565 = vunpack.c.l.b16 %v123
  %v566 = vunpack.c.l.b16 %v124
  %v567 = vunpack.c.l.b16 %v125
  %v568 = vunpack.c.l.b16 %v126
  %v569 = vunpack.c.l.b16 %v127
  %v570 = vunpack.c.l.b16 %v128
  %v571 = vunpack.c.l.b16 %v129
  %v572 = vunpack.c.l.b16 %v130
  %v573 = vunpack.c.l.b16 %v131
  %v574 = vunpack.c.l.b16 %v132
  %v575 = vunpack.c.l.b16 %v133
  %v576 = vunpack.c.l.b16 %v134
  %v577 = vunpack.c.l.b16 %v135
  %v578 = vunpack.c.l.b16 %v136
  %v579 = vunpack.c.l.b16 %v137
  %v580 = vunpack.c.l.b16 %v138
  %v581 = vunpack.c.l.b16 %v139
  %v582 = vunpack.c.l.b16 %v140
  %v583 = vunpack.c.l.b16 %v141
  %v584 = vunpack.c.l.b16 %v142
  %v585 = vunpack.c.l.b16 %v143
  %v586 = vunpack.c.l.b16 %v144
  %v587 = vunpack.c.l.b16 %v145
  %v588 = vunpack.c.l.b16 %v146
  %v589 = vunpack.c.l.b16 %v147
  %v590 = vunpack.c.l.b16 %v148
  %v591 = vunpack.c.l.b16 %v149
  %v592 = vunpack.c.l.b16 %v150
  %v593 = vunpack.c.l.b16 %v151
  %v594 = vunpack.c.l.b16 %v152
  %v595 = vunpack.c.l.b16 %v153
  %v596 = vunpack.c.l.b16 %v154
  %v597 = vunpack.c.l.b16 %v155
  %v598 = vunpack.c.l.b16 %v156
  %v599 = vunpack.c.l.b16 %v157
  %v600 = vunpack.c.l.b16 %v158
  %v601 = vunpack.c.l.b16 %v159
  %v602 = vunpack.c.l.b16 %v160
  %v603 = vunpack.c.l.b16 %v161
  %v604 = vunpack.c.l.b16 %v162
  %v605 = vunpack.c.l.b16 %v163
  %v606 = vunpack.c.l.b16 %v164
  %v607 = vunpack.c.l.b16 %v165
  %v608 = vunpack.c.l.b16 %v166
  %v609 = vunpack.c.l.b16 %v167
  %v610 = vunpack.c.l.b16 %v168
  %v611 = vunpack.c.l.b16 %v169
  %v612 = vunpack.c.l.b16 %v170
  %v613 = vunpack.c.l.b16 %v171
  %v614 = vunpack.c.l.b16 %v172
  %v615 = vunpack.c.l.b16 %v173
  %v616 = vunpack.c.l.b16 %v174
  %v617 = vunpack.c.l.b16 %v175
  %v618 = vunpack.c.l.b16 %v176
  %v619 = vpack.c.b16 %v492, %v491
  %v620 = vpack.c.b16 %v494, %v493
  %v621 = vpack.c.b16 %v496, %v495
  %v622 = vpack.c.b16 %v498, %v497
  %v623 = vpack.c.b16 %v500, %v499
  %v624 = vpack.c.b16 %v502, %v501
  %v625 = vpack.c.b16 %v504, %v503
  %v626 = vpack.c.b16 %v506, %v505
  %v627 = vpack.c.b16 %v508, %v507
  %v628 = vpack.c.b16 %v510, %v509
  %v629 = vpack.c.b16 %v512, %v511
  %v630 = vpack.c.b16 %v514, %v513
  %v631 = vpack.c.b16 %v516, %v515
  %v632 = vpack.c.b16 %v518, %v517
  %v633 = vpack.c.b16 %v520, %v519
  %v634 = vpack.c.b16 %v522, %v521
  %v635 = vpack.c.b16 %v524, %v523
  %v636 = vpack.c.b16 %v526, %v525
  %v637 = vpack.c.b16 %v528, %v527
  %v638 = vpack.c.b16 %v530, %v529
  %v639 = vpack.c.b16 %v532, %v531
  %v640 = vpack.c.b16 %v534, %v533
  %v641 = vpack.c.b16 %v536, %v535
  %v642 = vpack.c.b16 %v538, %v537
  %v643 = vpack.c.b16 %v540, %v539
  %v644 = vpack.c.b16 %v542, %v541
  %v645 = vpack.c.b16 %v544, %v543
  %v646 = vpack.c.b16 %v546, %v545
  %v647 = vpack.c.b16 %v548, %v547
  %v648 = vpack.c.b16 %v550, %v549
  %v649 = vpack.c.b16 %v552, %v551
  %v650 = vpack.c.b16 %v554, %v553
  %v651 = vpack.c.b16 %v556, %v555
  %v652 = vpack.c.b16 %v558, %v557
  %v653 = vpack.c.b16 %v560, %v559
  %v654 = vpack.c.b16 %v562, %v561
  %v655 = vpack.c.b16 %v564, %v563
  %v656 = vpack.c.b16 %v566, %v565
  %v657 = vpack.c.b16 %v568, %v567
  %v658 = vpack.c.b16 %v570, %v569
  %v659 = vpack.c.b16 %v572, %v571
  %v660 = vpack.c.b16 %v574, %v573
  %v661 = vpack.c.b16 %v576, %v575
  %v662 = vpack.c.b16 %v578, %v577
  %v663 = vpack.c.b16 %v580, %v579
  %v664 = vpack.c.b16 %v582, %v581
  %v665 = vpack.c.b16 %v584, %v583
  %v666 = vpack.c.b16 %v586, %v585
  %v667 = vpack.c.b16 %v588, %v587
  %v668 = vpack.c.b16 %v590, %v589
  %v669 = vpack.c.b16 %v592, %v591
  %v670 = vpack.c.b16 %v594, %v593
  %v671 = vpack.c.b16 %v596, %v595
  %v672 = vpack.c.b16 %v598, %v597
  %v673 = vpack.c.b16 %v600, %v599
  %v674 = vpack.c.b16 %v602, %v601
  %v675 = vpack.c.b16 %v604, %v603
  %v676 = vpack.c.b16 %v606, %v605
  %v677 = vpack.c.b16 %v608, %v607
  %v678 = vpack.c.b16 %v610, %v609
  %v679 = vpack.c.b16 %v612, %v611
  %v680 = vpack.c.b16 %v614, %v613
  %v681 = vpack.c.b16 %v616, %v615
  %v682 = vpack.c.b16 %v618, %v617
  %v685 = vunpack.c.l.b16 %v354
  %v686 = vunpack.c.l.b16 %v355
  %v687 = vpack.c.b16 %v686, %v685
  %v690 = vsel %vm232, %v619, 0
  %v693 = vsel %vm232, %v620, 0
  %v696 = vsel %vm232, %v621, 0
  %v699 = vsel %vm232, %v622, 0
  %v702 = vsel %vm232, %v623, 0
  %v705 = vsel %vm232, %v624, 0
  %v708 = vsel %vm232, %v625, 0
  %v711 = vsel %vm232, %v626, 0
  %v714 = vsel %vm232, %v627, 0
  %v717 = vsel %vm232, %v628, 0
  %v720 = vsel %vm232, %v629, 0
  %v723 = vsel %vm232, %v630, 0
  %v726 = vsel %vm232, %v631, 0
  %v729 = vsel %vm232, %v632, 0
  %v732 = vsel %vm232, %v633, 0
  %v735 = vsel %vm232, %v634, 0
  %v738 = vsel %vm232, %v635, 0
  %v741 = vsel %vm232, %v636, 0
  %v744 = vsel %vm232, %v637, 0
  %v747 = vsel %vm232, %v638, 0
  %v750 = vsel %vm232, %v639, 0
  %v753 = vsel %vm232, %v640, 0
  %v756 = vsel %vm232, %v641, 0
  %v759 = vsel %vm232, %v642, 0
  %v762 = vsel %vm232, %v643, 0
  %v765 = vsel %vm232, %v644, 0
  %v768 = vsel %vm232, %v645, 0
  %v771 = vsel %vm232, %v646, 0
  %v774 = vsel %vm232, %v647, 0
  %v777 = vsel %vm232, %v648, 0
  %v780 = vsel %vm232, %v649, 0
  %v783 = vsel %vm232, %v650, 0
  %v786 = vsel %vm232, %v651, 0
  %v789 = vsel %vm232, %v652, 0
  %v792 = vsel %vm232, %v653, 0
  %v795 = vsel %vm232, %v654, 0
  %v798 = vsel %vm232, %v655, 0
  %v801 = vsel %vm232, %v656, 0
  %v804 = vsel %vm232, %v657, 0
  %v807 = vsel %vm232, %v658, 0
  %v810 = vsel %vm232, %v659, 0
  %v813 = vsel %vm232, %v660, 0
  %v816 = vsel %vm232, %v661, 0
  %v819 = vsel %vm232, %v662, 0
  %v822 = vsel %vm232, %v663, 0
  %v825 = vsel %vm232, %v664, 0
  %v828 = vsel %vm232, %v665, 0
  %v831 = vsel %vm232, %v666, 0
  %v834 = vsel %vm232, %v667, 0
  %v837 = vsel %vm232, %v668, 0
  %v840 = vsel %vm232, %v669, 0
  %v843 = vsel %vm232, %v670, 0
  %v846 = vsel %vm232, %v671, 0
  %v849 = vsel %vm232, %v672, 0
  %v852 = vsel %vm232, %v673, 0
  %v855 = vsel %vm232, %v674, 0
  %v858 = vsel %vm232, %v675, 0
  %v861 = vsel %vm232, %v676, 0
  %v864 = vsel %vm232, %v677, 0
  %v867 = vsel %vm232, %v678, 0
  %v870 = vsel %vm232, %v679, 0
  %v873 = vsel %vm232, %v680, 0
  %v876 = vsel %vm232, %v681, 0
  %v879 = vsel %vm232, %v682, 0
  %881 = vmatprep.subr.bf16.mxu0 0
  %882 = vmatpush1.bf16.msra.mxu0 %v687
  %883 = vmatprep.subr.bf16.mxu0 0
  %884 = vmatpush1.bf16.msra.mxu0 0
  %885 = vmatprep.subr.bf16.mxu0 0
  %886 = vmatpush1.bf16.msra.mxu0 0
  %887 = vmatprep.subr.bf16.mxu0 0
  %888 = vmatpush1.bf16.msra.mxu0 0
  %889 = vmatprep.subr.bf16.mxu0 0
  %890 = vmatpush1.bf16.msra.mxu0 0
  %891 = vmatprep.subr.bf16.mxu0 0
  %892 = vmatpush1.bf16.msra.mxu0 0
  %893 = vmatprep.subr.bf16.mxu0 0
  %894 = vmatpush1.bf16.msra.mxu0 0
  %895 = vmatprep.subr.bf16.mxu0 0
  %896 = vmatpush1.bf16.msra.mxu0 0
  %897 = vmatprep.subr.bf16.mxu0 0
  %898 = vmatpush1.bf16.msra.mxu0 0
  %899 = vmatprep.subr.bf16.mxu0 0
  %900 = vmatpush1.bf16.msra.mxu0 0
  %901 = vmatprep.subr.bf16.mxu0 0
  %902 = vmatpush1.bf16.msra.mxu0 0
  %903 = vmatprep.subr.bf16.mxu0 0
  %904 = vmatpush1.bf16.msra.mxu0 0
  %905 = vmatprep.subr.bf16.mxu0 0
  %906 = vmatpush1.bf16.msra.mxu0 0
  %907 = vmatprep.subr.bf16.mxu0 0
  %908 = vmatpush1.bf16.msra.mxu0 0
  %909 = vmatprep.subr.bf16.mxu0 0
  %910 = vmatpush1.bf16.msra.mxu0 0
  %911 = vmatprep.subr.bf16.mxu0 0
  %912 = vmatpush1.bf16.msra.mxu0 0
  %913 = vmatprep.mubr.bf16.mxu0 0
  %914 = vmatmul.mubr.bf16.gmra.mrb[0].mxu0 %v690
  %v915 = vpop.f32.mrb[0].mxu0
  %v916 = vadd.f32 %v361, %v915
  %v917 = vpop.f32.mrb[0].mxu0
  %v918 = vpop.f32.mrb[0].mxu0
  %v919 = vadd.f32 %v361, %v918
  %v920 = vpop.f32.mrb[0].mxu0
  %921 = vmatprep.mubr.bf16.mxu0 0
  %922 = vmatmul.mubr.bf16.gmra.mrb[0].mxu0 %v693
  %v923 = vpop.f32.mrb[0].mxu0
  %v924 = vadd.f32 %v361, %v923
  %v925 = vpop.f32.mrb[0].mxu0
  %v926 = vpop.f32.mrb[0].mxu0
  %v927 = vadd.f32 %v361, %v926
  %v928 = vpop.f32.mrb[0].mxu0
  %929 = vmatprep.mubr.bf16.mxu0 0
  %930 = vmatmul.mubr.bf16.gmra.mrb[0].mxu0 %v696
  %v931 = vpop.f32.mrb[0].mxu0
  %v932 = vadd.f32 %v361, %v931
  %v933 = vpop.f32.mrb[0].mxu0
  %v934 = vpop.f32.mrb[0].mxu0
  %v935 = vadd.f32 %v361, %v934
  %v936 = vpop.f32.mrb[0].mxu0
  %937 = vmatprep.mubr.bf16.mxu0 0
  %938 = vmatmul.mubr.bf16.gmra.mrb[0].mxu0 %v699
  %v939 = vpop.f32.mrb[0].mxu0
  %v940 = vadd.f32 %v361, %v939
  %v941 = vpop.f32.mrb[0].mxu0
  %v942 = vpop.f32.mrb[0].mxu0
  %v943 = vadd.f32 %v361, %v942
  %v944 = vpop.f32.mrb[0].mxu0
  %945 = vmatprep.mubr.bf16.mxu0 0
  %946 = vmatmul.mubr.bf16.gmra.mrb[0].mxu0 %v702
  %v947 = vpop.f32.mrb[0].mxu0
  %v948 = vadd.f32 %v361, %v947
  %v949 = vpop.f32.mrb[0].mxu0
  %v950 = vpop.f32.mrb[0].mxu0
  %v951 = vadd.f32 %v361, %v950
  %v952 = vpop.f32.mrb[0].mxu0
  %953 = vmatprep.mubr.bf16.mxu0 0
  %954 = vmatmul.mubr.bf16.gmra.mrb[0].mxu0 %v705
  %v955 = vpop.f32.mrb[0].mxu0
  %v956 = vadd.f32 %v361, %v955
  %v957 = vpop.f32.mrb[0].mxu0
  %v958 = vpop.f32.mrb[0].mxu0
  %v959 = vadd.f32 %v361, %v958
  %v960 = vpop.f32.mrb[0].mxu0
  %961 = vmatprep.mubr.bf16.mxu0 0
  %962 = vmatmul.mubr.bf16.gmra.mrb[0].mxu0 %v708
  %v963 = vpop.f32.mrb[0].mxu0
  %v964 = vadd.f32 %v361, %v963
  %v965 = vpop.f32.mrb[0].mxu0
  %v966 = vpop.f32.mrb[0].mxu0
  %v967 = vadd.f32 %v361, %v966
  %v968 = vpop.f32.mrb[0].mxu0
  %969 = vmatprep.mubr.bf16.mxu0 0
  %970 = vmatmul.mubr.bf16.gmra.mrb[0].mxu0 %v711
  %v971 = vpop.f32.mrb[0].mxu0
  %v972 = vadd.f32 %v361, %v971
  %v973 = vpop.f32.mrb[0].mxu0
  %v974 = vpop.f32.mrb[0].mxu0
  %v975 = vadd.f32 %v361, %v974
  %v976 = vpop.f32.mrb[0].mxu0
  %977 = vmatprep.mubr.bf16.mxu0 0
  %978 = vmatmul.mubr.bf16.gmra.mrb[0].mxu0 %v714
  %v979 = vpop.f32.mrb[0].mxu0
  %v980 = vadd.f32 %v361, %v979
  %v981 = vpop.f32.mrb[0].mxu0
  %v982 = vpop.f32.mrb[0].mxu0
  %v983 = vadd.f32 %v361, %v982
  %v984 = vpop.f32.mrb[0].mxu0
  %985 = vmatprep.mubr.bf16.mxu0 0
  %986 = vmatmul.mubr.bf16.gmra.mrb[0].mxu0 %v717
  %v987 = vpop.f32.mrb[0].mxu0
  %v988 = vadd.f32 %v361, %v987
  %v989 = vpop.f32.mrb[0].mxu0
  %v990 = vpop.f32.mrb[0].mxu0
  %v991 = vadd.f32 %v361, %v990
  %v992 = vpop.f32.mrb[0].mxu0
  %993 = vmatprep.mubr.bf16.mxu0 0
  %994 = vmatmul.mubr.bf16.gmra.mrb[0].mxu0 %v720
  %v995 = vpop.f32.mrb[0].mxu0
  %v996 = vadd.f32 %v361, %v995
  %v997 = vpop.f32.mrb[0].mxu0
  %v998 = vpop.f32.mrb[0].mxu0
  %v999 = vadd.f32 %v361, %v998
  %v1000 = vpop.f32.mrb[0].mxu0
  %1001 = vmatprep.mubr.bf16.mxu0 0
  %1002 = vmatmul.mubr.bf16.gmra.mrb[0].mxu0 %v723
  %v1003 = vpop.f32.mrb[0].mxu0
  %v1004 = vadd.f32 %v361, %v1003
  %v1005 = vpop.f32.mrb[0].mxu0
  %v1006 = vpop.f32.mrb[0].mxu0
  %v1007 = vadd.f32 %v361, %v1006
  %v1008 = vpop.f32.mrb[0].mxu0
  %1009 = vmatprep.mubr.bf16.mxu0 0
  %1010 = vmatmul.mubr.bf16.gmra.mrb[0].mxu0 %v726
  %v1011 = vpop.f32.mrb[0].mxu0
  %v1012 = vadd.f32 %v361, %v1011
  %v1013 = vpop.f32.mrb[0].mxu0
  %v1014 = vpop.f32.mrb[0].mxu0
  %v1015 = vadd.f32 %v361, %v1014
  %v1016 = vpop.f32.mrb[0].mxu0
  %1017 = vmatprep.mubr.bf16.mxu0 0
  %1018 = vmatmul.mubr.bf16.gmra.mrb[0].mxu0 %v729
  %v1019 = vpop.f32.mrb[0].mxu0
  %v1020 = vadd.f32 %v361, %v1019
  %v1021 = vpop.f32.mrb[0].mxu0
  %v1022 = vpop.f32.mrb[0].mxu0
  %v1023 = vadd.f32 %v361, %v1022
  %v1024 = vpop.f32.mrb[0].mxu0
  %1025 = vmatprep.mubr.bf16.mxu0 0
  %1026 = vmatmul.mubr.bf16.gmra.mrb[0].mxu0 %v732
  %v1027 = vpop.f32.mrb[0].mxu0
  %v1028 = vadd.f32 %v361, %v1027
  %v1029 = vpop.f32.mrb[0].mxu0
  %v1030 = vpop.f32.mrb[0].mxu0
  %v1031 = vadd.f32 %v361, %v1030
  %v1032 = vpop.f32.mrb[0].mxu0
  %1033 = vmatprep.mubr.bf16.mxu0 0
  %1034 = vmatmul.mubr.bf16.gmra.mrb[0].mxu0 %v735
  %v1035 = vpop.f32.mrb[0].mxu0
  %v1036 = vadd.f32 %v361, %v1035
  %v1037 = vpop.f32.mrb[0].mxu0
  %v1038 = vpop.f32.mrb[0].mxu0
  %v1039 = vadd.f32 %v361, %v1038
  %v1040 = vpop.f32.mrb[0].mxu0
  %1041 = vmatprep.mubr.bf16.mxu0 0
  %1042 = vmatmul.mubr.bf16.gmra.mrb[0].mxu0 %v738
  %v1043 = vpop.f32.mrb[0].mxu0
  %v1044 = vadd.f32 %v361, %v1043
  %v1045 = vpop.f32.mrb[0].mxu0
  %v1046 = vpop.f32.mrb[0].mxu0
  %v1047 = vadd.f32 %v361, %v1046
  %v1048 = vpop.f32.mrb[0].mxu0
  %1049 = vmatprep.mubr.bf16.mxu0 0
  %1050 = vmatmul.mubr.bf16.gmra.mrb[0].mxu0 %v741
  %v1051 = vpop.f32.mrb[0].mxu0
  %v1052 = vadd.f32 %v361, %v1051
  %v1053 = vpop.f32.mrb[0].mxu0
  %v1054 = vpop.f32.mrb[0].mxu0
  %v1055 = vadd.f32 %v361, %v1054
  %v1056 = vpop.f32.mrb[0].mxu0
  %1057 = vmatprep.mubr.bf16.mxu0 0
  %1058 = vmatmul.mubr.bf16.gmra.mrb[0].mxu0 %v744
  %v1059 = vpop.f32.mrb[0].mxu0
  %v1060 = vadd.f32 %v361, %v1059
  %v1061 = vpop.f32.mrb[0].mxu0
  %v1062 = vpop.f32.mrb[0].mxu0
  %v1063 = vadd.f32 %v361, %v1062
  %v1064 = vpop.f32.mrb[0].mxu0
  %1065 = vmatprep.mubr.bf16.mxu0 0
  %1066 = vmatmul.mubr.bf16.gmra.mrb[0].mxu0 %v747
  %v1067 = vpop.f32.mrb[0].mxu0
  %v1068 = vadd.f32 %v361, %v1067
  %v1069 = vpop.f32.mrb[0].mxu0
  %v1070 = vpop.f32.mrb[0].mxu0
  %v1071 = vadd.f32 %v361, %v1070
  %v1072 = vpop.f32.mrb[0].mxu0
  %1073 = vmatprep.mubr.bf16.mxu0 0
  %1074 = vmatmul.mubr.bf16.gmra.mrb[0].mxu0 %v750
  %v1075 = vpop.f32.mrb[0].mxu0
  %v1076 = vadd.f32 %v361, %v1075
  %v1077 = vpop.f32.mrb[0].mxu0
  %v1078 = vpop.f32.mrb[0].mxu0
  %v1079 = vadd.f32 %v361, %v1078
  %v1080 = vpop.f32.mrb[0].mxu0
  %1081 = vmatprep.mubr.bf16.mxu0 0
  %1082 = vmatmul.mubr.bf16.gmra.mrb[0].mxu0 %v753
  %v1083 = vpop.f32.mrb[0].mxu0
  %v1084 = vadd.f32 %v361, %v1083
  %v1085 = vpop.f32.mrb[0].mxu0
  %v1086 = vpop.f32.mrb[0].mxu0
  %v1087 = vadd.f32 %v361, %v1086
  %v1088 = vpop.f32.mrb[0].mxu0
  %1089 = vmatprep.mubr.bf16.mxu0 0
  %1090 = vmatmul.mubr.bf16.gmra.mrb[0].mxu0 %v756
  %v1091 = vpop.f32.mrb[0].mxu0
  %v1092 = vadd.f32 %v361, %v1091
  %v1093 = vpop.f32.mrb[0].mxu0
  %v1094 = vpop.f32.mrb[0].mxu0
  %v1095 = vadd.f32 %v361, %v1094
  %v1096 = vpop.f32.mrb[0].mxu0
  %1097 = vmatprep.mubr.bf16.mxu0 0
  %1098 = vmatmul.mubr.bf16.gmra.mrb[0].mxu0 %v759
  %v1099 = vpop.f32.mrb[0].mxu0
  %v1100 = vadd.f32 %v361, %v1099
  %v1101 = vpop.f32.mrb[0].mxu0
  %v1102 = vpop.f32.mrb[0].mxu0
  %v1103 = vadd.f32 %v361, %v1102
  %v1104 = vpop.f32.mrb[0].mxu0
  %1105 = vmatprep.mubr.bf16.mxu0 0
  %1106 = vmatmul.mubr.bf16.gmra.mrb[0].mxu0 %v762
  %v1107 = vpop.f32.mrb[0].mxu0
  %v1108 = vadd.f32 %v361, %v1107
  %v1109 = vpop.f32.mrb[0].mxu0
  %v1110 = vpop.f32.mrb[0].mxu0
  %v1111 = vadd.f32 %v361, %v1110
  %v1112 = vpop.f32.mrb[0].mxu0
  %1113 = vmatprep.mubr.bf16.mxu0 0
  %1114 = vmatmul.mubr.bf16.gmra.mrb[0].mxu0 %v765
  %v1115 = vpop.f32.mrb[0].mxu0
  %v1116 = vadd.f32 %v361, %v1115
  %v1117 = vpop.f32.mrb[0].mxu0
  %v1118 = vpop.f32.mrb[0].mxu0
  %v1119 = vadd.f32 %v361, %v1118
  %v1120 = vpop.f32.mrb[0].mxu0
  %1121 = vmatprep.mubr.bf16.mxu0 0
  %1122 = vmatmul.mubr.bf16.gmra.mrb[0].mxu0 %v768
  %v1123 = vpop.f32.mrb[0].mxu0
  %v1124 = vadd.f32 %v361, %v1123
  %v1125 = vpop.f32.mrb[0].mxu0
  %v1126 = vpop.f32.mrb[0].mxu0
  %v1127 = vadd.f32 %v361, %v1126
  %v1128 = vpop.f32.mrb[0].mxu0
  %1129 = vmatprep.mubr.bf16.mxu0 0
  %1130 = vmatmul.mubr.bf16.gmra.mrb[0].mxu0 %v771
  %v1131 = vpop.f32.mrb[0].mxu0
  %v1132 = vadd.f32 %v361, %v1131
  %v1133 = vpop.f32.mrb[0].mxu0
  %v1134 = vpop.f32.mrb[0].mxu0
  %v1135 = vadd.f32 %v361, %v1134
  %v1136 = vpop.f32.mrb[0].mxu0
  %1137 = vmatprep.mubr.bf16.mxu0 0
  %1138 = vmatmul.mubr.bf16.gmra.mrb[0].mxu0 %v774
  %v1139 = vpop.f32.mrb[0].mxu0
  %v1140 = vadd.f32 %v361, %v1139
  %v1141 = vpop.f32.mrb[0].mxu0
  %v1142 = vpop.f32.mrb[0].mxu0
  %v1143 = vadd.f32 %v361, %v1142
  %v1144 = vpop.f32.mrb[0].mxu0
  %1145 = vmatprep.mubr.bf16.mxu0 0
  %1146 = vmatmul.mubr.bf16.gmra.mrb[0].mxu0 %v777
  %v1147 = vpop.f32.mrb[0].mxu0
  %v1148 = vadd.f32 %v361, %v1147
  %v1149 = vpop.f32.mrb[0].mxu0
  %v1150 = vpop.f32.mrb[0].mxu0
  %v1151 = vadd.f32 %v361, %v1150
  %v1152 = vpop.f32.mrb[0].mxu0
  %1153 = vmatprep.mubr.bf16.mxu0 0
  %1154 = vmatmul.mubr.bf16.gmra.mrb[0].mxu0 %v780
  %v1155 = vpop.f32.mrb[0].mxu0
  %v1156 = vadd.f32 %v361, %v1155
  %v1157 = vpop.f32.mrb[0].mxu0
  %v1158 = vpop.f32.mrb[0].mxu0
  %v1159 = vadd.f32 %v361, %v1158
  %v1160 = vpop.f32.mrb[0].mxu0
  %1161 = vmatprep.mubr.bf16.mxu0 0
  %1162 = vmatmul.mubr.bf16.gmra.mrb[0].mxu0 %v783
  %v1163 = vpop.f32.mrb[0].mxu0
  %v1164 = vadd.f32 %v361, %v1163
  %v1165 = vpop.f32.mrb[0].mxu0
  %v1166 = vpop.f32.mrb[0].mxu0
  %v1167 = vadd.f32 %v361, %v1166
  %v1168 = vpop.f32.mrb[0].mxu0
  %1169 = vmatprep.mubr.bf16.mxu0 0
  %1170 = vmatmul.mubr.bf16.gmra.mrb[0].mxu0 %v234
  %v1171 = vpop.f32.mrb[0].mxu0
  %v1172 = vadd.f32 %v361, %v1171
  %v1173 = vpop.f32.mrb[0].mxu0
  %v1174 = vpop.f32.mrb[0].mxu0
  %v1175 = vadd.f32 %v361, %v1174
  %v1176 = vpop.f32.mrb[0].mxu0
  %1177 = vmatprep.mubr.bf16.mxu0 0
  %1178 = vmatmul.mubr.bf16.gmra.mrb[0].mxu0 %v237
  %v1179 = vpop.f32.mrb[0].mxu0
  %v1180 = vadd.f32 %v361, %v1179
  %v1181 = vpop.f32.mrb[0].mxu0
  %v1182 = vpop.f32.mrb[0].mxu0
  %v1183 = vadd.f32 %v361, %v1182
  %v1184 = vpop.f32.mrb[0].mxu0
  %1185 = vmatprep.mubr.bf16.mxu0 0
  %1186 = vmatmul.mubr.bf16.gmra.mrb[0].mxu0 %v240
  %v1187 = vpop.f32.mrb[0].mxu0
  %v1188 = vadd.f32 %v361, %v1187
  %v1189 = vpop.f32.mrb[0].mxu0
  %v1190 = vpop.f32.mrb[0].mxu0
  %v1191 = vadd.f32 %v361, %v1190
  %v1192 = vpop.f32.mrb[0].mxu0
  %1193 = vmatprep.mubr.bf16.mxu0 0
  %1194 = vmatmul.mubr.bf16.gmra.mrb[0].mxu0 %v243
  %v1195 = vpop.f32.mrb[0].mxu0
  %v1196 = vadd.f32 %v361, %v1195
  %v1197 = vpop.f32.mrb[0].mxu0
  %v1198 = vpop.f32.mrb[0].mxu0
  %v1199 = vadd.f32 %v361, %v1198
  %v1200 = vpop.f32.mrb[0].mxu0
  %1201 = vmatprep.mubr.bf16.mxu0 0
  %1202 = vmatmul.mubr.bf16.gmra.mrb[0].mxu0 %v246
  %v1203 = vpop.f32.mrb[0].mxu0
  %v1204 = vadd.f32 %v361, %v1203
  %v1205 = vpop.f32.mrb[0].mxu0
  %v1206 = vpop.f32.mrb[0].mxu0
  %v1207 = vadd.f32 %v361, %v1206
  %v1208 = vpop.f32.mrb[0].mxu0
  %1209 = vmatprep.mubr.bf16.mxu0 0
  %1210 = vmatmul.mubr.bf16.gmra.mrb[0].mxu0 %v249
  %v1211 = vpop.f32.mrb[0].mxu0
  %v1212 = vadd.f32 %v361, %v1211
  %v1213 = vpop.f32.mrb[0].mxu0
  %v1214 = vpop.f32.mrb[0].mxu0
  %v1215 = vadd.f32 %v361, %v1214
  %v1216 = vpop.f32.mrb[0].mxu0
  %1217 = vmatprep.mubr.bf16.mxu0 0
  %1218 = vmatmul.mubr.bf16.gmra.mrb[0].mxu0 %v252
  %v1219 = vpop.f32.mrb[0].mxu0
  %v1220 = vadd.f32 %v361, %v1219
  %v1221 = vpop.f32.mrb[0].mxu0
  %v1222 = vpop.f32.mrb[0].mxu0
  %v1223 = vadd.f32 %v361, %v1222
  %v1224 = vpop.f32.mrb[0].mxu0
  %1225 = vmatprep.mubr.bf16.mxu0 0
  %1226 = vmatmul.mubr.bf16.gmra.mrb[0].mxu0 %v255
  %v1227 = vpop.f32.mrb[0].mxu0
  %v1228 = vadd.f32 %v361, %v1227
  %v1229 = vpop.f32.mrb[0].mxu0
  %v1230 = vpop.f32.mrb[0].mxu0
  %v1231 = vadd.f32 %v361, %v1230
  %v1232 = vpop.f32.mrb[0].mxu0
  %1233 = vmatprep.mubr.bf16.mxu0 0
  %1234 = vmatmul.mubr.bf16.gmra.mrb[0].mxu0 %v786
  %v1235 = vpop.f32.mrb[0].mxu0
  %v1236 = vadd.f32 %v361, %v1235
  %v1237 = vpop.f32.mrb[0].mxu0
  %v1238 = vpop.f32.mrb[0].mxu0
  %v1239 = vadd.f32 %v361, %v1238
  %v1240 = vpop.f32.mrb[0].mxu0
  %1241 = vmatprep.mubr.bf16.mxu0 0
  %1242 = vmatmul.mubr.bf16.gmra.mrb[0].mxu0 %v789
  %v1243 = vpop.f32.mrb[0].mxu0
  %v1244 = vadd.f32 %v361, %v1243
  %v1245 = vpop.f32.mrb[0].mxu0
  %v1246 = vpop.f32.mrb[0].mxu0
  %v1247 = vadd.f32 %v361, %v1246
  %v1248 = vpop.f32.mrb[0].mxu0
  %1249 = vmatprep.mubr.bf16.mxu0 0
  %1250 = vmatmul.mubr.bf16.gmra.mrb[0].mxu0 %v792
  %v1251 = vpop.f32.mrb[0].mxu0
  %v1252 = vadd.f32 %v361, %v1251
  %v1253 = vpop.f32.mrb[0].mxu0
  %v1254 = vpop.f32.mrb[0].mxu0
  %v1255 = vadd.f32 %v361, %v1254
  %v1256 = vpop.f32.mrb[0].mxu0
  %1257 = vmatprep.mubr.bf16.mxu0 0
  %1258 = vmatmul.mubr.bf16.gmra.mrb[0].mxu0 %v795
  %v1259 = vpop.f32.mrb[0].mxu0
  %v1260 = vadd.f32 %v361, %v1259
  %v1261 = vpop.f32.mrb[0].mxu0
  %v1262 = vpop.f32.mrb[0].mxu0
  %v1263 = vadd.f32 %v361, %v1262
  %v1264 = vpop.f32.mrb[0].mxu0
  %1265 = vmatprep.mubr.bf16.mxu0 0
  %1266 = vmatmul.mubr.bf16.gmra.mrb[0].mxu0 %v798
  %v1267 = vpop.f32.mrb[0].mxu0
  %v1268 = vadd.f32 %v361, %v1267
  %v1269 = vpop.f32.mrb[0].mxu0
  %v1270 = vpop.f32.mrb[0].mxu0
  %v1271 = vadd.f32 %v361, %v1270
  %v1272 = vpop.f32.mrb[0].mxu0
  %1273 = vmatprep.mubr.bf16.mxu0 0
  %1274 = vmatmul.mubr.bf16.gmra.mrb[0].mxu0 %v801
  %v1275 = vpop.f32.mrb[0].mxu0
  %v1276 = vadd.f32 %v361, %v1275
  %v1277 = vpop.f32.mrb[0].mxu0
  %v1278 = vpop.f32.mrb[0].mxu0
  %v1279 = vadd.f32 %v361, %v1278
  %v1280 = vpop.f32.mrb[0].mxu0
  %1281 = vmatprep.mubr.bf16.mxu0 0
  %1282 = vmatmul.mubr.bf16.gmra.mrb[0].mxu0 %v804
  %v1283 = vpop.f32.mrb[0].mxu0
  %v1284 = vadd.f32 %v361, %v1283
  %v1285 = vpop.f32.mrb[0].mxu0
  %v1286 = vpop.f32.mrb[0].mxu0
  %v1287 = vadd.f32 %v361, %v1286
  %v1288 = vpop.f32.mrb[0].mxu0
  %1289 = vmatprep.mubr.bf16.mxu0 0
  %1290 = vmatmul.mubr.bf16.gmra.mrb[0].mxu0 %v807
  %v1291 = vpop.f32.mrb[0].mxu0
  %v1292 = vadd.f32 %v361, %v1291
  %v1293 = vpop.f32.mrb[0].mxu0
  %v1294 = vpop.f32.mrb[0].mxu0
  %v1295 = vadd.f32 %v361, %v1294
  %v1296 = vpop.f32.mrb[0].mxu0
  %1297 = vmatprep.mubr.bf16.mxu0 0
  %1298 = vmatmul.mubr.bf16.gmra.mrb[0].mxu0 %v810
  %v1299 = vpop.f32.mrb[0].mxu0
  %v1300 = vadd.f32 %v361, %v1299
  %v1301 = vpop.f32.mrb[0].mxu0
  %v1302 = vpop.f32.mrb[0].mxu0
  %v1303 = vadd.f32 %v361, %v1302
  %v1304 = vpop.f32.mrb[0].mxu0
  %1305 = vmatprep.mubr.bf16.mxu0 0
  %1306 = vmatmul.mubr.bf16.gmra.mrb[0].mxu0 %v813
  %v1307 = vpop.f32.mrb[0].mxu0
  %v1308 = vadd.f32 %v361, %v1307
  %v1309 = vpop.f32.mrb[0].mxu0
  %v1310 = vpop.f32.mrb[0].mxu0
  %v1311 = vadd.f32 %v361, %v1310
  %v1312 = vpop.f32.mrb[0].mxu0
  %1313 = vmatprep.mubr.bf16.mxu0 0
  %1314 = vmatmul.mubr.bf16.gmra.mrb[0].mxu0 %v816
  %v1315 = vpop.f32.mrb[0].mxu0
  %v1316 = vadd.f32 %v361, %v1315
  %v1317 = vpop.f32.mrb[0].mxu0
  %v1318 = vpop.f32.mrb[0].mxu0
  %v1319 = vadd.f32 %v361, %v1318
  %v1320 = vpop.f32.mrb[0].mxu0
  %1321 = vmatprep.mubr.bf16.mxu0 0
  %1322 = vmatmul.mubr.bf16.gmra.mrb[0].mxu0 %v819
  %v1323 = vpop.f32.mrb[0].mxu0
  %v1324 = vadd.f32 %v361, %v1323
  %v1325 = vpop.f32.mrb[0].mxu0
  %v1326 = vpop.f32.mrb[0].mxu0
  %v1327 = vadd.f32 %v361, %v1326
  %v1328 = vpop.f32.mrb[0].mxu0
  %1329 = vmatprep.mubr.bf16.mxu0 0
  %1330 = vmatmul.mubr.bf16.gmra.mrb[0].mxu0 %v822
  %v1331 = vpop.f32.mrb[0].mxu0
  %v1332 = vadd.f32 %v361, %v1331
  %v1333 = vpop.f32.mrb[0].mxu0
  %v1334 = vpop.f32.mrb[0].mxu0
  %v1335 = vadd.f32 %v361, %v1334
  %v1336 = vpop.f32.mrb[0].mxu0
  %1337 = vmatprep.mubr.bf16.mxu0 0
  %1338 = vmatmul.mubr.bf16.gmra.mrb[0].mxu0 %v825
  %v1339 = vpop.f32.mrb[0].mxu0
  %v1340 = vadd.f32 %v361, %v1339
  %v1341 = vpop.f32.mrb[0].mxu0
  %v1342 = vpop.f32.mrb[0].mxu0
  %v1343 = vadd.f32 %v361, %v1342
  %v1344 = vpop.f32.mrb[0].mxu0
  %1345 = vmatprep.mubr.bf16.mxu0 0
  %1346 = vmatmul.mubr.bf16.gmra.mrb[0].mxu0 %v828
  %v1347 = vpop.f32.mrb[0].mxu0
  %v1348 = vadd.f32 %v361, %v1347
  %v1349 = vpop.f32.mrb[0].mxu0
  %v1350 = vpop.f32.mrb[0].mxu0
  %v1351 = vadd.f32 %v361, %v1350
  %v1352 = vpop.f32.mrb[0].mxu0
  %1353 = vmatprep.mubr.bf16.mxu0 0
  %1354 = vmatmul.mubr.bf16.gmra.mrb[0].mxu0 %v831
  %v1355 = vpop.f32.mrb[0].mxu0
  %v1356 = vadd.f32 %v361, %v1355
  %v1357 = vpop.f32.mrb[0].mxu0
  %v1358 = vpop.f32.mrb[0].mxu0
  %v1359 = vadd.f32 %v361, %v1358
  %v1360 = vpop.f32.mrb[0].mxu0
  %1361 = vmatprep.mubr.bf16.mxu0 0
  %1362 = vmatmul.mubr.bf16.gmra.mrb[0].mxu0 %v834
  %v1363 = vpop.f32.mrb[0].mxu0
  %v1364 = vadd.f32 %v361, %v1363
  %v1365 = vpop.f32.mrb[0].mxu0
  %v1366 = vpop.f32.mrb[0].mxu0
  %v1367 = vadd.f32 %v361, %v1366
  %v1368 = vpop.f32.mrb[0].mxu0
  %1369 = vmatprep.mubr.bf16.mxu0 0
  %1370 = vmatmul.mubr.bf16.gmra.mrb[0].mxu0 %v837
  %v1371 = vpop.f32.mrb[0].mxu0
  %v1372 = vadd.f32 %v361, %v1371
  %v1373 = vpop.f32.mrb[0].mxu0
  %v1374 = vpop.f32.mrb[0].mxu0
  %v1375 = vadd.f32 %v361, %v1374
  %v1376 = vpop.f32.mrb[0].mxu0
  %1377 = vmatprep.mubr.bf16.mxu0 0
  %1378 = vmatmul.mubr.bf16.gmra.mrb[0].mxu0 %v840
  %v1379 = vpop.f32.mrb[0].mxu0
  %v1380 = vadd.f32 %v361, %v1379
  %v1381 = vpop.f32.mrb[0].mxu0
  %v1382 = vpop.f32.mrb[0].mxu0
  %v1383 = vadd.f32 %v361, %v1382
  %v1384 = vpop.f32.mrb[0].mxu0
  %1385 = vmatprep.mubr.bf16.mxu0 0
  %1386 = vmatmul.mubr.bf16.gmra.mrb[0].mxu0 %v843
  %v1387 = vpop.f32.mrb[0].mxu0
  %v1388 = vadd.f32 %v361, %v1387
  %v1389 = vpop.f32.mrb[0].mxu0
  %v1390 = vpop.f32.mrb[0].mxu0
  %v1391 = vadd.f32 %v361, %v1390
  %v1392 = vpop.f32.mrb[0].mxu0
  %1393 = vmatprep.mubr.bf16.mxu0 0
  %1394 = vmatmul.mubr.bf16.gmra.mrb[0].mxu0 %v846
  %v1395 = vpop.f32.mrb[0].mxu0
  %v1396 = vadd.f32 %v361, %v1395
  %v1397 = vpop.f32.mrb[0].mxu0
  %v1398 = vpop.f32.mrb[0].mxu0
  %v1399 = vadd.f32 %v361, %v1398
  %v1400 = vpop.f32.mrb[0].mxu0
  %1401 = vmatprep.mubr.bf16.mxu0 0
  %1402 = vmatmul.mubr.bf16.gmra.mrb[0].mxu0 %v849
  %v1403 = vpop.f32.mrb[0].mxu0
  %v1404 = vadd.f32 %v361, %v1403
  %v1405 = vpop.f32.mrb[0].mxu0
  %v1406 = vpop.f32.mrb[0].mxu0
  %v1407 = vadd.f32 %v361, %v1406
  %v1408 = vpop.f32.mrb[0].mxu0
  %1409 = vmatprep.mubr.bf16.mxu0 0
  %1410 = vmatmul.mubr.bf16.gmra.mrb[0].mxu0 %v852
  %v1411 = vpop.f32.mrb[0].mxu0
  %v1412 = vadd.f32 %v361, %v1411
  %v1413 = vpop.f32.mrb[0].mxu0
  %v1414 = vpop.f32.mrb[0].mxu0
  %v1415 = vadd.f32 %v361, %v1414
  %v1416 = vpop.f32.mrb[0].mxu0
  %1417 = vmatprep.mubr.bf16.mxu0 0
  %1418 = vmatmul.mubr.bf16.gmra.mrb[0].mxu0 %v855
  %v1419 = vpop.f32.mrb[0].mxu0
  %v1420 = vadd.f32 %v361, %v1419
  %v1421 = vpop.f32.mrb[0].mxu0
  %v1422 = vpop.f32.mrb[0].mxu0
  %v1423 = vadd.f32 %v361, %v1422
  %v1424 = vpop.f32.mrb[0].mxu0
  %1425 = vmatprep.mubr.bf16.mxu0 0
  %1426 = vmatmul.mubr.bf16.gmra.mrb[0].mxu0 %v858
  %v1427 = vpop.f32.mrb[0].mxu0
  %v1428 = vadd.f32 %v361, %v1427
  %v1429 = vpop.f32.mrb[0].mxu0
  %v1430 = vpop.f32.mrb[0].mxu0
  %v1431 = vadd.f32 %v361, %v1430
  %v1432 = vpop.f32.mrb[0].mxu0
  %1433 = vmatprep.mubr.bf16.mxu0 0
  %1434 = vmatmul.mubr.bf16.gmra.mrb[0].mxu0 %v861
  %v1435 = vpop.f32.mrb[0].mxu0
  %v1436 = vadd.f32 %v361, %v1435
  %v1437 = vpop.f32.mrb[0].mxu0
  %v1438 = vpop.f32.mrb[0].mxu0
  %v1439 = vadd.f32 %v361, %v1438
  %v1440 = vpop.f32.mrb[0].mxu0
  %1441 = vmatprep.mubr.bf16.mxu0 0
  %1442 = vmatmul.mubr.bf16.gmra.mrb[0].mxu0 %v864
  %v1443 = vpop.f32.mrb[0].mxu0
  %v1444 = vadd.f32 %v361, %v1443
  %v1445 = vpop.f32.mrb[0].mxu0
  %v1446 = vpop.f32.mrb[0].mxu0
  %v1447 = vadd.f32 %v361, %v1446
  %v1448 = vpop.f32.mrb[0].mxu0
  %1449 = vmatprep.mubr.bf16.mxu0 0
  %1450 = vmatmul.mubr.bf16.gmra.mrb[0].mxu0 %v867
  %v1451 = vpop.f32.mrb[0].mxu0
  %v1452 = vadd.f32 %v361, %v1451
  %v1453 = vpop.f32.mrb[0].mxu0
  %v1454 = vpop.f32.mrb[0].mxu0
  %v1455 = vadd.f32 %v361, %v1454
  %v1456 = vpop.f32.mrb[0].mxu0
  %1457 = vmatprep.mubr.bf16.mxu0 0
  %1458 = vmatmul.mubr.bf16.gmra.mrb[0].mxu0 %v870
  %v1459 = vpop.f32.mrb[0].mxu0
  %v1460 = vadd.f32 %v361, %v1459
  %v1461 = vpop.f32.mrb[0].mxu0
  %v1462 = vpop.f32.mrb[0].mxu0
  %v1463 = vadd.f32 %v361, %v1462
  %v1464 = vpop.f32.mrb[0].mxu0
  %1465 = vmatprep.mubr.bf16.mxu0 0
  %1466 = vmatmul.mubr.bf16.gmra.mrb[0].mxu0 %v873
  %v1467 = vpop.f32.mrb[0].mxu0
  %v1468 = vadd.f32 %v361, %v1467
  %v1469 = vpop.f32.mrb[0].mxu0
  %v1470 = vpop.f32.mrb[0].mxu0
  %v1471 = vadd.f32 %v361, %v1470
  %v1472 = vpop.f32.mrb[0].mxu0
  %1473 = vmatprep.mubr.bf16.mxu0 0
  %1474 = vmatmul.mubr.bf16.gmra.mrb[0].mxu0 %v876
  %v1475 = vpop.f32.mrb[0].mxu0
  %v1476 = vadd.f32 %v361, %v1475
  %v1477 = vpop.f32.mrb[0].mxu0
  %v1478 = vpop.f32.mrb[0].mxu0
  %v1479 = vadd.f32 %v361, %v1478
  %v1480 = vpop.f32.mrb[0].mxu0
  %1481 = vmatprep.mubr.bf16.mxu0 0
  %1482 = vmatmul.mubr.bf16.gmra.mrb[0].mxu0 %v879
  %v1483 = vpop.f32.mrb[0].mxu0
  %v1484 = vadd.f32 %v361, %v1483
  %v1485 = vpop.f32.mrb[0].mxu0
  %v1486 = vpop.f32.mrb[0].mxu0
  %v1487 = vadd.f32 %v361, %v1486
  %v1488 = vpop.f32.mrb[0].mxu0
  %1489 = vdwg.mxu0
  %v1490 = vmul.f32 %v916, %v916
  %v1491 = vmul.f32 %v919, %v919
  %v1492 = vmul.f32 %v924, %v924
  %v1493 = vmul.f32 %v927, %v927
  %v1494 = vmul.f32 %v932, %v932
  %v1495 = vmul.f32 %v935, %v935
  %v1496 = vmul.f32 %v940, %v940
  %v1497 = vmul.f32 %v943, %v943
  %v1498 = vmul.f32 %v948, %v948
  %v1499 = vmul.f32 %v951, %v951
  %v1500 = vmul.f32 %v956, %v956
  %v1501 = vmul.f32 %v959, %v959
  %v1502 = vmul.f32 %v964, %v964
  %v1503 = vmul.f32 %v967, %v967
  %v1504 = vmul.f32 %v972, %v972
  %v1505 = vmul.f32 %v975, %v975
  %v1506 = vmul.f32 %v980, %v980
  %v1507 = vmul.f32 %v983, %v983
  %v1508 = vmul.f32 %v988, %v988
  %v1509 = vmul.f32 %v991, %v991
  %v1510 = vmul.f32 %v996, %v996
  %v1511 = vmul.f32 %v999, %v999
  %v1512 = vmul.f32 %v1004, %v1004
  %v1513 = vmul.f32 %v1007, %v1007
  %v1514 = vmul.f32 %v1012, %v1012
  %v1515 = vmul.f32 %v1015, %v1015
  %v1516 = vmul.f32 %v1020, %v1020
  %v1517 = vmul.f32 %v1023, %v1023
  %v1518 = vmul.f32 %v1028, %v1028
  %v1519 = vmul.f32 %v1031, %v1031
  %v1520 = vmul.f32 %v1036, %v1036
  %v1521 = vmul.f32 %v1039, %v1039
  %v1522 = vmul.f32 %v1044, %v1044
  %v1523 = vmul.f32 %v1047, %v1047
  %v1524 = vmul.f32 %v1052, %v1052
  %v1525 = vmul.f32 %v1055, %v1055
  %v1526 = vmul.f32 %v1060, %v1060
  %v1527 = vmul.f32 %v1063, %v1063
  %v1528 = vmul.f32 %v1068, %v1068
  %v1529 = vmul.f32 %v1071, %v1071
  %v1530 = vmul.f32 %v1076, %v1076
  %v1531 = vmul.f32 %v1079, %v1079
  %v1532 = vmul.f32 %v1084, %v1084
  %v1533 = vmul.f32 %v1087, %v1087
  %v1534 = vmul.f32 %v1092, %v1092
  %v1535 = vmul.f32 %v1095, %v1095
  %v1536 = vmul.f32 %v1100, %v1100
  %v1537 = vmul.f32 %v1103, %v1103
  %v1538 = vmul.f32 %v1108, %v1108
  %v1539 = vmul.f32 %v1111, %v1111
  %v1540 = vmul.f32 %v1116, %v1116
  %v1541 = vmul.f32 %v1119, %v1119
  %v1542 = vmul.f32 %v1124, %v1124
  %v1543 = vmul.f32 %v1127, %v1127
  %v1544 = vmul.f32 %v1132, %v1132
  %v1545 = vmul.f32 %v1135, %v1135
  %v1546 = vmul.f32 %v1140, %v1140
  %v1547 = vmul.f32 %v1143, %v1143
  %v1548 = vmul.f32 %v1148, %v1148
  %v1549 = vmul.f32 %v1151, %v1151
  %v1550 = vmul.f32 %v1156, %v1156
  %v1551 = vmul.f32 %v1159, %v1159
  %v1552 = vmul.f32 %v1164, %v1164
  %v1553 = vmul.f32 %v1167, %v1167
  %v1554 = vmul.f32 %v1172, %v1172
  %v1555 = vmul.f32 %v1175, %v1175
  %v1556 = vmul.f32 %v1180, %v1180
  %v1557 = vmul.f32 %v1183, %v1183
  %v1558 = vmul.f32 %v1188, %v1188
  %v1559 = vmul.f32 %v1191, %v1191
  %v1560 = vmul.f32 %v1196, %v1196
  %v1561 = vmul.f32 %v1199, %v1199
  %v1562 = vmul.f32 %v1204, %v1204
  %v1563 = vmul.f32 %v1207, %v1207
  %v1564 = vmul.f32 %v1212, %v1212
  %v1565 = vmul.f32 %v1215, %v1215
  %v1566 = vmul.f32 %v1220, %v1220
  %v1567 = vmul.f32 %v1223, %v1223
  %v1568 = vmul.f32 %v1228, %v1228
  %v1569 = vmul.f32 %v1231, %v1231
  %v1570 = vmul.f32 %v1236, %v1236
  %v1571 = vmul.f32 %v1239, %v1239
  %v1572 = vmul.f32 %v1244, %v1244
  %v1573 = vmul.f32 %v1247, %v1247
  %v1574 = vmul.f32 %v1252, %v1252
  %v1575 = vmul.f32 %v1255, %v1255
  %v1576 = vmul.f32 %v1260, %v1260
  %v1577 = vmul.f32 %v1263, %v1263
  %v1578 = vmul.f32 %v1268, %v1268
  %v1579 = vmul.f32 %v1271, %v1271
  %v1580 = vmul.f32 %v1276, %v1276
  %v1581 = vmul.f32 %v1279, %v1279
  %v1582 = vmul.f32 %v1284, %v1284
  %v1583 = vmul.f32 %v1287, %v1287
  %v1584 = vmul.f32 %v1292, %v1292
  %v1585 = vmul.f32 %v1295, %v1295
  %v1586 = vmul.f32 %v1300, %v1300
  %v1587 = vmul.f32 %v1303, %v1303
  %v1588 = vmul.f32 %v1308, %v1308
  %v1589 = vmul.f32 %v1311, %v1311
  %v1590 = vmul.f32 %v1316, %v1316
  %v1591 = vmul.f32 %v1319, %v1319
  %v1592 = vmul.f32 %v1324, %v1324
  %v1593 = vmul.f32 %v1327, %v1327
  %v1594 = vmul.f32 %v1332, %v1332
  %v1595 = vmul.f32 %v1335, %v1335
  %v1596 = vmul.f32 %v1340, %v1340
  %v1597 = vmul.f32 %v1343, %v1343
  %v1598 = vmul.f32 %v1348, %v1348
  %v1599 = vmul.f32 %v1351, %v1351
  %v1600 = vmul.f32 %v1356, %v1356
  %v1601 = vmul.f32 %v1359, %v1359
  %v1602 = vmul.f32 %v1364, %v1364
  %v1603 = vmul.f32 %v1367, %v1367
  %v1604 = vmul.f32 %v1372, %v1372
  %v1605 = vmul.f32 %v1375, %v1375
  %v1606 = vmul.f32 %v1380, %v1380
  %v1607 = vmul.f32 %v1383, %v1383
  %v1608 = vmul.f32 %v1388, %v1388
  %v1609 = vmul.f32 %v1391, %v1391
  %v1610 = vmul.f32 %v1396, %v1396
  %v1611 = vmul.f32 %v1399, %v1399
  %v1612 = vmul.f32 %v1404, %v1404
  %v1613 = vmul.f32 %v1407, %v1407
  %v1614 = vmul.f32 %v1412, %v1412
  %v1615 = vmul.f32 %v1415, %v1415
  %v1616 = vmul.f32 %v1420, %v1420
  %v1617 = vmul.f32 %v1423, %v1423
  %v1618 = vmul.f32 %v1428, %v1428
  %v1619 = vmul.f32 %v1431, %v1431
  %v1620 = vmul.f32 %v1436, %v1436
  %v1621 = vmul.f32 %v1439, %v1439
  %v1622 = vmul.f32 %v1444, %v1444
  %v1623 = vmul.f32 %v1447, %v1447
  %v1624 = vmul.f32 %v1452, %v1452
  %v1625 = vmul.f32 %v1455, %v1455
  %v1626 = vmul.f32 %v1460, %v1460
  %v1627 = vmul.f32 %v1463, %v1463
  %v1628 = vmul.f32 %v1468, %v1468
  %v1629 = vmul.f32 %v1471, %v1471
  %v1630 = vmul.f32 %v1476, %v1476
  %v1631 = vmul.f32 %v1479, %v1479
  %v1632 = vmul.f32 %v1484, %v1484
  %v1633 = vmul.f32 %v1487, %v1487
  %v1634 = vmul.f32 %v916, %v1490
  %v1635 = vmul.f32 %v919, %v1491
  %v1636 = vmul.f32 %v924, %v1492
  %v1637 = vmul.f32 %v927, %v1493
  %v1638 = vmul.f32 %v932, %v1494
  %v1639 = vmul.f32 %v935, %v1495
  %v1640 = vmul.f32 %v940, %v1496
  %v1641 = vmul.f32 %v943, %v1497
  %v1642 = vmul.f32 %v948, %v1498
  %v1643 = vmul.f32 %v951, %v1499
  %v1644 = vmul.f32 %v956, %v1500
  %v1645 = vmul.f32 %v959, %v1501
  %v1646 = vmul.f32 %v964, %v1502
  %v1647 = vmul.f32 %v967, %v1503
  %v1648 = vmul.f32 %v972, %v1504
  %v1649 = vmul.f32 %v975, %v1505
  %v1650 = vmul.f32 %v980, %v1506
  %v1651 = vmul.f32 %v983, %v1507
  %v1652 = vmul.f32 %v988, %v1508
  %v1653 = vmul.f32 %v991, %v1509
  %v1654 = vmul.f32 %v996, %v1510
  %v1655 = vmul.f32 %v999, %v1511
  %v1656 = vmul.f32 %v1004, %v1512
  %v1657 = vmul.f32 %v1007, %v1513
  %v1658 = vmul.f32 %v1012, %v1514
  %v1659 = vmul.f32 %v1015, %v1515
  %v1660 = vmul.f32 %v1020, %v1516
  %v1661 = vmul.f32 %v1023, %v1517
  %v1662 = vmul.f32 %v1028, %v1518
  %v1663 = vmul.f32 %v1031, %v1519
  %v1664 = vmul.f32 %v1036, %v1520
  %v1665 = vmul.f32 %v1039, %v1521
  %v1666 = vmul.f32 %v1044, %v1522
  %v1667 = vmul.f32 %v1047, %v1523
  %v1668 = vmul.f32 %v1052, %v1524
  %v1669 = vmul.f32 %v1055, %v1525
  %v1670 = vmul.f32 %v1060, %v1526
  %v1671 = vmul.f32 %v1063, %v1527
  %v1672 = vmul.f32 %v1068, %v1528
  %v1673 = vmul.f32 %v1071, %v1529
  %v1674 = vmul.f32 %v1076, %v1530
  %v1675 = vmul.f32 %v1079, %v1531
  %v1676 = vmul.f32 %v1084, %v1532
  %v1677 = vmul.f32 %v1087, %v1533
  %v1678 = vmul.f32 %v1092, %v1534
  %v1679 = vmul.f32 %v1095, %v1535
  %v1680 = vmul.f32 %v1100, %v1536
  %v1681 = vmul.f32 %v1103, %v1537
  %v1682 = vmul.f32 %v1108, %v1538
  %v1683 = vmul.f32 %v1111, %v1539
  %v1684 = vmul.f32 %v1116, %v1540
  %v1685 = vmul.f32 %v1119, %v1541
  %v1686 = vmul.f32 %v1124, %v1542
  %v1687 = vmul.f32 %v1127, %v1543
  %v1688 = vmul.f32 %v1132, %v1544
  %v1689 = vmul.f32 %v1135, %v1545
  %v1690 = vmul.f32 %v1140, %v1546
  %v1691 = vmul.f32 %v1143, %v1547
  %v1692 = vmul.f32 %v1148, %v1548
  %v1693 = vmul.f32 %v1151, %v1549
  %v1694 = vmul.f32 %v1156, %v1550
  %v1695 = vmul.f32 %v1159, %v1551
  %v1696 = vmul.f32 %v1164, %v1552
  %v1697 = vmul.f32 %v1167, %v1553
  %v1698 = vmul.f32 %v1172, %v1554
  %v1699 = vmul.f32 %v1175, %v1555
  %v1700 = vmul.f32 %v1180, %v1556
  %v1701 = vmul.f32 %v1183, %v1557
  %v1702 = vmul.f32 %v1188, %v1558
  %v1703 = vmul.f32 %v1191, %v1559
  %v1704 = vmul.f32 %v1196, %v1560
  %v1705 = vmul.f32 %v1199, %v1561
  %v1706 = vmul.f32 %v1204, %v1562
  %v1707 = vmul.f32 %v1207, %v1563
  %v1708 = vmul.f32 %v1212, %v1564
  %v1709 = vmul.f32 %v1215, %v1565
  %v1710 = vmul.f32 %v1220, %v1566
  %v1711 = vmul.f32 %v1223, %v1567
  %v1712 = vmul.f32 %v1228, %v1568
  %v1713 = vmul.f32 %v1231, %v1569
  %v1714 = vmul.f32 %v1236, %v1570
  %v1715 = vmul.f32 %v1239, %v1571
  %v1716 = vmul.f32 %v1244, %v1572
  %v1717 = vmul.f32 %v1247, %v1573
  %v1718 = vmul.f32 %v1252, %v1574
  %v1719 = vmul.f32 %v1255, %v1575
  %v1720 = vmul.f32 %v1260, %v1576
  %v1721 = vmul.f32 %v1263, %v1577
  %v1722 = vmul.f32 %v1268, %v1578
  %v1723 = vmul.f32 %v1271, %v1579
  %v1724 = vmul.f32 %v1276, %v1580
  %v1725 = vmul.f32 %v1279, %v1581
  %v1726 = vmul.f32 %v1284, %v1582
  %v1727 = vmul.f32 %v1287, %v1583
  %v1728 = vmul.f32 %v1292, %v1584
  %v1729 = vmul.f32 %v1295, %v1585
  %v1730 = vmul.f32 %v1300, %v1586
  %v1731 = vmul.f32 %v1303, %v1587
  %v1732 = vmul.f32 %v1308, %v1588
  %v1733 = vmul.f32 %v1311, %v1589
  %v1734 = vmul.f32 %v1316, %v1590
  %v1735 = vmul.f32 %v1319, %v1591
  %v1736 = vmul.f32 %v1324, %v1592
  %v1737 = vmul.f32 %v1327, %v1593
  %v1738 = vmul.f32 %v1332, %v1594
  %v1739 = vmul.f32 %v1335, %v1595
  %v1740 = vmul.f32 %v1340, %v1596
  %v1741 = vmul.f32 %v1343, %v1597
  %v1742 = vmul.f32 %v1348, %v1598
  %v1743 = vmul.f32 %v1351, %v1599
  %v1744 = vmul.f32 %v1356, %v1600
  %v1745 = vmul.f32 %v1359, %v1601
  %v1746 = vmul.f32 %v1364, %v1602
  %v1747 = vmul.f32 %v1367, %v1603
  %v1748 = vmul.f32 %v1372, %v1604
  %v1749 = vmul.f32 %v1375, %v1605
  %v1750 = vmul.f32 %v1380, %v1606
  %v1751 = vmul.f32 %v1383, %v1607
  %v1752 = vmul.f32 %v1388, %v1608
  %v1753 = vmul.f32 %v1391, %v1609
  %v1754 = vmul.f32 %v1396, %v1610
  %v1755 = vmul.f32 %v1399, %v1611
  %v1756 = vmul.f32 %v1404, %v1612
  %v1757 = vmul.f32 %v1407, %v1613
  %v1758 = vmul.f32 %v1412, %v1614
  %v1759 = vmul.f32 %v1415, %v1615
  %v1760 = vmul.f32 %v1420, %v1616
  %v1761 = vmul.f32 %v1423, %v1617
  %v1762 = vmul.f32 %v1428, %v1618
  %v1763 = vmul.f32 %v1431, %v1619
  %v1764 = vmul.f32 %v1436, %v1620
  %v1765 = vmul.f32 %v1439, %v1621
  %v1766 = vmul.f32 %v1444, %v1622
  %v1767 = vmul.f32 %v1447, %v1623
  %v1768 = vmul.f32 %v1452, %v1624
  %v1769 = vmul.f32 %v1455, %v1625
  %v1770 = vmul.f32 %v1460, %v1626
  %v1771 = vmul.f32 %v1463, %v1627
  %v1772 = vmul.f32 %v1468, %v1628
  %v1773 = vmul.f32 %v1471, %v1629
  %v1774 = vmul.f32 %v1476, %v1630
  %v1775 = vmul.f32 %v1479, %v1631
  %v1776 = vmul.f32 %v1484, %v1632
  %v1777 = vmul.f32 %v1487, %v1633
  %v1778 = vmul.f32 %v1634, 0.044715
  %v1779 = vmul.f32 %v1635, 0.044715
  %v1780 = vmul.f32 %v1636, 0.044715
  %v1781 = vmul.f32 %v1637, 0.044715
  %v1782 = vmul.f32 %v1638, 0.044715
  %v1783 = vmul.f32 %v1639, 0.044715
  %v1784 = vmul.f32 %v1640, 0.044715
  %v1785 = vmul.f32 %v1641, 0.044715
  %v1786 = vmul.f32 %v1642, 0.044715
  %v1787 = vmul.f32 %v1643, 0.044715
  %v1788 = vmul.f32 %v1644, 0.044715
  %v1789 = vmul.f32 %v1645, 0.044715
  %v1790 = vmul.f32 %v1646, 0.044715
  %v1791 = vmul.f32 %v1647, 0.044715
  %v1792 = vmul.f32 %v1648, 0.044715
  %v1793 = vmul.f32 %v1649, 0.044715
  %v1794 = vmul.f32 %v1650, 0.044715
  %v1795 = vmul.f32 %v1651, 0.044715
  %v1796 = vmul.f32 %v1652, 0.044715
  %v1797 = vmul.f32 %v1653, 0.044715
  %v1798 = vmul.f32 %v1654, 0.044715
  %v1799 = vmul.f32 %v1655, 0.044715
  %v1800 = vmul.f32 %v1656, 0.044715
  %v1801 = vmul.f32 %v1657, 0.044715
  %v1802 = vmul.f32 %v1658, 0.044715
  %v1803 = vmul.f32 %v1659, 0.044715
  %v1804 = vmul.f32 %v1660, 0.044715
  %v1805 = vmul.f32 %v1661, 0.044715
  %v1806 = vmul.f32 %v1662, 0.044715
  %v1807 = vmul.f32 %v1663, 0.044715
  %v1808 = vmul.f32 %v1664, 0.044715
  %v1809 = vmul.f32 %v1665, 0.044715
  %v1810 = vmul.f32 %v1666, 0.044715
  %v1811 = vmul.f32 %v1667, 0.044715
  %v1812 = vmul.f32 %v1668, 0.044715
  %v1813 = vmul.f32 %v1669, 0.044715
  %v1814 = vmul.f32 %v1670, 0.044715
  %v1815 = vmul.f32 %v1671, 0.044715
  %v1816 = vmul.f32 %v1672, 0.044715
  %v1817 = vmul.f32 %v1673, 0.044715
  %v1818 = vmul.f32 %v1674, 0.044715
  %v1819 = vmul.f32 %v1675, 0.044715
  %v1820 = vmul.f32 %v1676, 0.044715
  %v1821 = vmul.f32 %v1677, 0.044715
  %v1822 = vmul.f32 %v1678, 0.044715
  %v1823 = vmul.f32 %v1679, 0.044715
  %v1824 = vmul.f32 %v1680, 0.044715
  %v1825 = vmul.f32 %v1681, 0.044715
  %v1826 = vmul.f32 %v1682, 0.044715
  %v1827 = vmul.f32 %v1683, 0.044715
  %v1828 = vmul.f32 %v1684, 0.044715
  %v1829 = vmul.f32 %v1685, 0.044715
  %v1830 = vmul.f32 %v1686, 0.044715
  %v1831 = vmul.f32 %v1687, 0.044715
  %v1832 = vmul.f32 %v1688, 0.044715
  %v1833 = vmul.f32 %v1689, 0.044715
  %v1834 = vmul.f32 %v1690, 0.044715
  %v1835 = vmul.f32 %v1691, 0.044715
  %v1836 = vmul.f32 %v1692, 0.044715
  %v1837 = vmul.f32 %v1693, 0.044715
  %v1838 = vmul.f32 %v1694, 0.044715
  %v1839 = vmul.f32 %v1695, 0.044715
  %v1840 = vmul.f32 %v1696, 0.044715
  %v1841 = vmul.f32 %v1697, 0.044715
  %v1842 = vmul.f32 %v1698, 0.044715
  %v1843 = vmul.f32 %v1699, 0.044715
  %v1844 = vmul.f32 %v1700, 0.044715
  %v1845 = vmul.f32 %v1701, 0.044715
  %v1846 = vmul.f32 %v1702, 0.044715
  %v1847 = vmul.f32 %v1703, 0.044715
  %v1848 = vmul.f32 %v1704, 0.044715
  %v1849 = vmul.f32 %v1705, 0.044715
  %v1850 = vmul.f32 %v1706, 0.044715
  %v1851 = vmul.f32 %v1707, 0.044715
  %v1852 = vmul.f32 %v1708, 0.044715
  %v1853 = vmul.f32 %v1709, 0.044715
  %v1854 = vmul.f32 %v1710, 0.044715
  %v1855 = vmul.f32 %v1711, 0.044715
  %v1856 = vmul.f32 %v1712, 0.044715
  %v1857 = vmul.f32 %v1713, 0.044715
  %v1858 = vmul.f32 %v1714, 0.044715
  %v1859 = vmul.f32 %v1715, 0.044715
  %v1860 = vmul.f32 %v1716, 0.044715
  %v1861 = vmul.f32 %v1717, 0.044715
  %v1862 = vmul.f32 %v1718, 0.044715
  %v1863 = vmul.f32 %v1719, 0.044715
  %v1864 = vmul.f32 %v1720, 0.044715
  %v1865 = vmul.f32 %v1721, 0.044715
  %v1866 = vmul.f32 %v1722, 0.044715
  %v1867 = vmul.f32 %v1723, 0.044715
  %v1868 = vmul.f32 %v1724, 0.044715
  %v1869 = vmul.f32 %v1725, 0.044715
  %v1870 = vmul.f32 %v1726, 0.044715
  %v1871 = vmul.f32 %v1727, 0.044715
  %v1872 = vmul.f32 %v1728, 0.044715
  %v1873 = vmul.f32 %v1729, 0.044715
  %v1874 = vmul.f32 %v1730, 0.044715
  %v1875 = vmul.f32 %v1731, 0.044715
  %v1876 = vmul.f32 %v1732, 0.044715
  %v1877 = vmul.f32 %v1733, 0.044715
  %v1878 = vmul.f32 %v1734, 0.044715
  %v1879 = vmul.f32 %v1735, 0.044715
  %v1880 = vmul.f32 %v1736, 0.044715
  %v1881 = vmul.f32 %v1737, 0.044715
  %v1882 = vmul.f32 %v1738, 0.044715
  %v1883 = vmul.f32 %v1739, 0.044715
  %v1884 = vmul.f32 %v1740, 0.044715
  %v1885 = vmul.f32 %v1741, 0.044715
  %v1886 = vmul.f32 %v1742, 0.044715
  %v1887 = vmul.f32 %v1743, 0.044715
  %v1888 = vmul.f32 %v1744, 0.044715
  %v1889 = vmul.f32 %v1745, 0.044715
  %v1890 = vmul.f32 %v1746, 0.044715
  %v1891 = vmul.f32 %v1747, 0.044715
  %v1892 = vmul.f32 %v1748, 0.044715
  %v1893 = vmul.f32 %v1749, 0.044715
  %v1894 = vmul.f32 %v1750, 0.044715
  %v1895 = vmul.f32 %v1751, 0.044715
  %v1896 = vmul.f32 %v1752, 0.044715
  %v1897 = vmul.f32 %v1753, 0.044715
  %v1898 = vmul.f32 %v1754, 0.044715
  %v1899 = vmul.f32 %v1755, 0.044715
  %v1900 = vmul.f32 %v1756, 0.044715
  %v1901 = vmul.f32 %v1757, 0.044715
  %v1902 = vmul.f32 %v1758, 0.044715
  %v1903 = vmul.f32 %v1759, 0.044715
  %v1904 = vmul.f32 %v1760, 0.044715
  %v1905 = vmul.f32 %v1761, 0.044715
  %v1906 = vmul.f32 %v1762, 0.044715
  %v1907 = vmul.f32 %v1763, 0.044715
  %v1908 = vmul.f32 %v1764, 0.044715
  %v1909 = vmul.f32 %v1765, 0.044715
  %v1910 = vmul.f32 %v1766, 0.044715
  %v1911 = vmul.f32 %v1767, 0.044715
  %v1912 = vmul.f32 %v1768, 0.044715
  %v1913 = vmul.f32 %v1769, 0.044715
  %v1914 = vmul.f32 %v1770, 0.044715
  %v1915 = vmul.f32 %v1771, 0.044715
  %v1916 = vmul.f32 %v1772, 0.044715
  %v1917 = vmul.f32 %v1773, 0.044715
  %v1918 = vmul.f32 %v1774, 0.044715
  %v1919 = vmul.f32 %v1775, 0.044715
  %v1920 = vmul.f32 %v1776, 0.044715
  %v1921 = vmul.f32 %v1777, 0.044715
  %v1922 = vadd.f32 %v916, %v1778
  %v1923 = vadd.f32 %v919, %v1779
  %v1924 = vadd.f32 %v924, %v1780
  %v1925 = vadd.f32 %v927, %v1781
  %v1926 = vadd.f32 %v932, %v1782
  %v1927 = vadd.f32 %v935, %v1783
  %v1928 = vadd.f32 %v940, %v1784
  %v1929 = vadd.f32 %v943, %v1785
  %v1930 = vadd.f32 %v948, %v1786
  %v1931 = vadd.f32 %v951, %v1787
  %v1932 = vadd.f32 %v956, %v1788
  %v1933 = vadd.f32 %v959, %v1789
  %v1934 = vadd.f32 %v964, %v1790
  %v1935 = vadd.f32 %v967, %v1791
  %v1936 = vadd.f32 %v972, %v1792
  %v1937 = vadd.f32 %v975, %v1793
  %v1938 = vadd.f32 %v980, %v1794
  %v1939 = vadd.f32 %v983, %v1795
  %v1940 = vadd.f32 %v988, %v1796
  %v1941 = vadd.f32 %v991, %v1797
  %v1942 = vadd.f32 %v996, %v1798
  %v1943 = vadd.f32 %v999, %v1799
  %v1944 = vadd.f32 %v1004, %v1800
  %v1945 = vadd.f32 %v1007, %v1801
  %v1946 = vadd.f32 %v1012, %v1802
  %v1947 = vadd.f32 %v1015, %v1803
  %v1948 = vadd.f32 %v1020, %v1804
  %v1949 = vadd.f32 %v1023, %v1805
  %v1950 = vadd.f32 %v1028, %v1806
  %v1951 = vadd.f32 %v1031, %v1807
  %v1952 = vadd.f32 %v1036, %v1808
  %v1953 = vadd.f32 %v1039, %v1809
  %v1954 = vadd.f32 %v1044, %v1810
  %v1955 = vadd.f32 %v1047, %v1811
  %v1956 = vadd.f32 %v1052, %v1812
  %v1957 = vadd.f32 %v1055, %v1813
  %v1958 = vadd.f32 %v1060, %v1814
  %v1959 = vadd.f32 %v1063, %v1815
  %v1960 = vadd.f32 %v1068, %v1816
  %v1961 = vadd.f32 %v1071, %v1817
  %v1962 = vadd.f32 %v1076, %v1818
  %v1963 = vadd.f32 %v1079, %v1819
  %v1964 = vadd.f32 %v1084, %v1820
  %v1965 = vadd.f32 %v1087, %v1821
  %v1966 = vadd.f32 %v1092, %v1822
  %v1967 = vadd.f32 %v1095, %v1823
  %v1968 = vadd.f32 %v1100, %v1824
  %v1969 = vadd.f32 %v1103, %v1825
  %v1970 = vadd.f32 %v1108, %v1826
  %v1971 = vadd.f32 %v1111, %v1827
  %v1972 = vadd.f32 %v1116, %v1828
  %v1973 = vadd.f32 %v1119, %v1829
  %v1974 = vadd.f32 %v1124, %v1830
  %v1975 = vadd.f32 %v1127, %v1831
  %v1976 = vadd.f32 %v1132, %v1832
  %v1977 = vadd.f32 %v1135, %v1833
  %v1978 = vadd.f32 %v1140, %v1834
  %v1979 = vadd.f32 %v1143, %v1835
  %v1980 = vadd.f32 %v1148, %v1836
  %v1981 = vadd.f32 %v1151, %v1837
  %v1982 = vadd.f32 %v1156, %v1838
  %v1983 = vadd.f32 %v1159, %v1839
  %v1984 = vadd.f32 %v1164, %v1840
  %v1985 = vadd.f32 %v1167, %v1841
  %v1986 = vadd.f32 %v1172, %v1842
  %v1987 = vadd.f32 %v1175, %v1843
  %v1988 = vadd.f32 %v1180, %v1844
  %v1989 = vadd.f32 %v1183, %v1845
  %v1990 = vadd.f32 %v1188, %v1846
  %v1991 = vadd.f32 %v1191, %v1847
  %v1992 = vadd.f32 %v1196, %v1848
  %v1993 = vadd.f32 %v1199, %v1849
  %v1994 = vadd.f32 %v1204, %v1850
  %v1995 = vadd.f32 %v1207, %v1851
  %v1996 = vadd.f32 %v1212, %v1852
  %v1997 = vadd.f32 %v1215, %v1853
  %v1998 = vadd.f32 %v1220, %v1854
  %v1999 = vadd.f32 %v1223, %v1855
  %v2000 = vadd.f32 %v1228, %v1856
  %v2001 = vadd.f32 %v1231, %v1857
  %v2002 = vadd.f32 %v1236, %v1858
  %v2003 = vadd.f32 %v1239, %v1859
  %v2004 = vadd.f32 %v1244, %v1860
  %v2005 = vadd.f32 %v1247, %v1861
  %v2006 = vadd.f32 %v1252, %v1862
  %v2007 = vadd.f32 %v1255, %v1863
  %v2008 = vadd.f32 %v1260, %v1864
  %v2009 = vadd.f32 %v1263, %v1865
  %v2010 = vadd.f32 %v1268, %v1866
  %v2011 = vadd.f32 %v1271, %v1867
  %v2012 = vadd.f32 %v1276, %v1868
  %v2013 = vadd.f32 %v1279, %v1869
  %v2014 = vadd.f32 %v1284, %v1870
  %v2015 = vadd.f32 %v1287, %v1871
  %v2016 = vadd.f32 %v1292, %v1872
  %v2017 = vadd.f32 %v1295, %v1873
  %v2018 = vadd.f32 %v1300, %v1874
  %v2019 = vadd.f32 %v1303, %v1875
  %v2020 = vadd.f32 %v1308, %v1876
  %v2021 = vadd.f32 %v1311, %v1877
  %v2022 = vadd.f32 %v1316, %v1878
  %v2023 = vadd.f32 %v1319, %v1879
  %v2024 = vadd.f32 %v1324, %v1880
  %v2025 = vadd.f32 %v1327, %v1881
  %v2026 = vadd.f32 %v1332, %v1882
  %v2027 = vadd.f32 %v1335, %v1883
  %v2028 = vadd.f32 %v1340, %v1884
  %v2029 = vadd.f32 %v1343, %v1885
  %v2030 = vadd.f32 %v1348, %v1886
  %v2031 = vadd.f32 %v1351, %v1887
  %v2032 = vadd.f32 %v1356, %v1888
  %v2033 = vadd.f32 %v1359, %v1889
  %v2034 = vadd.f32 %v1364, %v1890
  %v2035 = vadd.f32 %v1367, %v1891
  %v2036 = vadd.f32 %v1372, %v1892
  %v2037 = vadd.f32 %v1375, %v1893
  %v2038 = vadd.f32 %v1380, %v1894
  %v2039 = vadd.f32 %v1383, %v1895
  %v2040 = vadd.f32 %v1388, %v1896
  %v2041 = vadd.f32 %v1391, %v1897
  %v2042 = vadd.f32 %v1396, %v1898
  %v2043 = vadd.f32 %v1399, %v1899
  %v2044 = vadd.f32 %v1404, %v1900
  %v2045 = vadd.f32 %v1407, %v1901
  %v2046 = vadd.f32 %v1412, %v1902
  %v2047 = vadd.f32 %v1415, %v1903
  %v2048 = vadd.f32 %v1420, %v1904
  %v2049 = vadd.f32 %v1423, %v1905
  %v2050 = vadd.f32 %v1428, %v1906
  %v2051 = vadd.f32 %v1431, %v1907
  %v2052 = vadd.f32 %v1436, %v1908
  %v2053 = vadd.f32 %v1439, %v1909
  %v2054 = vadd.f32 %v1444, %v1910
  %v2055 = vadd.f32 %v1447, %v1911
  %v2056 = vadd.f32 %v1452, %v1912
  %v2057 = vadd.f32 %v1455, %v1913
  %v2058 = vadd.f32 %v1460, %v1914
  %v2059 = vadd.f32 %v1463, %v1915
  %v2060 = vadd.f32 %v1468, %v1916
  %v2061 = vadd.f32 %v1471, %v1917
  %v2062 = vadd.f32 %v1476, %v1918
  %v2063 = vadd.f32 %v1479, %v1919
  %v2064 = vadd.f32 %v1484, %v1920
  %v2065 = vadd.f32 %v1487, %v1921
  %v2066 = vmul.f32 %v1922, 0.7978846
  %v2067 = vmul.f32 %v1923, 0.7978846
  %v2068 = vmul.f32 %v1924, 0.7978846
  %v2069 = vmul.f32 %v1925, 0.7978846
  %v2070 = vmul.f32 %v1926, 0.7978846
  %v2071 = vmul.f32 %v1927, 0.7978846
  %v2072 = vmul.f32 %v1928, 0.7978846
  %v2073 = vmul.f32 %v1929, 0.7978846
  %v2074 = vmul.f32 %v1930, 0.7978846
  %v2075 = vmul.f32 %v1931, 0.7978846
  %v2076 = vmul.f32 %v1932, 0.7978846
  %v2077 = vmul.f32 %v1933, 0.7978846
  %v2078 = vmul.f32 %v1934, 0.7978846
  %v2079 = vmul.f32 %v1935, 0.7978846
  %v2080 = vmul.f32 %v1936, 0.7978846
  %v2081 = vmul.f32 %v1937, 0.7978846
  %v2082 = vmul.f32 %v1938, 0.7978846
  %v2083 = vmul.f32 %v1939, 0.7978846
  %v2084 = vmul.f32 %v1940, 0.7978846
  %v2085 = vmul.f32 %v1941, 0.7978846
  %v2086 = vmul.f32 %v1942, 0.7978846
  %v2087 = vmul.f32 %v1943, 0.7978846
  %v2088 = vmul.f32 %v1944, 0.7978846
  %v2089 = vmul.f32 %v1945, 0.7978846
  %v2090 = vmul.f32 %v1946, 0.7978846
  %v2091 = vmul.f32 %v1947, 0.7978846
  %v2092 = vmul.f32 %v1948, 0.7978846
  %v2093 = vmul.f32 %v1949, 0.7978846
  %v2094 = vmul.f32 %v1950, 0.7978846
  %v2095 = vmul.f32 %v1951, 0.7978846
  %v2096 = vmul.f32 %v1952, 0.7978846
  %v2097 = vmul.f32 %v1953, 0.7978846
  %v2098 = vmul.f32 %v1954, 0.7978846
  %v2099 = vmul.f32 %v1955, 0.7978846
  %v2100 = vmul.f32 %v1956, 0.7978846
  %v2101 = vmul.f32 %v1957, 0.7978846
  %v2102 = vmul.f32 %v1958, 0.7978846
  %v2103 = vmul.f32 %v1959, 0.7978846
  %v2104 = vmul.f32 %v1960, 0.7978846
  %v2105 = vmul.f32 %v1961, 0.7978846
  %v2106 = vmul.f32 %v1962, 0.7978846
  %v2107 = vmul.f32 %v1963, 0.7978846
  %v2108 = vmul.f32 %v1964, 0.7978846
  %v2109 = vmul.f32 %v1965, 0.7978846
  %v2110 = vmul.f32 %v1966, 0.7978846
  %v2111 = vmul.f32 %v1967, 0.7978846
  %v2112 = vmul.f32 %v1968, 0.7978846
  %v2113 = vmul.f32 %v1969, 0.7978846
  %v2114 = vmul.f32 %v1970, 0.7978846
  %v2115 = vmul.f32 %v1971, 0.7978846
  %v2116 = vmul.f32 %v1972, 0.7978846
  %v2117 = vmul.f32 %v1973, 0.7978846
  %v2118 = vmul.f32 %v1974, 0.7978846
  %v2119 = vmul.f32 %v1975, 0.7978846
  %v2120 = vmul.f32 %v1976, 0.7978846
  %v2121 = vmul.f32 %v1977, 0.7978846
  %v2122 = vmul.f32 %v1978, 0.7978846
  %v2123 = vmul.f32 %v1979, 0.7978846
  %v2124 = vmul.f32 %v1980, 0.7978846
  %v2125 = vmul.f32 %v1981, 0.7978846
  %v2126 = vmul.f32 %v1982, 0.7978846
  %v2127 = vmul.f32 %v1983, 0.7978846
  %v2128 = vmul.f32 %v1984, 0.7978846
  %v2129 = vmul.f32 %v1985, 0.7978846
  %v2130 = vmul.f32 %v1986, 0.7978846
  %v2131 = vmul.f32 %v1987, 0.7978846
  %v2132 = vmul.f32 %v1988, 0.7978846
  %v2133 = vmul.f32 %v1989, 0.7978846
  %v2134 = vmul.f32 %v1990, 0.7978846
  %v2135 = vmul.f32 %v1991, 0.7978846
  %v2136 = vmul.f32 %v1992, 0.7978846
  %v2137 = vmul.f32 %v1993, 0.7978846
  %v2138 = vmul.f32 %v1994, 0.7978846
  %v2139 = vmul.f32 %v1995, 0.7978846
  %v2140 = vmul.f32 %v1996, 0.7978846
  %v2141 = vmul.f32 %v1997, 0.7978846
  %v2142 = vmul.f32 %v1998, 0.7978846
  %v2143 = vmul.f32 %v1999, 0.7978846
  %v2144 = vmul.f32 %v2000, 0.7978846
  %v2145 = vmul.f32 %v2001, 0.7978846
  %v2146 = vmul.f32 %v2002, 0.7978846
  %v2147 = vmul.f32 %v2003, 0.7978846
  %v2148 = vmul.f32 %v2004, 0.7978846
  %v2149 = vmul.f32 %v2005, 0.7978846
  %v2150 = vmul.f32 %v2006, 0.7978846
  %v2151 = vmul.f32 %v2007, 0.7978846
  %v2152 = vmul.f32 %v2008, 0.7978846
  %v2153 = vmul.f32 %v2009, 0.7978846
  %v2154 = vmul.f32 %v2010, 0.7978846
  %v2155 = vmul.f32 %v2011, 0.7978846
  %v2156 = vmul.f32 %v2012, 0.7978846
  %v2157 = vmul.f32 %v2013, 0.7978846
  %v2158 = vmul.f32 %v2014, 0.7978846
  %v2159 = vmul.f32 %v2015, 0.7978846
  %v2160 = vmul.f32 %v2016, 0.7978846
  %v2161 = vmul.f32 %v2017, 0.7978846
  %v2162 = vmul.f32 %v2018, 0.7978846
  %v2163 = vmul.f32 %v2019, 0.7978846
  %v2164 = vmul.f32 %v2020, 0.7978846
  %v2165 = vmul.f32 %v2021, 0.7978846
  %v2166 = vmul.f32 %v2022, 0.7978846
  %v2167 = vmul.f32 %v2023, 0.7978846
  %v2168 = vmul.f32 %v2024, 0.7978846
  %v2169 = vmul.f32 %v2025, 0.7978846
  %v2170 = vmul.f32 %v2026, 0.7978846
  %v2171 = vmul.f32 %v2027, 0.7978846
  %v2172 = vmul.f32 %v2028, 0.7978846
  %v2173 = vmul.f32 %v2029, 0.7978846
  %v2174 = vmul.f32 %v2030, 0.7978846
  %v2175 = vmul.f32 %v2031, 0.7978846
  %v2176 = vmul.f32 %v2032, 0.7978846
  %v2177 = vmul.f32 %v2033, 0.7978846
  %v2178 = vmul.f32 %v2034, 0.7978846
  %v2179 = vmul.f32 %v2035, 0.7978846
  %v2180 = vmul.f32 %v2036, 0.7978846
  %v2181 = vmul.f32 %v2037, 0.7978846
  %v2182 = vmul.f32 %v2038, 0.7978846
  %v2183 = vmul.f32 %v2039, 0.7978846
  %v2184 = vmul.f32 %v2040, 0.7978846
  %v2185 = vmul.f32 %v2041, 0.7978846
  %v2186 = vmul.f32 %v2042, 0.7978846
  %v2187 = vmul.f32 %v2043, 0.7978846
  %v2188 = vmul.f32 %v2044, 0.7978846
  %v2189 = vmul.f32 %v2045, 0.7978846
  %v2190 = vmul.f32 %v2046, 0.7978846
  %v2191 = vmul.f32 %v2047, 0.7978846
  %v2192 = vmul.f32 %v2048, 0.7978846
  %v2193 = vmul.f32 %v2049, 0.7978846
  %v2194 = vmul.f32 %v2050, 0.7978846
  %v2195 = vmul.f32 %v2051, 0.7978846
  %v2196 = vmul.f32 %v2052, 0.7978846
  %v2197 = vmul.f32 %v2053, 0.7978846
  %v2198 = vmul.f32 %v2054, 0.7978846
  %v2199 = vmul.f32 %v2055, 0.7978846
  %v2200 = vmul.f32 %v2056, 0.7978846
  %v2201 = vmul.f32 %v2057, 0.7978846
  %v2202 = vmul.f32 %v2058, 0.7978846
  %v2203 = vmul.f32 %v2059, 0.7978846
  %v2204 = vmul.f32 %v2060, 0.7978846
  %v2205 = vmul.f32 %v2061, 0.7978846
  %v2206 = vmul.f32 %v2062, 0.7978846
  %v2207 = vmul.f32 %v2063, 0.7978846
  %v2208 = vmul.f32 %v2064, 0.7978846
  %v2209 = vmul.f32 %v2065, 0.7978846
  %v2210 = vtanh.pop %v2066
  %v2211 = vtanh.pop %v2067
  %v2212 = vtanh.pop %v2068
  %v2213 = vtanh.pop %v2069
  %v2214 = vtanh.pop %v2070
  %v2215 = vtanh.pop %v2071
  %v2216 = vtanh.pop %v2072
  %v2217 = vtanh.pop %v2073
  %v2218 = vtanh.pop %v2074
  %v2219 = vtanh.pop %v2075
  %v2220 = vtanh.pop %v2076
  %v2221 = vtanh.pop %v2077
  %v2222 = vtanh.pop %v2078
  %v2223 = vtanh.pop %v2079
  %v2224 = vtanh.pop %v2080
  %v2225 = vtanh.pop %v2081
  %v2226 = vtanh.pop %v2082
  %v2227 = vtanh.pop %v2083
  %v2228 = vtanh.pop %v2084
  %v2229 = vtanh.pop %v2085
  %v2230 = vtanh.pop %v2086
  %v2231 = vtanh.pop %v2087
  %v2232 = vtanh.pop %v2088
  %v2233 = vtanh.pop %v2089
  %v2234 = vtanh.pop %v2090
  %v2235 = vtanh.pop %v2091
  %v2236 = vtanh.pop %v2092
  %v2237 = vtanh.pop %v2093
  %v2238 = vtanh.pop %v2094
  %v2239 = vtanh.pop %v2095
  %v2240 = vtanh.pop %v2096
  %v2241 = vtanh.pop %v2097
  %v2242 = vtanh.pop %v2098
  %v2243 = vtanh.pop %v2099
  %v2244 = vtanh.pop %v2100
  %v2245 = vtanh.pop %v2101
  %v2246 = vtanh.pop %v2102
  %v2247 = vtanh.pop %v2103
  %v2248 = vtanh.pop %v2104
  %v2249 = vtanh.pop %v2105
  %v2250 = vtanh.pop %v2106
  %v2251 = vtanh.pop %v2107
  %v2252 = vtanh.pop %v2108
  %v2253 = vtanh.pop %v2109
  %v2254 = vtanh.pop %v2110
  %v2255 = vtanh.pop %v2111
  %v2256 = vtanh.pop %v2112
  %v2257 = vtanh.pop %v2113
  %v2258 = vtanh.pop %v2114
  %v2259 = vtanh.pop %v2115
  %v2260 = vtanh.pop %v2116
  %v2261 = vtanh.pop %v2117
  %v2262 = vtanh.pop %v2118
  %v2263 = vtanh.pop %v2119
  %v2264 = vtanh.pop %v2120
  %v2265 = vtanh.pop %v2121
  %v2266 = vtanh.pop %v2122
  %v2267 = vtanh.pop %v2123
  %v2268 = vtanh.pop %v2124
  %v2269 = vtanh.pop %v2125
  %v2270 = vtanh.pop %v2126
  %v2271 = vtanh.pop %v2127
  %v2272 = vtanh.pop %v2128
  %v2273 = vtanh.pop %v2129
  %v2274 = vtanh.pop %v2130
  %v2275 = vtanh.pop %v2131
  %v2276 = vtanh.pop %v2132
  %v2277 = vtanh.pop %v2133
  %v2278 = vtanh.pop %v2134
  %v2279 = vtanh.pop %v2135
  %v2280 = vtanh.pop %v2136
  %v2281 = vtanh.pop %v2137
  %v2282 = vtanh.pop %v2138
  %v2283 = vtanh.pop %v2139
  %v2284 = vtanh.pop %v2140
  %v2285 = vtanh.pop %v2141
  %v2286 = vtanh.pop %v2142
  %v2287 = vtanh.pop %v2143
  %v2288 = vtanh.pop %v2144
  %v2289 = vtanh.pop %v2145
  %v2290 = vtanh.pop %v2146
  %v2291 = vtanh.pop %v2147
  %v2292 = vtanh.pop %v2148
  %v2293 = vtanh.pop %v2149
  %v2294 = vtanh.pop %v2150
  %v2295 = vtanh.pop %v2151
  %v2296 = vtanh.pop %v2152
  %v2297 = vtanh.pop %v2153
  %v2298 = vtanh.pop %v2154
  %v2299 = vtanh.pop %v2155
  %v2300 = vtanh.pop %v2156
  %v2301 = vtanh.pop %v2157
  %v2302 = vtanh.pop %v2158
  %v2303 = vtanh.pop %v2159
  %v2304 = vtanh.pop %v2160
  %v2305 = vtanh.pop %v2161
  %v2306 = vtanh.pop %v2162
  %v2307 = vtanh.pop %v2163
  %v2308 = vtanh.pop %v2164
  %v2309 = vtanh.pop %v2165
  %v2310 = vtanh.pop %v2166
  %v2311 = vtanh.pop %v2167
  %v2312 = vtanh.pop %v2168
  %v2313 = vtanh.pop %v2169
  %v2314 = vtanh.pop %v2170
  %v2315 = vtanh.pop %v2171
  %v2316 = vtanh.pop %v2172
  %v2317 = vtanh.pop %v2173
  %v2318 = vtanh.pop %v2174
  %v2319 = vtanh.pop %v2175
  %v2320 = vtanh.pop %v2176
  %v2321 = vtanh.pop %v2177
  %v2322 = vtanh.pop %v2178
  %v2323 = vtanh.pop %v2179
  %v2324 = vtanh.pop %v2180
  %v2325 = vtanh.pop %v2181
  %v2326 = vtanh.pop %v2182
  %v2327 = vtanh.pop %v2183
  %v2328 = vtanh.pop %v2184
  %v2329 = vtanh.pop %v2185
  %v2330 = vtanh.pop %v2186
  %v2331 = vtanh.pop %v2187
  %v2332 = vtanh.pop %v2188
  %v2333 = vtanh.pop %v2189
  %v2334 = vtanh.pop %v2190
  %v2335 = vtanh.pop %v2191
  %v2336 = vtanh.pop %v2192
  %v2337 = vtanh.pop %v2193
  %v2338 = vtanh.pop %v2194
  %v2339 = vtanh.pop %v2195
  %v2340 = vtanh.pop %v2196
  %v2341 = vtanh.pop %v2197
  %v2342 = vtanh.pop %v2198
  %v2343 = vtanh.pop %v2199
  %v2344 = vtanh.pop %v2200
  %v2345 = vtanh.pop %v2201
  %v2346 = vtanh.pop %v2202
  %v2347 = vtanh.pop %v2203
  %v2348 = vtanh.pop %v2204
  %v2349 = vtanh.pop %v2205
  %v2350 = vtanh.pop %v2206
  %v2351 = vtanh.pop %v2207
  %v2352 = vtanh.pop %v2208
  %v2353 = vtanh.pop %v2209
  %v2354 = vadd.f32 %v2210, 1.0
  %v2355 = vadd.f32 %v2211, 1.0
  %v2356 = vadd.f32 %v2212, 1.0
  %v2357 = vadd.f32 %v2213, 1.0
  %v2358 = vadd.f32 %v2214, 1.0
  %v2359 = vadd.f32 %v2215, 1.0
  %v2360 = vadd.f32 %v2216, 1.0
  %v2361 = vadd.f32 %v2217, 1.0
  %v2362 = vadd.f32 %v2218, 1.0
  %v2363 = vadd.f32 %v2219, 1.0
  %v2364 = vadd.f32 %v2220, 1.0
  %v2365 = vadd.f32 %v2221, 1.0
  %v2366 = vadd.f32 %v2222, 1.0
  %v2367 = vadd.f32 %v2223, 1.0
  %v2368 = vadd.f32 %v2224, 1.0
  %v2369 = vadd.f32 %v2225, 1.0
  %v2370 = vadd.f32 %v2226, 1.0
  %v2371 = vadd.f32 %v2227, 1.0
  %v2372 = vadd.f32 %v2228, 1.0
  %v2373 = vadd.f32 %v2229, 1.0
  %v2374 = vadd.f32 %v2230, 1.0
  %v2375 = vadd.f32 %v2231, 1.0
  %v2376 = vadd.f32 %v2232, 1.0
  %v2377 = vadd.f32 %v2233, 1.0
  %v2378 = vadd.f32 %v2234, 1.0
  %v2379 = vadd.f32 %v2235, 1.0
  %v2380 = vadd.f32 %v2236, 1.0
  %v2381 = vadd.f32 %v2237, 1.0
  %v2382 = vadd.f32 %v2238, 1.0
  %v2383 = vadd.f32 %v2239, 1.0
  %v2384 = vadd.f32 %v2240, 1.0
  %v2385 = vadd.f32 %v2241, 1.0
  %v2386 = vadd.f32 %v2242, 1.0
  %v2387 = vadd.f32 %v2243, 1.0
  %v2388 = vadd.f32 %v2244, 1.0
  %v2389 = vadd.f32 %v2245, 1.0
  %v2390 = vadd.f32 %v2246, 1.0
  %v2391 = vadd.f32 %v2247, 1.0
  %v2392 = vadd.f32 %v2248, 1.0
  %v2393 = vadd.f32 %v2249, 1.0
  %v2394 = vadd.f32 %v2250, 1.0
  %v2395 = vadd.f32 %v2251, 1.0
  %v2396 = vadd.f32 %v2252, 1.0
  %v2397 = vadd.f32 %v2253, 1.0
  %v2398 = vadd.f32 %v2254, 1.0
  %v2399 = vadd.f32 %v2255, 1.0
  %v2400 = vadd.f32 %v2256, 1.0
  %v2401 = vadd.f32 %v2257, 1.0
  %v2402 = vadd.f32 %v2258, 1.0
  %v2403 = vadd.f32 %v2259, 1.0
  %v2404 = vadd.f32 %v2260, 1.0
  %v2405 = vadd.f32 %v2261, 1.0
  %v2406 = vadd.f32 %v2262, 1.0
  %v2407 = vadd.f32 %v2263, 1.0
  %v2408 = vadd.f32 %v2264, 1.0
  %v2409 = vadd.f32 %v2265, 1.0
  %v2410 = vadd.f32 %v2266, 1.0
  %v2411 = vadd.f32 %v2267, 1.0
  %v2412 = vadd.f32 %v2268, 1.0
  %v2413 = vadd.f32 %v2269, 1.0
  %v2414 = vadd.f32 %v2270, 1.0
  %v2415 = vadd.f32 %v2271, 1.0
  %v2416 = vadd.f32 %v2272, 1.0
  %v2417 = vadd.f32 %v2273, 1.0
  %v2418 = vadd.f32 %v2274, 1.0
  %v2419 = vadd.f32 %v2275, 1.0
  %v2420 = vadd.f32 %v2276, 1.0
  %v2421 = vadd.f32 %v2277, 1.0
  %v2422 = vadd.f32 %v2278, 1.0
  %v2423 = vadd.f32 %v2279, 1.0
  %v2424 = vadd.f32 %v2280, 1.0
  %v2425 = vadd.f32 %v2281, 1.0
  %v2426 = vadd.f32 %v2282, 1.0
  %v2427 = vadd.f32 %v2283, 1.0
  %v2428 = vadd.f32 %v2284, 1.0
  %v2429 = vadd.f32 %v2285, 1.0
  %v2430 = vadd.f32 %v2286, 1.0
  %v2431 = vadd.f32 %v2287, 1.0
  %v2432 = vadd.f32 %v2288, 1.0
  %v2433 = vadd.f32 %v2289, 1.0
  %v2434 = vadd.f32 %v2290, 1.0
  %v2435 = vadd.f32 %v2291, 1.0
  %v2436 = vadd.f32 %v2292, 1.0
  %v2437 = vadd.f32 %v2293, 1.0
  %v2438 = vadd.f32 %v2294, 1.0
  %v2439 = vadd.f32 %v2295, 1.0
  %v2440 = vadd.f32 %v2296, 1.0
  %v2441 = vadd.f32 %v2297, 1.0
  %v2442 = vadd.f32 %v2298, 1.0
  %v2443 = vadd.f32 %v2299, 1.0
  %v2444 = vadd.f32 %v2300, 1.0
  %v2445 = vadd.f32 %v2301, 1.0
  %v2446 = vadd.f32 %v2302, 1.0
  %v2447 = vadd.f32 %v2303, 1.0
  %v2448 = vadd.f32 %v2304, 1.0
  %v2449 = vadd.f32 %v2305, 1.0
  %v2450 = vadd.f32 %v2306, 1.0
  %v2451 = vadd.f32 %v2307, 1.0
  %v2452 = vadd.f32 %v2308, 1.0
  %v2453 = vadd.f32 %v2309, 1.0
  %v2454 = vadd.f32 %v2310, 1.0
  %v2455 = vadd.f32 %v2311, 1.0
  %v2456 = vadd.f32 %v2312, 1.0
  %v2457 = vadd.f32 %v2313, 1.0
  %v2458 = vadd.f32 %v2314, 1.0
  %v2459 = vadd.f32 %v2315, 1.0
  %v2460 = vadd.f32 %v2316, 1.0
  %v2461 = vadd.f32 %v2317, 1.0
  %v2462 = vadd.f32 %v2318, 1.0
  %v2463 = vadd.f32 %v2319, 1.0
  %v2464 = vadd.f32 %v2320, 1.0
  %v2465 = vadd.f32 %v2321, 1.0
  %v2466 = vadd.f32 %v2322, 1.0
  %v2467 = vadd.f32 %v2323, 1.0
  %v2468 = vadd.f32 %v2324, 1.0
  %v2469 = vadd.f32 %v2325, 1.0
  %v2470 = vadd.f32 %v2326, 1.0
  %v2471 = vadd.f32 %v2327, 1.0
  %v2472 = vadd.f32 %v2328, 1.0
  %v2473 = vadd.f32 %v2329, 1.0
  %v2474 = vadd.f32 %v2330, 1.0
  %v2475 = vadd.f32 %v2331, 1.0
  %v2476 = vadd.f32 %v2332, 1.0
  %v2477 = vadd.f32 %v2333, 1.0
  %v2478 = vadd.f32 %v2334, 1.0
  %v2479 = vadd.f32 %v2335, 1.0
  %v2480 = vadd.f32 %v2336, 1.0
  %v2481 = vadd.f32 %v2337, 1.0
  %v2482 = vadd.f32 %v2338, 1.0
  %v2483 = vadd.f32 %v2339, 1.0
  %v2484 = vadd.f32 %v2340, 1.0
  %v2485 = vadd.f32 %v2341, 1.0
  %v2486 = vadd.f32 %v2342, 1.0
  %v2487 = vadd.f32 %v2343, 1.0
  %v2488 = vadd.f32 %v2344, 1.0
  %v2489 = vadd.f32 %v2345, 1.0
  %v2490 = vadd.f32 %v2346, 1.0
  %v2491 = vadd.f32 %v2347, 1.0
  %v2492 = vadd.f32 %v2348, 1.0
  %v2493 = vadd.f32 %v2349, 1.0
  %v2494 = vadd.f32 %v2350, 1.0
  %v2495 = vadd.f32 %v2351, 1.0
  %v2496 = vadd.f32 %v2352, 1.0
  %v2497 = vadd.f32 %v2353, 1.0
  %v2498 = vmul.f32 %v2354, 0.5
  %v2499 = vmul.f32 %v2355, 0.5
  %v2500 = vmul.f32 %v2356, 0.5
  %v2501 = vmul.f32 %v2357, 0.5
  %v2502 = vmul.f32 %v2358, 0.5
  %v2503 = vmul.f32 %v2359, 0.5
  %v2504 = vmul.f32 %v2360, 0.5
  %v2505 = vmul.f32 %v2361, 0.5
  %v2506 = vmul.f32 %v2362, 0.5
  %v2507 = vmul.f32 %v2363, 0.5
  %v2508 = vmul.f32 %v2364, 0.5
  %v2509 = vmul.f32 %v2365, 0.5
  %v2510 = vmul.f32 %v2366, 0.5
  %v2511 = vmul.f32 %v2367, 0.5
  %v2512 = vmul.f32 %v2368, 0.5
  %v2513 = vmul.f32 %v2369, 0.5
  %v2514 = vmul.f32 %v2370, 0.5
  %v2515 = vmul.f32 %v2371, 0.5
  %v2516 = vmul.f32 %v2372, 0.5
  %v2517 = vmul.f32 %v2373, 0.5
  %v2518 = vmul.f32 %v2374, 0.5
  %v2519 = vmul.f32 %v2375, 0.5
  %v2520 = vmul.f32 %v2376, 0.5
  %v2521 = vmul.f32 %v2377, 0.5
  %v2522 = vmul.f32 %v2378, 0.5
  %v2523 = vmul.f32 %v2379, 0.5
  %v2524 = vmul.f32 %v2380, 0.5
  %v2525 = vmul.f32 %v2381, 0.5
  %v2526 = vmul.f32 %v2382, 0.5
  %v2527 = vmul.f32 %v2383, 0.5
  %v2528 = vmul.f32 %v2384, 0.5
  %v2529 = vmul.f32 %v2385, 0.5
  %v2530 = vmul.f32 %v2386, 0.5
  %v2531 = vmul.f32 %v2387, 0.5
  %v2532 = vmul.f32 %v2388, 0.5
  %v2533 = vmul.f32 %v2389, 0.5
  %v2534 = vmul.f32 %v2390, 0.5
  %v2535 = vmul.f32 %v2391, 0.5
  %v2536 = vmul.f32 %v2392, 0.5
  %v2537 = vmul.f32 %v2393, 0.5
  %v2538 = vmul.f32 %v2394, 0.5
  %v2539 = vmul.f32 %v2395, 0.5
  %v2540 = vmul.f32 %v2396, 0.5
  %v2541 = vmul.f32 %v2397, 0.5
  %v2542 = vmul.f32 %v2398, 0.5
  %v2543 = vmul.f32 %v2399, 0.5
  %v2544 = vmul.f32 %v2400, 0.5
  %v2545 = vmul.f32 %v2401, 0.5
  %v2546 = vmul.f32 %v2402, 0.5
  %v2547 = vmul.f32 %v2403, 0.5
  %v2548 = vmul.f32 %v2404, 0.5
  %v2549 = vmul.f32 %v2405, 0.5
  %v2550 = vmul.f32 %v2406, 0.5
  %v2551 = vmul.f32 %v2407, 0.5
  %v2552 = vmul.f32 %v2408, 0.5
  %v2553 = vmul.f32 %v2409, 0.5
  %v2554 = vmul.f32 %v2410, 0.5
  %v2555 = vmul.f32 %v2411, 0.5
  %v2556 = vmul.f32 %v2412, 0.5
  %v2557 = vmul.f32 %v2413, 0.5
  %v2558 = vmul.f32 %v2414, 0.5
  %v2559 = vmul.f32 %v2415, 0.5
  %v2560 = vmul.f32 %v2416, 0.5
  %v2561 = vmul.f32 %v2417, 0.5
  %v2562 = vmul.f32 %v2418, 0.5
  %v2563 = vmul.f32 %v2419, 0.5
  %v2564 = vmul.f32 %v2420, 0.5
  %v2565 = vmul.f32 %v2421, 0.5
  %v2566 = vmul.f32 %v2422, 0.5
  %v2567 = vmul.f32 %v2423, 0.5
  %v2568 = vmul.f32 %v2424, 0.5
  %v2569 = vmul.f32 %v2425, 0.5
  %v2570 = vmul.f32 %v2426, 0.5
  %v2571 = vmul.f32 %v2427, 0.5
  %v2572 = vmul.f32 %v2428, 0.5
  %v2573 = vmul.f32 %v2429, 0.5
  %v2574 = vmul.f32 %v2430, 0.5
  %v2575 = vmul.f32 %v2431, 0.5
  %v2576 = vmul.f32 %v2432, 0.5
  %v2577 = vmul.f32 %v2433, 0.5
  %v2578 = vmul.f32 %v2434, 0.5
  %v2579 = vmul.f32 %v2435, 0.5
  %v2580 = vmul.f32 %v2436, 0.5
  %v2581 = vmul.f32 %v2437, 0.5
  %v2582 = vmul.f32 %v2438, 0.5
  %v2583 = vmul.f32 %v2439, 0.5
  %v2584 = vmul.f32 %v2440, 0.5
  %v2585 = vmul.f32 %v2441, 0.5
  %v2586 = vmul.f32 %v2442, 0.5
  %v2587 = vmul.f32 %v2443, 0.5
  %v2588 = vmul.f32 %v2444, 0.5
  %v2589 = vmul.f32 %v2445, 0.5
  %v2590 = vmul.f32 %v2446, 0.5
  %v2591 = vmul.f32 %v2447, 0.5
  %v2592 = vmul.f32 %v2448, 0.5
  %v2593 = vmul.f32 %v2449, 0.5
  %v2594 = vmul.f32 %v2450, 0.5
  %v2595 = vmul.f32 %v2451, 0.5
  %v2596 = vmul.f32 %v2452, 0.5
  %v2597 = vmul.f32 %v2453, 0.5
  %v2598 = vmul.f32 %v2454, 0.5
  %v2599 = vmul.f32 %v2455, 0.5
  %v2600 = vmul.f32 %v2456, 0.5
  %v2601 = vmul.f32 %v2457, 0.5
  %v2602 = vmul.f32 %v2458, 0.5
  %v2603 = vmul.f32 %v2459, 0.5
  %v2604 = vmul.f32 %v2460, 0.5
  %v2605 = vmul.f32 %v2461, 0.5
  %v2606 = vmul.f32 %v2462, 0.5
  %v2607 = vmul.f32 %v2463, 0.5
  %v2608 = vmul.f32 %v2464, 0.5
  %v2609 = vmul.f32 %v2465, 0.5
  %v2610 = vmul.f32 %v2466, 0.5
  %v2611 = vmul.f32 %v2467, 0.5
  %v2612 = vmul.f32 %v2468, 0.5
  %v2613 = vmul.f32 %v2469, 0.5
  %v2614 = vmul.f32 %v2470, 0.5
  %v2615 = vmul.f32 %v2471, 0.5
  %v2616 = vmul.f32 %v2472, 0.5
  %v2617 = vmul.f32 %v2473, 0.5
  %v2618 = vmul.f32 %v2474, 0.5
  %v2619 = vmul.f32 %v2475, 0.5
  %v2620 = vmul.f32 %v2476, 0.5
  %v2621 = vmul.f32 %v2477, 0.5
  %v2622 = vmul.f32 %v2478, 0.5
  %v2623 = vmul.f32 %v2479, 0.5
  %v2624 = vmul.f32 %v2480, 0.5
  %v2625 = vmul.f32 %v2481, 0.5
  %v2626 = vmul.f32 %v2482, 0.5
  %v2627 = vmul.f32 %v2483, 0.5
  %v2628 = vmul.f32 %v2484, 0.5
  %v2629 = vmul.f32 %v2485, 0.5
  %v2630 = vmul.f32 %v2486, 0.5
  %v2631 = vmul.f32 %v2487, 0.5
  %v2632 = vmul.f32 %v2488, 0.5
  %v2633 = vmul.f32 %v2489, 0.5
  %v2634 = vmul.f32 %v2490, 0.5
  %v2635 = vmul.f32 %v2491, 0.5
  %v2636 = vmul.f32 %v2492, 0.5
  %v2637 = vmul.f32 %v2493, 0.5
  %v2638 = vmul.f32 %v2494, 0.5
  %v2639 = vmul.f32 %v2495, 0.5
  %v2640 = vmul.f32 %v2496, 0.5
  %v2641 = vmul.f32 %v2497, 0.5
  %v2642 = vmul.f32 %v916, %v2498
  %v2643 = vmul.f32 %v919, %v2499
  %v2644 = vmul.f32 %v924, %v2500
  %v2645 = vmul.f32 %v927, %v2501
  %v2646 = vmul.f32 %v932, %v2502
  %v2647 = vmul.f32 %v935, %v2503
  %v2648 = vmul.f32 %v940, %v2504
  %v2649 = vmul.f32 %v943, %v2505
  %v2650 = vmul.f32 %v948, %v2506
  %v2651 = vmul.f32 %v951, %v2507
  %v2652 = vmul.f32 %v956, %v2508
  %v2653 = vmul.f32 %v959, %v2509
  %v2654 = vmul.f32 %v964, %v2510
  %v2655 = vmul.f32 %v967, %v2511
  %v2656 = vmul.f32 %v972, %v2512
  %v2657 = vmul.f32 %v975, %v2513
  %v2658 = vmul.f32 %v980, %v2514
  %v2659 = vmul.f32 %v983, %v2515
  %v2660 = vmul.f32 %v988, %v2516
  %v2661 = vmul.f32 %v991, %v2517
  %v2662 = vmul.f32 %v996, %v2518
  %v2663 = vmul.f32 %v999, %v2519
  %v2664 = vmul.f32 %v1004, %v2520
  %v2665 = vmul.f32 %v1007, %v2521
  %v2666 = vmul.f32 %v1012, %v2522
  %v2667 = vmul.f32 %v1015, %v2523
  %v2668 = vmul.f32 %v1020, %v2524
  %v2669 = vmul.f32 %v1023, %v2525
  %v2670 = vmul.f32 %v1028, %v2526
  %v2671 = vmul.f32 %v1031, %v2527
  %v2672 = vmul.f32 %v1036, %v2528
  %v2673 = vmul.f32 %v1039, %v2529
  %v2674 = vmul.f32 %v1044, %v2530
  %v2675 = vmul.f32 %v1047, %v2531
  %v2676 = vmul.f32 %v1052, %v2532
  %v2677 = vmul.f32 %v1055, %v2533
  %v2678 = vmul.f32 %v1060, %v2534
  %v2679 = vmul.f32 %v1063, %v2535
  %v2680 = vmul.f32 %v1068, %v2536
  %v2681 = vmul.f32 %v1071, %v2537
  %v2682 = vmul.f32 %v1076, %v2538
  %v2683 = vmul.f32 %v1079, %v2539
  %v2684 = vmul.f32 %v1084, %v2540
  %v2685 = vmul.f32 %v1087, %v2541
  %v2686 = vmul.f32 %v1092, %v2542
  %v2687 = vmul.f32 %v1095, %v2543
  %v2688 = vmul.f32 %v1100, %v2544
  %v2689 = vmul.f32 %v1103, %v2545
  %v2690 = vmul.f32 %v1108, %v2546
  %v2691 = vmul.f32 %v1111, %v2547
  %v2692 = vmul.f32 %v1116, %v2548
  %v2693 = vmul.f32 %v1119, %v2549
  %v2694 = vmul.f32 %v1124, %v2550
  %v2695 = vmul.f32 %v1127, %v2551
  %v2696 = vmul.f32 %v1132, %v2552
  %v2697 = vmul.f32 %v1135, %v2553
  %v2698 = vmul.f32 %v1140, %v2554
  %v2699 = vmul.f32 %v1143, %v2555
  %v2700 = vmul.f32 %v1148, %v2556
  %v2701 = vmul.f32 %v1151, %v2557
  %v2702 = vmul.f32 %v1156, %v2558
  %v2703 = vmul.f32 %v1159, %v2559
  %v2704 = vmul.f32 %v1164, %v2560
  %v2705 = vmul.f32 %v1167, %v2561
  %v2706 = vmul.f32 %v1172, %v2562
  %v2707 = vmul.f32 %v1175, %v2563
  %v2708 = vmul.f32 %v1180, %v2564
  %v2709 = vmul.f32 %v1183, %v2565
  %v2710 = vmul.f32 %v1188, %v2566
  %v2711 = vmul.f32 %v1191, %v2567
  %v2712 = vmul.f32 %v1196, %v2568
  %v2713 = vmul.f32 %v1199, %v2569
  %v2714 = vmul.f32 %v1204, %v2570
  %v2715 = vmul.f32 %v1207, %v2571
  %v2716 = vmul.f32 %v1212, %v2572
  %v2717 = vmul.f32 %v1215, %v2573
  %v2718 = vmul.f32 %v1220, %v2574
  %v2719 = vmul.f32 %v1223, %v2575
  %v2720 = vmul.f32 %v1228, %v2576
  %v2721 = vmul.f32 %v1231, %v2577
  %v2722 = vmul.f32 %v1236, %v2578
  %v2723 = vmul.f32 %v1239, %v2579
  %v2724 = vmul.f32 %v1244, %v2580
  %v2725 = vmul.f32 %v1247, %v2581
  %v2726 = vmul.f32 %v1252, %v2582
  %v2727 = vmul.f32 %v1255, %v2583
  %v2728 = vmul.f32 %v1260, %v2584
  %v2729 = vmul.f32 %v1263, %v2585
  %v2730 = vmul.f32 %v1268, %v2586
  %v2731 = vmul.f32 %v1271, %v2587
  %v2732 = vmul.f32 %v1276, %v2588
  %v2733 = vmul.f32 %v1279, %v2589
  %v2734 = vmul.f32 %v1284, %v2590
  %v2735 = vmul.f32 %v1287, %v2591
  %v2736 = vmul.f32 %v1292, %v2592
  %v2737 = vmul.f32 %v1295, %v2593
  %v2738 = vmul.f32 %v1300, %v2594
  %v2739 = vmul.f32 %v1303, %v2595
  %v2740 = vmul.f32 %v1308, %v2596
  %v2741 = vmul.f32 %v1311, %v2597
  %v2742 = vmul.f32 %v1316, %v2598
  %v2743 = vmul.f32 %v1319, %v2599
  %v2744 = vmul.f32 %v1324, %v2600
  %v2745 = vmul.f32 %v1327, %v2601
  %v2746 = vmul.f32 %v1332, %v2602
  %v2747 = vmul.f32 %v1335, %v2603
  %v2748 = vmul.f32 %v1340, %v2604
  %v2749 = vmul.f32 %v1343, %v2605
  %v2750 = vmul.f32 %v1348, %v2606
  %v2751 = vmul.f32 %v1351, %v2607
  %v2752 = vmul.f32 %v1356, %v2608
  %v2753 = vmul.f32 %v1359, %v2609
  %v2754 = vmul.f32 %v1364, %v2610
  %v2755 = vmul.f32 %v1367, %v2611
  %v2756 = vmul.f32 %v1372, %v2612
  %v2757 = vmul.f32 %v1375, %v2613
  %v2758 = vmul.f32 %v1380, %v2614
  %v2759 = vmul.f32 %v1383, %v2615
  %v2760 = vmul.f32 %v1388, %v2616
  %v2761 = vmul.f32 %v1391, %v2617
  %v2762 = vmul.f32 %v1396, %v2618
  %v2763 = vmul.f32 %v1399, %v2619
  %v2764 = vmul.f32 %v1404, %v2620
  %v2765 = vmul.f32 %v1407, %v2621
  %v2766 = vmul.f32 %v1412, %v2622
  %v2767 = vmul.f32 %v1415, %v2623
  %v2768 = vmul.f32 %v1420, %v2624
  %v2769 = vmul.f32 %v1423, %v2625
  %v2770 = vmul.f32 %v1428, %v2626
  %v2771 = vmul.f32 %v1431, %v2627
  %v2772 = vmul.f32 %v1436, %v2628
  %v2773 = vmul.f32 %v1439, %v2629
  %v2774 = vmul.f32 %v1444, %v2630
  %v2775 = vmul.f32 %v1447, %v2631
  %v2776 = vmul.f32 %v1452, %v2632
  %v2777 = vmul.f32 %v1455, %v2633
  %v2778 = vmul.f32 %v1460, %v2634
  %v2779 = vmul.f32 %v1463, %v2635
  %v2780 = vmul.f32 %v1468, %v2636
  %v2781 = vmul.f32 %v1471, %v2637
  %v2782 = vmul.f32 %v1476, %v2638
  %v2783 = vmul.f32 %v1479, %v2639
  %v2784 = vmul.f32 %v1484, %v2640
  %v2785 = vmul.f32 %v1487, %v2641
  %v2786 = vld [vmem:[%s5] sm:$0x1]
  %v2787 = vld [vmem:[%s5 + $0x1] sm:$0x1]
  %v2788 = vld [vmem:[%s5 + $0x2] sm:$0x1]
  %v2789 = vld [vmem:[%s5 + $0x3] sm:$0x1]
  %v2790 = vld [vmem:[%s5 + $0x4] sm:$0x1]
  %v2791 = vld [vmem:[%s5 + $0x5] sm:$0x1]
  %v2792 = vld [vmem:[%s5 + $0x6] sm:$0x1]
  %v2793 = vld [vmem:[%s5 + $0x7] sm:$0x1]
  %v2794 = vld [vmem:[%s5 + $0x8] sm:$0x1]
  %v2804 = vlaneseq
  %v2805 = vshrl.u32 %v2804, 7
  %v2806 = vsub.s32 0, %v2805
  %v2807 = vrot.slane %v2786, %v2806
  %v2808 = vlaneseq
  %v2809 = vshrl.u32 %v2808, 7
  %v2810 = vsub.s32 0, %v2809
  %v2811 = vrot.slane %v2787, %v2810
  %v2812 = vlaneseq
  %v2813 = vshrl.u32 %v2812, 7
  %v2814 = vsub.s32 0, %v2813
  %v2815 = vrot.slane %v2788, %v2814
  %v2816 = vlaneseq
  %v2817 = vshrl.u32 %v2816, 7
  %v2818 = vsub.s32 0, %v2817
  %v2819 = vrot.slane %v2789, %v2818
  %v2820 = vlaneseq
  %v2821 = vshrl.u32 %v2820, 7
  %v2822 = vsub.s32 0, %v2821
  %v2823 = vrot.slane %v2790, %v2822
  %v2824 = vlaneseq
  %v2825 = vshrl.u32 %v2824, 7
  %v2826 = vsub.s32 0, %v2825
  %v2827 = vrot.slane %v2791, %v2826
  %v2828 = vlaneseq
  %v2829 = vshrl.u32 %v2828, 7
  %v2830 = vsub.s32 0, %v2829
  %v2831 = vrot.slane %v2792, %v2830
  %v2832 = vlaneseq
  %v2833 = vshrl.u32 %v2832, 7
  %v2834 = vsub.s32 0, %v2833
  %v2835 = vrot.slane %v2793, %v2834
  %v2836 = vlaneseq
  %v2837 = vshrl.u32 %v2836, 7
  %v2838 = vsub.s32 0, %v2837
  %v2839 = vrot.slane %v2794, %v2838
  %v2849 = vmul.f32 %v2642, %v2807
  %v2850 = vmul.f32 %v2643, %v2807
  %v2851 = vmul.f32 %v2644, %v2807
  %v2852 = vmul.f32 %v2645, %v2807
  %v2853 = vmul.f32 %v2646, %v2807
  %v2854 = vmul.f32 %v2647, %v2807
  %v2855 = vmul.f32 %v2648, %v2807
  %v2856 = vmul.f32 %v2649, %v2807
  %v2857 = vmul.f32 %v2650, %v2807
  %v2858 = vmul.f32 %v2651, %v2807
  %v2859 = vmul.f32 %v2652, %v2807
  %v2860 = vmul.f32 %v2653, %v2807
  %v2861 = vmul.f32 %v2654, %v2807
  %v2862 = vmul.f32 %v2655, %v2807
  %v2863 = vmul.f32 %v2656, %v2807
  %v2864 = vmul.f32 %v2657, %v2807
  %v2865 = vmul.f32 %v2658, %v2811
  %v2866 = vmul.f32 %v2659, %v2811
  %v2867 = vmul.f32 %v2660, %v2811
  %v2868 = vmul.f32 %v2661, %v2811
  %v2869 = vmul.f32 %v2662, %v2811
  %v2870 = vmul.f32 %v2663, %v2811
  %v2871 = vmul.f32 %v2664, %v2811
  %v2872 = vmul.f32 %v2665, %v2811
  %v2873 = vmul.f32 %v2666, %v2811
  %v2874 = vmul.f32 %v2667, %v2811
  %v2875 = vmul.f32 %v2668, %v2811
  %v2876 = vmul.f32 %v2669, %v2811
  %v2877 = vmul.f32 %v2670, %v2811
  %v2878 = vmul.f32 %v2671, %v2811
  %v2879 = vmul.f32 %v2672, %v2811
  %v2880 = vmul.f32 %v2673, %v2811
  %v2881 = vmul.f32 %v2674, %v2815
  %v2882 = vmul.f32 %v2675, %v2815
  %v2883 = vmul.f32 %v2676, %v2815
  %v2884 = vmul.f32 %v2677, %v2815
  %v2885 = vmul.f32 %v2678, %v2815
  %v2886 = vmul.f32 %v2679, %v2815
  %v2887 = vmul.f32 %v2680, %v2815
  %v2888 = vmul.f32 %v2681, %v2815
  %v2889 = vmul.f32 %v2682, %v2815
  %v2890 = vmul.f32 %v2683, %v2815
  %v2891 = vmul.f32 %v2684, %v2815
  %v2892 = vmul.f32 %v2685, %v2815
  %v2893 = vmul.f32 %v2686, %v2815
  %v2894 = vmul.f32 %v2687, %v2815
  %v2895 = vmul.f32 %v2688, %v2815
  %v2896 = vmul.f32 %v2689, %v2815
  %v2897 = vmul.f32 %v2690, %v2819
  %v2898 = vmul.f32 %v2691, %v2819
  %v2899 = vmul.f32 %v2692, %v2819
  %v2900 = vmul.f32 %v2693, %v2819
  %v2901 = vmul.f32 %v2694, %v2819
  %v2902 = vmul.f32 %v2695, %v2819
  %v2903 = vmul.f32 %v2696, %v2819
  %v2904 = vmul.f32 %v2697, %v2819
  %v2905 = vmul.f32 %v2698, %v2819
  %v2906 = vmul.f32 %v2699, %v2819
  %v2907 = vmul.f32 %v2700, %v2819
  %v2908 = vmul.f32 %v2701, %v2819
  %v2909 = vmul.f32 %v2702, %v2819
  %v2910 = vmul.f32 %v2703, %v2819
  %v2911 = vmul.f32 %v2704, %v2819
  %v2912 = vmul.f32 %v2705, %v2819
  %v2913 = vmul.f32 %v2706, %v2823
  %v2914 = vmul.f32 %v2707, %v2823
  %v2915 = vmul.f32 %v2708, %v2823
  %v2916 = vmul.f32 %v2709, %v2823
  %v2917 = vmul.f32 %v2710, %v2823
  %v2918 = vmul.f32 %v2711, %v2823
  %v2919 = vmul.f32 %v2712, %v2823
  %v2920 = vmul.f32 %v2713, %v2823
  %v2921 = vmul.f32 %v2714, %v2823
  %v2922 = vmul.f32 %v2715, %v2823
  %v2923 = vmul.f32 %v2716, %v2823
  %v2924 = vmul.f32 %v2717, %v2823
  %v2925 = vmul.f32 %v2718, %v2823
  %v2926 = vmul.f32 %v2719, %v2823
  %v2927 = vmul.f32 %v2720, %v2823
  %v2928 = vmul.f32 %v2721, %v2823
  %v2929 = vmul.f32 %v2722, %v2827
  %v2930 = vmul.f32 %v2723, %v2827
  %v2931 = vmul.f32 %v2724, %v2827
  %v2932 = vmul.f32 %v2725, %v2827
  %v2933 = vmul.f32 %v2726, %v2827
  %v2934 = vmul.f32 %v2727, %v2827
  %v2935 = vmul.f32 %v2728, %v2827
  %v2936 = vmul.f32 %v2729, %v2827
  %v2937 = vmul.f32 %v2730, %v2827
  %v2938 = vmul.f32 %v2731, %v2827
  %v2939 = vmul.f32 %v2732, %v2827
  %v2940 = vmul.f32 %v2733, %v2827
  %v2941 = vmul.f32 %v2734, %v2827
  %v2942 = vmul.f32 %v2735, %v2827
  %v2943 = vmul.f32 %v2736, %v2827
  %v2944 = vmul.f32 %v2737, %v2827
  %v2945 = vmul.f32 %v2738, %v2831
  %v2946 = vmul.f32 %v2739, %v2831
  %v2947 = vmul.f32 %v2740, %v2831
  %v2948 = vmul.f32 %v2741, %v2831
  %v2949 = vmul.f32 %v2742, %v2831
  %v2950 = vmul.f32 %v2743, %v2831
  %v2951 = vmul.f32 %v2744, %v2831
  %v2952 = vmul.f32 %v2745, %v2831
  %v2953 = vmul.f32 %v2746, %v2831
  %v2954 = vmul.f32 %v2747, %v2831
  %v2955 = vmul.f32 %v2748, %v2831
  %v2956 = vmul.f32 %v2749, %v2831
  %v2957 = vmul.f32 %v2750, %v2831
  %v2958 = vmul.f32 %v2751, %v2831
  %v2959 = vmul.f32 %v2752, %v2831
  %v2960 = vmul.f32 %v2753, %v2831
  %v2961 = vmul.f32 %v2754, %v2835
  %v2962 = vmul.f32 %v2755, %v2835
  %v2963 = vmul.f32 %v2756, %v2835
  %v2964 = vmul.f32 %v2757, %v2835
  %v2965 = vmul.f32 %v2758, %v2835
  %v2966 = vmul.f32 %v2759, %v2835
  %v2967 = vmul.f32 %v2760, %v2835
  %v2968 = vmul.f32 %v2761, %v2835
  %v2969 = vmul.f32 %v2762, %v2835
  %v2970 = vmul.f32 %v2763, %v2835
  %v2971 = vmul.f32 %v2764, %v2835
  %v2972 = vmul.f32 %v2765, %v2835
  %v2973 = vmul.f32 %v2766, %v2835
  %v2974 = vmul.f32 %v2767, %v2835
  %v2975 = vmul.f32 %v2768, %v2835
  %v2976 = vmul.f32 %v2769, %v2835
  %v2977 = vmul.f32 %v2770, %v2839
  %v2978 = vmul.f32 %v2771, %v2839
  %v2979 = vmul.f32 %v2772, %v2839
  %v2980 = vmul.f32 %v2773, %v2839
  %v2981 = vmul.f32 %v2774, %v2839
  %v2982 = vmul.f32 %v2775, %v2839
  %v2983 = vmul.f32 %v2776, %v2839
  %v2984 = vmul.f32 %v2777, %v2839
  %v2985 = vmul.f32 %v2778, %v2839
  %v2986 = vmul.f32 %v2779, %v2839
  %v2987 = vmul.f32 %v2780, %v2839
  %v2988 = vmul.f32 %v2781, %v2839
  %v2989 = vmul.f32 %v2782, %v2839
  %v2990 = vmul.f32 %v2783, %v2839
  %v2991 = vmul.f32 %v2784, %v2839
  %v2992 = vmul.f32 %v2785, %v2839
  %vm2993 = vcmask 261120
  %v2994 = vsel %vm2993, %v2849, 0.0
  %v2995 = vsel %vm2993, %v2865, 0.0
  %v2996 = vadd.f32 %v2994, %v2995
  %v2997 = vsel %vm2993, %v2881, 0.0
  %v2998 = vadd.f32 %v2996, %v2997
  %v2999 = vsel %vm2993, %v2897, 0.0
  %v3000 = vadd.f32 %v2998, %v2999
  %v3001 = vsel %vm2993, %v2913, 0.0
  %v3002 = vadd.f32 %v3000, %v3001
  %v3003 = vsel %vm2993, %v2929, 0.0
  %v3004 = vadd.f32 %v3002, %v3003
  %v3005 = vsel %vm2993, %v2945, 0.0
  %v3006 = vadd.f32 %v3004, %v3005
  %v3007 = vsel %vm2993, %v2961, 0.0
  %v3008 = vadd.f32 %v3006, %v3007
  %v3009 = vsel %vm2993, %v2977, 0.0
  %v3010 = vadd.f32 %v3008, %v3009
  %v3011 = vsel %vm2993, %v2850, 0.0
  %v3012 = vsel %vm2993, %v2866, 0.0
  %v3013 = vadd.f32 %v3011, %v3012
  %v3014 = vsel %vm2993, %v2882, 0.0
  %v3015 = vadd.f32 %v3013, %v3014
  %v3016 = vsel %vm2993, %v2898, 0.0
  %v3017 = vadd.f32 %v3015, %v3016
  %v3018 = vsel %vm2993, %v2914, 0.0
  %v3019 = vadd.f32 %v3017, %v3018
  %v3020 = vsel %vm2993, %v2930, 0.0
  %v3021 = vadd.f32 %v3019, %v3020
  %v3022 = vsel %vm2993, %v2946, 0.0
  %v3023 = vadd.f32 %v3021, %v3022
  %v3024 = vsel %vm2993, %v2962, 0.0
  %v3025 = vadd.f32 %v3023, %v3024
  %v3026 = vsel %vm2993, %v2978, 0.0
  %v3027 = vadd.f32 %v3025, %v3026
  %v3028 = vsel %vm2993, %v2851, 0.0
  %v3029 = vsel %vm2993, %v2867, 0.0
  %v3030 = vadd.f32 %v3028, %v3029
  %v3031 = vsel %vm2993, %v2883, 0.0
  %v3032 = vadd.f32 %v3030, %v3031
  %v3033 = vsel %vm2993, %v2899, 0.0
  %v3034 = vadd.f32 %v3032, %v3033
  %v3035 = vsel %vm2993, %v2915, 0.0
  %v3036 = vadd.f32 %v3034, %v3035
  %v3037 = vsel %vm2993, %v2931, 0.0
  %v3038 = vadd.f32 %v3036, %v3037
  %v3039 = vsel %vm2993, %v2947, 0.0
  %v3040 = vadd.f32 %v3038, %v3039
  %v3041 = vsel %vm2993, %v2963, 0.0
  %v3042 = vadd.f32 %v3040, %v3041
  %v3043 = vsel %vm2993, %v2979, 0.0
  %v3044 = vadd.f32 %v3042, %v3043
  %v3045 = vsel %vm2993, %v2852, 0.0
  %v3046 = vsel %vm2993, %v2868, 0.0
  %v3047 = vadd.f32 %v3045, %v3046
  %v3048 = vsel %vm2993, %v2884, 0.0
  %v3049 = vadd.f32 %v3047, %v3048
  %v3050 = vsel %vm2993, %v2900, 0.0
  %v3051 = vadd.f32 %v3049, %v3050
  %v3052 = vsel %vm2993, %v2916, 0.0
  %v3053 = vadd.f32 %v3051, %v3052
  %v3054 = vsel %vm2993, %v2932, 0.0
  %v3055 = vadd.f32 %v3053, %v3054
  %v3056 = vsel %vm2993, %v2948, 0.0
  %v3057 = vadd.f32 %v3055, %v3056
  %v3058 = vsel %vm2993, %v2964, 0.0
  %v3059 = vadd.f32 %v3057, %v3058
  %v3060 = vsel %vm2993, %v2980, 0.0
  %v3061 = vadd.f32 %v3059, %v3060
  %v3062 = vsel %vm2993, %v2853, 0.0
  %v3063 = vsel %vm2993, %v2869, 0.0
  %v3064 = vadd.f32 %v3062, %v3063
  %v3065 = vsel %vm2993, %v2885, 0.0
  %v3066 = vadd.f32 %v3064, %v3065
  %v3067 = vsel %vm2993, %v2901, 0.0
  %v3068 = vadd.f32 %v3066, %v3067
  %v3069 = vsel %vm2993, %v2917, 0.0
  %v3070 = vadd.f32 %v3068, %v3069
  %v3071 = vsel %vm2993, %v2933, 0.0
  %v3072 = vadd.f32 %v3070, %v3071
  %v3073 = vsel %vm2993, %v2949, 0.0
  %v3074 = vadd.f32 %v3072, %v3073
  %v3075 = vsel %vm2993, %v2965, 0.0
  %v3076 = vadd.f32 %v3074, %v3075
  %v3077 = vsel %vm2993, %v2981, 0.0
  %v3078 = vadd.f32 %v3076, %v3077
  %v3079 = vsel %vm2993, %v2854, 0.0
  %v3080 = vsel %vm2993, %v2870, 0.0
  %v3081 = vadd.f32 %v3079, %v3080
  %v3082 = vsel %vm2993, %v2886, 0.0
  %v3083 = vadd.f32 %v3081, %v3082
  %v3084 = vsel %vm2993, %v2902, 0.0
  %v3085 = vadd.f32 %v3083, %v3084
  %v3086 = vsel %vm2993, %v2918, 0.0
  %v3087 = vadd.f32 %v3085, %v3086
  %v3088 = vsel %vm2993, %v2934, 0.0
  %v3089 = vadd.f32 %v3087, %v3088
  %v3090 = vsel %vm2993, %v2950, 0.0
  %v3091 = vadd.f32 %v3089, %v3090
  %v3092 = vsel %vm2993, %v2966, 0.0
  %v3093 = vadd.f32 %v3091, %v3092
  %v3094 = vsel %vm2993, %v2982, 0.0
  %v3095 = vadd.f32 %v3093, %v3094
  %v3096 = vsel %vm2993, %v2855, 0.0
  %v3097 = vsel %vm2993, %v2871, 0.0
  %v3098 = vadd.f32 %v3096, %v3097
  %v3099 = vsel %vm2993, %v2887, 0.0
  %v3100 = vadd.f32 %v3098, %v3099
  %v3101 = vsel %vm2993, %v2903, 0.0
  %v3102 = vadd.f32 %v3100, %v3101
  %v3103 = vsel %vm2993, %v2919, 0.0
  %v3104 = vadd.f32 %v3102, %v3103
  %v3105 = vsel %vm2993, %v2935, 0.0
  %v3106 = vadd.f32 %v3104, %v3105
  %v3107 = vsel %vm2993, %v2951, 0.0
  %v3108 = vadd.f32 %v3106, %v3107
  %v3109 = vsel %vm2993, %v2967, 0.0
  %v3110 = vadd.f32 %v3108, %v3109
  %v3111 = vsel %vm2993, %v2983, 0.0
  %v3112 = vadd.f32 %v3110, %v3111
  %v3113 = vsel %vm2993, %v2856, 0.0
  %v3114 = vsel %vm2993, %v2872, 0.0
  %v3115 = vadd.f32 %v3113, %v3114
  %v3116 = vsel %vm2993, %v2888, 0.0
  %v3117 = vadd.f32 %v3115, %v3116
  %v3118 = vsel %vm2993, %v2904, 0.0
  %v3119 = vadd.f32 %v3117, %v3118
  %v3120 = vsel %vm2993, %v2920, 0.0
  %v3121 = vadd.f32 %v3119, %v3120
  %v3122 = vsel %vm2993, %v2936, 0.0
  %v3123 = vadd.f32 %v3121, %v3122
  %v3124 = vsel %vm2993, %v2952, 0.0
  %v3125 = vadd.f32 %v3123, %v3124
  %v3126 = vsel %vm2993, %v2968, 0.0
  %v3127 = vadd.f32 %v3125, %v3126
  %v3128 = vsel %vm2993, %v2984, 0.0
  %v3129 = vadd.f32 %v3127, %v3128
  %v3130 = vsel %vm2993, %v2857, 0.0
  %v3131 = vsel %vm2993, %v2873, 0.0
  %v3132 = vadd.f32 %v3130, %v3131
  %v3133 = vsel %vm2993, %v2889, 0.0
  %v3134 = vadd.f32 %v3132, %v3133
  %v3135 = vsel %vm2993, %v2905, 0.0
  %v3136 = vadd.f32 %v3134, %v3135
  %v3137 = vsel %vm2993, %v2921, 0.0
  %v3138 = vadd.f32 %v3136, %v3137
  %v3139 = vsel %vm2993, %v2937, 0.0
  %v3140 = vadd.f32 %v3138, %v3139
  %v3141 = vsel %vm2993, %v2953, 0.0
  %v3142 = vadd.f32 %v3140, %v3141
  %v3143 = vsel %vm2993, %v2969, 0.0
  %v3144 = vadd.f32 %v3142, %v3143
  %v3145 = vsel %vm2993, %v2985, 0.0
  %v3146 = vadd.f32 %v3144, %v3145
  %v3147 = vsel %vm2993, %v2858, 0.0
  %v3148 = vsel %vm2993, %v2874, 0.0
  %v3149 = vadd.f32 %v3147, %v3148
  %v3150 = vsel %vm2993, %v2890, 0.0
  %v3151 = vadd.f32 %v3149, %v3150
  %v3152 = vsel %vm2993, %v2906, 0.0
  %v3153 = vadd.f32 %v3151, %v3152
  %v3154 = vsel %vm2993, %v2922, 0.0
  %v3155 = vadd.f32 %v3153, %v3154
  %v3156 = vsel %vm2993, %v2938, 0.0
  %v3157 = vadd.f32 %v3155, %v3156
  %v3158 = vsel %vm2993, %v2954, 0.0
  %v3159 = vadd.f32 %v3157, %v3158
  %v3160 = vsel %vm2993, %v2970, 0.0
  %v3161 = vadd.f32 %v3159, %v3160
  %v3162 = vsel %vm2993, %v2986, 0.0
  %v3163 = vadd.f32 %v3161, %v3162
  %v3164 = vsel %vm2993, %v2859, 0.0
  %v3165 = vsel %vm2993, %v2875, 0.0
  %v3166 = vadd.f32 %v3164, %v3165
  %v3167 = vsel %vm2993, %v2891, 0.0
  %v3168 = vadd.f32 %v3166, %v3167
  %v3169 = vsel %vm2993, %v2907, 0.0
  %v3170 = vadd.f32 %v3168, %v3169
  %v3171 = vsel %vm2993, %v2923, 0.0
  %v3172 = vadd.f32 %v3170, %v3171
  %v3173 = vsel %vm2993, %v2939, 0.0
  %v3174 = vadd.f32 %v3172, %v3173
  %v3175 = vsel %vm2993, %v2955, 0.0
  %v3176 = vadd.f32 %v3174, %v3175
  %v3177 = vsel %vm2993, %v2971, 0.0
  %v3178 = vadd.f32 %v3176, %v3177
  %v3179 = vsel %vm2993, %v2987, 0.0
  %v3180 = vadd.f32 %v3178, %v3179
  %v3181 = vsel %vm2993, %v2860, 0.0
  %v3182 = vsel %vm2993, %v2876, 0.0
  %v3183 = vadd.f32 %v3181, %v3182
  %v3184 = vsel %vm2993, %v2892, 0.0
  %v3185 = vadd.f32 %v3183, %v3184
  %v3186 = vsel %vm2993, %v2908, 0.0
  %v3187 = vadd.f32 %v3185, %v3186
  %v3188 = vsel %vm2993, %v2924, 0.0
  %v3189 = vadd.f32 %v3187, %v3188
  %v3190 = vsel %vm2993, %v2940, 0.0
  %v3191 = vadd.f32 %v3189, %v3190
  %v3192 = vsel %vm2993, %v2956, 0.0
  %v3193 = vadd.f32 %v3191, %v3192
  %v3194 = vsel %vm2993, %v2972, 0.0
  %v3195 = vadd.f32 %v3193, %v3194
  %v3196 = vsel %vm2993, %v2988, 0.0
  %v3197 = vadd.f32 %v3195, %v3196
  %v3198 = vsel %vm2993, %v2861, 0.0
  %v3199 = vsel %vm2993, %v2877, 0.0
  %v3200 = vadd.f32 %v3198, %v3199
  %v3201 = vsel %vm2993, %v2893, 0.0
  %v3202 = vadd.f32 %v3200, %v3201
  %v3203 = vsel %vm2993, %v2909, 0.0
  %v3204 = vadd.f32 %v3202, %v3203
  %v3205 = vsel %vm2993, %v2925, 0.0
  %v3206 = vadd.f32 %v3204, %v3205
  %v3207 = vsel %vm2993, %v2941, 0.0
  %v3208 = vadd.f32 %v3206, %v3207
  %v3209 = vsel %vm2993, %v2957, 0.0
  %v3210 = vadd.f32 %v3208, %v3209
  %v3211 = vsel %vm2993, %v2973, 0.0
  %v3212 = vadd.f32 %v3210, %v3211
  %v3213 = vsel %vm2993, %v2989, 0.0
  %v3214 = vadd.f32 %v3212, %v3213
  %v3215 = vsel %vm2993, %v2862, 0.0
  %v3216 = vsel %vm2993, %v2878, 0.0
  %v3217 = vadd.f32 %v3215, %v3216
  %v3218 = vsel %vm2993, %v2894, 0.0
  %v3219 = vadd.f32 %v3217, %v3218
  %v3220 = vsel %vm2993, %v2910, 0.0
  %v3221 = vadd.f32 %v3219, %v3220
  %v3222 = vsel %vm2993, %v2926, 0.0
  %v3223 = vadd.f32 %v3221, %v3222
  %v3224 = vsel %vm2993, %v2942, 0.0
  %v3225 = vadd.f32 %v3223, %v3224
  %v3226 = vsel %vm2993, %v2958, 0.0
  %v3227 = vadd.f32 %v3225, %v3226
  %v3228 = vsel %vm2993, %v2974, 0.0
  %v3229 = vadd.f32 %v3227, %v3228
  %v3230 = vsel %vm2993, %v2990, 0.0
  %v3231 = vadd.f32 %v3229, %v3230
  %v3232 = vsel %vm2993, %v2863, 0.0
  %v3233 = vsel %vm2993, %v2879, 0.0
  %v3234 = vadd.f32 %v3232, %v3233
  %v3235 = vsel %vm2993, %v2895, 0.0
  %v3236 = vadd.f32 %v3234, %v3235
  %v3237 = vsel %vm2993, %v2911, 0.0
  %v3238 = vadd.f32 %v3236, %v3237
  %v3239 = vsel %vm2993, %v2927, 0.0
  %v3240 = vadd.f32 %v3238, %v3239
  %v3241 = vsel %vm2993, %v2943, 0.0
  %v3242 = vadd.f32 %v3240, %v3241
  %v3243 = vsel %vm2993, %v2959, 0.0
  %v3244 = vadd.f32 %v3242, %v3243
  %v3245 = vsel %vm2993, %v2975, 0.0
  %v3246 = vadd.f32 %v3244, %v3245
  %v3247 = vsel %vm2993, %v2991, 0.0
  %v3248 = vadd.f32 %v3246, %v3247
  %v3249 = vsel %vm2993, %v2864, 0.0
  %v3250 = vsel %vm2993, %v2880, 0.0
  %v3251 = vadd.f32 %v3249, %v3250
  %v3252 = vsel %vm2993, %v2896, 0.0
  %v3253 = vadd.f32 %v3251, %v3252
  %v3254 = vsel %vm2993, %v2912, 0.0
  %v3255 = vadd.f32 %v3253, %v3254
  %v3256 = vsel %vm2993, %v2928, 0.0
  %v3257 = vadd.f32 %v3255, %v3256
  %v3258 = vsel %vm2993, %v2944, 0.0
  %v3259 = vadd.f32 %v3257, %v3258
  %v3260 = vsel %vm2993, %v2960, 0.0
  %v3261 = vadd.f32 %v3259, %v3260
  %v3262 = vsel %vm2993, %v2976, 0.0
  %v3263 = vadd.f32 %v3261, %v3262
  %v3264 = vsel %vm2993, %v2992, 0.0
  %v3265 = vadd.f32 %v3263, %v3264
  %v3266 = vld [vmem:[%s6] sm:$0x1]
  %v3268 = vlaneseq
  %v3269 = vshrl.u32 %v3268, 7
  %v3270 = vsub.s32 0, %v3269
  %v3271 = vrot.slane %v3266, %v3270
  %v3273 = vadd.f32 %v3010, %v3271
  %v3274 = vadd.f32 %v3027, %v3271
  %v3275 = vadd.f32 %v3044, %v3271
  %v3276 = vadd.f32 %v3061, %v3271
  %v3277 = vadd.f32 %v3078, %v3271
  %v3278 = vadd.f32 %v3095, %v3271
  %v3279 = vadd.f32 %v3112, %v3271
  %v3280 = vadd.f32 %v3129, %v3271
  %v3281 = vadd.f32 %v3146, %v3271
  %v3282 = vadd.f32 %v3163, %v3271
  %v3283 = vadd.f32 %v3180, %v3271
  %v3284 = vadd.f32 %v3197, %v3271
  %v3285 = vadd.f32 %v3214, %v3271
  %v3286 = vadd.f32 %v3231, %v3271
  %v3287 = vadd.f32 %v3248, %v3271
  %v3288 = vadd.f32 %v3265, %v3271
  %v3289 = vmul.f32 %v3273, %v3273
  %v3290 = vmul.f32 %v3274, %v3274
  %v3291 = vmul.f32 %v3275, %v3275
  %v3292 = vmul.f32 %v3276, %v3276
  %v3293 = vmul.f32 %v3277, %v3277
  %v3294 = vmul.f32 %v3278, %v3278
  %v3295 = vmul.f32 %v3279, %v3279
  %v3296 = vmul.f32 %v3280, %v3280
  %v3297 = vmul.f32 %v3281, %v3281
  %v3298 = vmul.f32 %v3282, %v3282
  %v3299 = vmul.f32 %v3283, %v3283
  %v3300 = vmul.f32 %v3284, %v3284
  %v3301 = vmul.f32 %v3285, %v3285
  %v3302 = vmul.f32 %v3286, %v3286
  %v3303 = vmul.f32 %v3287, %v3287
  %v3304 = vmul.f32 %v3288, %v3288
  %v3305 = vmul.f32 %v3273, %v3289
  %v3306 = vmul.f32 %v3274, %v3290
  %v3307 = vmul.f32 %v3275, %v3291
  %v3308 = vmul.f32 %v3276, %v3292
  %v3309 = vmul.f32 %v3277, %v3293
  %v3310 = vmul.f32 %v3278, %v3294
  %v3311 = vmul.f32 %v3279, %v3295
  %v3312 = vmul.f32 %v3280, %v3296
  %v3313 = vmul.f32 %v3281, %v3297
  %v3314 = vmul.f32 %v3282, %v3298
  %v3315 = vmul.f32 %v3283, %v3299
  %v3316 = vmul.f32 %v3284, %v3300
  %v3317 = vmul.f32 %v3285, %v3301
  %v3318 = vmul.f32 %v3286, %v3302
  %v3319 = vmul.f32 %v3287, %v3303
  %v3320 = vmul.f32 %v3288, %v3304
  %v3321 = vmul.f32 %v3305, 0.044715
  %v3322 = vmul.f32 %v3306, 0.044715
  %v3323 = vmul.f32 %v3307, 0.044715
  %v3324 = vmul.f32 %v3308, 0.044715
  %v3325 = vmul.f32 %v3309, 0.044715
  %v3326 = vmul.f32 %v3310, 0.044715
  %v3327 = vmul.f32 %v3311, 0.044715
  %v3328 = vmul.f32 %v3312, 0.044715
  %v3329 = vmul.f32 %v3313, 0.044715
  %v3330 = vmul.f32 %v3314, 0.044715
  %v3331 = vmul.f32 %v3315, 0.044715
  %v3332 = vmul.f32 %v3316, 0.044715
  %v3333 = vmul.f32 %v3317, 0.044715
  %v3334 = vmul.f32 %v3318, 0.044715
  %v3335 = vmul.f32 %v3319, 0.044715
  %v3336 = vmul.f32 %v3320, 0.044715
  %v3337 = vadd.f32 %v3273, %v3321
  %v3338 = vadd.f32 %v3274, %v3322
  %v3339 = vadd.f32 %v3275, %v3323
  %v3340 = vadd.f32 %v3276, %v3324
  %v3341 = vadd.f32 %v3277, %v3325
  %v3342 = vadd.f32 %v3278, %v3326
  %v3343 = vadd.f32 %v3279, %v3327
  %v3344 = vadd.f32 %v3280, %v3328
  %v3345 = vadd.f32 %v3281, %v3329
  %v3346 = vadd.f32 %v3282, %v3330
  %v3347 = vadd.f32 %v3283, %v3331
  %v3348 = vadd.f32 %v3284, %v3332
  %v3349 = vadd.f32 %v3285, %v3333
  %v3350 = vadd.f32 %v3286, %v3334
  %v3351 = vadd.f32 %v3287, %v3335
  %v3352 = vadd.f32 %v3288, %v3336
  %v3353 = vmul.f32 %v3337, 0.7978846
  %v3354 = vmul.f32 %v3338, 0.7978846
  %v3355 = vmul.f32 %v3339, 0.7978846
  %v3356 = vmul.f32 %v3340, 0.7978846
  %v3357 = vmul.f32 %v3341, 0.7978846
  %v3358 = vmul.f32 %v3342, 0.7978846
  %v3359 = vmul.f32 %v3343, 0.7978846
  %v3360 = vmul.f32 %v3344, 0.7978846
  %v3361 = vmul.f32 %v3345, 0.7978846
  %v3362 = vmul.f32 %v3346, 0.7978846
  %v3363 = vmul.f32 %v3347, 0.7978846
  %v3364 = vmul.f32 %v3348, 0.7978846
  %v3365 = vmul.f32 %v3349, 0.7978846
  %v3366 = vmul.f32 %v3350, 0.7978846
  %v3367 = vmul.f32 %v3351, 0.7978846
  %v3368 = vmul.f32 %v3352, 0.7978846
  %v3369 = vtanh.pop %v3353
  %v3370 = vtanh.pop %v3354
  %v3371 = vtanh.pop %v3355
  %v3372 = vtanh.pop %v3356
  %v3373 = vtanh.pop %v3357
  %v3374 = vtanh.pop %v3358
  %v3375 = vtanh.pop %v3359
  %v3376 = vtanh.pop %v3360
  %v3377 = vtanh.pop %v3361
  %v3378 = vtanh.pop %v3362
  %v3379 = vtanh.pop %v3363
  %v3380 = vtanh.pop %v3364
  %v3381 = vtanh.pop %v3365
  %v3382 = vtanh.pop %v3366
  %v3383 = vtanh.pop %v3367
  %v3384 = vtanh.pop %v3368
  %v3385 = vadd.f32 %v3369, 1.0
  %v3386 = vadd.f32 %v3370, 1.0
  %v3387 = vadd.f32 %v3371, 1.0
  %v3388 = vadd.f32 %v3372, 1.0
  %v3389 = vadd.f32 %v3373, 1.0
  %v3390 = vadd.f32 %v3374, 1.0
  %v3391 = vadd.f32 %v3375, 1.0
  %v3392 = vadd.f32 %v3376, 1.0
  %v3393 = vadd.f32 %v3377, 1.0
  %v3394 = vadd.f32 %v3378, 1.0
  %v3395 = vadd.f32 %v3379, 1.0
  %v3396 = vadd.f32 %v3380, 1.0
  %v3397 = vadd.f32 %v3381, 1.0
  %v3398 = vadd.f32 %v3382, 1.0
  %v3399 = vadd.f32 %v3383, 1.0
  %v3400 = vadd.f32 %v3384, 1.0
  %v3401 = vmul.f32 %v3385, 0.5
  %v3402 = vmul.f32 %v3386, 0.5
  %v3403 = vmul.f32 %v3387, 0.5
  %v3404 = vmul.f32 %v3388, 0.5
  %v3405 = vmul.f32 %v3389, 0.5
  %v3406 = vmul.f32 %v3390, 0.5
  %v3407 = vmul.f32 %v3391, 0.5
  %v3408 = vmul.f32 %v3392, 0.5
  %v3409 = vmul.f32 %v3393, 0.5
  %v3410 = vmul.f32 %v3394, 0.5
  %v3411 = vmul.f32 %v3395, 0.5
  %v3412 = vmul.f32 %v3396, 0.5
  %v3413 = vmul.f32 %v3397, 0.5
  %v3414 = vmul.f32 %v3398, 0.5
  %v3415 = vmul.f32 %v3399, 0.5
  %v3416 = vmul.f32 %v3400, 0.5
  %v3417 = vmul.f32 %v3273, %v3401
  %v3418 = vmul.f32 %v3274, %v3402
  %v3419 = vmul.f32 %v3275, %v3403
  %v3420 = vmul.f32 %v3276, %v3404
  %v3421 = vmul.f32 %v3277, %v3405
  %v3422 = vmul.f32 %v3278, %v3406
  %v3423 = vmul.f32 %v3279, %v3407
  %v3424 = vmul.f32 %v3280, %v3408
  %v3425 = vmul.f32 %v3281, %v3409
  %v3426 = vmul.f32 %v3282, %v3410
  %v3427 = vmul.f32 %v3283, %v3411
  %v3428 = vmul.f32 %v3284, %v3412
  %v3429 = vmul.f32 %v3285, %v3413
  %v3430 = vmul.f32 %v3286, %v3414
  %v3431 = vmul.f32 %v3287, %v3415
  %v3432 = vmul.f32 %v3288, %v3416
  %v3433 = vpack.c.bf16 %v3418, %v3417
  %v3434 = vpack.c.bf16 %v3420, %v3419
  %v3435 = vpack.c.bf16 %v3422, %v3421
  %v3436 = vpack.c.bf16 %v3424, %v3423
  %v3437 = vpack.c.bf16 %v3426, %v3425
  %v3438 = vpack.c.bf16 %v3428, %v3427
  %v3439 = vpack.c.bf16 %v3430, %v3429
  %v3440 = vpack.c.bf16 %v3432, %v3431
  %v3441 = vld [vmem:[%s7] sm:$0xf]
  %v3442 = vld [vmem:[%s7 + $0x4] sm:$0xf]
  %v3443 = vld [vmem:[%s7 + $0x8] sm:$0xf]
  %v3444 = vld [vmem:[%s7 + $0xc] sm:$0xf]
  %v3445 = vld [vmem:[%s8] sm:$0x1]
  %v3447 = vlaneseq
  %v3448 = vshrl.u32 %v3447, 7
  %v3449 = vsub.s32 0, %v3448
  %v3450 = vrot.slane %v3445, %v3449
  %v3456 = vunpack.c.l.b16 %v3441
  %v3457 = vunpack.c.l.b16 %v3442
  %v3458 = vunpack.c.l.b16 %v3443
  %v3459 = vunpack.c.l.b16 %v3444
  %v3460 = vpack.c.b16 %v3457, %v3456
  %v3461 = vpack.c.b16 %v3459, %v3458
  %v3465 = vsel %vm2993, %v3433, 0
  %v3468 = vsel %vm2993, %v3434, 0
  %v3471 = vsel %vm2993, %v3435, 0
  %v3474 = vsel %vm2993, %v3436, 0
  %v3477 = vsel %vm2993, %v3437, 0
  %v3480 = vsel %vm2993, %v3438, 0
  %v3483 = vsel %vm2993, %v3439, 0
  %v3486 = vsel %vm2993, %v3440, 0
  %3488 = vmatprep.subr.bf16.mxu0 0
  %3489 = vmatpush1.bf16.msra.mxu0 %v3460
  %3490 = vmatprep.subr.bf16.mxu0 0
  %3491 = vmatpush1.bf16.msra.mxu0 %v3461
  %3492 = vmatprep.subr.bf16.mxu0 0
  %3493 = vmatpush1.bf16.msra.mxu0 0
  %3494 = vmatprep.subr.bf16.mxu0 0
  %3495 = vmatpush1.bf16.msra.mxu0 0
  %3496 = vmatprep.subr.bf16.mxu0 0
  %3497 = vmatpush1.bf16.msra.mxu0 0
  %3498 = vmatprep.subr.bf16.mxu0 0
  %3499 = vmatpush1.bf16.msra.mxu0 0
  %3500 = vmatprep.subr.bf16.mxu0 0
  %3501 = vmatpush1.bf16.msra.mxu0 0
  %3502 = vmatprep.subr.bf16.mxu0 0
  %3503 = vmatpush1.bf16.msra.mxu0 0
  %3504 = vmatprep.subr.bf16.mxu0 0
  %3505 = vmatpush1.bf16.msra.mxu0 0
  %3506 = vmatprep.subr.bf16.mxu0 0
  %3507 = vmatpush1.bf16.msra.mxu0 0
  %3508 = vmatprep.subr.bf16.mxu0 0
  %3509 = vmatpush1.bf16.msra.mxu0 0
  %3510 = vmatprep.subr.bf16.mxu0 0
  %3511 = vmatpush1.bf16.msra.mxu0 0
  %3512 = vmatprep.subr.bf16.mxu0 0
  %3513 = vmatpush1.bf16.msra.mxu0 0
  %3514 = vmatprep.subr.bf16.mxu0 0
  %3515 = vmatpush1.bf16.msra.mxu0 0
  %3516 = vmatprep.subr.bf16.mxu0 0
  %3517 = vmatpush1.bf16.msra.mxu0 0
  %3518 = vmatprep.subr.bf16.mxu0 0
  %3519 = vmatpush1.bf16.msra.mxu0 0
  %3520 = vmatprep.mubr.bf16.mxu0 0
  %3521 = vmatmul.mubr.bf16.gmra.mrb[0].mxu0 %v3465
  %v3522 = vpop.f32.mrb[0].mxu0
  %v3523 = vadd.f32 %v3450, %v3522
  %v3524 = vpop.f32.mrb[0].mxu0
  %v3525 = vpop.f32.mrb[0].mxu0
  %v3526 = vadd.f32 %v3450, %v3525
  %v3527 = vpop.f32.mrb[0].mxu0
  %3528 = vmatprep.mubr.bf16.mxu0 0
  %3529 = vmatmul.mubr.bf16.gmra.mrb[0].mxu0 %v3468
  %v3530 = vpop.f32.mrb[0].mxu0
  %v3531 = vadd.f32 %v3450, %v3530
  %v3532 = vpop.f32.mrb[0].mxu0
  %v3533 = vpop.f32.mrb[0].mxu0
  %v3534 = vadd.f32 %v3450, %v3533
  %v3535 = vpop.f32.mrb[0].mxu0
  %3536 = vmatprep.mubr.bf16.mxu0 0
  %3537 = vmatmul.mubr.bf16.gmra.mrb[0].mxu0 %v3471
  %v3538 = vpop.f32.mrb[0].mxu0
  %v3539 = vadd.f32 %v3450, %v3538
  %v3540 = vpop.f32.mrb[0].mxu0
  %v3541 = vpop.f32.mrb[0].mxu0
  %v3542 = vadd.f32 %v3450, %v3541
  %v3543 = vpop.f32.mrb[0].mxu0
  %3544 = vmatprep.mubr.bf16.mxu0 0
  %3545 = vmatmul.mubr.bf16.gmra.mrb[0].mxu0 %v3474
  %v3546 = vpop.f32.mrb[0].mxu0
  %v3547 = vadd.f32 %v3450, %v3546
  %v3548 = vpop.f32.mrb[0].mxu0
  %v3549 = vpop.f32.mrb[0].mxu0
  %v3550 = vadd.f32 %v3450, %v3549
  %v3551 = vpop.f32.mrb[0].mxu0
  %3552 = vmatprep.mubr.bf16.mxu0 0
  %3553 = vmatmul.mubr.bf16.gmra.mrb[0].mxu0 %v3477
  %v3554 = vpop.f32.mrb[0].mxu0
  %v3555 = vadd.f32 %v3450, %v3554
  %v3556 = vpop.f32.mrb[0].mxu0
  %v3557 = vpop.f32.mrb[0].mxu0
  %v3558 = vadd.f32 %v3450, %v3557
  %v3559 = vpop.f32.mrb[0].mxu0
  %3560 = vmatprep.mubr.bf16.mxu0 0
  %3561 = vmatmul.mubr.bf16.gmra.mrb[0].mxu0 %v3480
  %v3562 = vpop.f32.mrb[0].mxu0
  %v3563 = vadd.f32 %v3450, %v3562
  %v3564 = vpop.f32.mrb[0].mxu0
  %v3565 = vpop.f32.mrb[0].mxu0
  %v3566 = vadd.f32 %v3450, %v3565
  %v3567 = vpop.f32.mrb[0].mxu0
  %3568 = vmatprep.mubr.bf16.mxu0 0
  %3569 = vmatmul.mubr.bf16.gmra.mrb[0].mxu0 %v3483
  %v3570 = vpop.f32.mrb[0].mxu0
  %v3571 = vadd.f32 %v3450, %v3570
  %v3572 = vpop.f32.mrb[0].mxu0
  %v3573 = vpop.f32.mrb[0].mxu0
  %v3574 = vadd.f32 %v3450, %v3573
  %v3575 = vpop.f32.mrb[0].mxu0
  %3576 = vmatprep.mubr.bf16.mxu0 0
  %3577 = vmatmul.mubr.bf16.gmra.mrb[0].mxu0 %v3486
  %v3578 = vpop.f32.mrb[0].mxu0
  %v3579 = vadd.f32 %v3450, %v3578
  %v3580 = vpop.f32.mrb[0].mxu0
  %v3581 = vpop.f32.mrb[0].mxu0
  %v3582 = vadd.f32 %v3450, %v3581
  %v3583 = vpop.f32.mrb[0].mxu0
  %3584 = vdwg.mxu0
  %v3585 = vadd.f32 %v292, %v3523
  %v3586 = vadd.f32 %v295, %v3526
  %v3587 = vadd.f32 %v300, %v3531
  %v3588 = vadd.f32 %v303, %v3534
  %v3589 = vadd.f32 %v308, %v3539
  %v3590 = vadd.f32 %v311, %v3542
  %v3591 = vadd.f32 %v316, %v3547
  %v3592 = vadd.f32 %v319, %v3550
  %v3593 = vadd.f32 %v324, %v3555
  %v3594 = vadd.f32 %v327, %v3558
  %v3595 = vadd.f32 %v332, %v3563
  %v3596 = vadd.f32 %v335, %v3566
  %v3597 = vadd.f32 %v340, %v3571
  %v3598 = vadd.f32 %v343, %v3574
  %v3599 = vadd.f32 %v348, %v3579
  %v3600 = vadd.f32 %v351, %v3582
  %v3601 = vpack.c.bf16 %v3586, %v3585
  %v3602 = vpack.c.bf16 %v3588, %v3587
  %v3603 = vpack.c.bf16 %v3590, %v3589
  %v3604 = vpack.c.bf16 %v3592, %v3591
  %v3605 = vpack.c.bf16 %v3594, %v3593
  %v3606 = vpack.c.bf16 %v3596, %v3595
  %v3607 = vpack.c.bf16 %v3598, %v3597
  %v3608 = vpack.c.bf16 %v3600, %v3599
  %v3617 = vunpack.c.l.b16 %v3601
  %v3618 = vunpack.c.h.b16 %v3601
  %v3619 = vunpack.c.l.b16 %v3602
  %v3620 = vunpack.c.h.b16 %v3602
  %v3621 = vunpack.c.l.b16 %v3603
  %v3622 = vunpack.c.h.b16 %v3603
  %v3623 = vunpack.c.l.b16 %v3604
  %v3624 = vunpack.c.h.b16 %v3604
  %v3625 = vunpack.c.l.b16 %v3605
  %v3626 = vunpack.c.h.b16 %v3605
  %v3627 = vunpack.c.l.b16 %v3606
  %v3628 = vunpack.c.h.b16 %v3606
  %v3629 = vunpack.c.l.b16 %v3607
  %v3630 = vunpack.c.h.b16 %v3607
  %v3631 = vunpack.c.l.b16 %v3608
  %v3632 = vunpack.c.h.b16 %v3608
  %v3633 = vpack.c.b16 %v3617, %v3617
  %v3634 = vpack.c.b16 %v3618, %v3618
  %v3635 = vpack.c.b16 %v3619, %v3619
  %v3636 = vpack.c.b16 %v3620, %v3620
  %v3637 = vpack.c.b16 %v3621, %v3621
  %v3638 = vpack.c.b16 %v3622, %v3622
  %v3639 = vpack.c.b16 %v3623, %v3623
  %v3640 = vpack.c.b16 %v3624, %v3624
  %v3641 = vpack.c.b16 %v3625, %v3625
  %v3642 = vpack.c.b16 %v3626, %v3626
  %v3643 = vpack.c.b16 %v3627, %v3627
  %v3644 = vpack.c.b16 %v3628, %v3628
  %v3645 = vpack.c.b16 %v3629, %v3629
  %v3646 = vpack.c.b16 %v3630, %v3630
  %v3647 = vpack.c.b16 %v3631, %v3631
  %v3648 = vpack.c.b16 %v3632, %v3632
  %vm3665 = vcmask 257024
  %3666 = vst.msk [vmem:[%s9] sm:$0xf] %vm3665, %v3633
  %3667 = vst.msk [vmem:[%s9 + $0x4] sm:$0xf] %vm3665, %v3634
  %3668 = vst.msk [vmem:[%s9 + $0x8] sm:$0xf] %vm3665, %v3635
  %3669 = vst.msk [vmem:[%s9 + $0xc] sm:$0xf] %vm3665, %v3636
  %3670 = vst.msk [vmem:[%s9 + $0x10] sm:$0xf] %vm3665, %v3637
  %3671 = vst.msk [vmem:[%s9 + $0x14] sm:$0xf] %vm3665, %v3638
  %3672 = vst.msk [vmem:[%s9 + $0x18] sm:$0xf] %vm3665, %v3639
  %3673 = vst.msk [vmem:[%s9 + $0x1c] sm:$0xf] %vm3665, %v3640
  %3674 = vst.msk [vmem:[%s9 + $0x20] sm:$0xf] %vm3665, %v3641
  %3675 = vst.msk [vmem:[%s9 + $0x24] sm:$0xf] %vm3665, %v3642
  %3676 = vst.msk [vmem:[%s9 + $0x28] sm:$0xf] %vm3665, %v3643
  %3677 = vst.msk [vmem:[%s9 + $0x2c] sm:$0xf] %vm3665, %v3644
  %3678 = vst.msk [vmem:[%s9 + $0x30] sm:$0xf] %vm3665, %v3645
  %3679 = vst.msk [vmem:[%s9 + $0x34] sm:$0xf] %vm3665, %v3646
  %3680 = vst.msk [vmem:[%s9 + $0x38] sm:$0xf] %vm3665, %v3647
  %3681 = vst.msk [vmem:[%s9 + $0x3c] sm:$0xf] %vm3665, %v3648
  // Predicated region
  $region38: #{_lambda_.5} parent=0 // pred_check
    _
  $region39: #{_lambda_.5} parent=0 // pred_check_branch
    %3683 = sbr.rel (0) target = $region41
  $region40: #{_lambda_.5} parent=0 // pred_region
    _
  $region41: #{_lambda_.5} parent=0 // pred_fallthru
    _
  // Predicated region
  $region42: #{_lambda_.5} parent=0 // pred_check
    _
  $region43: #{_lambda_.5} parent=0 // pred_check_branch
    %3685 = sbr.rel (0) target = $region45
  $region44: #{_lambda_.5} parent=0 // pred_region
    _
  $region45: #{_lambda_.5} parent=0 // pred_fallthru
    _

// kernel: _lambda_.7
$region0: #{_lambda_.7}
  #allocation0 [shape = 'u32[]', space=smem, size = 0x4, offset = 0x4, fixed_abs, tag = 'smem constant byte address 0x4 - core index']
  #allocation1 [shape = 'u32[144,128]{1,0:T(1,128)}', space=vmem, size = 0x12000, scoped, tag = 'internal scratch']
  #allocation2 [shape = 'f32[2,16,192]{2,1,0:T(8,128)}', space=vmem, size = 0x8000, scoped, tag = 'scratch operand']
  #allocation3 [shape = 'f32[2,16,64]{2,1,0:T(8,128)}', space=vmem, size = 0x4000, scoped, tag = 'scratch operand']
  %s0 = inlined_call_operand.vmem [shape: bf16[2,16,64], index: 0, kind: input, shape index: {}]
  %s1 = inlined_call_operand.vmem [shape: f32[2,1,64], index: 1, kind: input, shape index: {}]
  %s2 = inlined_call_operand.vmem [shape: f32[2,1,64], index: 2, kind: input, shape index: {}]
  %s3 = inlined_call_operand.vmem [shape: bf16[2,64,192], index: 3, kind: input, shape index: {}]
  %s4 = inlined_call_operand.vmem [shape: f32[2,1,192], index: 4, kind: input, shape index: {}]
  %s5 = inlined_call_operand.vmem [shape: bf16[2,64,64], index: 5, kind: input, shape index: {}]
  %s6 = inlined_call_operand.vmem [shape: f32[2,1,64], index: 6, kind: input, shape index: {}]
  %s7 = inlined_call_operand.vmem [shape: f32[2,1,64], index: 7, kind: input, shape index: {}]
  %s8 = inlined_call_operand.vmem [shape: f32[2,1,64], index: 8, kind: input, shape index: {}]
  %s9 = inlined_call_operand.vmem [shape: bf16[2,64,128], index: 9, kind: input, shape index: {}]
  %s10 = inlined_call_operand.vmem [shape: f32[2,1,128], index: 10, kind: input, shape index: {}]
  %s11 = inlined_call_operand.vmem [shape: bf16[2,128,64], index: 11, kind: input, shape index: {}]
  %s12 = inlined_call_operand.vmem [shape: f32[2,1,64], index: 12, kind: input, shape index: {}]
  %s13 = inlined_call_operand.vmem [shape: f32[1,64], index: 13, kind: input, shape index: {}]
  %s14 = inlined_call_operand.vmem [shape: f32[1,64], index: 14, kind: input, shape index: {}]
  %s15 = inlined_call_operand.vmem [shape: bf16[64,512], index: 15, kind: input, shape index: {}]
  %s16 = inlined_call_operand.vmem [shape: f32[1,512], index: 16, kind: input, shape index: {}]
  %s17 = inlined_call_operand.hbm [shape: f32[2,512], index: 17, kind: output, shape index: {}]
  %s18 = sld [smem:[#allocation0]]
  $region78: #{_lambda_.7} parent=0
    _
  %s20 = ssub.s32 1, %s18
  %s21 = scalar_select 0, %s20, %s18
  $region1: #{_lambda_.7} parent=0
    #allocation4 [shape = 'u8[4096]{0}', space=vmem, size = 0x1000, scoped, tag = 'output window, operand 0, single buffered']
    #allocation5 [shape = 's32[1]{0}', space=sflag, size = 0x4, scoped, tag = 'scoped memory for _lambda_.7']
    %22 = vsyncpa [#allocation5], 0
    // Predicated region
    $region2: #{_lambda_.7} parent=1 // pred_check
      _
    $region3: #{_lambda_.7} parent=1 // pred_check_branch
      %24 = sbr.rel (0) target = $region5
    $region4: #{_lambda_.7} parent=1 // pred_region
      _
    $region5: #{_lambda_.7} parent=1 // pred_fallthru
      _
    // Predicated region
    $region6: #{_lambda_.7} parent=1 // pred_check
      _
    $region7: #{_lambda_.7} parent=1 // pred_check_branch
      %26 = sbr.rel (0) target = $region9
    $region8: #{_lambda_.7} parent=1 // pred_region
      _
    $region9: #{_lambda_.7} parent=1 // pred_fallthru
      _
    // Predicated region
    $region10: #{_lambda_.7} parent=1 // pred_check
      _
    $region11: #{_lambda_.7} parent=1 // pred_check_branch
      %28 = sbr.rel (0) target = $region13
    $region12: #{_lambda_.7} parent=1 // pred_region
      _
    $region13: #{_lambda_.7} parent=1 // pred_fallthru
      _
    // Predicated region
    $region14: #{_lambda_.7} parent=1 // pred_check
      _
    $region15: #{_lambda_.7} parent=1 // pred_check_branch
      %30 = sbr.rel (0) target = $region17
    $region16: #{_lambda_.7} parent=1 // pred_region
      _
    $region17: #{_lambda_.7} parent=1 // pred_fallthru
      _
    // Predicated region
    $region18: #{_lambda_.7} parent=1 // pred_check
      _
    $region19: #{_lambda_.7} parent=1 // pred_check_branch
      %32 = sbr.rel (0) target = $region21
    $region20: #{_lambda_.7} parent=1 // pred_region
      _
    $region21: #{_lambda_.7} parent=1 // pred_fallthru
      _
    // Predicated region
    $region22: #{_lambda_.7} parent=1 // pred_check
      _
    $region23: #{_lambda_.7} parent=1 // pred_check_branch
      %34 = sbr.rel (0) target = $region25
    $region24: #{_lambda_.7} parent=1 // pred_region
      _
    $region25: #{_lambda_.7} parent=1 // pred_fallthru
      _
    // Predicated region
    $region26: #{_lambda_.7} parent=1 // pred_check
      _
    $region27: #{_lambda_.7} parent=1 // pred_check_branch
      %36 = sbr.rel (0) target = $region29
    $region28: #{_lambda_.7} parent=1 // pred_region
      _
    $region29: #{_lambda_.7} parent=1 // pred_fallthru
      _
    // Predicated region
    $region30: #{_lambda_.7} parent=1 // pred_check
      _
    $region31: #{_lambda_.7} parent=1 // pred_check_branch
      %38 = sbr.rel (0) target = $region33
    $region32: #{_lambda_.7} parent=1 // pred_region
      _
    $region33: #{_lambda_.7} parent=1 // pred_fallthru
      _
    // Predicated region
    $region34: #{_lambda_.7} parent=1 // pred_check
      _
    $region35: #{_lambda_.7} parent=1 // pred_check_branch
      %40 = sbr.rel (0) target = $region37
    $region36: #{_lambda_.7} parent=1 // pred_region
      _
    $region37: #{_lambda_.7} parent=1 // pred_fallthru
      _
    // Predicated region
    $region38: #{_lambda_.7} parent=1 // pred_check
      _
    $region39: #{_lambda_.7} parent=1 // pred_check_branch
      %42 = sbr.rel (0) target = $region41
    $region40: #{_lambda_.7} parent=1 // pred_region
      _
    $region41: #{_lambda_.7} parent=1 // pred_fallthru
      _
    // Predicated region
    $region42: #{_lambda_.7} parent=1 // pred_check
      _
    $region43: #{_lambda_.7} parent=1 // pred_check_branch
      %44 = sbr.rel (0) target = $region45
    $region44: #{_lambda_.7} parent=1 // pred_region
      _
    $region45: #{_lambda_.7} parent=1 // pred_fallthru
      _
    // Predicated region
    $region46: #{_lambda_.7} parent=1 // pred_check
      _
    $region47: #{_lambda_.7} parent=1 // pred_check_branch
      %46 = sbr.rel (0) target = $region49
    $region48: #{_lambda_.7} parent=1 // pred_region
      _
    $region49: #{_lambda_.7} parent=1 // pred_fallthru
      _
    // Predicated region
    $region50: #{_lambda_.7} parent=1 // pred_check
      _
    $region51: #{_lambda_.7} parent=1 // pred_check_branch
      %48 = sbr.rel (0) target = $region53
    $region52: #{_lambda_.7} parent=1 // pred_region
      _
    $region53: #{_lambda_.7} parent=1 // pred_fallthru
      _
    // Predicated region
    $region54: #{_lambda_.7} parent=1 // pred_check
      _
    $region55: #{_lambda_.7} parent=1 // pred_check_branch
      %50 = sbr.rel (0) target = $region57
    $region56: #{_lambda_.7} parent=1 // pred_region
      _
    $region57: #{_lambda_.7} parent=1 // pred_fallthru
      _
    // Predicated region
    $region58: #{_lambda_.7} parent=1 // pred_check
      _
    $region59: #{_lambda_.7} parent=1 // pred_check_branch
      %52 = sbr.rel (0) target = $region61
    $region60: #{_lambda_.7} parent=1 // pred_region
      _
    $region61: #{_lambda_.7} parent=1 // pred_fallthru
      _
    // Predicated region
    $region62: #{_lambda_.7} parent=1 // pred_check
      _
    $region63: #{_lambda_.7} parent=1 // pred_check_branch
      %54 = sbr.rel (0) target = $region65
    $region64: #{_lambda_.7} parent=1 // pred_region
      _
    $region65: #{_lambda_.7} parent=1 // pred_fallthru
      _
    // Predicated region
    $region66: #{_lambda_.7} parent=1 // pred_check
      _
    $region67: #{_lambda_.7} parent=1 // pred_check_branch
      %56 = sbr.rel (0) target = $region69
    $region68: #{_lambda_.7} parent=1 // pred_region
      _
    $region69: #{_lambda_.7} parent=1 // pred_fallthru
      _
    %v58 = vld [vmem:[%s0] sm:$0xf]
    %v59 = vld [vmem:[%s0 + $0x4] sm:$0xf]
    %v60 = vld [vmem:[%s0 + $0x8] sm:$0xf]
    %v61 = vld [vmem:[%s0 + $0xc] sm:$0xf]
    %v62 = vunpack.c.l.bf16 %v58
    %v63 = vunpack.c.l.bf16 %v59
    %v64 = vunpack.c.l.bf16 %v60
    %v65 = vunpack.c.l.bf16 %v61
    %v66 = vld [vmem:[%s1] sm:$0x1]
    %v67 = vld [vmem:[%s2] sm:$0x1]
    %vm68 = vcmask 523264
    %v69 = vsel %vm68, %v62, 0.0
    %70 = vadd.xlane.f32.xlu0 %v69
    %v71 = vpop.xlane.xlu0 %70
    %v72 = vsel %vm68, %v63, 0.0
    %73 = vadd.xlane.f32.xlu0 %v72
    %v74 = vpop.xlane.xlu0 %73
    %v75 = vsel %vm68, %v64, 0.0
    %76 = vadd.xlane.f32.xlu0 %v75
    %v77 = vpop.xlane.xlu0 %76
    %v78 = vsel %vm68, %v65, 0.0
    %79 = vadd.xlane.f32.xlu0 %v78
    %v80 = vpop.xlane.xlu0 %79
    %v81 = vrcp.pop 64.0
    %v82 = vmul.f32 %v71, %v81
    %v83 = vmul.f32 %v74, %v81
    %v84 = vmul.f32 %v77, %v81
    %v85 = vmul.f32 %v80, %v81
    %v86 = vsub.f32 %v62, %v82
    %v87 = vsub.f32 %v63, %v83
    %v88 = vsub.f32 %v64, %v84
    %v89 = vsub.f32 %v65, %v85
    %v90 = vmul.f32 %v86, %v86
    %v91 = vmul.f32 %v87, %v87
    %v92 = vmul.f32 %v88, %v88
    %v93 = vmul.f32 %v89, %v89
    %v94 = vsel %vm68, %v90, 0.0
    %95 = vadd.xlane.f32.xlu0 %v94
    %v96 = vpop.xlane.xlu0 %95
    %v97 = vsel %vm68, %v91, 0.0
    %98 = vadd.xlane.f32.xlu0 %v97
    %v99 = vpop.xlane.xlu0 %98
    %v100 = vsel %vm68, %v92, 0.0
    %101 = vadd.xlane.f32.xlu0 %v100
    %v102 = vpop.xlane.xlu0 %101
    %v103 = vsel %vm68, %v93, 0.0
    %104 = vadd.xlane.f32.xlu0 %v103
    %v105 = vpop.xlane.xlu0 %104
    %v106 = vmul.f32 %v96, %v81
    %v107 = vmul.f32 %v99, %v81
    %v108 = vmul.f32 %v102, %v81
    %v109 = vmul.f32 %v105, %v81
    %v110 = vadd.f32 %v106, 1e-05
    %v111 = vadd.f32 %v107, 1e-05
    %v112 = vadd.f32 %v108, 1e-05
    %v113 = vadd.f32 %v109, 1e-05
    %v114 = vrsqrt.pop %v110
    %v115 = vrsqrt.pop %v111
    %v116 = vrsqrt.pop %v112
    %v117 = vrsqrt.pop %v113
    %v118 = vmul.f32 %v86, %v114
    %v119 = vmul.f32 %v87, %v115
    %v120 = vmul.f32 %v88, %v116
    %v121 = vmul.f32 %v89, %v117
    %v123 = vlaneseq
    %v124 = vshrl.u32 %v123, 7
    %v125 = vsub.s32 0, %v124
    %v126 = vrot.slane %v66, %v125
    %v128 = vmul.f32 %v118, %v126
    %v129 = vmul.f32 %v119, %v126
    %v130 = vmul.f32 %v120, %v126
    %v131 = vmul.f32 %v121, %v126
    %v133 = vlaneseq
    %v134 = vshrl.u32 %v133, 7
    %v135 = vsub.s32 0, %v134
    %v136 = vrot.slane %v67, %v135
    %v138 = vadd.f32 %v128, %v136
    %v139 = vadd.f32 %v129, %v136
    %v140 = vadd.f32 %v130, %v136
    %v141 = vadd.f32 %v131, %v136
    %v142 = vpack.c.bf16 %v139, %v138
    %v143 = vpack.c.bf16 %v141, %v140
    %v144 = vld [vmem:[%s3] sm:$0xff]
    %v145 = vld [vmem:[%s3 + $0x8] sm:$0xff]
    %v146 = vld [vmem:[%s3 + $0x10] sm:$0xff]
    %v147 = vld [vmem:[%s3 + $0x18] sm:$0xff]
    %v148 = vld [vmem:[%s3 + $0x20] sm:$0xff]
    %v149 = vld [vmem:[%s3 + $0x28] sm:$0xff]
    %v150 = vld [vmem:[%s3 + $0x30] sm:$0xff]
    %v151 = vld [vmem:[%s3 + $0x38] sm:$0xff]
    %v152 = vld [vmem:[%s4] sm:$0x3]
    %v154 = vlaneseq
    %v155 = vshrl.u32 %v154, 7
    %v156 = vsub.s32 0, %v155
    %v157 = vrot.slane %v152, %v156
    %v158 = vlaneseq
    %v159 = vshrl.u32 %v158, 7
    %v160 = vsub.s32 1, %v159
    %v161 = vrot.slane %v152, %v160
    %v172 = vunpack.c.l.b16 %v144
    %v173 = vunpack.c.h.b16 %v144
    %v174 = vunpack.c.l.b16 %v145
    %v175 = vunpack.c.h.b16 %v145
    %v176 = vunpack.c.l.b16 %v146
    %v177 = vunpack.c.h.b16 %v146
    %v178 = vunpack.c.l.b16 %v147
    %v179 = vunpack.c.h.b16 %v147
    %v180 = vunpack.c.l.b16 %v148
    %v181 = vunpack.c.h.b16 %v148
    %v182 = vunpack.c.l.b16 %v149
    %v183 = vunpack.c.h.b16 %v149
    %v184 = vunpack.c.l.b16 %v150
    %v185 = vunpack.c.h.b16 %v150
    %v186 = vunpack.c.l.b16 %v151
    %v187 = vunpack.c.h.b16 %v151
    %v188 = vpack.c.b16 %v174, %v172
    %v189 = vpack.c.b16 %v175, %v173
    %v190 = vpack.c.b16 %v178, %v176
    %v191 = vpack.c.b16 %v179, %v177
    %v192 = vpack.c.b16 %v182, %v180
    %v193 = vpack.c.b16 %v183, %v181
    %v194 = vpack.c.b16 %v186, %v184
    %v195 = vpack.c.b16 %v187, %v185
    %v205 = vsel %vm68, %v142, 0
    %v208 = vsel %vm68, %v143, 0
    %210 = vmatprep.subr.bf16.mxu0 %v189
    %211 = vmatpush1.bf16.msra.mxu0 %v188
    %212 = vmatprep.subr.bf16.mxu0 %v191
    %213 = vmatpush1.bf16.msra.mxu0 %v190
    %214 = vmatprep.subr.bf16.mxu0 %v193
    %215 = vmatpush1.bf16.msra.mxu0 %v192
    %216 = vmatprep.subr.bf16.mxu0 %v195
    %217 = vmatpush1.bf16.msra.mxu0 %v194
    %218 = vmatprep.subr.bf16.mxu0 0
    %219 = vmatpush1.bf16.msra.mxu0 0
    %220 = vmatprep.subr.bf16.mxu0 0
    %221 = vmatpush1.bf16.msra.mxu0 0
    %222 = vmatprep.subr.bf16.mxu0 0
    %223 = vmatpush1.bf16.msra.mxu0 0
    %224 = vmatprep.subr.bf16.mxu0 0
    %225 = vmatpush1.bf16.msra.mxu0 0
    %226 = vmatprep.subr.bf16.mxu0 0
    %227 = vmatpush1.bf16.msra.mxu0 0
    %228 = vmatprep.subr.bf16.mxu0 0
    %229 = vmatpush1.bf16.msra.mxu0 0
    %230 = vmatprep.subr.bf16.mxu0 0
    %231 = vmatpush1.bf16.msra.mxu0 0
    %232 = vmatprep.subr.bf16.mxu0 0
    %233 = vmatpush1.bf16.msra.mxu0 0
    %234 = vmatprep.subr.bf16.mxu0 0
    %235 = vmatpush1.bf16.msra.mxu0 0
    %236 = vmatprep.subr.bf16.mxu0 0
    %237 = vmatpush1.bf16.msra.mxu0 0
    %238 = vmatprep.subr.bf16.mxu0 0
    %239 = vmatpush1.bf16.msra.mxu0 0
    %240 = vmatprep.subr.bf16.mxu0 0
    %241 = vmatpush1.bf16.msra.mxu0 0
    %242 = vmatprep.mubr.bf16.mxu0 0
    %243 = vmatmul.mubr.bf16.gmra.mrb[0].mxu0 %v205
    %v244 = vpop.f32.mrb[0].mxu0
    %v245 = vadd.f32 %v157, %v244
    %v246 = vpop.f32.mrb[0].mxu0
    %v247 = vadd.f32 %v161, %v246
    %v248 = vpop.f32.mrb[0].mxu0
    %v249 = vadd.f32 %v157, %v248
    %v250 = vpop.f32.mrb[0].mxu0
    %v251 = vadd.f32 %v161, %v250
    %252 = vmatprep.mubr.bf16.mxu0 0
    %253 = vmatmul.mubr.bf16.gmra.mrb[0].mxu0 %v208
    %v254 = vpop.f32.mrb[0].mxu0
    %v255 = vadd.f32 %v157, %v254
    %v256 = vpop.f32.mrb[0].mxu0
    %v257 = vadd.f32 %v161, %v256
    %v258 = vpop.f32.mrb[0].mxu0
    %v259 = vadd.f32 %v157, %v258
    %v260 = vpop.f32.mrb[0].mxu0
    %v261 = vadd.f32 %v161, %v260
    %262 = vdwg.mxu0
    %263 = vst [vmem:[#allocation2] sm:$0xff] %v245
    %264 = vst.msk [vmem:[#allocation2 + $0x8] sm:$0xff] %vm68, %v247
    %265 = vst [vmem:[#allocation2 + $0x10] sm:$0xff] %v249
    %266 = vst.msk [vmem:[#allocation2 + $0x18] sm:$0xff] %vm68, %v251
    %267 = vst [vmem:[#allocation2 + $0x20] sm:$0xff] %v255
    %268 = vst.msk [vmem:[#allocation2 + $0x28] sm:$0xff] %vm68, %v257
    %269 = vst [vmem:[#allocation2 + $0x30] sm:$0xff] %v259
    %270 = vst.msk [vmem:[#allocation2 + $0x38] sm:$0xff] %vm68, %v261
    %v271 = vld [vmem:[#allocation2] sm:$0xff]
    %v272 = vld [vmem:[#allocation2 + $0x10] sm:$0xff]
    %v273 = vld [vmem:[#allocation2 + $0x20] sm:$0xff]
    %v274 = vld [vmem:[#allocation2 + $0x30] sm:$0xff]
    %v275 = vpack.c.bf16 %v272, %v271
    %v276 = vpack.c.bf16 %v274, %v273
    %v277 = vld [vmem:[#allocation2 + $0x8] sm:$0xff]
    %v278 = vld [vmem:[#allocation2 + $0x18] sm:$0xff]
    %v279 = vld [vmem:[#allocation2 + $0x28] sm:$0xff]
    %v280 = vld [vmem:[#allocation2 + $0x38] sm:$0xff]
    %v281 = vpack.c.bf16 %v278, %v277
    %v282 = vpack.c.bf16 %v280, %v279
    %284 = vrot.lane.b32.xlu0 %v275, 64
    %v285 = vpop.permute.xlu0 %284
    %vm286 = vcmask 130048
    %v288 = vsel %vm286, %v275, 0
    %v291 = vsel %vm286, %v285, 0
    %293 = vmatprep.subr.bf16.mxu0 0
    %294 = vmatpush1.bf16.xpose.msra.mxu0 %v291
    %295 = vmatprep.subr.bf16.mxu0 0
    %296 = vmatpush1.bf16.xpose.msra.mxu0 0
    %297 = vmatprep.subr.bf16.mxu0 0
    %298 = vmatpush1.bf16.xpose.msra.mxu0 0
    %299 = vmatprep.subr.bf16.mxu0 0
    %300 = vmatpush1.bf16.xpose.msra.mxu0 0
    %301 = vmatprep.subr.bf16.mxu0 0
    %302 = vmatpush1.bf16.xpose.msra.mxu0 0
    %303 = vmatprep.subr.bf16.mxu0 0
    %304 = vmatpush1.bf16.xpose.msra.mxu0 0
    %305 = vmatprep.subr.bf16.mxu0 0
    %306 = vmatpush1.bf16.xpose.msra.mxu0 0
    %307 = vmatprep.subr.bf16.mxu0 0
    %308 = vmatpush1.bf16.xpose.msra.mxu0 0
    %309 = vmatprep.subr.bf16.mxu0 0
    %310 = vmatpush1.bf16.xpose.msra.mxu0 0
    %311 = vmatprep.subr.bf16.mxu0 0
    %312 = vmatpush1.bf16.xpose.msra.mxu0 0
    %313 = vmatprep.subr.bf16.mxu0 0
    %314 = vmatpush1.bf16.xpose.msra.mxu0 0
    %315 = vmatprep.subr.bf16.mxu0 0
    %316 = vmatpush1.bf16.xpose.msra.mxu0 0
    %317 = vmatprep.subr.bf16.mxu0 0
    %318 = vmatpush1.bf16.xpose.msra.mxu0 0
    %319 = vmatprep.subr.bf16.mxu0 0
    %320 = vmatpush1.bf16.xpose.msra.mxu0 0
    %321 = vmatprep.subr.bf16.mxu0 0
    %322 = vmatpush1.bf16.xpose.msra.mxu0 0
    %323 = vmatprep.subr.bf16.mxu0 0
    %324 = vmatpush1.bf16.xpose.msra.mxu0 0
    %325 = vmatprep.mubr.bf16.mxu0 0
    %326 = vmatmul.mubr.bf16.gmra.mrb[0].mxu0 %v288
    %v327 = vpop.f32.mrb[0].mxu0
    %v328 = vadd.f32 0.0, %v327
    %v329 = vpop.f32.mrb[0].mxu0
    %v330 = vpop.f32.mrb[0].mxu0
    %v331 = vadd.f32 0.0, %v330
    %v332 = vpop.f32.mrb[0].mxu0
    %333 = vdwg.mxu0
    %335 = vrot.lane.b32.xlu0 %v276, 64
    %v336 = vpop.permute.xlu0 %335
    %v338 = vsel %vm286, %v276, 0
    %v341 = vsel %vm286, %v336, 0
    %343 = vmatprep.subr.bf16.mxu0 0
    %344 = vmatpush1.bf16.xpose.msra.mxu0 %v341
    %345 = vmatprep.subr.bf16.mxu0 0
    %346 = vmatpush1.bf16.xpose.msra.mxu0 0
    %347 = vmatprep.subr.bf16.mxu0 0
    %348 = vmatpush1.bf16.xpose.msra.mxu0 0
    %349 = vmatprep.subr.bf16.mxu0 0
    %350 = vmatpush1.bf16.xpose.msra.mxu0 0
    %351 = vmatprep.subr.bf16.mxu0 0
    %352 = vmatpush1.bf16.xpose.msra.mxu0 0
    %353 = vmatprep.subr.bf16.mxu0 0
    %354 = vmatpush1.bf16.xpose.msra.mxu0 0
    %355 = vmatprep.subr.bf16.mxu0 0
    %356 = vmatpush1.bf16.xpose.msra.mxu0 0
    %357 = vmatprep.subr.bf16.mxu0 0
    %358 = vmatpush1.bf16.xpose.msra.mxu0 0
    %359 = vmatprep.subr.bf16.mxu0 0
    %360 = vmatpush1.bf16.xpose.msra.mxu0 0
    %361 = vmatprep.subr.bf16.mxu0 0
    %362 = vmatpush1.bf16.xpose.msra.mxu0 0
    %363 = vmatprep.subr.bf16.mxu0 0
    %364 = vmatpush1.bf16.xpose.msra.mxu0 0
    %365 = vmatprep.subr.bf16.mxu0 0
    %366 = vmatpush1.bf16.xpose.msra.mxu0 0
    %367 = vmatprep.subr.bf16.mxu0 0
    %368 = vmatpush1.bf16.xpose.msra.mxu0 0
    %369 = vmatprep.subr.bf16.mxu0 0
    %370 = vmatpush1.bf16.xpose.msra.mxu0 0
    %371 = vmatprep.subr.bf16.mxu0 0
    %372 = vmatpush1.bf16.xpose.msra.mxu0 0
    %373 = vmatprep.subr.bf16.mxu0 0
    %374 = vmatpush1.bf16.xpose.msra.mxu0 0
    %375 = vmatprep.mubr.bf16.mxu0 0
    %376 = vmatmul.mubr.bf16.gmra.mrb[0].mxu0 %v338
    %v377 = vpop.f32.mrb[0].mxu0
    %v378 = vadd.f32 0.0, %v377
    %v379 = vpop.f32.mrb[0].mxu0
    %v380 = vpop.f32.mrb[0].mxu0
    %v381 = vadd.f32 0.0, %v380
    %v382 = vpop.f32.mrb[0].mxu0
    %383 = vdwg.mxu0
    %v384 = vmul.f32 %v328, 0.25
    %v385 = vmul.f32 %v331, 0.25
    %v386 = vmul.f32 %v378, 0.25
    %v387 = vmul.f32 %v381, 0.25
    %v388 = vsel %vm286, %v384, -inf
    %389 = vmax.xlane.f32.xlu0 %v388
    %v390 = vpop.xlane.xlu0 %389
    %v391 = vsel %vm286, %v385, -inf
    %392 = vmax.xlane.f32.xlu0 %v391
    %v393 = vpop.xlane.xlu0 %392
    %v394 = vsel %vm286, %v386, -inf
    %395 = vmax.xlane.f32.xlu0 %v394
    %v396 = vpop.xlane.xlu0 %395
    %v397 = vsel %vm286, %v387, -inf
    %398 = vmax.xlane.f32.xlu0 %v397
    %v399 = vpop.xlane.xlu0 %398
    %v400 = vsub.f32 %v384, %v390
    %v401 = vsub.f32 %v385, %v393
    %v402 = vsub.f32 %v386, %v396
    %v403 = vsub.f32 %v387, %v399
    %v404 = vmul.f32 %v400, 1.442695
    %v405 = vpow.pop %v404
    %v406 = vmul.f32 %v401, 1.442695
    %v407 = vpow.pop %v406
    %v408 = vmul.f32 %v402, 1.442695
    %v409 = vpow.pop %v408
    %v410 = vmul.f32 %v403, 1.442695
    %v411 = vpow.pop %v410
    %v412 = vsel %vm286, %v405, 0.0
    %413 = vadd.xlane.f32.xlu0 %v412
    %v414 = vpop.xlane.xlu0 %413
    %v415 = vsel %vm286, %v407, 0.0
    %416 = vadd.xlane.f32.xlu0 %v415
    %v417 = vpop.xlane.xlu0 %416
    %v418 = vsel %vm286, %v409, 0.0
    %419 = vadd.xlane.f32.xlu0 %v418
    %v420 = vpop.xlane.xlu0 %419
    %v421 = vsel %vm286, %v411, 0.0
    %422 = vadd.xlane.f32.xlu0 %v421
    %v423 = vpop.xlane.xlu0 %422
    %v424 = vrcp.pop %v414
    %v425 = vrcp.pop %v417
    %v426 = vrcp.pop %v420
    %v427 = vrcp.pop %v423
    %v428 = vmul.f32 %v405, %v424
    %v429 = vmul.f32 %v407, %v425
    %v430 = vmul.f32 %v409, %v426
    %v431 = vmul.f32 %v411, %v427
    %v432 = vpack.c.bf16 %v429, %v428
    %v433 = vpack.c.bf16 %v431, %v430
    %v435 = vsel %vm286, %v432, 0
    %437 = vmatprep.subr.bf16.mxu0 0
    %438 = vmatpush1.bf16.msra.mxu0 %v281
    %439 = vmatprep.subr.bf16.mxu0 0
    %440 = vmatpush1.bf16.msra.mxu0 0
    %441 = vmatprep.subr.bf16.mxu0 0
    %442 = vmatpush1.bf16.msra.mxu0 0
    %443 = vmatprep.subr.bf16.mxu0 0
    %444 = vmatpush1.bf16.msra.mxu0 0
    %445 = vmatprep.subr.bf16.mxu0 0
    %446 = vmatpush1.bf16.msra.mxu0 0
    %447 = vmatprep.subr.bf16.mxu0 0
    %448 = vmatpush1.bf16.msra.mxu0 0
    %449 = vmatprep.subr.bf16.mxu0 0
    %450 = vmatpush1.bf16.msra.mxu0 0
    %451 = vmatprep.subr.bf16.mxu0 0
    %452 = vmatpush1.bf16.msra.mxu0 0
    %453 = vmatprep.subr.bf16.mxu0 0
    %454 = vmatpush1.bf16.msra.mxu0 0
    %455 = vmatprep.subr.bf16.mxu0 0
    %456 = vmatpush1.bf16.msra.mxu0 0
    %457 = vmatprep.subr.bf16.mxu0 0
    %458 = vmatpush1.bf16.msra.mxu0 0
    %459 = vmatprep.subr.bf16.mxu0 0
    %460 = vmatpush1.bf16.msra.mxu0 0
    %461 = vmatprep.subr.bf16.mxu0 0
    %462 = vmatpush1.bf16.msra.mxu0 0
    %463 = vmatprep.subr.bf16.mxu0 0
    %464 = vmatpush1.bf16.msra.mxu0 0
    %465 = vmatprep.subr.bf16.mxu0 0
    %466 = vmatpush1.bf16.msra.mxu0 0
    %467 = vmatprep.subr.bf16.mxu0 0
    %468 = vmatpush1.bf16.msra.mxu0 0
    %469 = vmatprep.mubr.bf16.mxu0 0
    %470 = vmatmul.mubr.bf16.gmra.mrb[0].mxu0 %v435
    %v471 = vpop.f32.mrb[0].mxu0
    %v472 = vadd.f32 0.0, %v471
    %v473 = vpop.f32.mrb[0].mxu0
    %v474 = vpop.f32.mrb[0].mxu0
    %v475 = vadd.f32 0.0, %v474
    %v476 = vpop.f32.mrb[0].mxu0
    %477 = vdwg.mxu0
    %v479 = vsel %vm286, %v433, 0
    %481 = vmatprep.subr.bf16.mxu0 0
    %482 = vmatpush1.bf16.msra.mxu0 %v282
    %483 = vmatprep.subr.bf16.mxu0 0
    %484 = vmatpush1.bf16.msra.mxu0 0
    %485 = vmatprep.subr.bf16.mxu0 0
    %486 = vmatpush1.bf16.msra.mxu0 0
    %487 = vmatprep.subr.bf16.mxu0 0
    %488 = vmatpush1.bf16.msra.mxu0 0
    %489 = vmatprep.subr.bf16.mxu0 0
    %490 = vmatpush1.bf16.msra.mxu0 0
    %491 = vmatprep.subr.bf16.mxu0 0
    %492 = vmatpush1.bf16.msra.mxu0 0
    %493 = vmatprep.subr.bf16.mxu0 0
    %494 = vmatpush1.bf16.msra.mxu0 0
    %495 = vmatprep.subr.bf16.mxu0 0
    %496 = vmatpush1.bf16.msra.mxu0 0
    %497 = vmatprep.subr.bf16.mxu0 0
    %498 = vmatpush1.bf16.msra.mxu0 0
    %499 = vmatprep.subr.bf16.mxu0 0
    %500 = vmatpush1.bf16.msra.mxu0 0
    %501 = vmatprep.subr.bf16.mxu0 0
    %502 = vmatpush1.bf16.msra.mxu0 0
    %503 = vmatprep.subr.bf16.mxu0 0
    %504 = vmatpush1.bf16.msra.mxu0 0
    %505 = vmatprep.subr.bf16.mxu0 0
    %506 = vmatpush1.bf16.msra.mxu0 0
    %507 = vmatprep.subr.bf16.mxu0 0
    %508 = vmatpush1.bf16.msra.mxu0 0
    %509 = vmatprep.subr.bf16.mxu0 0
    %510 = vmatpush1.bf16.msra.mxu0 0
    %511 = vmatprep.subr.bf16.mxu0 0
    %512 = vmatpush1.bf16.msra.mxu0 0
    %513 = vmatprep.mubr.bf16.mxu0 0
    %514 = vmatmul.mubr.bf16.gmra.mrb[0].mxu0 %v479
    %v515 = vpop.f32.mrb[0].mxu0
    %v516 = vadd.f32 0.0, %v515
    %v517 = vpop.f32.mrb[0].mxu0
    %v518 = vpop.f32.mrb[0].mxu0
    %v519 = vadd.f32 0.0, %v518
    %v520 = vpop.f32.mrb[0].mxu0
    %521 = vdwg.mxu0
    %522 = vst.msk [vmem:[#allocation3] sm:$0xff] %vm286, %v472
    %523 = vst.msk [vmem:[#allocation3 + $0x8] sm:$0xff] %vm286, %v475
    %524 = vst.msk [vmem:[#allocation3 + $0x10] sm:$0xff] %vm286, %v516
    %525 = vst.msk [vmem:[#allocation3 + $0x18] sm:$0xff] %vm286, %v519
    %v526 = vld [vmem:[#allocation2] sm:$0xff]
    %v527 = vld [vmem:[#allocation2 + $0x10] sm:$0xff]
    %v528 = vld [vmem:[#allocation2 + $0x20] sm:$0xff]
    %v529 = vld [vmem:[#allocation2 + $0x30] sm:$0xff]
    %v530 = vpack.c.bf16 %v527, %v526
    %v531 = vpack.c.bf16 %v529, %v528
    %v532 = vld [vmem:[#allocation2 + $0x8] sm:$0xff]
    %v533 = vld [vmem:[#allocation2 + $0x18] sm:$0xff]
    %v534 = vld [vmem:[#allocation2 + $0x28] sm:$0xff]
    %v535 = vld [vmem:[#allocation2 + $0x38] sm:$0xff]
    %v536 = vpack.c.bf16 %v533, %v532
    %v537 = vpack.c.bf16 %v535, %v534
    %539 = vrot.lane.b32.xlu0 %v530, 112
    %v540 = vpop.permute.xlu0 %539
    %541 = vrot.lane.b32.xlu0 %v530, 48
    %v542 = vpop.permute.xlu0 %541
    %v544 = vsel %vm286, %v540, 0
    %v547 = vsel %vm286, %v542, 0
    %549 = vmatprep.subr.bf16.mxu0 0
    %550 = vmatpush1.bf16.xpose.msra.mxu0 %v547
    %551 = vmatprep.subr.bf16.mxu0 0
    %552 = vmatpush1.bf16.xpose.msra.mxu0 0
    %553 = vmatprep.subr.bf16.mxu0 0
    %554 = vmatpush1.bf16.xpose.msra.mxu0 0
    %555 = vmatprep.subr.bf16.mxu0 0
    %556 = vmatpush1.bf16.xpose.msra.mxu0 0
    %557 = vmatprep.subr.bf16.mxu0 0
    %558 = vmatpush1.bf16.xpose.msra.mxu0 0
    %559 = vmatprep.subr.bf16.mxu0 0
    %560 = vmatpush1.bf16.xpose.msra.mxu0 0
    %561 = vmatprep.subr.bf16.mxu0 0
    %562 = vmatpush1.bf16.xpose.msra.mxu0 0
    %563 = vmatprep.subr.bf16.mxu0 0
    %564 = vmatpush1.bf16.xpose.msra.mxu0 0
    %565 = vmatprep.subr.bf16.mxu0 0
    %566 = vmatpush1.bf16.xpose.msra.mxu0 0
    %567 = vmatprep.subr.bf16.mxu0 0
    %568 = vmatpush1.bf16.xpose.msra.mxu0 0
    %569 = vmatprep.subr.bf16.mxu0 0
    %570 = vmatpush1.bf16.xpose.msra.mxu0 0
    %571 = vmatprep.subr.bf16.mxu0 0
    %572 = vmatpush1.bf16.xpose.msra.mxu0 0
    %573 = vmatprep.subr.bf16.mxu0 0
    %574 = vmatpush1.bf16.xpose.msra.mxu0 0
    %575 = vmatprep.subr.bf16.mxu0 0
    %576 = vmatpush1.bf16.xpose.msra.mxu0 0
    %577 = vmatprep.subr.bf16.mxu0 0
    %578 = vmatpush1.bf16.xpose.msra.mxu0 0
    %579 = vmatprep.subr.bf16.mxu0 0
    %580 = vmatpush1.bf16.xpose.msra.mxu0 0
    %581 = vmatprep.mubr.bf16.mxu0 0
    %582 = vmatmul.mubr.bf16.gmra.mrb[0].mxu0 %v544
    %v583 = vpop.f32.mrb[0].mxu0
    %v584 = vadd.f32 0.0, %v583
    %v585 = vpop.f32.mrb[0].mxu0
    %v586 = vpop.f32.mrb[0].mxu0
    %v587 = vadd.f32 0.0, %v586
    %v588 = vpop.f32.mrb[0].mxu0
    %589 = vdwg.mxu0
    %591 = vrot.lane.b32.xlu0 %v531, 112
    %v592 = vpop.permute.xlu0 %591
    %593 = vrot.lane.b32.xlu0 %v531, 48
    %v594 = vpop.permute.xlu0 %593
    %v596 = vsel %vm286, %v592, 0
    %v599 = vsel %vm286, %v594, 0
    %601 = vmatprep.subr.bf16.mxu0 0
    %602 = vmatpush1.bf16.xpose.msra.mxu0 %v599
    %603 = vmatprep.subr.bf16.mxu0 0
    %604 = vmatpush1.bf16.xpose.msra.mxu0 0
    %605 = vmatprep.subr.bf16.mxu0 0
    %606 = vmatpush1.bf16.xpose.msra.mxu0 0
    %607 = vmatprep.subr.bf16.mxu0 0
    %608 = vmatpush1.bf16.xpose.msra.mxu0 0
    %609 = vmatprep.subr.bf16.mxu0 0
    %610 = vmatpush1.bf16.xpose.msra.mxu0 0
    %611 = vmatprep.subr.bf16.mxu0 0
    %612 = vmatpush1.bf16.xpose.msra.mxu0 0
    %613 = vmatprep.subr.bf16.mxu0 0
    %614 = vmatpush1.bf16.xpose.msra.mxu0 0
    %615 = vmatprep.subr.bf16.mxu0 0
    %616 = vmatpush1.bf16.xpose.msra.mxu0 0
    %617 = vmatprep.subr.bf16.mxu0 0
    %618 = vmatpush1.bf16.xpose.msra.mxu0 0
    %619 = vmatprep.subr.bf16.mxu0 0
    %620 = vmatpush1.bf16.xpose.msra.mxu0 0
    %621 = vmatprep.subr.bf16.mxu0 0
    %622 = vmatpush1.bf16.xpose.msra.mxu0 0
    %623 = vmatprep.subr.bf16.mxu0 0
    %624 = vmatpush1.bf16.xpose.msra.mxu0 0
    %625 = vmatprep.subr.bf16.mxu0 0
    %626 = vmatpush1.bf16.xpose.msra.mxu0 0
    %627 = vmatprep.subr.bf16.mxu0 0
    %628 = vmatpush1.bf16.xpose.msra.mxu0 0
    %629 = vmatprep.subr.bf16.mxu0 0
    %630 = vmatpush1.bf16.xpose.msra.mxu0 0
    %631 = vmatprep.subr.bf16.mxu0 0
    %632 = vmatpush1.bf16.xpose.msra.mxu0 0
    %633 = vmatprep.mubr.bf16.mxu0 0
    %634 = vmatmul.mubr.bf16.gmra.mrb[0].mxu0 %v596
    %v635 = vpop.f32.mrb[0].mxu0
    %v636 = vadd.f32 0.0, %v635
    %v637 = vpop.f32.mrb[0].mxu0
    %v638 = vpop.f32.mrb[0].mxu0
    %v639 = vadd.f32 0.0, %v638
    %v640 = vpop.f32.mrb[0].mxu0
    %641 = vdwg.mxu0
    %v642 = vmul.f32 %v584, 0.25
    %v643 = vmul.f32 %v587, 0.25
    %v644 = vmul.f32 %v636, 0.25
    %v645 = vmul.f32 %v639, 0.25
    %v646 = vsel %vm286, %v642, -inf
    %647 = vmax.xlane.f32.xlu0 %v646
    %v648 = vpop.xlane.xlu0 %647
    %v649 = vsel %vm286, %v643, -inf
    %650 = vmax.xlane.f32.xlu0 %v649
    %v651 = vpop.xlane.xlu0 %650
    %v652 = vsel %vm286, %v644, -inf
    %653 = vmax.xlane.f32.xlu0 %v652
    %v654 = vpop.xlane.xlu0 %653
    %v655 = vsel %vm286, %v645, -inf
    %656 = vmax.xlane.f32.xlu0 %v655
    %v657 = vpop.xlane.xlu0 %656
    %v658 = vsub.f32 %v642, %v648
    %v659 = vsub.f32 %v643, %v651
    %v660 = vsub.f32 %v644, %v654
    %v661 = vsub.f32 %v645, %v657
    %v662 = vmul.f32 %v658, 1.442695
    %v663 = vpow.pop %v662
    %v664 = vmul.f32 %v659, 1.442695
    %v665 = vpow.pop %v664
    %v666 = vmul.f32 %v660, 1.442695
    %v667 = vpow.pop %v666
    %v668 = vmul.f32 %v661, 1.442695
    %v669 = vpow.pop %v668
    %v670 = vsel %vm286, %v663, 0.0
    %671 = vadd.xlane.f32.xlu0 %v670
    %v672 = vpop.xlane.xlu0 %671
    %v673 = vsel %vm286, %v665, 0.0
    %674 = vadd.xlane.f32.xlu0 %v673
    %v675 = vpop.xlane.xlu0 %674
    %v676 = vsel %vm286, %v667, 0.0
    %677 = vadd.xlane.f32.xlu0 %v676
    %v678 = vpop.xlane.xlu0 %677
    %v679 = vsel %vm286, %v669, 0.0
    %680 = vadd.xlane.f32.xlu0 %v679
    %v681 = vpop.xlane.xlu0 %680
    %v682 = vrcp.pop %v672
    %v683 = vrcp.pop %v675
    %v684 = vrcp.pop %v678
    %v685 = vrcp.pop %v681
    %v686 = vmul.f32 %v663, %v682
    %v687 = vmul.f32 %v665, %v683
    %v688 = vmul.f32 %v667, %v684
    %v689 = vmul.f32 %v669, %v685
    %v690 = vpack.c.bf16 %v687, %v686
    %v691 = vpack.c.bf16 %v689, %v688
    %693 = vrot.lane.b32.xlu0 %v536, 112
    %v694 = vpop.permute.xlu0 %693
    %v697 = vsel %vm286, %v690, 0
    %699 = vmatprep.subr.bf16.mxu0 0
    %700 = vmatpush1.bf16.msra.mxu0 %v694
    %701 = vmatprep.subr.bf16.mxu0 0
    %702 = vmatpush1.bf16.msra.mxu0 0
    %703 = vmatprep.subr.bf16.mxu0 0
    %704 = vmatpush1.bf16.msra.mxu0 0
    %705 = vmatprep.subr.bf16.mxu0 0
    %706 = vmatpush1.bf16.msra.mxu0 0
    %707 = vmatprep.subr.bf16.mxu0 0
    %708 = vmatpush1.bf16.msra.mxu0 0
    %709 = vmatprep.subr.bf16.mxu0 0
    %710 = vmatpush1.bf16.msra.mxu0 0
    %711 = vmatprep.subr.bf16.mxu0 0
    %712 = vmatpush1.bf16.msra.mxu0 0
    %713 = vmatprep.subr.bf16.mxu0 0
    %714 = vmatpush1.bf16.msra.mxu0 0
    %715 = vmatprep.subr.bf16.mxu0 0
    %716 = vmatpush1.bf16.msra.mxu0 0
    %717 = vmatprep.subr.bf16.mxu0 0
    %718 = vmatpush1.bf16.msra.mxu0 0
    %719 = vmatprep.subr.bf16.mxu0 0
    %720 = vmatpush1.bf16.msra.mxu0 0
    %721 = vmatprep.subr.bf16.mxu0 0
    %722 = vmatpush1.bf16.msra.mxu0 0
    %723 = vmatprep.subr.bf16.mxu0 0
    %724 = vmatpush1.bf16.msra.mxu0 0
    %725 = vmatprep.subr.bf16.mxu0 0
    %726 = vmatpush1.bf16.msra.mxu0 0
    %727 = vmatprep.subr.bf16.mxu0 0
    %728 = vmatpush1.bf16.msra.mxu0 0
    %729 = vmatprep.subr.bf16.mxu0 0
    %730 = vmatpush1.bf16.msra.mxu0 0
    %731 = vmatprep.mubr.bf16.mxu0 0
    %732 = vmatmul.mubr.bf16.gmra.mrb[0].mxu0 %v697
    %v733 = vpop.f32.mrb[0].mxu0
    %v734 = vadd.f32 0.0, %v733
    %v735 = vpop.f32.mrb[0].mxu0
    %v736 = vpop.f32.mrb[0].mxu0
    %v737 = vadd.f32 0.0, %v736
    %v738 = vpop.f32.mrb[0].mxu0
    %739 = vdwg.mxu0
    %741 = vrot.lane.b32.xlu0 %v537, 112
    %v742 = vpop.permute.xlu0 %741
    %v745 = vsel %vm286, %v691, 0
    %747 = vmatprep.subr.bf16.mxu0 0
    %748 = vmatpush1.bf16.msra.mxu0 %v742
    %749 = vmatprep.subr.bf16.mxu0 0
    %750 = vmatpush1.bf16.msra.mxu0 0
    %751 = vmatprep.subr.bf16.mxu0 0
    %752 = vmatpush1.bf16.msra.mxu0 0
    %753 = vmatprep.subr.bf16.mxu0 0
    %754 = vmatpush1.bf16.msra.mxu0 0
    %755 = vmatprep.subr.bf16.mxu0 0
    %756 = vmatpush1.bf16.msra.mxu0 0
    %757 = vmatprep.subr.bf16.mxu0 0
    %758 = vmatpush1.bf16.msra.mxu0 0
    %759 = vmatprep.subr.bf16.mxu0 0
    %760 = vmatpush1.bf16.msra.mxu0 0
    %761 = vmatprep.subr.bf16.mxu0 0
    %762 = vmatpush1.bf16.msra.mxu0 0
    %763 = vmatprep.subr.bf16.mxu0 0
    %764 = vmatpush1.bf16.msra.mxu0 0
    %765 = vmatprep.subr.bf16.mxu0 0
    %766 = vmatpush1.bf16.msra.mxu0 0
    %767 = vmatprep.subr.bf16.mxu0 0
    %768 = vmatpush1.bf16.msra.mxu0 0
    %769 = vmatprep.subr.bf16.mxu0 0
    %770 = vmatpush1.bf16.msra.mxu0 0
    %771 = vmatprep.subr.bf16.mxu0 0
    %772 = vmatpush1.bf16.msra.mxu0 0
    %773 = vmatprep.subr.bf16.mxu0 0
    %774 = vmatpush1.bf16.msra.mxu0 0
    %775 = vmatprep.subr.bf16.mxu0 0
    %776 = vmatpush1.bf16.msra.mxu0 0
    %777 = vmatprep.subr.bf16.mxu0 0
    %778 = vmatpush1.bf16.msra.mxu0 0
    %779 = vmatprep.mubr.bf16.mxu0 0
    %780 = vmatmul.mubr.bf16.gmra.mrb[0].mxu0 %v745
    %v781 = vpop.f32.mrb[0].mxu0
    %v782 = vadd.f32 0.0, %v781
    %v783 = vpop.f32.mrb[0].mxu0
    %v784 = vpop.f32.mrb[0].mxu0
    %v785 = vadd.f32 0.0, %v784
    %v786 = vpop.f32.mrb[0].mxu0
    %787 = vdwg.mxu0
    %792 = vrot.lane.b32.xlu0 %v734, 16
    %v793 = vpop.permute.xlu0 %792
    %794 = vrot.lane.b32.xlu0 %v737, 16
    %v795 = vpop.permute.xlu0 %794
    %796 = vrot.lane.b32.xlu0 %v782, 16
    %v797 = vpop.permute.xlu0 %796
    %798 = vrot.lane.b32.xlu0 %v785, 16
    %v799 = vpop.permute.xlu0 %798
    %vm804 = vcmask 261248
    %805 = vst.msk [vmem:[#allocation3] sm:$0xff] %vm804, %v793
    %806 = vst.msk [vmem:[#allocation3 + $0x8] sm:$0xff] %vm804, %v795
    %807 = vst.msk [vmem:[#allocation3 + $0x10] sm:$0xff] %vm804, %v797
    %808 = vst.msk [vmem:[#allocation3 + $0x18] sm:$0xff] %vm804, %v799
    %v809 = vld [vmem:[#allocation2] sm:$0xff]
    %v810 = vld [vmem:[#allocation2 + $0x10] sm:$0xff]
    %v811 = vld [vmem:[#allocation2 + $0x20] sm:$0xff]
    %v812 = vld [vmem:[#allocation2 + $0x30] sm:$0xff]
    %v813 = vpack.c.bf16 %v810, %v809
    %v814 = vpack.c.bf16 %v812, %v811
    %v815 = vld [vmem:[#allocation2 + $0x8] sm:$0xff]
    %v816 = vld [vmem:[#allocation2 + $0x18] sm:$0xff]
    %v817 = vld [vmem:[#allocation2 + $0x28] sm:$0xff]
    %v818 = vld [vmem:[#allocation2 + $0x38] sm:$0xff]
    %v819 = vpack.c.bf16 %v816, %v815
    %v820 = vpack.c.bf16 %v818, %v817
    %822 = vrot.lane.b32.xlu0 %v813, 96
    %v823 = vpop.permute.xlu0 %822
    %824 = vrot.lane.b32.xlu0 %v813, 32
    %v825 = vpop.permute.xlu0 %824
    %v827 = vsel %vm286, %v823, 0
    %v830 = vsel %vm286, %v825, 0
    %832 = vmatprep.subr.bf16.mxu0 0
    %833 = vmatpush1.bf16.xpose.msra.mxu0 %v830
    %834 = vmatprep.subr.bf16.mxu0 0
    %835 = vmatpush1.bf16.xpose.msra.mxu0 0
    %836 = vmatprep.subr.bf16.mxu0 0
    %837 = vmatpush1.bf16.xpose.msra.mxu0 0
    %838 = vmatprep.subr.bf16.mxu0 0
    %839 = vmatpush1.bf16.xpose.msra.mxu0 0
    %840 = vmatprep.subr.bf16.mxu0 0
    %841 = vmatpush1.bf16.xpose.msra.mxu0 0
    %842 = vmatprep.subr.bf16.mxu0 0
    %843 = vmatpush1.bf16.xpose.msra.mxu0 0
    %844 = vmatprep.subr.bf16.mxu0 0
    %845 = vmatpush1.bf16.xpose.msra.mxu0 0
    %846 = vmatprep.subr.bf16.mxu0 0
    %847 = vmatpush1.bf16.xpose.msra.mxu0 0
    %848 = vmatprep.subr.bf16.mxu0 0
    %849 = vmatpush1.bf16.xpose.msra.mxu0 0
    %850 = vmatprep.subr.bf16.mxu0 0
    %851 = vmatpush1.bf16.xpose.msra.mxu0 0
    %852 = vmatprep.subr.bf16.mxu0 0
    %853 = vmatpush1.bf16.xpose.msra.mxu0 0
    %854 = vmatprep.subr.bf16.mxu0 0
    %855 = vmatpush1.bf16.xpose.msra.mxu0 0
    %856 = vmatprep.subr.bf16.mxu0 0
    %857 = vmatpush1.bf16.xpose.msra.mxu0 0
    %858 = vmatprep.subr.bf16.mxu0 0
    %859 = vmatpush1.bf16.xpose.msra.mxu0 0
    %860 = vmatprep.subr.bf16.mxu0 0
    %861 = vmatpush1.bf16.xpose.msra.mxu0 0
    %862 = vmatprep.subr.bf16.mxu0 0
    %863 = vmatpush1.bf16.xpose.msra.mxu0 0
    %864 = vmatprep.mubr.bf16.mxu0 0
    %865 = vmatmul.mubr.bf16.gmra.mrb[0].mxu0 %v827
    %v866 = vpop.f32.mrb[0].mxu0
    %v867 = vadd.f32 0.0, %v866
    %v868 = vpop.f32.mrb[0].mxu0
    %v869 = vpop.f32.mrb[0].mxu0
    %v870 = vadd.f32 0.0, %v869
    %v871 = vpop.f32.mrb[0].mxu0
    %872 = vdwg.mxu0
    %874 = vrot.lane.b32.xlu0 %v814, 96
    %v875 = vpop.permute.xlu0 %874
    %876 = vrot.lane.b32.xlu0 %v814, 32
    %v877 = vpop.permute.xlu0 %876
    %v879 = vsel %vm286, %v875, 0
    %v882 = vsel %vm286, %v877, 0
    %884 = vmatprep.subr.bf16.mxu0 0
    %885 = vmatpush1.bf16.xpose.msra.mxu0 %v882
    %886 = vmatprep.subr.bf16.mxu0 0
    %887 = vmatpush1.bf16.xpose.msra.mxu0 0
    %888 = vmatprep.subr.bf16.mxu0 0
    %889 = vmatpush1.bf16.xpose.msra.mxu0 0
    %890 = vmatprep.subr.bf16.mxu0 0
    %891 = vmatpush1.bf16.xpose.msra.mxu0 0
    %892 = vmatprep.subr.bf16.mxu0 0
    %893 = vmatpush1.bf16.xpose.msra.mxu0 0
    %894 = vmatprep.subr.bf16.mxu0 0
    %895 = vmatpush1.bf16.xpose.msra.mxu0 0
    %896 = vmatprep.subr.bf16.mxu0 0
    %897 = vmatpush1.bf16.xpose.msra.mxu0 0
    %898 = vmatprep.subr.bf16.mxu0 0
    %899 = vmatpush1.bf16.xpose.msra.mxu0 0
    %900 = vmatprep.subr.bf16.mxu0 0
    %901 = vmatpush1.bf16.xpose.msra.mxu0 0
    %902 = vmatprep.subr.bf16.mxu0 0
    %903 = vmatpush1.bf16.xpose.msra.mxu0 0
    %904 = vmatprep.subr.bf16.mxu0 0
    %905 = vmatpush1.bf16.xpose.msra.mxu0 0
    %906 = vmatprep.subr.bf16.mxu0 0
    %907 = vmatpush1.bf16.xpose.msra.mxu0 0
    %908 = vmatprep.subr.bf16.mxu0 0
    %909 = vmatpush1.bf16.xpose.msra.mxu0 0
    %910 = vmatprep.subr.bf16.mxu0 0
    %911 = vmatpush1.bf16.xpose.msra.mxu0 0
    %912 = vmatprep.subr.bf16.mxu0 0
    %913 = vmatpush1.bf16.xpose.msra.mxu0 0
    %914 = vmatprep.subr.bf16.mxu0 0
    %915 = vmatpush1.bf16.xpose.msra.mxu0 0
    %916 = vmatprep.mubr.bf16.mxu0 0
    %917 = vmatmul.mubr.bf16.gmra.mrb[0].mxu0 %v879
    %v918 = vpop.f32.mrb[0].mxu0
    %v919 = vadd.f32 0.0, %v918
    %v920 = vpop.f32.mrb[0].mxu0
    %v921 = vpop.f32.mrb[0].mxu0
    %v922 = vadd.f32 0.0, %v921
    %v923 = vpop.f32.mrb[0].mxu0
    %924 = vdwg.mxu0
    %v925 = vmul.f32 %v867, 0.25
    %v926 = vmul.f32 %v870, 0.25
    %v927 = vmul.f32 %v919, 0.25
    %v928 = vmul.f32 %v922, 0.25
    %v929 = vsel %vm286, %v925, -inf
    %930 = vmax.xlane.f32.xlu0 %v929
    %v931 = vpop.xlane.xlu0 %930
    %v932 = vsel %vm286, %v926, -inf
    %933 = vmax.xlane.f32.xlu0 %v932
    %v934 = vpop.xlane.xlu0 %933
    %v935 = vsel %vm286, %v927, -inf
    %936 = vmax.xlane.f32.xlu0 %v935
    %v937 = vpop.xlane.xlu0 %936
    %v938 = vsel %vm286, %v928, -inf
    %939 = vmax.xlane.f32.xlu0 %v938
    %v940 = vpop.xlane.xlu0 %939
    %v941 = vsub.f32 %v925, %v931
    %v942 = vsub.f32 %v926, %v934
    %v943 = vsub.f32 %v927, %v937
    %v944 = vsub.f32 %v928, %v940
    %v945 = vmul.f32 %v941, 1.442695
    %v946 = vpow.pop %v945
    %v947 = vmul.f32 %v942, 1.442695
    %v948 = vpow.pop %v947
    %v949 = vmul.f32 %v943, 1.442695
    %v950 = vpow.pop %v949
    %v951 = vmul.f32 %v944, 1.442695
    %v952 = vpow.pop %v951
    %v953 = vsel %vm286, %v946, 0.0
    %954 = vadd.xlane.f32.xlu0 %v953
    %v955 = vpop.xlane.xlu0 %954
    %v956 = vsel %vm286, %v948, 0.0
    %957 = vadd.xlane.f32.xlu0 %v956
    %v958 = vpop.xlane.xlu0 %957
    %v959 = vsel %vm286, %v950, 0.0
    %960 = vadd.xlane.f32.xlu0 %v959
    %v961 = vpop.xlane.xlu0 %960
    %v962 = vsel %vm286, %v952, 0.0
    %963 = vadd.xlane.f32.xlu0 %v962
    %v964 = vpop.xlane.xlu0 %963
    %v965 = vrcp.pop %v955
    %v966 = vrcp.pop %v958
    %v967 = vrcp.pop %v961
    %v968 = vrcp.pop %v964
    %v969 = vmul.f32 %v946, %v965
    %v970 = vmul.f32 %v948, %v966
    %v971 = vmul.f32 %v950, %v967
    %v972 = vmul.f32 %v952, %v968
    %v973 = vpack.c.bf16 %v970, %v969
    %v974 = vpack.c.bf16 %v972, %v971
    %976 = vrot.lane.b32.xlu0 %v819, 96
    %v977 = vpop.permute.xlu0 %976
    %v980 = vsel %vm286, %v973, 0
    %982 = vmatprep.subr.bf16.mxu0 0
    %983 = vmatpush1.bf16.msra.mxu0 %v977
    %984 = vmatprep.subr.bf16.mxu0 0
    %985 = vmatpush1.bf16.msra.mxu0 0
    %986 = vmatprep.subr.bf16.mxu0 0
    %987 = vmatpush1.bf16.msra.mxu0 0
    %988 = vmatprep.subr.bf16.mxu0 0
    %989 = vmatpush1.bf16.msra.mxu0 0
    %990 = vmatprep.subr.bf16.mxu0 0
    %991 = vmatpush1.bf16.msra.mxu0 0
    %992 = vmatprep.subr.bf16.mxu0 0
    %993 = vmatpush1.bf16.msra.mxu0 0
    %994 = vmatprep.subr.bf16.mxu0 0
    %995 = vmatpush1.bf16.msra.mxu0 0
    %996 = vmatprep.subr.bf16.mxu0 0
    %997 = vmatpush1.bf16.msra.mxu0 0
    %998 = vmatprep.subr.bf16.mxu0 0
    %999 = vmatpush1.bf16.msra.mxu0 0
    %1000 = vmatprep.subr.bf16.mxu0 0
    %1001 = vmatpush1.bf16.msra.mxu0 0
    %1002 = vmatprep.subr.bf16.mxu0 0
    %1003 = vmatpush1.bf16.msra.mxu0 0
    %1004 = vmatprep.subr.bf16.mxu0 0
    %1005 = vmatpush1.bf16.msra.mxu0 0
    %1006 = vmatprep.subr.bf16.mxu0 0
    %1007 = vmatpush1.bf16.msra.mxu0 0
    %1008 = vmatprep.subr.bf16.mxu0 0
    %1009 = vmatpush1.bf16.msra.mxu0 0
    %1010 = vmatprep.subr.bf16.mxu0 0
    %1011 = vmatpush1.bf16.msra.mxu0 0
    %1012 = vmatprep.subr.bf16.mxu0 0
    %1013 = vmatpush1.bf16.msra.mxu0 0
    %1014 = vmatprep.mubr.bf16.mxu0 0
    %1015 = vmatmul.mubr.bf16.gmra.mrb[0].mxu0 %v980
    %v1016 = vpop.f32.mrb[0].mxu0
    %v1017 = vadd.f32 0.0, %v1016
    %v1018 = vpop.f32.mrb[0].mxu0
    %v1019 = vpop.f32.mrb[0].mxu0
    %v1020 = vadd.f32 0.0, %v1019
    %v1021 = vpop.f32.mrb[0].mxu0
    %1022 = vdwg.mxu0
    %1024 = vrot.lane.b32.xlu0 %v820, 96
    %v1025 = vpop.permute.xlu0 %1024
    %v1028 = vsel %vm286, %v974, 0
    %1030 = vmatprep.subr.bf16.mxu0 0
    %1031 = vmatpush1.bf16.msra.mxu0 %v1025
    %1032 = vmatprep.subr.bf16.mxu0 0
    %1033 = vmatpush1.bf16.msra.mxu0 0
    %1034 = vmatprep.subr.bf16.mxu0 0
    %1035 = vmatpush1.bf16.msra.mxu0 0
    %1036 = vmatprep.subr.bf16.mxu0 0
    %1037 = vmatpush1.bf16.msra.mxu0 0
    %1038 = vmatprep.subr.bf16.mxu0 0
    %1039 = vmatpush1.bf16.msra.mxu0 0
    %1040 = vmatprep.subr.bf16.mxu0 0
    %1041 = vmatpush1.bf16.msra.mxu0 0
    %1042 = vmatprep.subr.bf16.mxu0 0
    %1043 = vmatpush1.bf16.msra.mxu0 0
    %1044 = vmatprep.subr.bf16.mxu0 0
    %1045 = vmatpush1.bf16.msra.mxu0 0
    %1046 = vmatprep.subr.bf16.mxu0 0
    %1047 = vmatpush1.bf16.msra.mxu0 0
    %1048 = vmatprep.subr.bf16.mxu0 0
    %1049 = vmatpush1.bf16.msra.mxu0 0
    %1050 = vmatprep.subr.bf16.mxu0 0
    %1051 = vmatpush1.bf16.msra.mxu0 0
    %1052 = vmatprep.subr.bf16.mxu0 0
    %1053 = vmatpush1.bf16.msra.mxu0 0
    %1054 = vmatprep.subr.bf16.mxu0 0
    %1055 = vmatpush1.bf16.msra.mxu0 0
    %1056 = vmatprep.subr.bf16.mxu0 0
    %1057 = vmatpush1.bf16.msra.mxu0 0
    %1058 = vmatprep.subr.bf16.mxu0 0
    %1059 = vmatpush1.bf16.msra.mxu0 0
    %1060 = vmatprep.subr.bf16.mxu0 0
    %1061 = vmatpush1.bf16.msra.mxu0 0
    %1062 = vmatprep.mubr.bf16.mxu0 0
    %1063 = vmatmul.mubr.bf16.gmra.mrb[0].mxu0 %v1028
    %v1064 = vpop.f32.mrb[0].mxu0
    %v1065 = vadd.f32 0.0, %v1064
    %v1066 = vpop.f32.mrb[0].mxu0
    %v1067 = vpop.f32.mrb[0].mxu0
    %v1068 = vadd.f32 0.0, %v1067
    %v1069 = vpop.f32.mrb[0].mxu0
    %1070 = vdwg.mxu0
    %1075 = vrot.lane.b32.xlu0 %v1017, 32
    %v1076 = vpop.permute.xlu0 %1075
    %1077 = vrot.lane.b32.xlu0 %v1020, 32
    %v1078 = vpop.permute.xlu0 %1077
    %1079 = vrot.lane.b32.xlu0 %v1065, 32
    %v1080 = vpop.permute.xlu0 %1079
    %1081 = vrot.lane.b32.xlu0 %v1068, 32
    %v1082 = vpop.permute.xlu0 %1081
    %vm1087 = vcmask 392448
    %1088 = vst.msk [vmem:[#allocation3] sm:$0xff] %vm1087, %v1076
    %1089 = vst.msk [vmem:[#allocation3 + $0x8] sm:$0xff] %vm1087, %v1078
    %1090 = vst.msk [vmem:[#allocation3 + $0x10] sm:$0xff] %vm1087, %v1080
    %1091 = vst.msk [vmem:[#allocation3 + $0x18] sm:$0xff] %vm1087, %v1082
    %v1092 = vld [vmem:[#allocation2] sm:$0xff]
    %v1093 = vld [vmem:[#allocation2 + $0x10] sm:$0xff]
    %v1094 = vld [vmem:[#allocation2 + $0x20] sm:$0xff]
    %v1095 = vld [vmem:[#allocation2 + $0x30] sm:$0xff]
    %v1096 = vpack.c.bf16 %v1093, %v1092
    %v1097 = vpack.c.bf16 %v1095, %v1094
    %v1098 = vld [vmem:[#allocation2 + $0x8] sm:$0xff]
    %v1099 = vld [vmem:[#allocation2 + $0x18] sm:$0xff]
    %v1100 = vld [vmem:[#allocation2 + $0x28] sm:$0xff]
    %v1101 = vld [vmem:[#allocation2 + $0x38] sm:$0xff]
    %v1102 = vpack.c.bf16 %v1099, %v1098
    %v1103 = vpack.c.bf16 %v1101, %v1100
    %1105 = vrot.lane.b32.xlu0 %v1096, 80
    %v1106 = vpop.permute.xlu0 %1105
    %1107 = vrot.lane.b32.xlu0 %v1096, 16
    %v1108 = vpop.permute.xlu0 %1107
    %v1110 = vsel %vm286, %v1106, 0
    %v1113 = vsel %vm286, %v1108, 0
    %1115 = vmatprep.subr.bf16.mxu0 0
    %1116 = vmatpush1.bf16.xpose.msra.mxu0 %v1113
    %1117 = vmatprep.subr.bf16.mxu0 0
    %1118 = vmatpush1.bf16.xpose.msra.mxu0 0
    %1119 = vmatprep.subr.bf16.mxu0 0
    %1120 = vmatpush1.bf16.xpose.msra.mxu0 0
    %1121 = vmatprep.subr.bf16.mxu0 0
    %1122 = vmatpush1.bf16.xpose.msra.mxu0 0
    %1123 = vmatprep.subr.bf16.mxu0 0
    %1124 = vmatpush1.bf16.xpose.msra.mxu0 0
    %1125 = vmatprep.subr.bf16.mxu0 0
    %1126 = vmatpush1.bf16.xpose.msra.mxu0 0
    %1127 = vmatprep.subr.bf16.mxu0 0
    %1128 = vmatpush1.bf16.xpose.msra.mxu0 0
    %1129 = vmatprep.subr.bf16.mxu0 0
    %1130 = vmatpush1.bf16.xpose.msra.mxu0 0
    %1131 = vmatprep.subr.bf16.mxu0 0
    %1132 = vmatpush1.bf16.xpose.msra.mxu0 0
    %1133 = vmatprep.subr.bf16.mxu0 0
    %1134 = vmatpush1.bf16.xpose.msra.mxu0 0
    %1135 = vmatprep.subr.bf16.mxu0 0
    %1136 = vmatpush1.bf16.xpose.msra.mxu0 0
    %1137 = vmatprep.subr.bf16.mxu0 0
    %1138 = vmatpush1.bf16.xpose.msra.mxu0 0
    %1139 = vmatprep.subr.bf16.mxu0 0
    %1140 = vmatpush1.bf16.xpose.msra.mxu0 0
    %1141 = vmatprep.subr.bf16.mxu0 0
    %1142 = vmatpush1.bf16.xpose.msra.mxu0 0
    %1143 = vmatprep.subr.bf16.mxu0 0
    %1144 = vmatpush1.bf16.xpose.msra.mxu0 0
    %1145 = vmatprep.subr.bf16.mxu0 0
    %1146 = vmatpush1.bf16.xpose.msra.mxu0 0
    %1147 = vmatprep.mubr.bf16.mxu0 0
    %1148 = vmatmul.mubr.bf16.gmra.mrb[0].mxu0 %v1110
    %v1149 = vpop.f32.mrb[0].mxu0
    %v1150 = vadd.f32 0.0, %v1149
    %v1151 = vpop.f32.mrb[0].mxu0
    %v1152 = vpop.f32.mrb[0].mxu0
    %v1153 = vadd.f32 0.0, %v1152
    %v1154 = vpop.f32.mrb[0].mxu0
    %1155 = vdwg.mxu0
    %1157 = vrot.lane.b32.xlu0 %v1097, 80
    %v1158 = vpop.permute.xlu0 %1157
    %1159 = vrot.lane.b32.xlu0 %v1097, 16
    %v1160 = vpop.permute.xlu0 %1159
    %v1162 = vsel %vm286, %v1158, 0
    %v1165 = vsel %vm286, %v1160, 0
    %1167 = vmatprep.subr.bf16.mxu0 0
    %1168 = vmatpush1.bf16.xpose.msra.mxu0 %v1165
    %1169 = vmatprep.subr.bf16.mxu0 0
    %1170 = vmatpush1.bf16.xpose.msra.mxu0 0
    %1171 = vmatprep.subr.bf16.mxu0 0
    %1172 = vmatpush1.bf16.xpose.msra.mxu0 0
    %1173 = vmatprep.subr.bf16.mxu0 0
    %1174 = vmatpush1.bf16.xpose.msra.mxu0 0
    %1175 = vmatprep.subr.bf16.mxu0 0
    %1176 = vmatpush1.bf16.xpose.msra.mxu0 0
    %1177 = vmatprep.subr.bf16.mxu0 0
    %1178 = vmatpush1.bf16.xpose.msra.mxu0 0
    %1179 = vmatprep.subr.bf16.mxu0 0
    %1180 = vmatpush1.bf16.xpose.msra.mxu0 0
    %1181 = vmatprep.subr.bf16.mxu0 0
    %1182 = vmatpush1.bf16.xpose.msra.mxu0 0
    %1183 = vmatprep.subr.bf16.mxu0 0
    %1184 = vmatpush1.bf16.xpose.msra.mxu0 0
    %1185 = vmatprep.subr.bf16.mxu0 0
    %1186 = vmatpush1.bf16.xpose.msra.mxu0 0
    %1187 = vmatprep.subr.bf16.mxu0 0
    %1188 = vmatpush1.bf16.xpose.msra.mxu0 0
    %1189 = vmatprep.subr.bf16.mxu0 0
    %1190 = vmatpush1.bf16.xpose.msra.mxu0 0
    %1191 = vmatprep.subr.bf16.mxu0 0
    %1192 = vmatpush1.bf16.xpose.msra.mxu0 0
    %1193 = vmatprep.subr.bf16.mxu0 0
    %1194 = vmatpush1.bf16.xpose.msra.mxu0 0
    %1195 = vmatprep.subr.bf16.mxu0 0
    %1196 = vmatpush1.bf16.xpose.msra.mxu0 0
    %1197 = vmatprep.subr.bf16.mxu0 0
    %1198 = vmatpush1.bf16.xpose.msra.mxu0 0
    %1199 = vmatprep.mubr.bf16.mxu0 0
    %1200 = vmatmul.mubr.bf16.gmra.mrb[0].mxu0 %v1162
    %v1201 = vpop.f32.mrb[0].mxu0
    %v1202 = vadd.f32 0.0, %v1201
    %v1203 = vpop.f32.mrb[0].mxu0
    %v1204 = vpop.f32.mrb[0].mxu0
    %v1205 = vadd.f32 0.0, %v1204
    %v1206 = vpop.f32.mrb[0].mxu0
    %1207 = vdwg.mxu0
    %v1208 = vmul.f32 %v1150, 0.25
    %v1209 = vmul.f32 %v1153, 0.25
    %v1210 = vmul.f32 %v1202, 0.25
    %v1211 = vmul.f32 %v1205, 0.25
    %v1212 = vsel %vm286, %v1208, -inf
    %1213 = vmax.xlane.f32.xlu0 %v1212
    %v1214 = vpop.xlane.xlu0 %1213
    %v1215 = vsel %vm286, %v1209, -inf
    %1216 = vmax.xlane.f32.xlu0 %v1215
    %v1217 = vpop.xlane.xlu0 %1216
    %v1218 = vsel %vm286, %v1210, -inf
    %1219 = vmax.xlane.f32.xlu0 %v1218
    %v1220 = vpop.xlane.xlu0 %1219
    %v1221 = vsel %vm286, %v1211, -inf
    %1222 = vmax.xlane.f32.xlu0 %v1221
    %v1223 = vpop.xlane.xlu0 %1222
    %v1224 = vsub.f32 %v1208, %v1214
    %v1225 = vsub.f32 %v1209, %v1217
    %v1226 = vsub.f32 %v1210, %v1220
    %v1227 = vsub.f32 %v1211, %v1223
    %v1228 = vmul.f32 %v1224, 1.442695
    %v1229 = vpow.pop %v1228
    %v1230 = vmul.f32 %v1225, 1.442695
    %v1231 = vpow.pop %v1230
    %v1232 = vmul.f32 %v1226, 1.442695
    %v1233 = vpow.pop %v1232
    %v1234 = vmul.f32 %v1227, 1.442695
    %v1235 = vpow.pop %v1234
    %v1236 = vsel %vm286, %v1229, 0.0
    %1237 = vadd.xlane.f32.xlu0 %v1236
    %v1238 = vpop.xlane.xlu0 %1237
    %v1239 = vsel %vm286, %v1231, 0.0
    %1240 = vadd.xlane.f32.xlu0 %v1239
    %v1241 = vpop.xlane.xlu0 %1240
    %v1242 = vsel %vm286, %v1233, 0.0
    %1243 = vadd.xlane.f32.xlu0 %v1242
    %v1244 = vpop.xlane.xlu0 %1243
    %v1245 = vsel %vm286, %v1235, 0.0
    %1246 = vadd.xlane.f32.xlu0 %v1245
    %v1247 = vpop.xlane.xlu0 %1246
    %v1248 = vrcp.pop %v1238
    %v1249 = vrcp.pop %v1241
    %v1250 = vrcp.pop %v1244
    %v1251 = vrcp.pop %v1247
    %v1252 = vmul.f32 %v1229, %v1248
    %v1253 = vmul.f32 %v1231, %v1249
    %v1254 = vmul.f32 %v1233, %v1250
    %v1255 = vmul.f32 %v1235, %v1251
    %v1256 = vpack.c.bf16 %v1253, %v1252
    %v1257 = vpack.c.bf16 %v1255, %v1254
    %1259 = vrot.lane.b32.xlu0 %v1102, 80
    %v1260 = vpop.permute.xlu0 %1259
    %v1263 = vsel %vm286, %v1256, 0
    %1265 = vmatprep.subr.bf16.mxu0 0
    %1266 = vmatpush1.bf16.msra.mxu0 %v1260
    %1267 = vmatprep.subr.bf16.mxu0 0
    %1268 = vmatpush1.bf16.msra.mxu0 0
    %1269 = vmatprep.subr.bf16.mxu0 0
    %1270 = vmatpush1.bf16.msra.mxu0 0
    %1271 = vmatprep.subr.bf16.mxu0 0
    %1272 = vmatpush1.bf16.msra.mxu0 0
    %1273 = vmatprep.subr.bf16.mxu0 0
    %1274 = vmatpush1.bf16.msra.mxu0 0
    %1275 = vmatprep.subr.bf16.mxu0 0
    %1276 = vmatpush1.bf16.msra.mxu0 0
    %1277 = vmatprep.subr.bf16.mxu0 0
    %1278 = vmatpush1.bf16.msra.mxu0 0
    %1279 = vmatprep.subr.bf16.mxu0 0
    %1280 = vmatpush1.bf16.msra.mxu0 0
    %1281 = vmatprep.subr.bf16.mxu0 0
    %1282 = vmatpush1.bf16.msra.mxu0 0
    %1283 = vmatprep.subr.bf16.mxu0 0
    %1284 = vmatpush1.bf16.msra.mxu0 0
    %1285 = vmatprep.subr.bf16.mxu0 0
    %1286 = vmatpush1.bf16.msra.mxu0 0
    %1287 = vmatprep.subr.bf16.mxu0 0
    %1288 = vmatpush1.bf16.msra.mxu0 0
    %1289 = vmatprep.subr.bf16.mxu0 0
    %1290 = vmatpush1.bf16.msra.mxu0 0
    %1291 = vmatprep.subr.bf16.mxu0 0
    %1292 = vmatpush1.bf16.msra.mxu0 0
    %1293 = vmatprep.subr.bf16.mxu0 0
    %1294 = vmatpush1.bf16.msra.mxu0 0
    %1295 = vmatprep.subr.bf16.mxu0 0
    %1296 = vmatpush1.bf16.msra.mxu0 0
    %1297 = vmatprep.mubr.bf16.mxu0 0
    %1298 = vmatmul.mubr.bf16.gmra.mrb[0].mxu0 %v1263
    %v1299 = vpop.f32.mrb[0].mxu0
    %v1300 = vadd.f32 0.0, %v1299
    %v1301 = vpop.f32.mrb[0].mxu0
    %v1302 = vpop.f32.mrb[0].mxu0
    %v1303 = vadd.f32 0.0, %v1302
    %v1304 = vpop.f32.mrb[0].mxu0
    %1305 = vdwg.mxu0
    %1307 = vrot.lane.b32.xlu0 %v1103, 80
    %v1308 = vpop.permute.xlu0 %1307
    %v1311 = vsel %vm286, %v1257, 0
    %1313 = vmatprep.subr.bf16.mxu0 0
    %1314 = vmatpush1.bf16.msra.mxu0 %v1308
    %1315 = vmatprep.subr.bf16.mxu0 0
    %1316 = vmatpush1.bf16.msra.mxu0 0
    %1317 = vmatprep.subr.bf16.mxu0 0
    %1318 = vmatpush1.bf16.msra.mxu0 0
    %1319 = vmatprep.subr.bf16.mxu0 0
    %1320 = vmatpush1.bf16.msra.mxu0 0
    %1321 = vmatprep.subr.bf16.mxu0 0
    %1322 = vmatpush1.bf16.msra.mxu0 0
    %1323 = vmatprep.subr.bf16.mxu0 0
    %1324 = vmatpush1.bf16.msra.mxu0 0
    %1325 = vmatprep.subr.bf16.mxu0 0
    %1326 = vmatpush1.bf16.msra.mxu0 0
    %1327 = vmatprep.subr.bf16.mxu0 0
    %1328 = vmatpush1.bf16.msra.mxu0 0
    %1329 = vmatprep.subr.bf16.mxu0 0
    %1330 = vmatpush1.bf16.msra.mxu0 0
    %1331 = vmatprep.subr.bf16.mxu0 0
    %1332 = vmatpush1.bf16.msra.mxu0 0
    %1333 = vmatprep.subr.bf16.mxu0 0
    %1334 = vmatpush1.bf16.msra.mxu0 0
    %1335 = vmatprep.subr.bf16.mxu0 0
    %1336 = vmatpush1.bf16.msra.mxu0 0
    %1337 = vmatprep.subr.bf16.mxu0 0
    %1338 = vmatpush1.bf16.msra.mxu0 0
    %1339 = vmatprep.subr.bf16.mxu0 0
    %1340 = vmatpush1.bf16.msra.mxu0 0
    %1341 = vmatprep.subr.bf16.mxu0 0
    %1342 = vmatpush1.bf16.msra.mxu0 0
    %1343 = vmatprep.subr.bf16.mxu0 0
    %1344 = vmatpush1.bf16.msra.mxu0 0
    %1345 = vmatprep.mubr.bf16.mxu0 0
    %1346 = vmatmul.mubr.bf16.gmra.mrb[0].mxu0 %v1311
    %v1347 = vpop.f32.mrb[0].mxu0
    %v1348 = vadd.f32 0.0, %v1347
    %v1349 = vpop.f32.mrb[0].mxu0
    %v1350 = vpop.f32.mrb[0].mxu0
    %v1351 = vadd.f32 0.0, %v1350
    %v1352 = vpop.f32.mrb[0].mxu0
    %1353 = vdwg.mxu0
    %1358 = vrot.lane.b32.xlu0 %v1300, 48
    %v1359 = vpop.permute.xlu0 %1358
    %1360 = vrot.lane.b32.xlu0 %v1303, 48
    %v1361 = vpop.permute.xlu0 %1360
    %1362 = vrot.lane.b32.xlu0 %v1348, 48
    %v1363 = vpop.permute.xlu0 %1362
    %1364 = vrot.lane.b32.xlu0 %v1351, 48
    %v1365 = vpop.permute.xlu0 %1364
    %vm1370 = vcmask 523648
    %1371 = vst.msk [vmem:[#allocation3] sm:$0xff] %vm1370, %v1359
    %1372 = vst.msk [vmem:[#allocation3 + $0x8] sm:$0xff] %vm1370, %v1361
    %1373 = vst.msk [vmem:[#allocation3 + $0x10] sm:$0xff] %vm1370, %v1363
    %1374 = vst.msk [vmem:[#allocation3 + $0x18] sm:$0xff] %vm1370, %v1365
    %v1375 = vld [vmem:[#allocation3] sm:$0xff]
    %v1376 = vld [vmem:[#allocation3 + $0x8] sm:$0xff]
    %v1377 = vld [vmem:[#allocation3 + $0x10] sm:$0xff]
    %v1378 = vld [vmem:[#allocation3 + $0x18] sm:$0xff]
    %v1379 = vpack.c.bf16 %v1376, %v1375
    %v1380 = vpack.c.bf16 %v1378, %v1377
    %v1381 = vld [vmem:[%s5] sm:$0xf]
    %v1382 = vld [vmem:[%s5 + $0x4] sm:$0xf]
    %v1383 = vld [vmem:[%s5 + $0x8] sm:$0xf]
    %v1384 = vld [vmem:[%s5 + $0xc] sm:$0xf]
    %v1385 = vld [vmem:[%s5 + $0x10] sm:$0xf]
    %v1386 = vld [vmem:[%s5 + $0x14] sm:$0xf]
    %v1387 = vld [vmem:[%s5 + $0x18] sm:$0xf]
    %v1388 = vld [vmem:[%s5 + $0x1c] sm:$0xf]
    %v1389 = vld [vmem:[%s6] sm:$0x1]
    %v1391 = vlaneseq
    %v1392 = vshrl.u32 %v1391, 7
    %v1393 = vsub.s32 0, %v1392
    %v1394 = vrot.slane %v1389, %v1393
    %v1404 = vunpack.c.l.b16 %v1381
    %v1405 = vunpack.c.l.b16 %v1382
    %v1406 = vunpack.c.l.b16 %v1383
    %v1407 = vunpack.c.l.b16 %v1384
    %v1408 = vunpack.c.l.b16 %v1385
    %v1409 = vunpack.c.l.b16 %v1386
    %v1410 = vunpack.c.l.b16 %v1387
    %v1411 = vunpack.c.l.b16 %v1388
    %v1412 = vpack.c.b16 %v1405, %v1404
    %v1413 = vpack.c.b16 %v1407, %v1406
    %v1414 = vpack.c.b16 %v1409, %v1408
    %v1415 = vpack.c.b16 %v1411, %v1410
    %v1421 = vsel %vm68, %v1379, 0
    %v1424 = vsel %vm68, %v1380, 0
    %1426 = vmatprep.subr.bf16.mxu0 0
    %1427 = vmatpush1.bf16.msra.mxu0 %v1412
    %1428 = vmatprep.subr.bf16.mxu0 0
    %1429 = vmatpush1.bf16.msra.mxu0 %v1413
    %1430 = vmatprep.subr.bf16.mxu0 0
    %1431 = vmatpush1.bf16.msra.mxu0 %v1414
    %1432 = vmatprep.subr.bf16.mxu0 0
    %1433 = vmatpush1.bf16.msra.mxu0 %v1415
    %1434 = vmatprep.subr.bf16.mxu0 0
    %1435 = vmatpush1.bf16.msra.mxu0 0
    %1436 = vmatprep.subr.bf16.mxu0 0
    %1437 = vmatpush1.bf16.msra.mxu0 0
    %1438 = vmatprep.subr.bf16.mxu0 0
    %1439 = vmatpush1.bf16.msra.mxu0 0
    %1440 = vmatprep.subr.bf16.mxu0 0
    %1441 = vmatpush1.bf16.msra.mxu0 0
    %1442 = vmatprep.subr.bf16.mxu0 0
    %1443 = vmatpush1.bf16.msra.mxu0 0
    %1444 = vmatprep.subr.bf16.mxu0 0
    %1445 = vmatpush1.bf16.msra.mxu0 0
    %1446 = vmatprep.subr.bf16.mxu0 0
    %1447 = vmatpush1.bf16.msra.mxu0 0
    %1448 = vmatprep.subr.bf16.mxu0 0
    %1449 = vmatpush1.bf16.msra.mxu0 0
    %1450 = vmatprep.subr.bf16.mxu0 0
    %1451 = vmatpush1.bf16.msra.mxu0 0
    %1452 = vmatprep.subr.bf16.mxu0 0
    %1453 = vmatpush1.bf16.msra.mxu0 0
    %1454 = vmatprep.subr.bf16.mxu0 0
    %1455 = vmatpush1.bf16.msra.mxu0 0
    %1456 = vmatprep.subr.bf16.mxu0 0
    %1457 = vmatpush1.bf16.msra.mxu0 0
    %1458 = vmatprep.mubr.bf16.mxu0 0
    %1459 = vmatmul.mubr.bf16.gmra.mrb[0].mxu0 %v1421
    %v1460 = vpop.f32.mrb[0].mxu0
    %v1461 = vadd.f32 %v1394, %v1460
    %v1462 = vpop.f32.mrb[0].mxu0
    %v1463 = vpop.f32.mrb[0].mxu0
    %v1464 = vadd.f32 %v1394, %v1463
    %v1465 = vpop.f32.mrb[0].mxu0
    %1466 = vmatprep.mubr.bf16.mxu0 0
    %1467 = vmatmul.mubr.bf16.gmra.mrb[0].mxu0 %v1424
    %v1468 = vpop.f32.mrb[0].mxu0
    %v1469 = vadd.f32 %v1394, %v1468
    %v1470 = vpop.f32.mrb[0].mxu0
    %v1471 = vpop.f32.mrb[0].mxu0
    %v1472 = vadd.f32 %v1394, %v1471
    %v1473 = vpop.f32.mrb[0].mxu0
    %1474 = vdwg.mxu0
    %v1475 = vadd.f32 %v62, %v1461
    %v1476 = vadd.f32 %v63, %v1464
    %v1477 = vadd.f32 %v64, %v1469
    %v1478 = vadd.f32 %v65, %v1472
    %v1479 = vld [vmem:[%s7] sm:$0x1]
    %v1480 = vld [vmem:[%s8] sm:$0x1]
    %v1481 = vsel %vm68, %v1475, 0.0
    %1482 = vadd.xlane.f32.xlu0 %v1481
    %v1483 = vpop.xlane.xlu0 %1482
    %v1484 = vsel %vm68, %v1476, 0.0
    %1485 = vadd.xlane.f32.xlu0 %v1484
    %v1486 = vpop.xlane.xlu0 %1485
    %v1487 = vsel %vm68, %v1477, 0.0
    %1488 = vadd.xlane.f32.xlu0 %v1487
    %v1489 = vpop.xlane.xlu0 %1488
    %v1490 = vsel %vm68, %v1478, 0.0
    %1491 = vadd.xlane.f32.xlu0 %v1490
    %v1492 = vpop.xlane.xlu0 %1491
    %v1493 = vmul.f32 %v1483, %v81
    %v1494 = vmul.f32 %v1486, %v81
    %v1495 = vmul.f32 %v1489, %v81
    %v1496 = vmul.f32 %v1492, %v81
    %v1497 = vsub.f32 %v1475, %v1493
    %v1498 = vsub.f32 %v1476, %v1494
    %v1499 = vsub.f32 %v1477, %v1495
    %v1500 = vsub.f32 %v1478, %v1496
    %v1501 = vmul.f32 %v1497, %v1497
    %v1502 = vmul.f32 %v1498, %v1498
    %v1503 = vmul.f32 %v1499, %v1499
    %v1504 = vmul.f32 %v1500, %v1500
    %v1505 = vsel %vm68, %v1501, 0.0
    %1506 = vadd.xlane.f32.xlu0 %v1505
    %v1507 = vpop.xlane.xlu0 %1506
    %v1508 = vsel %vm68, %v1502, 0.0
    %1509 = vadd.xlane.f32.xlu0 %v1508
    %v1510 = vpop.xlane.xlu0 %1509
    %v1511 = vsel %vm68, %v1503, 0.0
    %1512 = vadd.xlane.f32.xlu0 %v1511
    %v1513 = vpop.xlane.xlu0 %1512
    %v1514 = vsel %vm68, %v1504, 0.0
    %1515 = vadd.xlane.f32.xlu0 %v1514
    %v1516 = vpop.xlane.xlu0 %1515
    %v1517 = vmul.f32 %v1507, %v81
    %v1518 = vmul.f32 %v1510, %v81
    %v1519 = vmul.f32 %v1513, %v81
    %v1520 = vmul.f32 %v1516, %v81
    %v1521 = vadd.f32 %v1517, 1e-05
    %v1522 = vadd.f32 %v1518, 1e-05
    %v1523 = vadd.f32 %v1519, 1e-05
    %v1524 = vadd.f32 %v1520, 1e-05
    %v1525 = vrsqrt.pop %v1521
    %v1526 = vrsqrt.pop %v1522
    %v1527 = vrsqrt.pop %v1523
    %v1528 = vrsqrt.pop %v1524
    %v1529 = vmul.f32 %v1497, %v1525
    %v1530 = vmul.f32 %v1498, %v1526
    %v1531 = vmul.f32 %v1499, %v1527
    %v1532 = vmul.f32 %v1500, %v1528
    %v1534 = vlaneseq
    %v1535 = vshrl.u32 %v1534, 7
    %v1536 = vsub.s32 0, %v1535
    %v1537 = vrot.slane %v1479, %v1536
    %v1539 = vmul.f32 %v1529, %v1537
    %v1540 = vmul.f32 %v1530, %v1537
    %v1541 = vmul.f32 %v1531, %v1537
    %v1542 = vmul.f32 %v1532, %v1537
    %v1544 = vlaneseq
    %v1545 = vshrl.u32 %v1544, 7
    %v1546 = vsub.s32 0, %v1545
    %v1547 = vrot.slane %v1480, %v1546
    %v1549 = vadd.f32 %v1539, %v1547
    %v1550 = vadd.f32 %v1540, %v1547
    %v1551 = vadd.f32 %v1541, %v1547
    %v1552 = vadd.f32 %v1542, %v1547
    %v1553 = vpack.c.bf16 %v1550, %v1549
    %v1554 = vpack.c.bf16 %v1552, %v1551
    %v1555 = vld [vmem:[%s9] sm:$0xf]
    %v1556 = vld [vmem:[%s9 + $0x4] sm:$0xf]
    %v1557 = vld [vmem:[%s9 + $0x8] sm:$0xf]
    %v1558 = vld [vmem:[%s9 + $0xc] sm:$0xf]
    %v1559 = vld [vmem:[%s9 + $0x10] sm:$0xf]
    %v1560 = vld [vmem:[%s9 + $0x14] sm:$0xf]
    %v1561 = vld [vmem:[%s9 + $0x18] sm:$0xf]
    %v1562 = vld [vmem:[%s9 + $0x1c] sm:$0xf]
    %v1563 = vld [vmem:[%s10] sm:$0x1]
    %v1565 = vlaneseq
    %v1566 = vshrl.u32 %v1565, 7
    %v1567 = vsub.s32 0, %v1566
    %v1568 = vrot.slane %v1563, %v1567
    %v1578 = vunpack.c.l.b16 %v1555
    %v1579 = vunpack.c.l.b16 %v1556
    %v1580 = vunpack.c.l.b16 %v1557
    %v1581 = vunpack.c.l.b16 %v1558
    %v1582 = vunpack.c.l.b16 %v1559
    %v1583 = vunpack.c.l.b16 %v1560
    %v1584 = vunpack.c.l.b16 %v1561
    %v1585 = vunpack.c.l.b16 %v1562
    %v1586 = vpack.c.b16 %v1579, %v1578
    %v1587 = vpack.c.b16 %v1581, %v1580
    %v1588 = vpack.c.b16 %v1583, %v1582
    %v1589 = vpack.c.b16 %v1585, %v1584
    %v1595 = vsel %vm68, %v1553, 0
    %v1598 = vsel %vm68, %v1554, 0
    %1600 = vmatprep.subr.bf16.mxu0 0
    %1601 = vmatpush1.bf16.msra.mxu0 %v1586
    %1602 = vmatprep.subr.bf16.mxu0 0
    %1603 = vmatpush1.bf16.msra.mxu0 %v1587
    %1604 = vmatprep.subr.bf16.mxu0 0
    %1605 = vmatpush1.bf16.msra.mxu0 %v1588
    %1606 = vmatprep.subr.bf16.mxu0 0
    %1607 = vmatpush1.bf16.msra.mxu0 %v1589
    %1608 = vmatprep.subr.bf16.mxu0 0
    %1609 = vmatpush1.bf16.msra.mxu0 0
    %1610 = vmatprep.subr.bf16.mxu0 0
    %1611 = vmatpush1.bf16.msra.mxu0 0
    %1612 = vmatprep.subr.bf16.mxu0 0
    %1613 = vmatpush1.bf16.msra.mxu0 0
    %1614 = vmatprep.subr.bf16.mxu0 0
    %1615 = vmatpush1.bf16.msra.mxu0 0
    %1616 = vmatprep.subr.bf16.mxu0 0
    %1617 = vmatpush1.bf16.msra.mxu0 0
    %1618 = vmatprep.subr.bf16.mxu0 0
    %1619 = vmatpush1.bf16.msra.mxu0 0
    %1620 = vmatprep.subr.bf16.mxu0 0
    %1621 = vmatpush1.bf16.msra.mxu0 0
    %1622 = vmatprep.subr.bf16.mxu0 0
    %1623 = vmatpush1.bf16.msra.mxu0 0
    %1624 = vmatprep.subr.bf16.mxu0 0
    %1625 = vmatpush1.bf16.msra.mxu0 0
    %1626 = vmatprep.subr.bf16.mxu0 0
    %1627 = vmatpush1.bf16.msra.mxu0 0
    %1628 = vmatprep.subr.bf16.mxu0 0
    %1629 = vmatpush1.bf16.msra.mxu0 0
    %1630 = vmatprep.subr.bf16.mxu0 0
    %1631 = vmatpush1.bf16.msra.mxu0 0
    %1632 = vmatprep.mubr.bf16.mxu0 0
    %1633 = vmatmul.mubr.bf16.gmra.mrb[0].mxu0 %v1595
    %v1634 = vpop.f32.mrb[0].mxu0
    %v1635 = vadd.f32 %v1568, %v1634
    %v1636 = vpop.f32.mrb[0].mxu0
    %v1637 = vpop.f32.mrb[0].mxu0
    %v1638 = vadd.f32 %v1568, %v1637
    %v1639 = vpop.f32.mrb[0].mxu0
    %1640 = vmatprep.mubr.bf16.mxu0 0
    %1641 = vmatmul.mubr.bf16.gmra.mrb[0].mxu0 %v1598
    %v1642 = vpop.f32.mrb[0].mxu0
    %v1643 = vadd.f32 %v1568, %v1642
    %v1644 = vpop.f32.mrb[0].mxu0
    %v1645 = vpop.f32.mrb[0].mxu0
    %v1646 = vadd.f32 %v1568, %v1645
    %v1647 = vpop.f32.mrb[0].mxu0
    %1648 = vdwg.mxu0
    %v1649 = vmul.f32 %v1635, %v1635
    %v1650 = vmul.f32 %v1638, %v1638
    %v1651 = vmul.f32 %v1643, %v1643
    %v1652 = vmul.f32 %v1646, %v1646
    %v1653 = vmul.f32 %v1635, %v1649
    %v1654 = vmul.f32 %v1638, %v1650
    %v1655 = vmul.f32 %v1643, %v1651
    %v1656 = vmul.f32 %v1646, %v1652
    %v1657 = vmul.f32 %v1653, 0.044715
    %v1658 = vmul.f32 %v1654, 0.044715
    %v1659 = vmul.f32 %v1655, 0.044715
    %v1660 = vmul.f32 %v1656, 0.044715
    %v1661 = vadd.f32 %v1635, %v1657
    %v1662 = vadd.f32 %v1638, %v1658
    %v1663 = vadd.f32 %v1643, %v1659
    %v1664 = vadd.f32 %v1646, %v1660
    %v1665 = vmul.f32 %v1661, 0.7978846
    %v1666 = vmul.f32 %v1662, 0.7978846
    %v1667 = vmul.f32 %v1663, 0.7978846
    %v1668 = vmul.f32 %v1664, 0.7978846
    %v1669 = vtanh.pop %v1665
    %v1670 = vtanh.pop %v1666
    %v1671 = vtanh.pop %v1667
    %v1672 = vtanh.pop %v1668
    %v1673 = vadd.f32 %v1669, 1.0
    %v1674 = vadd.f32 %v1670, 1.0
    %v1675 = vadd.f32 %v1671, 1.0
    %v1676 = vadd.f32 %v1672, 1.0
    %v1677 = vmul.f32 %v1673, 0.5
    %v1678 = vmul.f32 %v1674, 0.5
    %v1679 = vmul.f32 %v1675, 0.5
    %v1680 = vmul.f32 %v1676, 0.5
    %v1681 = vmul.f32 %v1635, %v1677
    %v1682 = vmul.f32 %v1638, %v1678
    %v1683 = vmul.f32 %v1643, %v1679
    %v1684 = vmul.f32 %v1646, %v1680
    %v1685 = vpack.c.bf16 %v1682, %v1681
    %v1686 = vpack.c.bf16 %v1684, %v1683
    %v1687 = vld [vmem:[%s11] sm:$0xf]
    %v1688 = vld [vmem:[%s11 + $0x4] sm:$0xf]
    %v1689 = vld [vmem:[%s11 + $0x8] sm:$0xf]
    %v1690 = vld [vmem:[%s11 + $0xc] sm:$0xf]
    %v1691 = vld [vmem:[%s11 + $0x10] sm:$0xf]
    %v1692 = vld [vmem:[%s11 + $0x14] sm:$0xf]
    %v1693 = vld [vmem:[%s11 + $0x18] sm:$0xf]
    %v1694 = vld [vmem:[%s11 + $0x1c] sm:$0xf]
    %v1695 = vld [vmem:[%s11 + $0x20] sm:$0xf]
    %v1696 = vld [vmem:[%s11 + $0x24] sm:$0xf]
    %v1697 = vld [vmem:[%s11 + $0x28] sm:$0xf]
    %v1698 = vld [vmem:[%s11 + $0x2c] sm:$0xf]
    %v1699 = vld [vmem:[%s11 + $0x30] sm:$0xf]
    %v1700 = vld [vmem:[%s11 + $0x34] sm:$0xf]
    %v1701 = vld [vmem:[%s11 + $0x38] sm:$0xf]
    %v1702 = vld [vmem:[%s11 + $0x3c] sm:$0xf]
    %v1703 = vld [vmem:[%s12] sm:$0x1]
    %v1705 = vlaneseq
    %v1706 = vshrl.u32 %v1705, 7
    %v1707 = vsub.s32 0, %v1706
    %v1708 = vrot.slane %v1703, %v1707
    %v1726 = vunpack.c.l.b16 %v1687
    %v1727 = vunpack.c.l.b16 %v1688
    %v1728 = vunpack.c.l.b16 %v1689
    %v1729 = vunpack.c.l.b16 %v1690
    %v1730 = vunpack.c.l.b16 %v1691
    %v1731 = vunpack.c.l.b16 %v1692
    %v1732 = vunpack.c.l.b16 %v1693
    %v1733 = vunpack.c.l.b16 %v1694
    %v1734 = vunpack.c.l.b16 %v1695
    %v1735 = vunpack.c.l.b16 %v1696
    %v1736 = vunpack.c.l.b16 %v1697
    %v1737 = vunpack.c.l.b16 %v1698
    %v1738 = vunpack.c.l.b16 %v1699
    %v1739 = vunpack.c.l.b16 %v1700
    %v1740 = vunpack.c.l.b16 %v1701
    %v1741 = vunpack.c.l.b16 %v1702
    %v1742 = vpack.c.b16 %v1727, %v1726
    %v1743 = vpack.c.b16 %v1729, %v1728
    %v1744 = vpack.c.b16 %v1731, %v1730
    %v1745 = vpack.c.b16 %v1733, %v1732
    %v1746 = vpack.c.b16 %v1735, %v1734
    %v1747 = vpack.c.b16 %v1737, %v1736
    %v1748 = vpack.c.b16 %v1739, %v1738
    %v1749 = vpack.c.b16 %v1741, %v1740
    %1758 = vmatprep.subr.bf16.mxu0 0
    %1759 = vmatpush1.bf16.msra.mxu0 %v1742
    %1760 = vmatprep.subr.bf16.mxu0 0
    %1761 = vmatpush1.bf16.msra.mxu0 %v1743
    %1762 = vmatprep.subr.bf16.mxu0 0
    %1763 = vmatpush1.bf16.msra.mxu0 %v1744
    %1764 = vmatprep.subr.bf16.mxu0 0
    %1765 = vmatpush1.bf16.msra.mxu0 %v1745
    %1766 = vmatprep.subr.bf16.mxu0 0
    %1767 = vmatpush1.bf16.msra.mxu0 %v1746
    %1768 = vmatprep.subr.bf16.mxu0 0
    %1769 = vmatpush1.bf16.msra.mxu0 %v1747
    %1770 = vmatprep.subr.bf16.mxu0 0
    %1771 = vmatpush1.bf16.msra.mxu0 %v1748
    %1772 = vmatprep.subr.bf16.mxu0 0
    %1773 = vmatpush1.bf16.msra.mxu0 %v1749
    %1774 = vmatprep.subr.bf16.mxu0 0
    %1775 = vmatpush1.bf16.msra.mxu0 0
    %1776 = vmatprep.subr.bf16.mxu0 0
    %1777 = vmatpush1.bf16.msra.mxu0 0
    %1778 = vmatprep.subr.bf16.mxu0 0
    %1779 = vmatpush1.bf16.msra.mxu0 0
    %1780 = vmatprep.subr.bf16.mxu0 0
    %1781 = vmatpush1.bf16.msra.mxu0 0
    %1782 = vmatprep.subr.bf16.mxu0 0
    %1783 = vmatpush1.bf16.msra.mxu0 0
    %1784 = vmatprep.subr.bf16.mxu0 0
    %1785 = vmatpush1.bf16.msra.mxu0 0
    %1786 = vmatprep.subr.bf16.mxu0 0
    %1787 = vmatpush1.bf16.msra.mxu0 0
    %1788 = vmatprep.subr.bf16.mxu0 0
    %1789 = vmatpush1.bf16.msra.mxu0 0
    %1790 = vmatprep.mubr.bf16.mxu0 0
    %1791 = vmatmul.mubr.bf16.gmra.mrb[0].mxu0 %v1685
    %v1792 = vpop.f32.mrb[0].mxu0
    %v1793 = vadd.f32 %v1708, %v1792
    %v1794 = vpop.f32.mrb[0].mxu0
    %v1795 = vpop.f32.mrb[0].mxu0
    %v1796 = vadd.f32 %v1708, %v1795
    %v1797 = vpop.f32.mrb[0].mxu0
    %1798 = vmatprep.mubr.bf16.mxu0 0
    %1799 = vmatmul.mubr.bf16.gmra.mrb[0].mxu0 %v1686
    %v1800 = vpop.f32.mrb[0].mxu0
    %v1801 = vadd.f32 %v1708, %v1800
    %v1802 = vpop.f32.mrb[0].mxu0
    %v1803 = vpop.f32.mrb[0].mxu0
    %v1804 = vadd.f32 %v1708, %v1803
    %v1805 = vpop.f32.mrb[0].mxu0
    %1806 = vdwg.mxu0
    %v1807 = vadd.f32 %v1475, %v1793
    %v1808 = vadd.f32 %v1476, %v1796
    %v1809 = vadd.f32 %v1477, %v1801
    %v1810 = vadd.f32 %v1478, %v1804
    %s1811 = scalar_lea.vmem %s1, 1
    %v1812 = vld [vmem:[%s1811] sm:$0x1]
    %s1813 = scalar_lea.vmem %s2, 1
    %v1814 = vld [vmem:[%s1813] sm:$0x1]
    %v1815 = vsel %vm68, %v1807, 0.0
    %1816 = vadd.xlane.f32.xlu0 %v1815
    %v1817 = vpop.xlane.xlu0 %1816
    %v1818 = vsel %vm68, %v1808, 0.0
    %1819 = vadd.xlane.f32.xlu0 %v1818
    %v1820 = vpop.xlane.xlu0 %1819
    %v1821 = vsel %vm68, %v1809, 0.0
    %1822 = vadd.xlane.f32.xlu0 %v1821
    %v1823 = vpop.xlane.xlu0 %1822
    %v1824 = vsel %vm68, %v1810, 0.0
    %1825 = vadd.xlane.f32.xlu0 %v1824
    %v1826 = vpop.xlane.xlu0 %1825
    %v1827 = vmul.f32 %v1817, %v81
    %v1828 = vmul.f32 %v1820, %v81
    %v1829 = vmul.f32 %v1823, %v81
    %v1830 = vmul.f32 %v1826, %v81
    %v1831 = vsub.f32 %v1807, %v1827
    %v1832 = vsub.f32 %v1808, %v1828
    %v1833 = vsub.f32 %v1809, %v1829
    %v1834 = vsub.f32 %v1810, %v1830
    %v1835 = vmul.f32 %v1831, %v1831
    %v1836 = vmul.f32 %v1832, %v1832
    %v1837 = vmul.f32 %v1833, %v1833
    %v1838 = vmul.f32 %v1834, %v1834
    %v1839 = vsel %vm68, %v1835, 0.0
    %1840 = vadd.xlane.f32.xlu0 %v1839
    %v1841 = vpop.xlane.xlu0 %1840
    %v1842 = vsel %vm68, %v1836, 0.0
    %1843 = vadd.xlane.f32.xlu0 %v1842
    %v1844 = vpop.xlane.xlu0 %1843
    %v1845 = vsel %vm68, %v1837, 0.0
    %1846 = vadd.xlane.f32.xlu0 %v1845
    %v1847 = vpop.xlane.xlu0 %1846
    %v1848 = vsel %vm68, %v1838, 0.0
    %1849 = vadd.xlane.f32.xlu0 %v1848
    %v1850 = vpop.xlane.xlu0 %1849
    %v1851 = vmul.f32 %v1841, %v81
    %v1852 = vmul.f32 %v1844, %v81
    %v1853 = vmul.f32 %v1847, %v81
    %v1854 = vmul.f32 %v1850, %v81
    %v1855 = vadd.f32 %v1851, 1e-05
    %v1856 = vadd.f32 %v1852, 1e-05
    %v1857 = vadd.f32 %v1853, 1e-05
    %v1858 = vadd.f32 %v1854, 1e-05
    %v1859 = vrsqrt.pop %v1855
    %v1860 = vrsqrt.pop %v1856
    %v1861 = vrsqrt.pop %v1857
    %v1862 = vrsqrt.pop %v1858
    %v1863 = vmul.f32 %v1831, %v1859
    %v1864 = vmul.f32 %v1832, %v1860
    %v1865 = vmul.f32 %v1833, %v1861
    %v1866 = vmul.f32 %v1834, %v1862
    %v1868 = vlaneseq
    %v1869 = vshrl.u32 %v1868, 7
    %v1870 = vsub.s32 0, %v1869
    %v1871 = vrot.slane %v1812, %v1870
    %v1873 = vmul.f32 %v1863, %v1871
    %v1874 = vmul.f32 %v1864, %v1871
    %v1875 = vmul.f32 %v1865, %v1871
    %v1876 = vmul.f32 %v1866, %v1871
    %v1878 = vlaneseq
    %v1879 = vshrl.u32 %v1878, 7
    %v1880 = vsub.s32 0, %v1879
    %v1881 = vrot.slane %v1814, %v1880
    %v1883 = vadd.f32 %v1873, %v1881
    %v1884 = vadd.f32 %v1874, %v1881
    %v1885 = vadd.f32 %v1875, %v1881
    %v1886 = vadd.f32 %v1876, %v1881
    %v1887 = vpack.c.bf16 %v1884, %v1883
    %v1888 = vpack.c.bf16 %v1886, %v1885
    %s1889 = scalar_lea.vmem %s3, 64
    %v1890 = vld [vmem:[%s1889] sm:$0xff]
    %v1891 = vld [vmem:[%s1889 + $0x8] sm:$0xff]
    %v1892 = vld [vmem:[%s1889 + $0x10] sm:$0xff]
    %v1893 = vld [vmem:[%s1889 + $0x18] sm:$0xff]
    %v1894 = vld [vmem:[%s1889 + $0x20] sm:$0xff]
    %v1895 = vld [vmem:[%s1889 + $0x28] sm:$0xff]
    %v1896 = vld [vmem:[%s1889 + $0x30] sm:$0xff]
    %v1897 = vld [vmem:[%s1889 + $0x38] sm:$0xff]
    %s1898 = scalar_lea.vmem %s4, 2
    %v1899 = vld [vmem:[%s1898] sm:$0x3]
    %v1901 = vlaneseq
    %v1902 = vshrl.u32 %v1901, 7
    %v1903 = vsub.s32 0, %v1902
    %v1904 = vrot.slane %v1899, %v1903
    %v1905 = vlaneseq
    %v1906 = vshrl.u32 %v1905, 7
    %v1907 = vsub.s32 1, %v1906
    %v1908 = vrot.slane %v1899, %v1907
    %v1919 = vunpack.c.l.b16 %v1890
    %v1920 = vunpack.c.h.b16 %v1890
    %v1921 = vunpack.c.l.b16 %v1891
    %v1922 = vunpack.c.h.b16 %v1891
    %v1923 = vunpack.c.l.b16 %v1892
    %v1924 = vunpack.c.h.b16 %v1892
    %v1925 = vunpack.c.l.b16 %v1893
    %v1926 = vunpack.c.h.b16 %v1893
    %v1927 = vunpack.c.l.b16 %v1894
    %v1928 = vunpack.c.h.b16 %v1894
    %v1929 = vunpack.c.l.b16 %v1895
    %v1930 = vunpack.c.h.b16 %v1895
    %v1931 = vunpack.c.l.b16 %v1896
    %v1932 = vunpack.c.h.b16 %v1896
    %v1933 = vunpack.c.l.b16 %v1897
    %v1934 = vunpack.c.h.b16 %v1897
    %v1935 = vpack.c.b16 %v1921, %v1919
    %v1936 = vpack.c.b16 %v1922, %v1920
    %v1937 = vpack.c.b16 %v1925, %v1923
    %v1938 = vpack.c.b16 %v1926, %v1924
    %v1939 = vpack.c.b16 %v1929, %v1927
    %v1940 = vpack.c.b16 %v1930, %v1928
    %v1941 = vpack.c.b16 %v1933, %v1931
    %v1942 = vpack.c.b16 %v1934, %v1932
    %v1952 = vsel %vm68, %v1887, 0
    %v1955 = vsel %vm68, %v1888, 0
    %1957 = vmatprep.subr.bf16.mxu0 %v1936
    %1958 = vmatpush1.bf16.msra.mxu0 %v1935
    %1959 = vmatprep.subr.bf16.mxu0 %v1938
    %1960 = vmatpush1.bf16.msra.mxu0 %v1937
    %1961 = vmatprep.subr.bf16.mxu0 %v1940
    %1962 = vmatpush1.bf16.msra.mxu0 %v1939
    %1963 = vmatprep.subr.bf16.mxu0 %v1942
    %1964 = vmatpush1.bf16.msra.mxu0 %v1941
    %1965 = vmatprep.subr.bf16.mxu0 0
    %1966 = vmatpush1.bf16.msra.mxu0 0
    %1967 = vmatprep.subr.bf16.mxu0 0
    %1968 = vmatpush1.bf16.msra.mxu0 0
    %1969 = vmatprep.subr.bf16.mxu0 0
    %1970 = vmatpush1.bf16.msra.mxu0 0
    %1971 = vmatprep.subr.bf16.mxu0 0
    %1972 = vmatpush1.bf16.msra.mxu0 0
    %1973 = vmatprep.subr.bf16.mxu0 0
    %1974 = vmatpush1.bf16.msra.mxu0 0
    %1975 = vmatprep.subr.bf16.mxu0 0
    %1976 = vmatpush1.bf16.msra.mxu0 0
    %1977 = vmatprep.subr.bf16.mxu0 0
    %1978 = vmatpush1.bf16.msra.mxu0 0
    %1979 = vmatprep.subr.bf16.mxu0 0
    %1980 = vmatpush1.bf16.msra.mxu0 0
    %1981 = vmatprep.subr.bf16.mxu0 0
    %1982 = vmatpush1.bf16.msra.mxu0 0
    %1983 = vmatprep.subr.bf16.mxu0 0
    %1984 = vmatpush1.bf16.msra.mxu0 0
    %1985 = vmatprep.subr.bf16.mxu0 0
    %1986 = vmatpush1.bf16.msra.mxu0 0
    %1987 = vmatprep.subr.bf16.mxu0 0
    %1988 = vmatpush1.bf16.msra.mxu0 0
    %1989 = vmatprep.mubr.bf16.mxu0 0
    %1990 = vmatmul.mubr.bf16.gmra.mrb[0].mxu0 %v1952
    %v1991 = vpop.f32.mrb[0].mxu0
    %v1992 = vadd.f32 %v1904, %v1991
    %v1993 = vpop.f32.mrb[0].mxu0
    %v1994 = vadd.f32 %v1908, %v1993
    %v1995 = vpop.f32.mrb[0].mxu0
    %v1996 = vadd.f32 %v1904, %v1995
    %v1997 = vpop.f32.mrb[0].mxu0
    %v1998 = vadd.f32 %v1908, %v1997
    %1999 = vmatprep.mubr.bf16.mxu0 0
    %2000 = vmatmul.mubr.bf16.gmra.mrb[0].mxu0 %v1955
    %v2001 = vpop.f32.mrb[0].mxu0
    %v2002 = vadd.f32 %v1904, %v2001
    %v2003 = vpop.f32.mrb[0].mxu0
    %v2004 = vadd.f32 %v1908, %v2003
    %v2005 = vpop.f32.mrb[0].mxu0
    %v2006 = vadd.f32 %v1904, %v2005
    %v2007 = vpop.f32.mrb[0].mxu0
    %v2008 = vadd.f32 %v1908, %v2007
    %2009 = vdwg.mxu0
    %2010 = vst [vmem:[#allocation2] sm:$0xff] %v1992
    %2011 = vst.msk [vmem:[#allocation2 + $0x8] sm:$0xff] %vm68, %v1994
    %2012 = vst [vmem:[#allocation2 + $0x10] sm:$0xff] %v1996
    %2013 = vst.msk [vmem:[#allocation2 + $0x18] sm:$0xff] %vm68, %v1998
    %2014 = vst [vmem:[#allocation2 + $0x20] sm:$0xff] %v2002
    %2015 = vst.msk [vmem:[#allocation2 + $0x28] sm:$0xff] %vm68, %v2004
    %2016 = vst [vmem:[#allocation2 + $0x30] sm:$0xff] %v2006
    %2017 = vst.msk [vmem:[#allocation2 + $0x38] sm:$0xff] %vm68, %v2008
    %v2018 = vld [vmem:[#allocation2] sm:$0xff]
    %v2019 = vld [vmem:[#allocation2 + $0x10] sm:$0xff]
    %v2020 = vld [vmem:[#allocation2 + $0x20] sm:$0xff]
    %v2021 = vld [vmem:[#allocation2 + $0x30] sm:$0xff]
    %v2022 = vpack.c.bf16 %v2019, %v2018
    %v2023 = vpack.c.bf16 %v2021, %v2020
    %v2024 = vld [vmem:[#allocation2 + $0x8] sm:$0xff]
    %v2025 = vld [vmem:[#allocation2 + $0x18] sm:$0xff]
    %v2026 = vld [vmem:[#allocation2 + $0x28] sm:$0xff]
    %v2027 = vld [vmem:[#allocation2 + $0x38] sm:$0xff]
    %v2028 = vpack.c.bf16 %v2025, %v2024
    %v2029 = vpack.c.bf16 %v2027, %v2026
    %2031 = vrot.lane.b32.xlu0 %v2022, 64
    %v2032 = vpop.permute.xlu0 %2031
    %v2034 = vsel %vm286, %v2022, 0
    %v2037 = vsel %vm286, %v2032, 0
    %2039 = vmatprep.subr.bf16.mxu0 0
    %2040 = vmatpush1.bf16.xpose.msra.mxu0 %v2037
    %2041 = vmatprep.subr.bf16.mxu0 0
    %2042 = vmatpush1.bf16.xpose.msra.mxu0 0
    %2043 = vmatprep.subr.bf16.mxu0 0
    %2044 = vmatpush1.bf16.xpose.msra.mxu0 0
    %2045 = vmatprep.subr.bf16.mxu0 0
    %2046 = vmatpush1.bf16.xpose.msra.mxu0 0
    %2047 = vmatprep.subr.bf16.mxu0 0
    %2048 = vmatpush1.bf16.xpose.msra.mxu0 0
    %2049 = vmatprep.subr.bf16.mxu0 0
    %2050 = vmatpush1.bf16.xpose.msra.mxu0 0
    %2051 = vmatprep.subr.bf16.mxu0 0
    %2052 = vmatpush1.bf16.xpose.msra.mxu0 0
    %2053 = vmatprep.subr.bf16.mxu0 0
    %2054 = vmatpush1.bf16.xpose.msra.mxu0 0
    %2055 = vmatprep.subr.bf16.mxu0 0
    %2056 = vmatpush1.bf16.xpose.msra.mxu0 0
    %2057 = vmatprep.subr.bf16.mxu0 0
    %2058 = vmatpush1.bf16.xpose.msra.mxu0 0
    %2059 = vmatprep.subr.bf16.mxu0 0
    %2060 = vmatpush1.bf16.xpose.msra.mxu0 0
    %2061 = vmatprep.subr.bf16.mxu0 0
    %2062 = vmatpush1.bf16.xpose.msra.mxu0 0
    %2063 = vmatprep.subr.bf16.mxu0 0
    %2064 = vmatpush1.bf16.xpose.msra.mxu0 0
    %2065 = vmatprep.subr.bf16.mxu0 0
    %2066 = vmatpush1.bf16.xpose.msra.mxu0 0
    %2067 = vmatprep.subr.bf16.mxu0 0
    %2068 = vmatpush1.bf16.xpose.msra.mxu0 0
    %2069 = vmatprep.subr.bf16.mxu0 0
    %2070 = vmatpush1.bf16.xpose.msra.mxu0 0
    %2071 = vmatprep.mubr.bf16.mxu0 0
    %2072 = vmatmul.mubr.bf16.gmra.mrb[0].mxu0 %v2034
    %v2073 = vpop.f32.mrb[0].mxu0
    %v2074 = vadd.f32 0.0, %v2073
    %v2075 = vpop.f32.mrb[0].mxu0
    %v2076 = vpop.f32.mrb[0].mxu0
    %v2077 = vadd.f32 0.0, %v2076
    %v2078 = vpop.f32.mrb[0].mxu0
    %2079 = vdwg.mxu0
    %2081 = vrot.lane.b32.xlu0 %v2023, 64
    %v2082 = vpop.permute.xlu0 %2081
    %v2084 = vsel %vm286, %v2023, 0
    %v2087 = vsel %vm286, %v2082, 0
    %2089 = vmatprep.subr.bf16.mxu0 0
    %2090 = vmatpush1.bf16.xpose.msra.mxu0 %v2087
    %2091 = vmatprep.subr.bf16.mxu0 0
    %2092 = vmatpush1.bf16.xpose.msra.mxu0 0
    %2093 = vmatprep.subr.bf16.mxu0 0
    %2094 = vmatpush1.bf16.xpose.msra.mxu0 0
    %2095 = vmatprep.subr.bf16.mxu0 0
    %2096 = vmatpush1.bf16.xpose.msra.mxu0 0
    %2097 = vmatprep.subr.bf16.mxu0 0
    %2098 = vmatpush1.bf16.xpose.msra.mxu0 0
    %2099 = vmatprep.subr.bf16.mxu0 0
    %2100 = vmatpush1.bf16.xpose.msra.mxu0 0
    %2101 = vmatprep.subr.bf16.mxu0 0
    %2102 = vmatpush1.bf16.xpose.msra.mxu0 0
    %2103 = vmatprep.subr.bf16.mxu0 0
    %2104 = vmatpush1.bf16.xpose.msra.mxu0 0
    %2105 = vmatprep.subr.bf16.mxu0 0
    %2106 = vmatpush1.bf16.xpose.msra.mxu0 0
    %2107 = vmatprep.subr.bf16.mxu0 0
    %2108 = vmatpush1.bf16.xpose.msra.mxu0 0
    %2109 = vmatprep.subr.bf16.mxu0 0
    %2110 = vmatpush1.bf16.xpose.msra.mxu0 0
    %2111 = vmatprep.subr.bf16.mxu0 0
    %2112 = vmatpush1.bf16.xpose.msra.mxu0 0
    %2113 = vmatprep.subr.bf16.mxu0 0
    %2114 = vmatpush1.bf16.xpose.msra.mxu0 0
    %2115 = vmatprep.subr.bf16.mxu0 0
    %2116 = vmatpush1.bf16.xpose.msra.mxu0 0
    %2117 = vmatprep.subr.bf16.mxu0 0
    %2118 = vmatpush1.bf16.xpose.msra.mxu0 0
    %2119 = vmatprep.subr.bf16.mxu0 0
    %2120 = vmatpush1.bf16.xpose.msra.mxu0 0
    %2121 = vmatprep.mubr.bf16.mxu0 0
    %2122 = vmatmul.mubr.bf16.gmra.mrb[0].mxu0 %v2084
    %v2123 = vpop.f32.mrb[0].mxu0
    %v2124 = vadd.f32 0.0, %v2123
    %v2125 = vpop.f32.mrb[0].mxu0
    %v2126 = vpop.f32.mrb[0].mxu0
    %v2127 = vadd.f32 0.0, %v2126
    %v2128 = vpop.f32.mrb[0].mxu0
    %2129 = vdwg.mxu0
    %v2130 = vmul.f32 %v2074, 0.25
    %v2131 = vmul.f32 %v2077, 0.25
    %v2132 = vmul.f32 %v2124, 0.25
    %v2133 = vmul.f32 %v2127, 0.25
    %v2134 = vsel %vm286, %v2130, -inf
    %2135 = vmax.xlane.f32.xlu0 %v2134
    %v2136 = vpop.xlane.xlu0 %2135
    %v2137 = vsel %vm286, %v2131, -inf
    %2138 = vmax.xlane.f32.xlu0 %v2137
    %v2139 = vpop.xlane.xlu0 %2138
    %v2140 = vsel %vm286, %v2132, -inf
    %2141 = vmax.xlane.f32.xlu0 %v2140
    %v2142 = vpop.xlane.xlu0 %2141
    %v2143 = vsel %vm286, %v2133, -inf
    %2144 = vmax.xlane.f32.xlu0 %v2143
    %v2145 = vpop.xlane.xlu0 %2144
    %v2146 = vsub.f32 %v2130, %v2136
    %v2147 = vsub.f32 %v2131, %v2139
    %v2148 = vsub.f32 %v2132, %v2142
    %v2149 = vsub.f32 %v2133, %v2145
    %v2150 = vmul.f32 %v2146, 1.442695
    %v2151 = vpow.pop %v2150
    %v2152 = vmul.f32 %v2147, 1.442695
    %v2153 = vpow.pop %v2152
    %v2154 = vmul.f32 %v2148, 1.442695
    %v2155 = vpow.pop %v2154
    %v2156 = vmul.f32 %v2149, 1.442695
    %v2157 = vpow.pop %v2156
    %v2158 = vsel %vm286, %v2151, 0.0
    %2159 = vadd.xlane.f32.xlu0 %v2158
    %v2160 = vpop.xlane.xlu0 %2159
    %v2161 = vsel %vm286, %v2153, 0.0
    %2162 = vadd.xlane.f32.xlu0 %v2161
    %v2163 = vpop.xlane.xlu0 %2162
    %v2164 = vsel %vm286, %v2155, 0.0
    %2165 = vadd.xlane.f32.xlu0 %v2164
    %v2166 = vpop.xlane.xlu0 %2165
    %v2167 = vsel %vm286, %v2157, 0.0
    %2168 = vadd.xlane.f32.xlu0 %v2167
    %v2169 = vpop.xlane.xlu0 %2168
    %v2170 = vrcp.pop %v2160
    %v2171 = vrcp.pop %v2163
    %v2172 = vrcp.pop %v2166
    %v2173 = vrcp.pop %v2169
    %v2174 = vmul.f32 %v2151, %v2170
    %v2175 = vmul.f32 %v2153, %v2171
    %v2176 = vmul.f32 %v2155, %v2172
    %v2177 = vmul.f32 %v2157, %v2173
    %v2178 = vpack.c.bf16 %v2175, %v2174
    %v2179 = vpack.c.bf16 %v2177, %v2176
    %v2181 = vsel %vm286, %v2178, 0
    %2183 = vmatprep.subr.bf16.mxu0 0
    %2184 = vmatpush1.bf16.msra.mxu0 %v2028
    %2185 = vmatprep.subr.bf16.mxu0 0
    %2186 = vmatpush1.bf16.msra.mxu0 0
    %2187 = vmatprep.subr.bf16.mxu0 0
    %2188 = vmatpush1.bf16.msra.mxu0 0
    %2189 = vmatprep.subr.bf16.mxu0 0
    %2190 = vmatpush1.bf16.msra.mxu0 0
    %2191 = vmatprep.subr.bf16.mxu0 0
    %2192 = vmatpush1.bf16.msra.mxu0 0
    %2193 = vmatprep.subr.bf16.mxu0 0
    %2194 = vmatpush1.bf16.msra.mxu0 0
    %2195 = vmatprep.subr.bf16.mxu0 0
    %2196 = vmatpush1.bf16.msra.mxu0 0
    %2197 = vmatprep.subr.bf16.mxu0 0
    %2198 = vmatpush1.bf16.msra.mxu0 0
    %2199 = vmatprep.subr.bf16.mxu0 0
    %2200 = vmatpush1.bf16.msra.mxu0 0
    %2201 = vmatprep.subr.bf16.mxu0 0
    %2202 = vmatpush1.bf16.msra.mxu0 0
    %2203 = vmatprep.subr.bf16.mxu0 0
    %2204 = vmatpush1.bf16.msra.mxu0 0
    %2205 = vmatprep.subr.bf16.mxu0 0
    %2206 = vmatpush1.bf16.msra.mxu0 0
    %2207 = vmatprep.subr.bf16.mxu0 0
    %2208 = vmatpush1.bf16.msra.mxu0 0
    %2209 = vmatprep.subr.bf16.mxu0 0
    %2210 = vmatpush1.bf16.msra.mxu0 0
    %2211 = vmatprep.subr.bf16.mxu0 0
    %2212 = vmatpush1.bf16.msra.mxu0 0
    %2213 = vmatprep.subr.bf16.mxu0 0
    %2214 = vmatpush1.bf16.msra.mxu0 0
    %2215 = vmatprep.mubr.bf16.mxu0 0
    %2216 = vmatmul.mubr.bf16.gmra.mrb[0].mxu0 %v2181
    %v2217 = vpop.f32.mrb[0].mxu0
    %v2218 = vadd.f32 0.0, %v2217
    %v2219 = vpop.f32.mrb[0].mxu0
    %v2220 = vpop.f32.mrb[0].mxu0
    %v2221 = vadd.f32 0.0, %v2220
    %v2222 = vpop.f32.mrb[0].mxu0
    %2223 = vdwg.mxu0
    %v2225 = vsel %vm286, %v2179, 0
    %2227 = vmatprep.subr.bf16.mxu0 0
    %2228 = vmatpush1.bf16.msra.mxu0 %v2029
    %2229 = vmatprep.subr.bf16.mxu0 0
    %2230 = vmatpush1.bf16.msra.mxu0 0
    %2231 = vmatprep.subr.bf16.mxu0 0
    %2232 = vmatpush1.bf16.msra.mxu0 0
    %2233 = vmatprep.subr.bf16.mxu0 0
    %2234 = vmatpush1.bf16.msra.mxu0 0
    %2235 = vmatprep.subr.bf16.mxu0 0
    %2236 = vmatpush1.bf16.msra.mxu0 0
    %2237 = vmatprep.subr.bf16.mxu0 0
    %2238 = vmatpush1.bf16.msra.mxu0 0
    %2239 = vmatprep.subr.bf16.mxu0 0
    %2240 = vmatpush1.bf16.msra.mxu0 0
    %2241 = vmatprep.subr.bf16.mxu0 0
    %2242 = vmatpush1.bf16.msra.mxu0 0
    %2243 = vmatprep.subr.bf16.mxu0 0
    %2244 = vmatpush1.bf16.msra.mxu0 0
    %2245 = vmatprep.subr.bf16.mxu0 0
    %2246 = vmatpush1.bf16.msra.mxu0 0
    %2247 = vmatprep.subr.bf16.mxu0 0
    %2248 = vmatpush1.bf16.msra.mxu0 0
    %2249 = vmatprep.subr.bf16.mxu0 0
    %2250 = vmatpush1.bf16.msra.mxu0 0
    %2251 = vmatprep.subr.bf16.mxu0 0
    %2252 = vmatpush1.bf16.msra.mxu0 0
    %2253 = vmatprep.subr.bf16.mxu0 0
    %2254 = vmatpush1.bf16.msra.mxu0 0
    %2255 = vmatprep.subr.bf16.mxu0 0
    %2256 = vmatpush1.bf16.msra.mxu0 0
    %2257 = vmatprep.subr.bf16.mxu0 0
    %2258 = vmatpush1.bf16.msra.mxu0 0
    %2259 = vmatprep.mubr.bf16.mxu0 0
    %2260 = vmatmul.mubr.bf16.gmra.mrb[0].mxu0 %v2225
    %v2261 = vpop.f32.mrb[0].mxu0
    %v2262 = vadd.f32 0.0, %v2261
    %v2263 = vpop.f32.mrb[0].mxu0
    %v2264 = vpop.f32.mrb[0].mxu0
    %v2265 = vadd.f32 0.0, %v2264
    %v2266 = vpop.f32.mrb[0].mxu0
    %2267 = vdwg.mxu0
    %2268 = vst.msk [vmem:[#allocation3] sm:$0xff] %vm286, %v2218
    %2269 = vst.msk [vmem:[#allocation3 + $0x8] sm:$0xff] %vm286, %v2221
    %2270 = vst.msk [vmem:[#allocation3 + $0x10] sm:$0xff] %vm286, %v2262
    %2271 = vst.msk [vmem:[#allocation3 + $0x18] sm:$0xff] %vm286, %v2265
    %v2272 = vld [vmem:[#allocation2] sm:$0xff]
    %v2273 = vld [vmem:[#allocation2 + $0x10] sm:$0xff]
    %v2274 = vld [vmem:[#allocation2 + $0x20] sm:$0xff]
    %v2275 = vld [vmem:[#allocation2 + $0x30] sm:$0xff]
    %v2276 = vpack.c.bf16 %v2273, %v2272
    %v2277 = vpack.c.bf16 %v2275, %v2274
    %v2278 = vld [vmem:[#allocation2 + $0x8] sm:$0xff]
    %v2279 = vld [vmem:[#allocation2 + $0x18] sm:$0xff]
    %v2280 = vld [vmem:[#allocation2 + $0x28] sm:$0xff]
    %v2281 = vld [vmem:[#allocation2 + $0x38] sm:$0xff]
    %v2282 = vpack.c.bf16 %v2279, %v2278
    %v2283 = vpack.c.bf16 %v2281, %v2280
    %2285 = vrot.lane.b32.xlu0 %v2276, 112
    %v2286 = vpop.permute.xlu0 %2285
    %2287 = vrot.lane.b32.xlu0 %v2276, 48
    %v2288 = vpop.permute.xlu0 %2287
    %v2290 = vsel %vm286, %v2286, 0
    %v2293 = vsel %vm286, %v2288, 0
    %2295 = vmatprep.subr.bf16.mxu0 0
    %2296 = vmatpush1.bf16.xpose.msra.mxu0 %v2293
    %2297 = vmatprep.subr.bf16.mxu0 0
    %2298 = vmatpush1.bf16.xpose.msra.mxu0 0
    %2299 = vmatprep.subr.bf16.mxu0 0
    %2300 = vmatpush1.bf16.xpose.msra.mxu0 0
    %2301 = vmatprep.subr.bf16.mxu0 0
    %2302 = vmatpush1.bf16.xpose.msra.mxu0 0
    %2303 = vmatprep.subr.bf16.mxu0 0
    %2304 = vmatpush1.bf16.xpose.msra.mxu0 0
    %2305 = vmatprep.subr.bf16.mxu0 0
    %2306 = vmatpush1.bf16.xpose.msra.mxu0 0
    %2307 = vmatprep.subr.bf16.mxu0 0
    %2308 = vmatpush1.bf16.xpose.msra.mxu0 0
    %2309 = vmatprep.subr.bf16.mxu0 0
    %2310 = vmatpush1.bf16.xpose.msra.mxu0 0
    %2311 = vmatprep.subr.bf16.mxu0 0
    %2312 = vmatpush1.bf16.xpose.msra.mxu0 0
    %2313 = vmatprep.subr.bf16.mxu0 0
    %2314 = vmatpush1.bf16.xpose.msra.mxu0 0
    %2315 = vmatprep.subr.bf16.mxu0 0
    %2316 = vmatpush1.bf16.xpose.msra.mxu0 0
    %2317 = vmatprep.subr.bf16.mxu0 0
    %2318 = vmatpush1.bf16.xpose.msra.mxu0 0
    %2319 = vmatprep.subr.bf16.mxu0 0
    %2320 = vmatpush1.bf16.xpose.msra.mxu0 0
    %2321 = vmatprep.subr.bf16.mxu0 0
    %2322 = vmatpush1.bf16.xpose.msra.mxu0 0
    %2323 = vmatprep.subr.bf16.mxu0 0
    %2324 = vmatpush1.bf16.xpose.msra.mxu0 0
    %2325 = vmatprep.subr.bf16.mxu0 0
    %2326 = vmatpush1.bf16.xpose.msra.mxu0 0
    %2327 = vmatprep.mubr.bf16.mxu0 0
    %2328 = vmatmul.mubr.bf16.gmra.mrb[0].mxu0 %v2290
    %v2329 = vpop.f32.mrb[0].mxu0
    %v2330 = vadd.f32 0.0, %v2329
    %v2331 = vpop.f32.mrb[0].mxu0
    %v2332 = vpop.f32.mrb[0].mxu0
    %v2333 = vadd.f32 0.0, %v2332
    %v2334 = vpop.f32.mrb[0].mxu0
    %2335 = vdwg.mxu0
    %2337 = vrot.lane.b32.xlu0 %v2277, 112
    %v2338 = vpop.permute.xlu0 %2337
    %2339 = vrot.lane.b32.xlu0 %v2277, 48
    %v2340 = vpop.permute.xlu0 %2339
    %v2342 = vsel %vm286, %v2338, 0
    %v2345 = vsel %vm286, %v2340, 0
    %2347 = vmatprep.subr.bf16.mxu0 0
    %2348 = vmatpush1.bf16.xpose.msra.mxu0 %v2345
    %2349 = vmatprep.subr.bf16.mxu0 0
    %2350 = vmatpush1.bf16.xpose.msra.mxu0 0
    %2351 = vmatprep.subr.bf16.mxu0 0
    %2352 = vmatpush1.bf16.xpose.msra.mxu0 0
    %2353 = vmatprep.subr.bf16.mxu0 0
    %2354 = vmatpush1.bf16.xpose.msra.mxu0 0
    %2355 = vmatprep.subr.bf16.mxu0 0
    %2356 = vmatpush1.bf16.xpose.msra.mxu0 0
    %2357 = vmatprep.subr.bf16.mxu0 0
    %2358 = vmatpush1.bf16.xpose.msra.mxu0 0
    %2359 = vmatprep.subr.bf16.mxu0 0
    %2360 = vmatpush1.bf16.xpose.msra.mxu0 0
    %2361 = vmatprep.subr.bf16.mxu0 0
    %2362 = vmatpush1.bf16.xpose.msra.mxu0 0
    %2363 = vmatprep.subr.bf16.mxu0 0
    %2364 = vmatpush1.bf16.xpose.msra.mxu0 0
    %2365 = vmatprep.subr.bf16.mxu0 0
    %2366 = vmatpush1.bf16.xpose.msra.mxu0 0
    %2367 = vmatprep.subr.bf16.mxu0 0
    %2368 = vmatpush1.bf16.xpose.msra.mxu0 0
    %2369 = vmatprep.subr.bf16.mxu0 0
    %2370 = vmatpush1.bf16.xpose.msra.mxu0 0
    %2371 = vmatprep.subr.bf16.mxu0 0
    %2372 = vmatpush1.bf16.xpose.msra.mxu0 0
    %2373 = vmatprep.subr.bf16.mxu0 0
    %2374 = vmatpush1.bf16.xpose.msra.mxu0 0
    %2375 = vmatprep.subr.bf16.mxu0 0
    %2376 = vmatpush1.bf16.xpose.msra.mxu0 0
    %2377 = vmatprep.subr.bf16.mxu0 0
    %2378 = vmatpush1.bf16.xpose.msra.mxu0 0
    %2379 = vmatprep.mubr.bf16.mxu0 0
    %2380 = vmatmul.mubr.bf16.gmra.mrb[0].mxu0 %v2342
    %v2381 = vpop.f32.mrb[0].mxu0
    %v2382 = vadd.f32 0.0, %v2381
    %v2383 = vpop.f32.mrb[0].mxu0
    %v2384 = vpop.f32.mrb[0].mxu0
    %v2385 = vadd.f32 0.0, %v2384
    %v2386 = vpop.f32.mrb[0].mxu0
    %2387 = vdwg.mxu0
    %v2388 = vmul.f32 %v2330, 0.25
    %v2389 = vmul.f32 %v2333, 0.25
    %v2390 = vmul.f32 %v2382, 0.25
    %v2391 = vmul.f32 %v2385, 0.25
    %v2392 = vsel %vm286, %v2388, -inf
    %2393 = vmax.xlane.f32.xlu0 %v2392
    %v2394 = vpop.xlane.xlu0 %2393
    %v2395 = vsel %vm286, %v2389, -inf
    %2396 = vmax.xlane.f32.xlu0 %v2395
    %v2397 = vpop.xlane.xlu0 %2396
    %v2398 = vsel %vm286, %v2390, -inf
    %2399 = vmax.xlane.f32.xlu0 %v2398
    %v2400 = vpop.xlane.xlu0 %2399
    %v2401 = vsel %vm286, %v2391, -inf
    %2402 = vmax.xlane.f32.xlu0 %v2401
    %v2403 = vpop.xlane.xlu0 %2402
    %v2404 = vsub.f32 %v2388, %v2394
    %v2405 = vsub.f32 %v2389, %v2397
    %v2406 = vsub.f32 %v2390, %v2400
    %v2407 = vsub.f32 %v2391, %v2403
    %v2408 = vmul.f32 %v2404, 1.442695
    %v2409 = vpow.pop %v2408
    %v2410 = vmul.f32 %v2405, 1.442695
    %v2411 = vpow.pop %v2410
    %v2412 = vmul.f32 %v2406, 1.442695
    %v2413 = vpow.pop %v2412
    %v2414 = vmul.f32 %v2407, 1.442695
    %v2415 = vpow.pop %v2414
    %v2416 = vsel %vm286, %v2409, 0.0
    %2417 = vadd.xlane.f32.xlu0 %v2416
    %v2418 = vpop.xlane.xlu0 %2417
    %v2419 = vsel %vm286, %v2411, 0.0
    %2420 = vadd.xlane.f32.xlu0 %v2419
    %v2421 = vpop.xlane.xlu0 %2420
    %v2422 = vsel %vm286, %v2413, 0.0
    %2423 = vadd.xlane.f32.xlu0 %v2422
    %v2424 = vpop.xlane.xlu0 %2423
    %v2425 = vsel %vm286, %v2415, 0.0
    %2426 = vadd.xlane.f32.xlu0 %v2425
    %v2427 = vpop.xlane.xlu0 %2426
    %v2428 = vrcp.pop %v2418
    %v2429 = vrcp.pop %v2421
    %v2430 = vrcp.pop %v2424
    %v2431 = vrcp.pop %v2427
    %v2432 = vmul.f32 %v2409, %v2428
    %v2433 = vmul.f32 %v2411, %v2429
    %v2434 = vmul.f32 %v2413, %v2430
    %v2435 = vmul.f32 %v2415, %v2431
    %v2436 = vpack.c.bf16 %v2433, %v2432
    %v2437 = vpack.c.bf16 %v2435, %v2434
    %2439 = vrot.lane.b32.xlu0 %v2282, 112
    %v2440 = vpop.permute.xlu0 %2439
    %v2443 = vsel %vm286, %v2436, 0
    %2445 = vmatprep.subr.bf16.mxu0 0
    %2446 = vmatpush1.bf16.msra.mxu0 %v2440
    %2447 = vmatprep.subr.bf16.mxu0 0
    %2448 = vmatpush1.bf16.msra.mxu0 0
    %2449 = vmatprep.subr.bf16.mxu0 0
    %2450 = vmatpush1.bf16.msra.mxu0 0
    %2451 = vmatprep.subr.bf16.mxu0 0
    %2452 = vmatpush1.bf16.msra.mxu0 0
    %2453 = vmatprep.subr.bf16.mxu0 0
    %2454 = vmatpush1.bf16.msra.mxu0 0
    %2455 = vmatprep.subr.bf16.mxu0 0
    %2456 = vmatpush1.bf16.msra.mxu0 0
    %2457 = vmatprep.subr.bf16.mxu0 0
    %2458 = vmatpush1.bf16.msra.mxu0 0
    %2459 = vmatprep.subr.bf16.mxu0 0
    %2460 = vmatpush1.bf16.msra.mxu0 0
    %2461 = vmatprep.subr.bf16.mxu0 0
    %2462 = vmatpush1.bf16.msra.mxu0 0
    %2463 = vmatprep.subr.bf16.mxu0 0
    %2464 = vmatpush1.bf16.msra.mxu0 0
    %2465 = vmatprep.subr.bf16.mxu0 0
    %2466 = vmatpush1.bf16.msra.mxu0 0
    %2467 = vmatprep.subr.bf16.mxu0 0
    %2468 = vmatpush1.bf16.msra.mxu0 0
    %2469 = vmatprep.subr.bf16.mxu0 0
    %2470 = vmatpush1.bf16.msra.mxu0 0
    %2471 = vmatprep.subr.bf16.mxu0 0
    %2472 = vmatpush1.bf16.msra.mxu0 0
    %2473 = vmatprep.subr.bf16.mxu0 0
    %2474 = vmatpush1.bf16.msra.mxu0 0
    %2475 = vmatprep.subr.bf16.mxu0 0
    %2476 = vmatpush1.bf16.msra.mxu0 0
    %2477 = vmatprep.mubr.bf16.mxu0 0
    %2478 = vmatmul.mubr.bf16.gmra.mrb[0].mxu0 %v2443
    %v2479 = vpop.f32.mrb[0].mxu0
    %v2480 = vadd.f32 0.0, %v2479
    %v2481 = vpop.f32.mrb[0].mxu0
    %v2482 = vpop.f32.mrb[0].mxu0
    %v2483 = vadd.f32 0.0, %v2482
    %v2484 = vpop.f32.mrb[0].mxu0
    %2485 = vdwg.mxu0
    %2487 = vrot.lane.b32.xlu0 %v2283, 112
    %v2488 = vpop.permute.xlu0 %2487
    %v2491 = vsel %vm286, %v2437, 0
    %2493 = vmatprep.subr.bf16.mxu0 0
    %2494 = vmatpush1.bf16.msra.mxu0 %v2488
    %2495 = vmatprep.subr.bf16.mxu0 0
    %2496 = vmatpush1.bf16.msra.mxu0 0
    %2497 = vmatprep.subr.bf16.mxu0 0
    %2498 = vmatpush1.bf16.msra.mxu0 0
    %2499 = vmatprep.subr.bf16.mxu0 0
    %2500 = vmatpush1.bf16.msra.mxu0 0
    %2501 = vmatprep.subr.bf16.mxu0 0
    %2502 = vmatpush1.bf16.msra.mxu0 0
    %2503 = vmatprep.subr.bf16.mxu0 0
    %2504 = vmatpush1.bf16.msra.mxu0 0
    %2505 = vmatprep.subr.bf16.mxu0 0
    %2506 = vmatpush1.bf16.msra.mxu0 0
    %2507 = vmatprep.subr.bf16.mxu0 0
    %2508 = vmatpush1.bf16.msra.mxu0 0
    %2509 = vmatprep.subr.bf16.mxu0 0
    %2510 = vmatpush1.bf16.msra.mxu0 0
    %2511 = vmatprep.subr.bf16.mxu0 0
    %2512 = vmatpush1.bf16.msra.mxu0 0
    %2513 = vmatprep.subr.bf16.mxu0 0
    %2514 = vmatpush1.bf16.msra.mxu0 0
    %2515 = vmatprep.subr.bf16.mxu0 0
    %2516 = vmatpush1.bf16.msra.mxu0 0
    %2517 = vmatprep.subr.bf16.mxu0 0
    %2518 = vmatpush1.bf16.msra.mxu0 0
    %2519 = vmatprep.subr.bf16.mxu0 0
    %2520 = vmatpush1.bf16.msra.mxu0 0
    %2521 = vmatprep.subr.bf16.mxu0 0
    %2522 = vmatpush1.bf16.msra.mxu0 0
    %2523 = vmatprep.subr.bf16.mxu0 0
    %2524 = vmatpush1.bf16.msra.mxu0 0
    %2525 = vmatprep.mubr.bf16.mxu0 0
    %2526 = vmatmul.mubr.bf16.gmra.mrb[0].mxu0 %v2491
    %v2527 = vpop.f32.mrb[0].mxu0
    %v2528 = vadd.f32 0.0, %v2527
    %v2529 = vpop.f32.mrb[0].mxu0
    %v2530 = vpop.f32.mrb[0].mxu0
    %v2531 = vadd.f32 0.0, %v2530
    %v2532 = vpop.f32.mrb[0].mxu0
    %2533 = vdwg.mxu0
    %2538 = vrot.lane.b32.xlu0 %v2480, 16
    %v2539 = vpop.permute.xlu0 %2538
    %2540 = vrot.lane.b32.xlu0 %v2483, 16
    %v2541 = vpop.permute.xlu0 %2540
    %2542 = vrot.lane.b32.xlu0 %v2528, 16
    %v2543 = vpop.permute.xlu0 %2542
    %2544 = vrot.lane.b32.xlu0 %v2531, 16
    %v2545 = vpop.permute.xlu0 %2544
    %2550 = vst.msk [vmem:[#allocation3] sm:$0xff] %vm804, %v2539
    %2551 = vst.msk [vmem:[#allocation3 + $0x8] sm:$0xff] %vm804, %v2541
    %2552 = vst.msk [vmem:[#allocation3 + $0x10] sm:$0xff] %vm804, %v2543
    %2553 = vst.msk [vmem:[#allocation3 + $0x18] sm:$0xff] %vm804, %v2545
    %v2554 = vld [vmem:[#allocation2] sm:$0xff]
    %v2555 = vld [vmem:[#allocation2 + $0x10] sm:$0xff]
    %v2556 = vld [vmem:[#allocation2 + $0x20] sm:$0xff]
    %v2557 = vld [vmem:[#allocation2 + $0x30] sm:$0xff]
    %v2558 = vpack.c.bf16 %v2555, %v2554
    %v2559 = vpack.c.bf16 %v2557, %v2556
    %v2560 = vld [vmem:[#allocation2 + $0x8] sm:$0xff]
    %v2561 = vld [vmem:[#allocation2 + $0x18] sm:$0xff]
    %v2562 = vld [vmem:[#allocation2 + $0x28] sm:$0xff]
    %v2563 = vld [vmem:[#allocation2 + $0x38] sm:$0xff]
    %v2564 = vpack.c.bf16 %v2561, %v2560
    %v2565 = vpack.c.bf16 %v2563, %v2562
    %2567 = vrot.lane.b32.xlu0 %v2558, 96
    %v2568 = vpop.permute.xlu0 %2567
    %2569 = vrot.lane.b32.xlu0 %v2558, 32
    %v2570 = vpop.permute.xlu0 %2569
    %v2572 = vsel %vm286, %v2568, 0
    %v2575 = vsel %vm286, %v2570, 0
    %2577 = vmatprep.subr.bf16.mxu0 0
    %2578 = vmatpush1.bf16.xpose.msra.mxu0 %v2575
    %2579 = vmatprep.subr.bf16.mxu0 0
    %2580 = vmatpush1.bf16.xpose.msra.mxu0 0
    %2581 = vmatprep.subr.bf16.mxu0 0
    %2582 = vmatpush1.bf16.xpose.msra.mxu0 0
    %2583 = vmatprep.subr.bf16.mxu0 0
    %2584 = vmatpush1.bf16.xpose.msra.mxu0 0
    %2585 = vmatprep.subr.bf16.mxu0 0
    %2586 = vmatpush1.bf16.xpose.msra.mxu0 0
    %2587 = vmatprep.subr.bf16.mxu0 0
    %2588 = vmatpush1.bf16.xpose.msra.mxu0 0
    %2589 = vmatprep.subr.bf16.mxu0 0
    %2590 = vmatpush1.bf16.xpose.msra.mxu0 0
    %2591 = vmatprep.subr.bf16.mxu0 0
    %2592 = vmatpush1.bf16.xpose.msra.mxu0 0
    %2593 = vmatprep.subr.bf16.mxu0 0
    %2594 = vmatpush1.bf16.xpose.msra.mxu0 0
    %2595 = vmatprep.subr.bf16.mxu0 0
    %2596 = vmatpush1.bf16.xpose.msra.mxu0 0
    %2597 = vmatprep.subr.bf16.mxu0 0
    %2598 = vmatpush1.bf16.xpose.msra.mxu0 0
    %2599 = vmatprep.subr.bf16.mxu0 0
    %2600 = vmatpush1.bf16.xpose.msra.mxu0 0
    %2601 = vmatprep.subr.bf16.mxu0 0
    %2602 = vmatpush1.bf16.xpose.msra.mxu0 0
    %2603 = vmatprep.subr.bf16.mxu0 0
    %2604 = vmatpush1.bf16.xpose.msra.mxu0 0
    %2605 = vmatprep.subr.bf16.mxu0 0
    %2606 = vmatpush1.bf16.xpose.msra.mxu0 0
    %2607 = vmatprep.subr.bf16.mxu0 0
    %2608 = vmatpush1.bf16.xpose.msra.mxu0 0
    %2609 = vmatprep.mubr.bf16.mxu0 0
    %2610 = vmatmul.mubr.bf16.gmra.mrb[0].mxu0 %v2572
    %v2611 = vpop.f32.mrb[0].mxu0
    %v2612 = vadd.f32 0.0, %v2611
    %v2613 = vpop.f32.mrb[0].mxu0
    %v2614 = vpop.f32.mrb[0].mxu0
    %v2615 = vadd.f32 0.0, %v2614
    %v2616 = vpop.f32.mrb[0].mxu0
    %2617 = vdwg.mxu0
    %2619 = vrot.lane.b32.xlu0 %v2559, 96
    %v2620 = vpop.permute.xlu0 %2619
    %2621 = vrot.lane.b32.xlu0 %v2559, 32
    %v2622 = vpop.permute.xlu0 %2621
    %v2624 = vsel %vm286, %v2620, 0
    %v2627 = vsel %vm286, %v2622, 0
    %2629 = vmatprep.subr.bf16.mxu0 0
    %2630 = vmatpush1.bf16.xpose.msra.mxu0 %v2627
    %2631 = vmatprep.subr.bf16.mxu0 0
    %2632 = vmatpush1.bf16.xpose.msra.mxu0 0
    %2633 = vmatprep.subr.bf16.mxu0 0
    %2634 = vmatpush1.bf16.xpose.msra.mxu0 0
    %2635 = vmatprep.subr.bf16.mxu0 0
    %2636 = vmatpush1.bf16.xpose.msra.mxu0 0
    %2637 = vmatprep.subr.bf16.mxu0 0
    %2638 = vmatpush1.bf16.xpose.msra.mxu0 0
    %2639 = vmatprep.subr.bf16.mxu0 0
    %2640 = vmatpush1.bf16.xpose.msra.mxu0 0
    %2641 = vmatprep.subr.bf16.mxu0 0
    %2642 = vmatpush1.bf16.xpose.msra.mxu0 0
    %2643 = vmatprep.subr.bf16.mxu0 0
    %2644 = vmatpush1.bf16.xpose.msra.mxu0 0
    %2645 = vmatprep.subr.bf16.mxu0 0
    %2646 = vmatpush1.bf16.xpose.msra.mxu0 0
    %2647 = vmatprep.subr.bf16.mxu0 0
    %2648 = vmatpush1.bf16.xpose.msra.mxu0 0
    %2649 = vmatprep.subr.bf16.mxu0 0
    %2650 = vmatpush1.bf16.xpose.msra.mxu0 0
    %2651 = vmatprep.subr.bf16.mxu0 0
    %2652 = vmatpush1.bf16.xpose.msra.mxu0 0
    %2653 = vmatprep.subr.bf16.mxu0 0
    %2654 = vmatpush1.bf16.xpose.msra.mxu0 0
    %2655 = vmatprep.subr.bf16.mxu0 0
    %2656 = vmatpush1.bf16.xpose.msra.mxu0 0
    %2657 = vmatprep.subr.bf16.mxu0 0
    %2658 = vmatpush1.bf16.xpose.msra.mxu0 0
    %2659 = vmatprep.subr.bf16.mxu0 0
    %2660 = vmatpush1.bf16.xpose.msra.mxu0 0
    %2661 = vmatprep.mubr.bf16.mxu0 0
    %2662 = vmatmul.mubr.bf16.gmra.mrb[0].mxu0 %v2624
    %v2663 = vpop.f32.mrb[0].mxu0
    %v2664 = vadd.f32 0.0, %v2663
    %v2665 = vpop.f32.mrb[0].mxu0
    %v2666 = vpop.f32.mrb[0].mxu0
    %v2667 = vadd.f32 0.0, %v2666
    %v2668 = vpop.f32.mrb[0].mxu0
    %2669 = vdwg.mxu0
    %v2670 = vmul.f32 %v2612, 0.25
    %v2671 = vmul.f32 %v2615, 0.25
    %v2672 = vmul.f32 %v2664, 0.25
    %v2673 = vmul.f32 %v2667, 0.25
    %v2674 = vsel %vm286, %v2670, -inf
    %2675 = vmax.xlane.f32.xlu0 %v2674
    %v2676 = vpop.xlane.xlu0 %2675
    %v2677 = vsel %vm286, %v2671, -inf
    %2678 = vmax.xlane.f32.xlu0 %v2677
    %v2679 = vpop.xlane.xlu0 %2678
    %v2680 = vsel %vm286, %v2672, -inf
    %2681 = vmax.xlane.f32.xlu0 %v2680
    %v2682 = vpop.xlane.xlu0 %2681
    %v2683 = vsel %vm286, %v2673, -inf
    %2684 = vmax.xlane.f32.xlu0 %v2683
    %v2685 = vpop.xlane.xlu0 %2684
    %v2686 = vsub.f32 %v2670, %v2676
    %v2687 = vsub.f32 %v2671, %v2679
    %v2688 = vsub.f32 %v2672, %v2682
    %v2689 = vsub.f32 %v2673, %v2685
    %v2690 = vmul.f32 %v2686, 1.442695
    %v2691 = vpow.pop %v2690
    %v2692 = vmul.f32 %v2687, 1.442695
    %v2693 = vpow.pop %v2692
    %v2694 = vmul.f32 %v2688, 1.442695
    %v2695 = vpow.pop %v2694
    %v2696 = vmul.f32 %v2689, 1.442695
    %v2697 = vpow.pop %v2696
    %v2698 = vsel %vm286, %v2691, 0.0
    %2699 = vadd.xlane.f32.xlu0 %v2698
    %v2700 = vpop.xlane.xlu0 %2699
    %v2701 = vsel %vm286, %v2693, 0.0
    %2702 = vadd.xlane.f32.xlu0 %v2701
    %v2703 = vpop.xlane.xlu0 %2702
    %v2704 = vsel %vm286, %v2695, 0.0
    %2705 = vadd.xlane.f32.xlu0 %v2704
    %v2706 = vpop.xlane.xlu0 %2705
    %v2707 = vsel %vm286, %v2697, 0.0
    %2708 = vadd.xlane.f32.xlu0 %v2707
    %v2709 = vpop.xlane.xlu0 %2708
    %v2710 = vrcp.pop %v2700
    %v2711 = vrcp.pop %v2703
    %v2712 = vrcp.pop %v2706
    %v2713 = vrcp.pop %v2709
    %v2714 = vmul.f32 %v2691, %v2710
    %v2715 = vmul.f32 %v2693, %v2711
    %v2716 = vmul.f32 %v2695, %v2712
    %v2717 = vmul.f32 %v2697, %v2713
    %v2718 = vpack.c.bf16 %v2715, %v2714
    %v2719 = vpack.c.bf16 %v2717, %v2716
    %2721 = vrot.lane.b32.xlu0 %v2564, 96
    %v2722 = vpop.permute.xlu0 %2721
    %v2725 = vsel %vm286, %v2718, 0
    %2727 = vmatprep.subr.bf16.mxu0 0
    %2728 = vmatpush1.bf16.msra.mxu0 %v2722
    %2729 = vmatprep.subr.bf16.mxu0 0
    %2730 = vmatpush1.bf16.msra.mxu0 0
    %2731 = vmatprep.subr.bf16.mxu0 0
    %2732 = vmatpush1.bf16.msra.mxu0 0
    %2733 = vmatprep.subr.bf16.mxu0 0
    %2734 = vmatpush1.bf16.msra.mxu0 0
    %2735 = vmatprep.subr.bf16.mxu0 0
    %2736 = vmatpush1.bf16.msra.mxu0 0
    %2737 = vmatprep.subr.bf16.mxu0 0
    %2738 = vmatpush1.bf16.msra.mxu0 0
    %2739 = vmatprep.subr.bf16.mxu0 0
    %2740 = vmatpush1.bf16.msra.mxu0 0
    %2741 = vmatprep.subr.bf16.mxu0 0
    %2742 = vmatpush1.bf16.msra.mxu0 0
    %2743 = vmatprep.subr.bf16.mxu0 0
    %2744 = vmatpush1.bf16.msra.mxu0 0
    %2745 = vmatprep.subr.bf16.mxu0 0
    %2746 = vmatpush1.bf16.msra.mxu0 0
    %2747 = vmatprep.subr.bf16.mxu0 0
    %2748 = vmatpush1.bf16.msra.mxu0 0
    %2749 = vmatprep.subr.bf16.mxu0 0
    %2750 = vmatpush1.bf16.msra.mxu0 0
    %2751 = vmatprep.subr.bf16.mxu0 0
    %2752 = vmatpush1.bf16.msra.mxu0 0
    %2753 = vmatprep.subr.bf16.mxu0 0
    %2754 = vmatpush1.bf16.msra.mxu0 0
    %2755 = vmatprep.subr.bf16.mxu0 0
    %2756 = vmatpush1.bf16.msra.mxu0 0
    %2757 = vmatprep.subr.bf16.mxu0 0
    %2758 = vmatpush1.bf16.msra.mxu0 0
    %2759 = vmatprep.mubr.bf16.mxu0 0
    %2760 = vmatmul.mubr.bf16.gmra.mrb[0].mxu0 %v2725
    %v2761 = vpop.f32.mrb[0].mxu0
    %v2762 = vadd.f32 0.0, %v2761
    %v2763 = vpop.f32.mrb[0].mxu0
    %v2764 = vpop.f32.mrb[0].mxu0
    %v2765 = vadd.f32 0.0, %v2764
    %v2766 = vpop.f32.mrb[0].mxu0
    %2767 = vdwg.mxu0
    %2769 = vrot.lane.b32.xlu0 %v2565, 96
    %v2770 = vpop.permute.xlu0 %2769
    %v2773 = vsel %vm286, %v2719, 0
    %2775 = vmatprep.subr.bf16.mxu0 0
    %2776 = vmatpush1.bf16.msra.mxu0 %v2770
    %2777 = vmatprep.subr.bf16.mxu0 0
    %2778 = vmatpush1.bf16.msra.mxu0 0
    %2779 = vmatprep.subr.bf16.mxu0 0
    %2780 = vmatpush1.bf16.msra.mxu0 0
    %2781 = vmatprep.subr.bf16.mxu0 0
    %2782 = vmatpush1.bf16.msra.mxu0 0
    %2783 = vmatprep.subr.bf16.mxu0 0
    %2784 = vmatpush1.bf16.msra.mxu0 0
    %2785 = vmatprep.subr.bf16.mxu0 0
    %2786 = vmatpush1.bf16.msra.mxu0 0
    %2787 = vmatprep.subr.bf16.mxu0 0
    %2788 = vmatpush1.bf16.msra.mxu0 0
    %2789 = vmatprep.subr.bf16.mxu0 0
    %2790 = vmatpush1.bf16.msra.mxu0 0
    %2791 = vmatprep.subr.bf16.mxu0 0
    %2792 = vmatpush1.bf16.msra.mxu0 0
    %2793 = vmatprep.subr.bf16.mxu0 0
    %2794 = vmatpush1.bf16.msra.mxu0 0
    %2795 = vmatprep.subr.bf16.mxu0 0
    %2796 = vmatpush1.bf16.msra.mxu0 0
    %2797 = vmatprep.subr.bf16.mxu0 0
    %2798 = vmatpush1.bf16.msra.mxu0 0
    %2799 = vmatprep.subr.bf16.mxu0 0
    %2800 = vmatpush1.bf16.msra.mxu0 0
    %2801 = vmatprep.subr.bf16.mxu0 0
    %2802 = vmatpush1.bf16.msra.mxu0 0
    %2803 = vmatprep.subr.bf16.mxu0 0
    %2804 = vmatpush1.bf16.msra.mxu0 0
    %2805 = vmatprep.subr.bf16.mxu0 0
    %2806 = vmatpush1.bf16.msra.mxu0 0
    %2807 = vmatprep.mubr.bf16.mxu0 0
    %2808 = vmatmul.mubr.bf16.gmra.mrb[0].mxu0 %v2773
    %v2809 = vpop.f32.mrb[0].mxu0
    %v2810 = vadd.f32 0.0, %v2809
    %v2811 = vpop.f32.mrb[0].mxu0
    %v2812 = vpop.f32.mrb[0].mxu0
    %v2813 = vadd.f32 0.0, %v2812
    %v2814 = vpop.f32.mrb[0].mxu0
    %2815 = vdwg.mxu0
    %2820 = vrot.lane.b32.xlu0 %v2762, 32
    %v2821 = vpop.permute.xlu0 %2820
    %2822 = vrot.lane.b32.xlu0 %v2765, 32
    %v2823 = vpop.permute.xlu0 %2822
    %2824 = vrot.lane.b32.xlu0 %v2810, 32
    %v2825 = vpop.permute.xlu0 %2824
    %2826 = vrot.lane.b32.xlu0 %v2813, 32
    %v2827 = vpop.permute.xlu0 %2826
    %2832 = vst.msk [vmem:[#allocation3] sm:$0xff] %vm1087, %v2821
    %2833 = vst.msk [vmem:[#allocation3 + $0x8] sm:$0xff] %vm1087, %v2823
    %2834 = vst.msk [vmem:[#allocation3 + $0x10] sm:$0xff] %vm1087, %v2825
    %2835 = vst.msk [vmem:[#allocation3 + $0x18] sm:$0xff] %vm1087, %v2827
    %v2836 = vld [vmem:[#allocation2] sm:$0xff]
    %v2837 = vld [vmem:[#allocation2 + $0x10] sm:$0xff]
    %v2838 = vld [vmem:[#allocation2 + $0x20] sm:$0xff]
    %v2839 = vld [vmem:[#allocation2 + $0x30] sm:$0xff]
    %v2840 = vpack.c.bf16 %v2837, %v2836
    %v2841 = vpack.c.bf16 %v2839, %v2838
    %v2842 = vld [vmem:[#allocation2 + $0x8] sm:$0xff]
    %v2843 = vld [vmem:[#allocation2 + $0x18] sm:$0xff]
    %v2844 = vld [vmem:[#allocation2 + $0x28] sm:$0xff]
    %v2845 = vld [vmem:[#allocation2 + $0x38] sm:$0xff]
    %v2846 = vpack.c.bf16 %v2843, %v2842
    %v2847 = vpack.c.bf16 %v2845, %v2844
    %2849 = vrot.lane.b32.xlu0 %v2840, 80
    %v2850 = vpop.permute.xlu0 %2849
    %2851 = vrot.lane.b32.xlu0 %v2840, 16
    %v2852 = vpop.permute.xlu0 %2851
    %v2854 = vsel %vm286, %v2850, 0
    %v2857 = vsel %vm286, %v2852, 0
    %2859 = vmatprep.subr.bf16.mxu0 0
    %2860 = vmatpush1.bf16.xpose.msra.mxu0 %v2857
    %2861 = vmatprep.subr.bf16.mxu0 0
    %2862 = vmatpush1.bf16.xpose.msra.mxu0 0
    %2863 = vmatprep.subr.bf16.mxu0 0
    %2864 = vmatpush1.bf16.xpose.msra.mxu0 0
    %2865 = vmatprep.subr.bf16.mxu0 0
    %2866 = vmatpush1.bf16.xpose.msra.mxu0 0
    %2867 = vmatprep.subr.bf16.mxu0 0
    %2868 = vmatpush1.bf16.xpose.msra.mxu0 0
    %2869 = vmatprep.subr.bf16.mxu0 0
    %2870 = vmatpush1.bf16.xpose.msra.mxu0 0
    %2871 = vmatprep.subr.bf16.mxu0 0
    %2872 = vmatpush1.bf16.xpose.msra.mxu0 0
    %2873 = vmatprep.subr.bf16.mxu0 0
    %2874 = vmatpush1.bf16.xpose.msra.mxu0 0
    %2875 = vmatprep.subr.bf16.mxu0 0
    %2876 = vmatpush1.bf16.xpose.msra.mxu0 0
    %2877 = vmatprep.subr.bf16.mxu0 0
    %2878 = vmatpush1.bf16.xpose.msra.mxu0 0
    %2879 = vmatprep.subr.bf16.mxu0 0
    %2880 = vmatpush1.bf16.xpose.msra.mxu0 0
    %2881 = vmatprep.subr.bf16.mxu0 0
    %2882 = vmatpush1.bf16.xpose.msra.mxu0 0
    %2883 = vmatprep.subr.bf16.mxu0 0
    %2884 = vmatpush1.bf16.xpose.msra.mxu0 0
    %2885 = vmatprep.subr.bf16.mxu0 0
    %2886 = vmatpush1.bf16.xpose.msra.mxu0 0
    %2887 = vmatprep.subr.bf16.mxu0 0
    %2888 = vmatpush1.bf16.xpose.msra.mxu0 0
    %2889 = vmatprep.subr.bf16.mxu0 0
    %2890 = vmatpush1.bf16.xpose.msra.mxu0 0
    %2891 = vmatprep.mubr.bf16.mxu0 0
    %2892 = vmatmul.mubr.bf16.gmra.mrb[0].mxu0 %v2854
    %v2893 = vpop.f32.mrb[0].mxu0
    %v2894 = vadd.f32 0.0, %v2893
    %v2895 = vpop.f32.mrb[0].mxu0
    %v2896 = vpop.f32.mrb[0].mxu0
    %v2897 = vadd.f32 0.0, %v2896
    %v2898 = vpop.f32.mrb[0].mxu0
    %2899 = vdwg.mxu0
    %2901 = vrot.lane.b32.xlu0 %v2841, 80
    %v2902 = vpop.permute.xlu0 %2901
    %2903 = vrot.lane.b32.xlu0 %v2841, 16
    %v2904 = vpop.permute.xlu0 %2903
    %v2906 = vsel %vm286, %v2902, 0
    %v2909 = vsel %vm286, %v2904, 0
    %2911 = vmatprep.subr.bf16.mxu0 0
    %2912 = vmatpush1.bf16.xpose.msra.mxu0 %v2909
    %2913 = vmatprep.subr.bf16.mxu0 0
    %2914 = vmatpush1.bf16.xpose.msra.mxu0 0
    %2915 = vmatprep.subr.bf16.mxu0 0
    %2916 = vmatpush1.bf16.xpose.msra.mxu0 0
    %2917 = vmatprep.subr.bf16.mxu0 0
    %2918 = vmatpush1.bf16.xpose.msra.mxu0 0
    %2919 = vmatprep.subr.bf16.mxu0 0
    %2920 = vmatpush1.bf16.xpose.msra.mxu0 0
    %2921 = vmatprep.subr.bf16.mxu0 0
    %2922 = vmatpush1.bf16.xpose.msra.mxu0 0
    %2923 = vmatprep.subr.bf16.mxu0 0
    %2924 = vmatpush1.bf16.xpose.msra.mxu0 0
    %2925 = vmatprep.subr.bf16.mxu0 0
    %2926 = vmatpush1.bf16.xpose.msra.mxu0 0
    %2927 = vmatprep.subr.bf16.mxu0 0
    %2928 = vmatpush1.bf16.xpose.msra.mxu0 0
    %2929 = vmatprep.subr.bf16.mxu0 0
    %2930 = vmatpush1.bf16.xpose.msra.mxu0 0
    %2931 = vmatprep.subr.bf16.mxu0 0
    %2932 = vmatpush1.bf16.xpose.msra.mxu0 0
    %2933 = vmatprep.subr.bf16.mxu0 0
    %2934 = vmatpush1.bf16.xpose.msra.mxu0 0
    %2935 = vmatprep.subr.bf16.mxu0 0
    %2936 = vmatpush1.bf16.xpose.msra.mxu0 0
    %2937 = vmatprep.subr.bf16.mxu0 0
    %2938 = vmatpush1.bf16.xpose.msra.mxu0 0
    %2939 = vmatprep.subr.bf16.mxu0 0
    %2940 = vmatpush1.bf16.xpose.msra.mxu0 0
    %2941 = vmatprep.subr.bf16.mxu0 0
    %2942 = vmatpush1.bf16.xpose.msra.mxu0 0
    %2943 = vmatprep.mubr.bf16.mxu0 0
    %2944 = vmatmul.mubr.bf16.gmra.mrb[0].mxu0 %v2906
    %v2945 = vpop.f32.mrb[0].mxu0
    %v2946 = vadd.f32 0.0, %v2945
    %v2947 = vpop.f32.mrb[0].mxu0
    %v2948 = vpop.f32.mrb[0].mxu0
    %v2949 = vadd.f32 0.0, %v2948
    %v2950 = vpop.f32.mrb[0].mxu0
    %2951 = vdwg.mxu0
    %v2952 = vmul.f32 %v2894, 0.25
    %v2953 = vmul.f32 %v2897, 0.25
    %v2954 = vmul.f32 %v2946, 0.25
    %v2955 = vmul.f32 %v2949, 0.25
    %v2956 = vsel %vm286, %v2952, -inf
    %2957 = vmax.xlane.f32.xlu0 %v2956
    %v2958 = vpop.xlane.xlu0 %2957
    %v2959 = vsel %vm286, %v2953, -inf
    %2960 = vmax.xlane.f32.xlu0 %v2959
    %v2961 = vpop.xlane.xlu0 %2960
    %v2962 = vsel %vm286, %v2954, -inf
    %2963 = vmax.xlane.f32.xlu0 %v2962
    %v2964 = vpop.xlane.xlu0 %2963
    %v2965 = vsel %vm286, %v2955, -inf
    %2966 = vmax.xlane.f32.xlu0 %v2965
    %v2967 = vpop.xlane.xlu0 %2966
    %v2968 = vsub.f32 %v2952, %v2958
    %v2969 = vsub.f32 %v2953, %v2961
    %v2970 = vsub.f32 %v2954, %v2964
    %v2971 = vsub.f32 %v2955, %v2967
    %v2972 = vmul.f32 %v2968, 1.442695
    %v2973 = vpow.pop %v2972
    %v2974 = vmul.f32 %v2969, 1.442695
    %v2975 = vpow.pop %v2974
    %v2976 = vmul.f32 %v2970, 1.442695
    %v2977 = vpow.pop %v2976
    %v2978 = vmul.f32 %v2971, 1.442695
    %v2979 = vpow.pop %v2978
    %v2980 = vsel %vm286, %v2973, 0.0
    %2981 = vadd.xlane.f32.xlu0 %v2980
    %v2982 = vpop.xlane.xlu0 %2981
    %v2983 = vsel %vm286, %v2975, 0.0
    %2984 = vadd.xlane.f32.xlu0 %v2983
    %v2985 = vpop.xlane.xlu0 %2984
    %v2986 = vsel %vm286, %v2977, 0.0
    %2987 = vadd.xlane.f32.xlu0 %v2986
    %v2988 = vpop.xlane.xlu0 %2987
    %v2989 = vsel %vm286, %v2979, 0.0
    %2990 = vadd.xlane.f32.xlu0 %v2989
    %v2991 = vpop.xlane.xlu0 %2990
    %v2992 = vrcp.pop %v2982
    %v2993 = vrcp.pop %v2985
    %v2994 = vrcp.pop %v2988
    %v2995 = vrcp.pop %v2991
    %v2996 = vmul.f32 %v2973, %v2992
    %v2997 = vmul.f32 %v2975, %v2993
    %v2998 = vmul.f32 %v2977, %v2994
    %v2999 = vmul.f32 %v2979, %v2995
    %v3000 = vpack.c.bf16 %v2997, %v2996
    %v3001 = vpack.c.bf16 %v2999, %v2998
    %3003 = vrot.lane.b32.xlu0 %v2846, 80
    %v3004 = vpop.permute.xlu0 %3003
    %v3007 = vsel %vm286, %v3000, 0
    %3009 = vmatprep.subr.bf16.mxu0 0
    %3010 = vmatpush1.bf16.msra.mxu0 %v3004
    %3011 = vmatprep.subr.bf16.mxu0 0
    %3012 = vmatpush1.bf16.msra.mxu0 0
    %3013 = vmatprep.subr.bf16.mxu0 0
    %3014 = vmatpush1.bf16.msra.mxu0 0
    %3015 = vmatprep.subr.bf16.mxu0 0
    %3016 = vmatpush1.bf16.msra.mxu0 0
    %3017 = vmatprep.subr.bf16.mxu0 0
    %3018 = vmatpush1.bf16.msra.mxu0 0
    %3019 = vmatprep.subr.bf16.mxu0 0
    %3020 = vmatpush1.bf16.msra.mxu0 0
    %3021 = vmatprep.subr.bf16.mxu0 0
    %3022 = vmatpush1.bf16.msra.mxu0 0
    %3023 = vmatprep.subr.bf16.mxu0 0
    %3024 = vmatpush1.bf16.msra.mxu0 0
    %3025 = vmatprep.subr.bf16.mxu0 0
    %3026 = vmatpush1.bf16.msra.mxu0 0
    %3027 = vmatprep.subr.bf16.mxu0 0
    %3028 = vmatpush1.bf16.msra.mxu0 0
    %3029 = vmatprep.subr.bf16.mxu0 0
    %3030 = vmatpush1.bf16.msra.mxu0 0
    %3031 = vmatprep.subr.bf16.mxu0 0
    %3032 = vmatpush1.bf16.msra.mxu0 0
    %3033 = vmatprep.subr.bf16.mxu0 0
    %3034 = vmatpush1.bf16.msra.mxu0 0
    %3035 = vmatprep.subr.bf16.mxu0 0
    %3036 = vmatpush1.bf16.msra.mxu0 0
    %3037 = vmatprep.subr.bf16.mxu0 0
    %3038 = vmatpush1.bf16.msra.mxu0 0
    %3039 = vmatprep.subr.bf16.mxu0 0
    %3040 = vmatpush1.bf16.msra.mxu0 0
    %3041 = vmatprep.mubr.bf16.mxu0 0
    %3042 = vmatmul.mubr.bf16.gmra.mrb[0].mxu0 %v3007
    %v3043 = vpop.f32.mrb[0].mxu0
    %v3044 = vadd.f32 0.0, %v3043
    %v3045 = vpop.f32.mrb[0].mxu0
    %v3046 = vpop.f32.mrb[0].mxu0
    %v3047 = vadd.f32 0.0, %v3046
    %v3048 = vpop.f32.mrb[0].mxu0
    %3049 = vdwg.mxu0
    %3051 = vrot.lane.b32.xlu0 %v2847, 80
    %v3052 = vpop.permute.xlu0 %3051
    %v3055 = vsel %vm286, %v3001, 0
    %3057 = vmatprep.subr.bf16.mxu0 0
    %3058 = vmatpush1.bf16.msra.mxu0 %v3052
    %3059 = vmatprep.subr.bf16.mxu0 0
    %3060 = vmatpush1.bf16.msra.mxu0 0
    %3061 = vmatprep.subr.bf16.mxu0 0
    %3062 = vmatpush1.bf16.msra.mxu0 0
    %3063 = vmatprep.subr.bf16.mxu0 0
    %3064 = vmatpush1.bf16.msra.mxu0 0
    %3065 = vmatprep.subr.bf16.mxu0 0
    %3066 = vmatpush1.bf16.msra.mxu0 0
    %3067 = vmatprep.subr.bf16.mxu0 0
    %3068 = vmatpush1.bf16.msra.mxu0 0
    %3069 = vmatprep.subr.bf16.mxu0 0
    %3070 = vmatpush1.bf16.msra.mxu0 0
    %3071 = vmatprep.subr.bf16.mxu0 0
    %3072 = vmatpush1.bf16.msra.mxu0 0
    %3073 = vmatprep.subr.bf16.mxu0 0
    %3074 = vmatpush1.bf16.msra.mxu0 0
    %3075 = vmatprep.subr.bf16.mxu0 0
    %3076 = vmatpush1.bf16.msra.mxu0 0
    %3077 = vmatprep.subr.bf16.mxu0 0
    %3078 = vmatpush1.bf16.msra.mxu0 0
    %3079 = vmatprep.subr.bf16.mxu0 0
    %3080 = vmatpush1.bf16.msra.mxu0 0
    %3081 = vmatprep.subr.bf16.mxu0 0
    %3082 = vmatpush1.bf16.msra.mxu0 0
    %3083 = vmatprep.subr.bf16.mxu0 0
    %3084 = vmatpush1.bf16.msra.mxu0 0
    %3085 = vmatprep.subr.bf16.mxu0 0
    %3086 = vmatpush1.bf16.msra.mxu0 0
    %3087 = vmatprep.subr.bf16.mxu0 0
    %3088 = vmatpush1.bf16.msra.mxu0 0
    %3089 = vmatprep.mubr.bf16.mxu0 0
    %3090 = vmatmul.mubr.bf16.gmra.mrb[0].mxu0 %v3055
    %v3091 = vpop.f32.mrb[0].mxu0
    %v3092 = vadd.f32 0.0, %v3091
    %v3093 = vpop.f32.mrb[0].mxu0
    %v3094 = vpop.f32.mrb[0].mxu0
    %v3095 = vadd.f32 0.0, %v3094
    %v3096 = vpop.f32.mrb[0].mxu0
    %3097 = vdwg.mxu0
    %3102 = vrot.lane.b32.xlu0 %v3044, 48
    %v3103 = vpop.permute.xlu0 %3102
    %3104 = vrot.lane.b32.xlu0 %v3047, 48
    %v3105 = vpop.permute.xlu0 %3104
    %3106 = vrot.lane.b32.xlu0 %v3092, 48
    %v3107 = vpop.permute.xlu0 %3106
    %3108 = vrot.lane.b32.xlu0 %v3095, 48
    %v3109 = vpop.permute.xlu0 %3108
    %3114 = vst.msk [vmem:[#allocation3] sm:$0xff] %vm1370, %v3103
    %3115 = vst.msk [vmem:[#allocation3 + $0x8] sm:$0xff] %vm1370, %v3105
    %3116 = vst.msk [vmem:[#allocation3 + $0x10] sm:$0xff] %vm1370, %v3107
    %3117 = vst.msk [vmem:[#allocation3 + $0x18] sm:$0xff] %vm1370, %v3109
    %v3118 = vld [vmem:[#allocation3] sm:$0xff]
    %v3119 = vld [vmem:[#allocation3 + $0x8] sm:$0xff]
    %v3120 = vld [vmem:[#allocation3 + $0x10] sm:$0xff]
    %v3121 = vld [vmem:[#allocation3 + $0x18] sm:$0xff]
    %v3122 = vpack.c.bf16 %v3119, %v3118
    %v3123 = vpack.c.bf16 %v3121, %v3120
    %s3124 = scalar_lea.vmem %s5, 32
    %v3125 = vld [vmem:[%s3124] sm:$0xf]
    %v3126 = vld [vmem:[%s3124 + $0x4] sm:$0xf]
    %v3127 = vld [vmem:[%s3124 + $0x8] sm:$0xf]
    %v3128 = vld [vmem:[%s3124 + $0xc] sm:$0xf]
    %v3129 = vld [vmem:[%s3124 + $0x10] sm:$0xf]
    %v3130 = vld [vmem:[%s3124 + $0x14] sm:$0xf]
    %v3131 = vld [vmem:[%s3124 + $0x18] sm:$0xf]
    %v3132 = vld [vmem:[%s3124 + $0x1c] sm:$0xf]
    %s3133 = scalar_lea.vmem %s6, 1
    %v3134 = vld [vmem:[%s3133] sm:$0x1]
    %v3136 = vlaneseq
    %v3137 = vshrl.u32 %v3136, 7
    %v3138 = vsub.s32 0, %v3137
    %v3139 = vrot.slane %v3134, %v3138
    %v3149 = vunpack.c.l.b16 %v3125
    %v3150 = vunpack.c.l.b16 %v3126
    %v3151 = vunpack.c.l.b16 %v3127
    %v3152 = vunpack.c.l.b16 %v3128
    %v3153 = vunpack.c.l.b16 %v3129
    %v3154 = vunpack.c.l.b16 %v3130
    %v3155 = vunpack.c.l.b16 %v3131
    %v3156 = vunpack.c.l.b16 %v3132
    %v3157 = vpack.c.b16 %v3150, %v3149
    %v3158 = vpack.c.b16 %v3152, %v3151
    %v3159 = vpack.c.b16 %v3154, %v3153
    %v3160 = vpack.c.b16 %v3156, %v3155
    %v3166 = vsel %vm68, %v3122, 0
    %v3169 = vsel %vm68, %v3123, 0
    %3171 = vmatprep.subr.bf16.mxu0 0
    %3172 = vmatpush1.bf16.msra.mxu0 %v3157
    %3173 = vmatprep.subr.bf16.mxu0 0
    %3174 = vmatpush1.bf16.msra.mxu0 %v3158
    %3175 = vmatprep.subr.bf16.mxu0 0
    %3176 = vmatpush1.bf16.msra.mxu0 %v3159
    %3177 = vmatprep.subr.bf16.mxu0 0
    %3178 = vmatpush1.bf16.msra.mxu0 %v3160
    %3179 = vmatprep.subr.bf16.mxu0 0
    %3180 = vmatpush1.bf16.msra.mxu0 0
    %3181 = vmatprep.subr.bf16.mxu0 0
    %3182 = vmatpush1.bf16.msra.mxu0 0
    %3183 = vmatprep.subr.bf16.mxu0 0
    %3184 = vmatpush1.bf16.msra.mxu0 0
    %3185 = vmatprep.subr.bf16.mxu0 0
    %3186 = vmatpush1.bf16.msra.mxu0 0
    %3187 = vmatprep.subr.bf16.mxu0 0
    %3188 = vmatpush1.bf16.msra.mxu0 0
    %3189 = vmatprep.subr.bf16.mxu0 0
    %3190 = vmatpush1.bf16.msra.mxu0 0
    %3191 = vmatprep.subr.bf16.mxu0 0
    %3192 = vmatpush1.bf16.msra.mxu0 0
    %3193 = vmatprep.subr.bf16.mxu0 0
    %3194 = vmatpush1.bf16.msra.mxu0 0
    %3195 = vmatprep.subr.bf16.mxu0 0
    %3196 = vmatpush1.bf16.msra.mxu0 0
    %3197 = vmatprep.subr.bf16.mxu0 0
    %3198 = vmatpush1.bf16.msra.mxu0 0
    %3199 = vmatprep.subr.bf16.mxu0 0
    %3200 = vmatpush1.bf16.msra.mxu0 0
    %3201 = vmatprep.subr.bf16.mxu0 0
    %3202 = vmatpush1.bf16.msra.mxu0 0
    %3203 = vmatprep.mubr.bf16.mxu0 0
    %3204 = vmatmul.mubr.bf16.gmra.mrb[0].mxu0 %v3166
    %v3205 = vpop.f32.mrb[0].mxu0
    %v3206 = vadd.f32 %v3139, %v3205
    %v3207 = vpop.f32.mrb[0].mxu0
    %v3208 = vpop.f32.mrb[0].mxu0
    %v3209 = vadd.f32 %v3139, %v3208
    %v3210 = vpop.f32.mrb[0].mxu0
    %3211 = vmatprep.mubr.bf16.mxu0 0
    %3212 = vmatmul.mubr.bf16.gmra.mrb[0].mxu0 %v3169
    %v3213 = vpop.f32.mrb[0].mxu0
    %v3214 = vadd.f32 %v3139, %v3213
    %v3215 = vpop.f32.mrb[0].mxu0
    %v3216 = vpop.f32.mrb[0].mxu0
    %v3217 = vadd.f32 %v3139, %v3216
    %v3218 = vpop.f32.mrb[0].mxu0
    %3219 = vdwg.mxu0
    %v3220 = vadd.f32 %v1807, %v3206
    %v3221 = vadd.f32 %v1808, %v3209
    %v3222 = vadd.f32 %v1809, %v3214
    %v3223 = vadd.f32 %v1810, %v3217
    %s3224 = scalar_lea.vmem %s7, 1
    %v3225 = vld [vmem:[%s3224] sm:$0x1]
    %s3226 = scalar_lea.vmem %s8, 1
    %v3227 = vld [vmem:[%s3226] sm:$0x1]
    %v3228 = vsel %vm68, %v3220, 0.0
    %3229 = vadd.xlane.f32.xlu0 %v3228
    %v3230 = vpop.xlane.xlu0 %3229
    %v3231 = vsel %vm68, %v3221, 0.0
    %3232 = vadd.xlane.f32.xlu0 %v3231
    %v3233 = vpop.xlane.xlu0 %3232
    %v3234 = vsel %vm68, %v3222, 0.0
    %3235 = vadd.xlane.f32.xlu0 %v3234
    %v3236 = vpop.xlane.xlu0 %3235
    %v3237 = vsel %vm68, %v3223, 0.0
    %3238 = vadd.xlane.f32.xlu0 %v3237
    %v3239 = vpop.xlane.xlu0 %3238
    %v3240 = vmul.f32 %v3230, %v81
    %v3241 = vmul.f32 %v3233, %v81
    %v3242 = vmul.f32 %v3236, %v81
    %v3243 = vmul.f32 %v3239, %v81
    %v3244 = vsub.f32 %v3220, %v3240
    %v3245 = vsub.f32 %v3221, %v3241
    %v3246 = vsub.f32 %v3222, %v3242
    %v3247 = vsub.f32 %v3223, %v3243
    %v3248 = vmul.f32 %v3244, %v3244
    %v3249 = vmul.f32 %v3245, %v3245
    %v3250 = vmul.f32 %v3246, %v3246
    %v3251 = vmul.f32 %v3247, %v3247
    %v3252 = vsel %vm68, %v3248, 0.0
    %3253 = vadd.xlane.f32.xlu0 %v3252
    %v3254 = vpop.xlane.xlu0 %3253
    %v3255 = vsel %vm68, %v3249, 0.0
    %3256 = vadd.xlane.f32.xlu0 %v3255
    %v3257 = vpop.xlane.xlu0 %3256
    %v3258 = vsel %vm68, %v3250, 0.0
    %3259 = vadd.xlane.f32.xlu0 %v3258
    %v3260 = vpop.xlane.xlu0 %3259
    %v3261 = vsel %vm68, %v3251, 0.0
    %3262 = vadd.xlane.f32.xlu0 %v3261
    %v3263 = vpop.xlane.xlu0 %3262
    %v3264 = vmul.f32 %v3254, %v81
    %v3265 = vmul.f32 %v3257, %v81
    %v3266 = vmul.f32 %v3260, %v81
    %v3267 = vmul.f32 %v3263, %v81
    %v3268 = vadd.f32 %v3264, 1e-05
    %v3269 = vadd.f32 %v3265, 1e-05
    %v3270 = vadd.f32 %v3266, 1e-05
    %v3271 = vadd.f32 %v3267, 1e-05
    %v3272 = vrsqrt.pop %v3268
    %v3273 = vrsqrt.pop %v3269
    %v3274 = vrsqrt.pop %v3270
    %v3275 = vrsqrt.pop %v3271
    %v3276 = vmul.f32 %v3244, %v3272
    %v3277 = vmul.f32 %v3245, %v3273
    %v3278 = vmul.f32 %v3246, %v3274
    %v3279 = vmul.f32 %v3247, %v3275
    %v3281 = vlaneseq
    %v3282 = vshrl.u32 %v3281, 7
    %v3283 = vsub.s32 0, %v3282
    %v3284 = vrot.slane %v3225, %v3283
    %v3286 = vmul.f32 %v3276, %v3284
    %v3287 = vmul.f32 %v3277, %v3284
    %v3288 = vmul.f32 %v3278, %v3284
    %v3289 = vmul.f32 %v3279, %v3284
    %v3291 = vlaneseq
    %v3292 = vshrl.u32 %v3291, 7
    %v3293 = vsub.s32 0, %v3292
    %v3294 = vrot.slane %v3227, %v3293
    %v3296 = vadd.f32 %v3286, %v3294
    %v3297 = vadd.f32 %v3287, %v3294
    %v3298 = vadd.f32 %v3288, %v3294
    %v3299 = vadd.f32 %v3289, %v3294
    %v3300 = vpack.c.bf16 %v3297, %v3296
    %v3301 = vpack.c.bf16 %v3299, %v3298
    %s3302 = scalar_lea.vmem %s9, 32
    %v3303 = vld [vmem:[%s3302] sm:$0xf]
    %v3304 = vld [vmem:[%s3302 + $0x4] sm:$0xf]
    %v3305 = vld [vmem:[%s3302 + $0x8] sm:$0xf]
    %v3306 = vld [vmem:[%s3302 + $0xc] sm:$0xf]
    %v3307 = vld [vmem:[%s3302 + $0x10] sm:$0xf]
    %v3308 = vld [vmem:[%s3302 + $0x14] sm:$0xf]
    %v3309 = vld [vmem:[%s3302 + $0x18] sm:$0xf]
    %v3310 = vld [vmem:[%s3302 + $0x1c] sm:$0xf]
    %s3311 = scalar_lea.vmem %s10, 1
    %v3312 = vld [vmem:[%s3311] sm:$0x1]
    %v3314 = vlaneseq
    %v3315 = vshrl.u32 %v3314, 7
    %v3316 = vsub.s32 0, %v3315
    %v3317 = vrot.slane %v3312, %v3316
    %v3327 = vunpack.c.l.b16 %v3303
    %v3328 = vunpack.c.l.b16 %v3304
    %v3329 = vunpack.c.l.b16 %v3305
    %v3330 = vunpack.c.l.b16 %v3306
    %v3331 = vunpack.c.l.b16 %v3307
    %v3332 = vunpack.c.l.b16 %v3308
    %v3333 = vunpack.c.l.b16 %v3309
    %v3334 = vunpack.c.l.b16 %v3310
    %v3335 = vpack.c.b16 %v3328, %v3327
    %v3336 = vpack.c.b16 %v3330, %v3329
    %v3337 = vpack.c.b16 %v3332, %v3331
    %v3338 = vpack.c.b16 %v3334, %v3333
    %v3344 = vsel %vm68, %v3300, 0
    %v3347 = vsel %vm68, %v3301, 0
    %3349 = vmatprep.subr.bf16.mxu0 0
    %3350 = vmatpush1.bf16.msra.mxu0 %v3335
    %3351 = vmatprep.subr.bf16.mxu0 0
    %3352 = vmatpush1.bf16.msra.mxu0 %v3336
    %3353 = vmatprep.subr.bf16.mxu0 0
    %3354 = vmatpush1.bf16.msra.mxu0 %v3337
    %3355 = vmatprep.subr.bf16.mxu0 0
    %3356 = vmatpush1.bf16.msra.mxu0 %v3338
    %3357 = vmatprep.subr.bf16.mxu0 0
    %3358 = vmatpush1.bf16.msra.mxu0 0
    %3359 = vmatprep.subr.bf16.mxu0 0
    %3360 = vmatpush1.bf16.msra.mxu0 0
    %3361 = vmatprep.subr.bf16.mxu0 0
    %3362 = vmatpush1.bf16.msra.mxu0 0
    %3363 = vmatprep.subr.bf16.mxu0 0
    %3364 = vmatpush1.bf16.msra.mxu0 0
    %3365 = vmatprep.subr.bf16.mxu0 0
    %3366 = vmatpush1.bf16.msra.mxu0 0
    %3367 = vmatprep.subr.bf16.mxu0 0
    %3368 = vmatpush1.bf16.msra.mxu0 0
    %3369 = vmatprep.subr.bf16.mxu0 0
    %3370 = vmatpush1.bf16.msra.mxu0 0
    %3371 = vmatprep.subr.bf16.mxu0 0
    %3372 = vmatpush1.bf16.msra.mxu0 0
    %3373 = vmatprep.subr.bf16.mxu0 0
    %3374 = vmatpush1.bf16.msra.mxu0 0
    %3375 = vmatprep.subr.bf16.mxu0 0
    %3376 = vmatpush1.bf16.msra.mxu0 0
    %3377 = vmatprep.subr.bf16.mxu0 0
    %3378 = vmatpush1.bf16.msra.mxu0 0
    %3379 = vmatprep.subr.bf16.mxu0 0
    %3380 = vmatpush1.bf16.msra.mxu0 0
    %3381 = vmatprep.mubr.bf16.mxu0 0
    %3382 = vmatmul.mubr.bf16.gmra.mrb[0].mxu0 %v3344
    %v3383 = vpop.f32.mrb[0].mxu0
    %v3384 = vadd.f32 %v3317, %v3383
    %v3385 = vpop.f32.mrb[0].mxu0
    %v3386 = vpop.f32.mrb[0].mxu0
    %v3387 = vadd.f32 %v3317, %v3386
    %v3388 = vpop.f32.mrb[0].mxu0
    %3389 = vmatprep.mubr.bf16.mxu0 0
    %3390 = vmatmul.mubr.bf16.gmra.mrb[0].mxu0 %v3347
    %v3391 = vpop.f32.mrb[0].mxu0
    %v3392 = vadd.f32 %v3317, %v3391
    %v3393 = vpop.f32.mrb[0].mxu0
    %v3394 = vpop.f32.mrb[0].mxu0
    %v3395 = vadd.f32 %v3317, %v3394
    %v3396 = vpop.f32.mrb[0].mxu0
    %3397 = vdwg.mxu0
    %v3398 = vmul.f32 %v3384, %v3384
    %v3399 = vmul.f32 %v3387, %v3387
    %v3400 = vmul.f32 %v3392, %v3392
    %v3401 = vmul.f32 %v3395, %v3395
    %v3402 = vmul.f32 %v3384, %v3398
    %v3403 = vmul.f32 %v3387, %v3399
    %v3404 = vmul.f32 %v3392, %v3400
    %v3405 = vmul.f32 %v3395, %v3401
    %v3406 = vmul.f32 %v3402, 0.044715
    %v3407 = vmul.f32 %v3403, 0.044715
    %v3408 = vmul.f32 %v3404, 0.044715
    %v3409 = vmul.f32 %v3405, 0.044715
    %v3410 = vadd.f32 %v3384, %v3406
    %v3411 = vadd.f32 %v3387, %v3407
    %v3412 = vadd.f32 %v3392, %v3408
    %v3413 = vadd.f32 %v3395, %v3409
    %v3414 = vmul.f32 %v3410, 0.7978846
    %v3415 = vmul.f32 %v3411, 0.7978846
    %v3416 = vmul.f32 %v3412, 0.7978846
    %v3417 = vmul.f32 %v3413, 0.7978846
    %v3418 = vtanh.pop %v3414
    %v3419 = vtanh.pop %v3415
    %v3420 = vtanh.pop %v3416
    %v3421 = vtanh.pop %v3417
    %v3422 = vadd.f32 %v3418, 1.0
    %v3423 = vadd.f32 %v3419, 1.0
    %v3424 = vadd.f32 %v3420, 1.0
    %v3425 = vadd.f32 %v3421, 1.0
    %v3426 = vmul.f32 %v3422, 0.5
    %v3427 = vmul.f32 %v3423, 0.5
    %v3428 = vmul.f32 %v3424, 0.5
    %v3429 = vmul.f32 %v3425, 0.5
    %v3430 = vmul.f32 %v3384, %v3426
    %v3431 = vmul.f32 %v3387, %v3427
    %v3432 = vmul.f32 %v3392, %v3428
    %v3433 = vmul.f32 %v3395, %v3429
    %v3434 = vpack.c.bf16 %v3431, %v3430
    %v3435 = vpack.c.bf16 %v3433, %v3432
    %s3436 = scalar_lea.vmem %s11, 64
    %v3437 = vld [vmem:[%s3436] sm:$0xf]
    %v3438 = vld [vmem:[%s3436 + $0x4] sm:$0xf]
    %v3439 = vld [vmem:[%s3436 + $0x8] sm:$0xf]
    %v3440 = vld [vmem:[%s3436 + $0xc] sm:$0xf]
    %v3441 = vld [vmem:[%s3436 + $0x10] sm:$0xf]
    %v3442 = vld [vmem:[%s3436 + $0x14] sm:$0xf]
    %v3443 = vld [vmem:[%s3436 + $0x18] sm:$0xf]
    %v3444 = vld [vmem:[%s3436 + $0x1c] sm:$0xf]
    %v3445 = vld [vmem:[%s3436 + $0x20] sm:$0xf]
    %v3446 = vld [vmem:[%s3436 + $0x24] sm:$0xf]
    %v3447 = vld [vmem:[%s3436 + $0x28] sm:$0xf]
    %v3448 = vld [vmem:[%s3436 + $0x2c] sm:$0xf]
    %v3449 = vld [vmem:[%s3436 + $0x30] sm:$0xf]
    %v3450 = vld [vmem:[%s3436 + $0x34] sm:$0xf]
    %v3451 = vld [vmem:[%s3436 + $0x38] sm:$0xf]
    %v3452 = vld [vmem:[%s3436 + $0x3c] sm:$0xf]
    %s3453 = scalar_lea.vmem %s12, 1
    %v3454 = vld [vmem:[%s3453] sm:$0x1]
    %v3456 = vlaneseq
    %v3457 = vshrl.u32 %v3456, 7
    %v3458 = vsub.s32 0, %v3457
    %v3459 = vrot.slane %v3454, %v3458
    %v3477 = vunpack.c.l.b16 %v3437
    %v3478 = vunpack.c.l.b16 %v3438
    %v3479 = vunpack.c.l.b16 %v3439
    %v3480 = vunpack.c.l.b16 %v3440
    %v3481 = vunpack.c.l.b16 %v3441
    %v3482 = vunpack.c.l.b16 %v3442
    %v3483 = vunpack.c.l.b16 %v3443
    %v3484 = vunpack.c.l.b16 %v3444
    %v3485 = vunpack.c.l.b16 %v3445
    %v3486 = vunpack.c.l.b16 %v3446
    %v3487 = vunpack.c.l.b16 %v3447
    %v3488 = vunpack.c.l.b16 %v3448
    %v3489 = vunpack.c.l.b16 %v3449
    %v3490 = vunpack.c.l.b16 %v3450
    %v3491 = vunpack.c.l.b16 %v3451
    %v3492 = vunpack.c.l.b16 %v3452
    %v3493 = vpack.c.b16 %v3478, %v3477
    %v3494 = vpack.c.b16 %v3480, %v3479
    %v3495 = vpack.c.b16 %v3482, %v3481
    %v3496 = vpack.c.b16 %v3484, %v3483
    %v3497 = vpack.c.b16 %v3486, %v3485
    %v3498 = vpack.c.b16 %v3488, %v3487
    %v3499 = vpack.c.b16 %v3490, %v3489
    %v3500 = vpack.c.b16 %v3492, %v3491
    %3509 = vmatprep.subr.bf16.mxu0 0
    %3510 = vmatpush1.bf16.msra.mxu0 %v3493
    %3511 = vmatprep.subr.bf16.mxu0 0
    %3512 = vmatpush1.bf16.msra.mxu0 %v3494
    %3513 = vmatprep.subr.bf16.mxu0 0
    %3514 = vmatpush1.bf16.msra.mxu0 %v3495
    %3515 = vmatprep.subr.bf16.mxu0 0
    %3516 = vmatpush1.bf16.msra.mxu0 %v3496
    %3517 = vmatprep.subr.bf16.mxu0 0
    %3518 = vmatpush1.bf16.msra.mxu0 %v3497
    %3519 = vmatprep.subr.bf16.mxu0 0
    %3520 = vmatpush1.bf16.msra.mxu0 %v3498
    %3521 = vmatprep.subr.bf16.mxu0 0
    %3522 = vmatpush1.bf16.msra.mxu0 %v3499
    %3523 = vmatprep.subr.bf16.mxu0 0
    %3524 = vmatpush1.bf16.msra.mxu0 %v3500
    %3525 = vmatprep.subr.bf16.mxu0 0
    %3526 = vmatpush1.bf16.msra.mxu0 0
    %3527 = vmatprep.subr.bf16.mxu0 0
    %3528 = vmatpush1.bf16.msra.mxu0 0
    %3529 = vmatprep.subr.bf16.mxu0 0
    %3530 = vmatpush1.bf16.msra.mxu0 0
    %3531 = vmatprep.subr.bf16.mxu0 0
    %3532 = vmatpush1.bf16.msra.mxu0 0
    %3533 = vmatprep.subr.bf16.mxu0 0
    %3534 = vmatpush1.bf16.msra.mxu0 0
    %3535 = vmatprep.subr.bf16.mxu0 0
    %3536 = vmatpush1.bf16.msra.mxu0 0
    %3537 = vmatprep.subr.bf16.mxu0 0
    %3538 = vmatpush1.bf16.msra.mxu0 0
    %3539 = vmatprep.subr.bf16.mxu0 0
    %3540 = vmatpush1.bf16.msra.mxu0 0
    %3541 = vmatprep.mubr.bf16.mxu0 0
    %3542 = vmatmul.mubr.bf16.gmra.mrb[0].mxu0 %v3434
    %v3543 = vpop.f32.mrb[0].mxu0
    %v3544 = vadd.f32 %v3459, %v3543
    %v3545 = vpop.f32.mrb[0].mxu0
    %v3546 = vpop.f32.mrb[0].mxu0
    %v3547 = vadd.f32 %v3459, %v3546
    %v3548 = vpop.f32.mrb[0].mxu0
    %3549 = vmatprep.mubr.bf16.mxu0 0
    %3550 = vmatmul.mubr.bf16.gmra.mrb[0].mxu0 %v3435
    %v3551 = vpop.f32.mrb[0].mxu0
    %v3552 = vadd.f32 %v3459, %v3551
    %v3553 = vpop.f32.mrb[0].mxu0
    %v3554 = vpop.f32.mrb[0].mxu0
    %v3555 = vadd.f32 %v3459, %v3554
    %v3556 = vpop.f32.mrb[0].mxu0
    %3557 = vdwg.mxu0
    %v3558 = vadd.f32 %v3220, %v3544
    %v3559 = vadd.f32 %v3221, %v3547
    %v3560 = vadd.f32 %v3222, %v3552
    %v3561 = vadd.f32 %v3223, %v3555
    %v3562 = vld [vmem:[%s13] sm:$0x1]
    %v3563 = vld [vmem:[%s14] sm:$0x1]
    %v3564 = vsel %vm68, %v3558, 0.0
    %3565 = vadd.xlane.f32.xlu0 %v3564
    %v3566 = vpop.xlane.xlu0 %3565
    %v3567 = vsel %vm68, %v3559, 0.0
    %3568 = vadd.xlane.f32.xlu0 %v3567
    %v3569 = vpop.xlane.xlu0 %3568
    %v3570 = vsel %vm68, %v3560, 0.0
    %3571 = vadd.xlane.f32.xlu0 %v3570
    %v3572 = vpop.xlane.xlu0 %3571
    %v3573 = vsel %vm68, %v3561, 0.0
    %3574 = vadd.xlane.f32.xlu0 %v3573
    %v3575 = vpop.xlane.xlu0 %3574
    %v3576 = vmul.f32 %v3566, %v81
    %v3577 = vmul.f32 %v3569, %v81
    %v3578 = vmul.f32 %v3572, %v81
    %v3579 = vmul.f32 %v3575, %v81
    %v3580 = vsub.f32 %v3558, %v3576
    %v3581 = vsub.f32 %v3559, %v3577
    %v3582 = vsub.f32 %v3560, %v3578
    %v3583 = vsub.f32 %v3561, %v3579
    %v3584 = vmul.f32 %v3580, %v3580
    %v3585 = vmul.f32 %v3581, %v3581
    %v3586 = vmul.f32 %v3582, %v3582
    %v3587 = vmul.f32 %v3583, %v3583
    %v3588 = vsel %vm68, %v3584, 0.0
    %3589 = vadd.xlane.f32.xlu0 %v3588
    %v3590 = vpop.xlane.xlu0 %3589
    %v3591 = vsel %vm68, %v3585, 0.0
    %3592 = vadd.xlane.f32.xlu0 %v3591
    %v3593 = vpop.xlane.xlu0 %3592
    %v3594 = vsel %vm68, %v3586, 0.0
    %3595 = vadd.xlane.f32.xlu0 %v3594
    %v3596 = vpop.xlane.xlu0 %3595
    %v3597 = vsel %vm68, %v3587, 0.0
    %3598 = vadd.xlane.f32.xlu0 %v3597
    %v3599 = vpop.xlane.xlu0 %3598
    %v3600 = vmul.f32 %v3590, %v81
    %v3601 = vmul.f32 %v3593, %v81
    %v3602 = vmul.f32 %v3596, %v81
    %v3603 = vmul.f32 %v3599, %v81
    %v3604 = vadd.f32 %v3600, 1e-05
    %v3605 = vadd.f32 %v3601, 1e-05
    %v3606 = vadd.f32 %v3602, 1e-05
    %v3607 = vadd.f32 %v3603, 1e-05
    %v3608 = vrsqrt.pop %v3604
    %v3609 = vrsqrt.pop %v3605
    %v3610 = vrsqrt.pop %v3606
    %v3611 = vrsqrt.pop %v3607
    %v3612 = vmul.f32 %v3580, %v3608
    %v3613 = vmul.f32 %v3581, %v3609
    %v3614 = vmul.f32 %v3582, %v3610
    %v3615 = vmul.f32 %v3583, %v3611
    %v3617 = vlaneseq
    %v3618 = vshrl.u32 %v3617, 7
    %v3619 = vsub.s32 0, %v3618
    %v3620 = vrot.slane %v3562, %v3619
    %v3622 = vmul.f32 %v3612, %v3620
    %v3623 = vmul.f32 %v3613, %v3620
    %v3624 = vmul.f32 %v3614, %v3620
    %v3625 = vmul.f32 %v3615, %v3620
    %v3627 = vlaneseq
    %v3628 = vshrl.u32 %v3627, 7
    %v3629 = vsub.s32 0, %v3628
    %v3630 = vrot.slane %v3563, %v3629
    %v3632 = vadd.f32 %v3622, %v3630
    %v3633 = vadd.f32 %v3623, %v3630
    %v3634 = vadd.f32 %v3624, %v3630
    %v3635 = vadd.f32 %v3625, %v3630
    %v3636 = vsel %vm68, %v3632, 0.0
    %v3637 = vsel %vm68, %v3633, 0.0
    %v3638 = vadd.f32 %v3636, %v3637
    %v3639 = vrot.slane %v3638, 4
    %v3640 = vadd.f32 %v3638, %v3639
    %v3641 = vrot.slane %v3640, 2
    %v3642 = vadd.f32 %v3640, %v3641
    %v3643 = vrot.slane %v3642, 1
    %v3644 = vadd.f32 %v3642, %v3643
    %v3645 = vsel %vm68, %v3634, 0.0
    %v3646 = vsel %vm68, %v3635, 0.0
    %v3647 = vadd.f32 %v3645, %v3646
    %v3648 = vrot.slane %v3647, 4
    %v3649 = vadd.f32 %v3647, %v3648
    %v3650 = vrot.slane %v3649, 2
    %v3651 = vadd.f32 %v3649, %v3650
    %v3652 = vrot.slane %v3651, 1
    %v3653 = vadd.f32 %v3651, %v3652
    %v3654 = vrcp.pop 16.0
    %v3655 = vmul.f32 %v3644, %v3654
    %v3656 = vmul.f32 %v3653, %v3654
    %v3657 = vpack.c.bf16 %v3655, %v3655
    %v3658 = vpack.c.bf16 %v3656, %v3656
    %v3659 = vld [vmem:[%s15] sm:$0xff]
    %v3660 = vld [vmem:[%s15 + $0x8] sm:$0xff]
    %v3661 = vld [vmem:[%s15 + $0x10] sm:$0xff]
    %v3662 = vld [vmem:[%s15 + $0x18] sm:$0xff]
    %v3663 = vld [vmem:[%s15 + $0x20] sm:$0xff]
    %v3664 = vld [vmem:[%s15 + $0x28] sm:$0xff]
    %v3665 = vld [vmem:[%s15 + $0x30] sm:$0xff]
    %v3666 = vld [vmem:[%s15 + $0x38] sm:$0xff]
    %v3667 = vld [vmem:[%s15 + $0x40] sm:$0xff]
    %v3668 = vld [vmem:[%s15 + $0x48] sm:$0xff]
    %v3669 = vld [vmem:[%s15 + $0x50] sm:$0xff]
    %v3670 = vld [vmem:[%s15 + $0x58] sm:$0xff]
    %v3671 = vld [vmem:[%s15 + $0x60] sm:$0xff]
    %v3672 = vld [vmem:[%s15 + $0x68] sm:$0xff]
    %v3673 = vld [vmem:[%s15 + $0x70] sm:$0xff]
    %v3674 = vld [vmem:[%s15 + $0x78] sm:$0xff]
    %v3675 = vld [vmem:[%s16] sm:$0xf]
    %v3677 = vlaneseq
    %v3678 = vshrl.u32 %v3677, 7
    %v3679 = vsub.s32 0, %v3678
    %v3680 = vrot.slane %v3675, %v3679
    %v3681 = vlaneseq
    %v3682 = vshrl.u32 %v3681, 7
    %v3683 = vsub.s32 1, %v3682
    %v3684 = vrot.slane %v3675, %v3683
    %v3685 = vlaneseq
    %v3686 = vshrl.u32 %v3685, 7
    %v3687 = vsub.s32 2, %v3686
    %v3688 = vrot.slane %v3675, %v3687
    %v3689 = vlaneseq
    %v3690 = vshrl.u32 %v3689, 7
    %v3691 = vsub.s32 3, %v3690
    %v3692 = vrot.slane %v3675, %v3691
    %v3699 = vunpack.c.l.b16 %v3657
    %v3700 = vunpack.c.l.b16 %v3658
    %vm3701 = vcmask 1041409
    %v3702 = vsel %vm3701, %v3700, %v3699
    %v3703 = vpack.c.b16 %v3702, %v3702
    %v3720 = vunpack.c.l.b16 %v3659
    %v3721 = vunpack.c.h.b16 %v3659
    %v3722 = vunpack.c.l.b16 %v3660
    %v3723 = vunpack.c.h.b16 %v3660
    %v3724 = vunpack.c.l.b16 %v3661
    %v3725 = vunpack.c.h.b16 %v3661
    %v3726 = vunpack.c.l.b16 %v3662
    %v3727 = vunpack.c.h.b16 %v3662
    %v3728 = vunpack.c.l.b16 %v3663
    %v3729 = vunpack.c.h.b16 %v3663
    %v3730 = vunpack.c.l.b16 %v3664
    %v3731 = vunpack.c.h.b16 %v3664
    %v3732 = vunpack.c.l.b16 %v3665
    %v3733 = vunpack.c.h.b16 %v3665
    %v3734 = vunpack.c.l.b16 %v3666
    %v3735 = vunpack.c.h.b16 %v3666
    %v3736 = vunpack.c.l.b16 %v3667
    %v3737 = vunpack.c.h.b16 %v3667
    %v3738 = vunpack.c.l.b16 %v3668
    %v3739 = vunpack.c.h.b16 %v3668
    %v3740 = vunpack.c.l.b16 %v3669
    %v3741 = vunpack.c.h.b16 %v3669
    %v3742 = vunpack.c.l.b16 %v3670
    %v3743 = vunpack.c.h.b16 %v3670
    %v3744 = vunpack.c.l.b16 %v3671
    %v3745 = vunpack.c.h.b16 %v3671
    %v3746 = vunpack.c.l.b16 %v3672
    %v3747 = vunpack.c.h.b16 %v3672
    %v3748 = vunpack.c.l.b16 %v3673
    %v3749 = vunpack.c.h.b16 %v3673
    %v3750 = vunpack.c.l.b16 %v3674
    %v3751 = vunpack.c.h.b16 %v3674
    %v3752 = vpack.c.b16 %v3724, %v3720
    %v3753 = vpack.c.b16 %v3725, %v3721
    %v3754 = vpack.c.b16 %v3726, %v3722
    %v3755 = vpack.c.b16 %v3727, %v3723
    %v3756 = vpack.c.b16 %v3732, %v3728
    %v3757 = vpack.c.b16 %v3733, %v3729
    %v3758 = vpack.c.b16 %v3734, %v3730
    %v3759 = vpack.c.b16 %v3735, %v3731
    %v3760 = vpack.c.b16 %v3740, %v3736
    %v3761 = vpack.c.b16 %v3741, %v3737
    %v3762 = vpack.c.b16 %v3742, %v3738
    %v3763 = vpack.c.b16 %v3743, %v3739
    %v3764 = vpack.c.b16 %v3748, %v3744
    %v3765 = vpack.c.b16 %v3749, %v3745
    %v3766 = vpack.c.b16 %v3750, %v3746
    %v3767 = vpack.c.b16 %v3751, %v3747
    %v3785 = vsel %vm68, %v3703, 0
    %3787 = vmatprep.subr.bf16.mxu0 %v3753
    %3788 = vmatpush1.bf16.msra.mxu0 %v3752
    %3789 = vmatprep.subr.bf16.mxu0 %v3757
    %3790 = vmatpush1.bf16.msra.mxu0 %v3756
    %3791 = vmatprep.subr.bf16.mxu0 %v3761
    %3792 = vmatpush1.bf16.msra.mxu0 %v3760
    %3793 = vmatprep.subr.bf16.mxu0 %v3765
    %3794 = vmatpush1.bf16.msra.mxu0 %v3764
    %3795 = vmatprep.subr.bf16.mxu0 0
    %3796 = vmatpush1.bf16.msra.mxu0 0
    %3797 = vmatprep.subr.bf16.mxu0 0
    %3798 = vmatpush1.bf16.msra.mxu0 0
    %3799 = vmatprep.subr.bf16.mxu0 0
    %3800 = vmatpush1.bf16.msra.mxu0 0
    %3801 = vmatprep.subr.bf16.mxu0 0
    %3802 = vmatpush1.bf16.msra.mxu0 0
    %3803 = vmatprep.subr.bf16.mxu0 0
    %3804 = vmatpush1.bf16.msra.mxu0 0
    %3805 = vmatprep.subr.bf16.mxu0 0
    %3806 = vmatpush1.bf16.msra.mxu0 0
    %3807 = vmatprep.subr.bf16.mxu0 0
    %3808 = vmatpush1.bf16.msra.mxu0 0
    %3809 = vmatprep.subr.bf16.mxu0 0
    %3810 = vmatpush1.bf16.msra.mxu0 0
    %3811 = vmatprep.subr.bf16.mxu0 0
    %3812 = vmatpush1.bf16.msra.mxu0 0
    %3813 = vmatprep.subr.bf16.mxu0 0
    %3814 = vmatpush1.bf16.msra.mxu0 0
    %3815 = vmatprep.subr.bf16.mxu0 0
    %3816 = vmatpush1.bf16.msra.mxu0 0
    %3817 = vmatprep.subr.bf16.mxu0 0
    %3818 = vmatpush1.bf16.msra.mxu0 0
    %3819 = vmatprep.mubr.bf16.mxu0 0
    %3820 = vmatmul.mubr.bf16.gmra.mrb[0].mxu0 %v3785
    %v3821 = vpop.f32.mrb[0].mxu0
    %v3822 = vadd.f32 %v3680, %v3821
    %v3823 = vpop.f32.mrb[0].mxu0
    %v3824 = vadd.f32 %v3684, %v3823
    %v3825 = vpop.f32.mrb[0].mxu0
    %v3826 = vpop.f32.mrb[0].mxu0
    %3827 = vdwg.mxu0
    %3828 = vmatprep.subr.bf16.mxu0 %v3755
    %3829 = vmatpush1.bf16.msra.mxu0 %v3754
    %3830 = vmatprep.subr.bf16.mxu0 %v3759
    %3831 = vmatpush1.bf16.msra.mxu0 %v3758
    %3832 = vmatprep.subr.bf16.mxu0 %v3763
    %3833 = vmatpush1.bf16.msra.mxu0 %v3762
    %3834 = vmatprep.subr.bf16.mxu0 %v3767
    %3835 = vmatpush1.bf16.msra.mxu0 %v3766
    %3836 = vmatprep.subr.bf16.mxu0 0
    %3837 = vmatpush1.bf16.msra.mxu0 0
    %3838 = vmatprep.subr.bf16.mxu0 0
    %3839 = vmatpush1.bf16.msra.mxu0 0
    %3840 = vmatprep.subr.bf16.mxu0 0
    %3841 = vmatpush1.bf16.msra.mxu0 0
    %3842 = vmatprep.subr.bf16.mxu0 0
    %3843 = vmatpush1.bf16.msra.mxu0 0
    %3844 = vmatprep.subr.bf16.mxu0 0
    %3845 = vmatpush1.bf16.msra.mxu0 0
    %3846 = vmatprep.subr.bf16.mxu0 0
    %3847 = vmatpush1.bf16.msra.mxu0 0
    %3848 = vmatprep.subr.bf16.mxu0 0
    %3849 = vmatpush1.bf16.msra.mxu0 0
    %3850 = vmatprep.subr.bf16.mxu0 0
    %3851 = vmatpush1.bf16.msra.mxu0 0
    %3852 = vmatprep.subr.bf16.mxu0 0
    %3853 = vmatpush1.bf16.msra.mxu0 0
    %3854 = vmatprep.subr.bf16.mxu0 0
    %3855 = vmatpush1.bf16.msra.mxu0 0
    %3856 = vmatprep.subr.bf16.mxu0 0
    %3857 = vmatpush1.bf16.msra.mxu0 0
    %3858 = vmatprep.subr.bf16.mxu0 0
    %3859 = vmatpush1.bf16.msra.mxu0 0
    %3860 = vmatprep.mubr.bf16.mxu0 0
    %3861 = vmatmul.mubr.bf16.gmra.mrb[0].mxu0 %v3785
    %v3862 = vpop.f32.mrb[0].mxu0
    %v3863 = vadd.f32 %v3688, %v3862
    %v3864 = vpop.f32.mrb[0].mxu0
    %v3865 = vadd.f32 %v3692, %v3864
    %v3866 = vpop.f32.mrb[0].mxu0
    %v3867 = vpop.f32.mrb[0].mxu0
    %3868 = vdwg.mxu0
    %v3873 = vcombine.low %v3822, %v3824
    %v3874 = vcombine.low %v3863, %v3865
    %v3876 = vunpack.c.l.s4 1983009808
    %v3877 = vunpack.c.0.s8 %v3876
    %v3878 = vlaneseq
    %v3879 = vshrl.u32 %v3878, 7
    %v3880 = vsub.s32 %v3877, %v3879
    %v3881 = vrot.slane %v3873, %v3880
    %v3883 = vunpack.c.l.s4 1983009808
    %v3884 = vunpack.c.0.s8 %v3883
    %v3885 = vlaneseq
    %v3886 = vshrl.u32 %v3885, 7
    %v3887 = vsub.s32 %v3884, %v3886
    %v3888 = vrot.slane %v3874, %v3887
    %v3889 = vcombine.low %v3881, %v3888
    %3891 = vst [vmem:[#allocation4] sm:$0xff] %v3889
    // Predicated region
    $region70: #{_lambda_.7} parent=1 // pred_check
      _
    $region71: #{_lambda_.7} parent=1 // pred_check_branch
      %3893 = sbr.rel (0) target = $region73
    $region72: #{_lambda_.7} parent=1 // pred_region
      %s3895 = ssub.s32 128, 128
      %3896 = vsyncadd [#allocation5], %s3895
      %s3898 = sshll.u32 [#allocation4], 4
      %s3899 = int_to_ptr.vmem [resolvable:$true] %s3898
      %3901 = dma.vmem_to_hbm [thread:$0]  %s3899, 128, %s17, [#allocation5]
    $region73: #{_lambda_.7} parent=1 // pred_fallthru
      _
    // Predicated region
    $region74: #{_lambda_.7} parent=1 // pred_check
      _
    $region75: #{_lambda_.7} parent=1 // pred_check_branch
      %3903 = sbr.rel (0) target = $region77
    $region76: #{_lambda_.7} parent=1 // pred_region
      %3904 = dma.done [#allocation5], 128
    $region77: #{_lambda_.7} parent=1 // pred_fallthru
      _
    %3905 = vsyncpa [#allocation5], 1

</llo_original>
